<compile_context>
chip_gen: v7x
topology: tpu7x:2x2x1
jax: 0.10.0
libtpu: 0.0.40
codegen_flags: <defaults>
</compile_context>

<pallas_src>
import functools

import jax
import jax.numpy as jnp
from jax import lax
from jax.experimental import pallas as pl
from jax.experimental.pallas import tpu as pltpu

HID = 200          # hidden_size_for_lstm
NUM_LAYERS = 2
LANE = 128
SUBLANE = 8


def _round_up(v, m):
    return ((v + m - 1) // m) * m


# ----------------------------- Pallas kernel --------------------------------
def encoder_kernel(x_ref,                    # (T_CHUNK, B_BLOCK, D_PAD) f32
                   w1_ref, b1_ref,           # fused layer-1 weight (bf16) + bias (f32)
                   w2_ref, b2_ref,           # fused layer-2 weight (bf16) + bias (f32)
                   wlin_ref, blin_ref,       # linear head (bf16 / f32)
                   out_ref, hn_ref, cn_ref,  # outputs (padded)
                   h1_s, c1_s, h2_s, c2_s,   # VMEM scratch state (persists across t-chunks)
                   *, hid_pad, t_chunk, t_total):
    tc = pl.program_id(1)                    # time-chunk index (sequential axis)
    n_tc = pl.num_programs(1)

    @pl.when(tc == 0)
    def _init():
        h1_s[...] = jnp.zeros_like(h1_s)
        c1_s[...] = jnp.zeros_like(c1_s)
        h2_s[...] = jnp.zeros_like(h2_s)
        c2_s[...] = jnp.zeros_like(c2_s)

    H = hid_pad
    B = h1_s.shape[0]

    # Hoist weight/bias reads (and the bias broadcasts) out of the unrolled loop.
    w1 = w1_ref[...]
    w2 = w2_ref[...]
    b1 = jnp.broadcast_to(b1_ref[...], (B, 4 * H))
    b2 = jnp.broadcast_to(b2_ref[...], (B, 4 * H))

    def gate_math(gates, c_prev):
        # 128-aligned gate slices (H is a multiple of 128).
        i = jax.nn.sigmoid(gates[:, 0 * H:1 * H])
        f = jax.nn.sigmoid(gates[:, 1 * H:2 * H])
        g = jnp.tanh(gates[:, 2 * H:3 * H])
        o = jax.nn.sigmoid(gates[:, 3 * H:4 * H])
        c_new = f * c_prev + i * g
        h_new = o * jnp.tanh(c_new)
        return h_new, c_new

    needs_mask = (t_total % t_chunk) != 0    # static

    def step(i, carry):
        h1, c1, h2, c2 = carry
        x_t = x_ref[i]                                        # (B, D_PAD) f32

        # Layer 1: one fused MXU dot over K = D_PAD + H.
        lhs1 = jnp.concatenate([x_t, h1], axis=-1).astype(jnp.bfloat16)
        g1 = jnp.dot(lhs1, w1, preferred_element_type=jnp.float32) + b1
        h1n, c1n = gate_math(g1, c1)

        # TODO(synk): nn.LSTM inter-layer Dropout(p=0.03) is training-only; eval == identity.

        # Layer 2: one fused MXU dot over K = 2*H.
        lhs2 = jnp.concatenate([h1n, h2], axis=-1).astype(jnp.bfloat16)
        g2 = jnp.dot(lhs2, w2, preferred_element_type=jnp.float32) + b2
        h2n, c2n = gate_math(g2, c2)

        if needs_mask:                                        # only traced if T % T_CHUNK != 0
            valid = (tc * t_chunk + i) < t_total
            h1n = jnp.where(valid, h1n, h1)
            c1n = jnp.where(valid, c1n, c1)
            h2n = jnp.where(valid, h2n, h2)
            c2n = jnp.where(valid, c2n, c2)
        return h1n, c1n, h2n, c2n

    carry0 = (h1_s[...], c1_s[...], h2_s[...], c2_s[...])
    h1, c1, h2, c2 = lax.fori_loop(0, t_chunk, step, carry0, unroll=True)

    h1_s[...] = h1
    c1_s[...] = c1
    h2_s[...] = h2
    c2_s[...] = c2

    @pl.when(tc == n_tc - 1)
    def _finalize():
        # linear(output[:, -1]) == linear(h2 at the last valid timestep)
        out_ref[...] = (jnp.dot(h2.astype(jnp.bfloat16), wlin_ref[...],
                                preferred_element_type=jnp.float32)
                        + blin_ref[...])
        hn_ref[0, :, :] = h1
        hn_ref[1, :, :] = h2
        cn_ref[0, :, :] = c1
        cn_ref[1, :, :] = c2


# ------------------------- parameter repacking -------------------------------
def pack_params(torch_params, input_size, hidden_out):
    """Build fused, gate-padded, lane-aligned bf16 weights from PyTorch-layout params."""
    (wih1, whh1, bih1, bhh1, wih2, whh2, bih2, bhh2, wlin, blin) = torch_params
    D_PAD = _round_up(input_size, LANE)
    H_PAD = _round_up(HID, LANE)
    O_PAD = _round_up(hidden_out, LANE)

    def fuse(w_in, w_h, b, in_dim, in_pad):
        # w_in: (4H, in_dim), w_h: (4H, HID), b: (4H,)  [PyTorch layout]
        w_in_t, w_h_t = w_in.T, w_h.T
        wf = jnp.zeros((in_pad + H_PAD, 4 * H_PAD), jnp.float32)
        bf = jnp.zeros((1, 4 * H_PAD), jnp.float32)
        for g in range(4):
            wf = wf.at[:in_dim, g * H_PAD:g * H_PAD + HID].set(
                w_in_t[:, g * HID:(g + 1) * HID])
            wf = wf.at[in_pad:in_pad + HID, g * H_PAD:g * H_PAD + HID].set(
                w_h_t[:, g * HID:(g + 1) * HID])
            bf = bf.at[0, g * H_PAD:g * H_PAD + HID].set(b[g * HID:(g + 1) * HID])
        return wf.astype(jnp.bfloat16), bf

    w1f, b1f = fuse(wih1, whh1, bih1 + bhh1, input_size, D_PAD)
    w2f, b2f = fuse(wih2, whh2, bih2 + bhh2, HID, H_PAD)

    wlin_p = (jnp.zeros((H_PAD, O_PAD), jnp.float32)
              .at[:HID, :hidden_out].set(wlin.T)).astype(jnp.bfloat16)
    blin_p = jnp.zeros((1, O_PAD), jnp.float32).at[0, :hidden_out].set(blin)
    return w1f, b1f, w2f, b2f, wlin_p, blin_p


# ------------------------------ wrapper --------------------------------------
def encoder_forward(x, torch_params, hidden_out, *, t_chunk=16):
    """x: (B, T, D) float32.  Returns (linear_out (B, hidden_out), (h_n, c_n) each (2, B, 200))."""
    B, T, D = x.shape
    assert T >= 1, "Encoder requires at least one timestep"

    D_PAD = _round_up(D, LANE)
    H_PAD = _round_up(HID, LANE)
    O_PAD = _round_up(hidden_out, LANE)

    B_sub = _round_up(B, SUBLANE)
    B_BLOCK = B_sub if B_sub <= 128 else 128
    B_PAD = _round_up(B, B_BLOCK)
    n_b = B_PAD // B_BLOCK

    T_CHUNK = max(1, min(t_chunk, T))
    n_t = (T + T_CHUNK - 1) // T_CHUNK
    T_PAD = n_t * T_CHUNK

    w1f, b1f, w2f, b2f, wlin_p, blin_p = pack_params(torch_params, D, hidden_out)

    # (B, T, D) -> (T_PAD, B_PAD, D_PAD), zero padded: time becomes the grid axis,
    # each per-step slab is a lane/sublane-aligned (B_PAD, D_PAD) tile.
    x_tbd = jnp.transpose(x, (1, 0, 2))
    x_p = jnp.zeros((T_PAD, B_PAD, D_PAD), jnp.float32).at[:T, :B, :D].set(x_tbd)

    out_shapes = (
        jax.ShapeDtypeStruct((B_PAD, O_PAD), jnp.float32),
        jax.ShapeDtypeStruct((NUM_LAYERS, B_PAD, H_PAD), jnp.float32),
        jax.ShapeDtypeStruct((NUM_LAYERS, B_PAD, H_PAD), jnp.float32),
    )

    in_specs = [
        pl.BlockSpec((T_CHUNK, B_BLOCK, D_PAD), lambda b, t: (t, b, 0)),   # x chunk
        pl.BlockSpec((D_PAD + H_PAD, 4 * H_PAD), lambda b, t: (0, 0)),     # fused W1
        pl.BlockSpec((1, 4 * H_PAD), lambda b, t: (0, 0)),                 # b1
        pl.BlockSpec((2 * H_PAD, 4 * H_PAD), lambda b, t: (0, 0)),         # fused W2
        pl.BlockSpec((1, 4 * H_PAD), lambda b, t: (0, 0)),                 # b2
        pl.BlockSpec((H_PAD, O_PAD), lambda b, t: (0, 0)),                 # W_lin^T
        pl.BlockSpec((1, O_PAD), lambda b, t: (0, 0)),                     # b_lin
    ]
    out_specs = (
        pl.BlockSpec((B_BLOCK, O_PAD), lambda b, t: (b, 0)),
        pl.BlockSpec((NUM_LAYERS, B_BLOCK, H_PAD), lambda b, t: (0, b, 0)),
        pl.BlockSpec((NUM_LAYERS, B_BLOCK, H_PAD), lambda b, t: (0, b, 0)),
    )
    scratch = [pltpu.VMEM((B_BLOCK, H_PAD), jnp.float32) for _ in range(4)]  # h1,c1,h2,c2

    # Advisory cost estimate for XLA's scheduler around this sequential call.
    flops = 2 * T * B * ((D + HID) * 4 * HID + (2 * HID) * 4 * HID) + 2 * B * HID * hidden_out
    transcendentals = T * B * HID * 10
    bytes_accessed = (4 * T_PAD * B_PAD * D_PAD
                      + 2 * ((D_PAD + H_PAD) * 4 * H_PAD + 2 * H_PAD * 4 * H_PAD
                             + H_PAD * O_PAD)
                      + 4 * (8 * H_PAD + O_PAD)
                      + 4 * (B_PAD * O_PAD + 4 * B_PAD * H_PAD))

    kernel = functools.partial(encoder_kernel, hid_pad=H_PAD,
                               t_chunk=T_CHUNK, t_total=T)

    lin, h_n, c_n = pl.pallas_call(
        kernel,
        out_shape=out_shapes,
        grid_spec=pltpu.PrefetchScalarGridSpec(
            num_scalar_prefetch=0,
            grid=(n_b, n_t),                      # batch blocks (parallel) x time chunks (sequential)
            in_specs=in_specs,
            out_specs=out_specs,
            scratch_shapes=scratch,
        ),
        compiler_params=pltpu.CompilerParams(
            dimension_semantics=("parallel", "arbitrary")),
        cost_estimate=pl.CostEstimate(flops=flops,
                                      transcendentals=transcendentals,
                                      bytes_accessed=bytes_accessed),
    )(x_p, w1f, b1f, w2f, b2f, wlin_p, blin_p)

    # Strip padding.
    return lin[:B, :hidden_out], (h_n[:, :B, :HID], c_n[:, :B, :HID])


# ---------------- pure-JAX references (for correctness checks) ---------------
def encoder_reference(x, torch_params, matmul_dtype=jnp.float32):
    """Reference LSTM+Linear.  matmul_dtype=bf16 mimics the kernel's MXU precision."""
    (wih1, whh1, bih1, bhh1, wih2, whh2, bih2, bhh2, wlin, blin) = torch_params
    B, T, D = x.shape
    b1 = (bih1 + bhh1)[None, :]
    b2 = (bih2 + bhh2)[None, :]

    def mm(a, w):
        return jnp.dot(a.astype(matmul_dtype), w.T.astype(matmul_dtype),
                       preferred_element_type=jnp.float32)

    def cell(inp, h, c, wih, whh, b):
        g = mm(inp, wih) + mm(h, whh) + b
        i = jax.nn.sigmoid(g[:, 0 * HID:1 * HID])
        f = jax.nn.sigmoid(g[:, 1 * HID:2 * HID])
        gg = jnp.tanh(g[:, 2 * HID:3 * HID])
        o = jax.nn.sigmoid(g[:, 3 * HID:4 * HID])
        c_new = f * c + i * gg
        return o * jnp.tanh(c_new), c_new

    def step(carry, x_t):
        h1, c1, h2, c2 = carry
        h1, c1 = cell(x_t, h1, c1, wih1, whh1, b1)
        h2, c2 = cell(h1, h2, c2, wih2, whh2, b2)
        return (h1, c1, h2, c2), None

    init = tuple(jnp.zeros((B, HID), jnp.float32) for _ in range(4))
    (h1, c1, h2, c2), _ = lax.scan(step, init, jnp.transpose(x, (1, 0, 2)))
    lin = mm(h2, wlin) + blin[None, :]
    return lin, (jnp.stack([h1, h2]), jnp.stack([c1, c2]))


def make_params(key, input_size, hidden_out):
    """PyTorch-layout parameters: W_ih (4H,in), W_hh (4H,H), biases (4H,), Linear (out,H)."""
    k = 1.0 / jnp.sqrt(jnp.float32(HID))
    keys = jax.random.split(key, 12)
    u = lambda kk, shape: jax.random.uniform(kk, shape, jnp.float32, -k, k)
    wih1 = u(keys[0], (4 * HID, input_size))
    whh1 = u(keys[1], (4 * HID, HID))
    bih1 = u(keys[2], (4 * HID,))
    bhh1 = u(keys[3], (4 * HID,))
    wih2 = u(keys[4], (4 * HID, HID))
    whh2 = u(keys[5], (4 * HID, HID))
    bih2 = u(keys[6], (4 * HID,))
    bhh2 = u(keys[7], (4 * HID,))
    wlin = u(keys[8], (hidden_out, HID))
    blin = u(keys[9], (hidden_out,))
    return (wih1, whh1, bih1, bhh1, wih2, whh2, bih2, bhh2, wlin, blin)


if __name__ == "__main__":
    B, T, D, HIDDEN_OUT = 2, 8, 16, 32
    key = jax.random.PRNGKey(0)
    kx, kp = jax.random.split(key)
    x = jax.random.normal(kx, (B, T, D), jnp.float32)
    params = make_params(kp, D, HIDDEN_OUT)

    lin, (h_n, c_n) = encoder_forward(x, params, HIDDEN_OUT)
    jax.block_until_ready((lin, h_n, c_n))

    assert lin.shape == (B, HIDDEN_OUT)
    assert h_n.shape == (NUM_LAYERS, B, HID) and c_n.shape == (NUM_LAYERS, B, HID)

    # Semantic check vs. full-f32 reference (loose: kernel matmuls run in bf16).
    lin32, (h32, c32) = encoder_reference(x, params, matmul_dtype=jnp.float32)
    assert float(jnp.max(jnp.abs(lin - lin32))) < 5e-2
    assert float(jnp.max(jnp.abs(h_n - h32))) < 5e-2
    assert float(jnp.max(jnp.abs(c_n - c32))) < 5e-2

    # Precision-matched check vs. bf16-matmul / f32-accumulate reference (tight).
    lin16, (h16, c16) = encoder_reference(x, params, matmul_dtype=jnp.bfloat16)
    assert float(jnp.max(jnp.abs(lin - lin16))) < 5e-3
    assert float(jnp.max(jnp.abs(h_n - h16))) < 5e-3
    assert float(jnp.max(jnp.abs(c_n - c16))) < 5e-3

    print("KERNEL_OK")
</pallas_src>

<mosaic_0001>
module attributes {stable_mosaic.version = 11 : i64} {
  func.func @encoder_kernel(%arg0: i32, %arg1: i32, %arg2: memref<8x8x128xf32, #tpu.memory_space<vmem>>, %arg3: memref<384x1024xbf16, #tpu.memory_space<vmem>>, %arg4: memref<1x1024xf32, #tpu.memory_space<vmem>>, %arg5: memref<512x1024xbf16, #tpu.memory_space<vmem>>, %arg6: memref<1x1024xf32, #tpu.memory_space<vmem>>, %arg7: memref<256x128xbf16, #tpu.memory_space<vmem>>, %arg8: memref<1x128xf32, #tpu.memory_space<vmem>>, %arg9: memref<8x128xf32, #tpu.memory_space<vmem>>, %arg10: memref<2x8x256xf32, #tpu.memory_space<vmem>>, %arg11: memref<2x8x256xf32, #tpu.memory_space<vmem>>, %arg12: memref<8x256xf32, #tpu.memory_space<vmem>>, %arg13: memref<8x256xf32, #tpu.memory_space<vmem>>, %arg14: memref<8x256xf32, #tpu.memory_space<vmem>>, %arg15: memref<8x256xf32, #tpu.memory_space<vmem>>) attributes {dimension_semantics = [#tpu.dimension_semantics<parallel>, #tpu.dimension_semantics<arbitrary>], iteration_bounds = array<i64: 1, 1>, scalar_prefetch = 0 : i64, scratch_operands = 4 : i64, tpu.core_type = #tpu.core_type<tc>, window_params = [{transform_indices = @transform_0, window_bounds = array<i64: 8, 8, 128>}, {pipeline_mode = #tpu.pipeline_mode<synchronous>, transform_indices = @transform_1, window_bounds = array<i64: 384, 1024>}, {pipeline_mode = #tpu.pipeline_mode<synchronous>, transform_indices = @transform_2, window_bounds = array<i64: 1, 1024>}, {pipeline_mode = #tpu.pipeline_mode<synchronous>, transform_indices = @transform_3, window_bounds = array<i64: 512, 1024>}, {pipeline_mode = #tpu.pipeline_mode<synchronous>, transform_indices = @transform_4, window_bounds = array<i64: 1, 1024>}, {pipeline_mode = #tpu.pipeline_mode<synchronous>, transform_indices = @transform_5, window_bounds = array<i64: 256, 128>}, {pipeline_mode = #tpu.pipeline_mode<synchronous>, transform_indices = @transform_6, window_bounds = array<i64: 1, 128>}, {transform_indices = @transform_7, window_bounds = array<i64: 8, 128>}, {transform_indices = @transform_8, window_bounds = array<i64: 2, 8, 256>}, {transform_indices = @transform_9, window_bounds = array<i64: 2, 8, 256>}]} {
    %c0_i32 = arith.constant 0 : i32
    %0 = arith.cmpi eq, %arg1, %c0_i32 : i32
    %1 = arith.extui %0 : i1 to i32
    %c0_i32_0 = arith.constant 0 : i32
    %2 = arith.cmpi ne, %1, %c0_i32_0 : i32
    scf.if %2 {
      %cst_106 = arith.constant 0.000000e+00 : f32
      %510 = vector.broadcast %cst_106 : f32 to vector<8x256xf32>
      %c0_107 = arith.constant 0 : index
      %c0_108 = arith.constant 0 : index
      %511 = vector.load %arg12[%c0_107, %c0_108] : memref<8x256xf32, #tpu.memory_space<vmem>>, vector<8x256xf32>
      tpu.vector_store %arg12[%c0_107, %c0_108], %510 {strides = array<i32>} : memref<8x256xf32, #tpu.memory_space<vmem>>, vector<8x256xf32>,
      %cst_109 = arith.constant 0.000000e+00 : f32
      %512 = vector.broadcast %cst_109 : f32 to vector<8x256xf32>
      %c0_110 = arith.constant 0 : index
      %c0_111 = arith.constant 0 : index
      %513 = vector.load %arg13[%c0_110, %c0_111] : memref<8x256xf32, #tpu.memory_space<vmem>>, vector<8x256xf32>
      tpu.vector_store %arg13[%c0_110, %c0_111], %512 {strides = array<i32>} : memref<8x256xf32, #tpu.memory_space<vmem>>, vector<8x256xf32>,
      %cst_112 = arith.constant 0.000000e+00 : f32
      %514 = vector.broadcast %cst_112 : f32 to vector<8x256xf32>
      %c0_113 = arith.constant 0 : index
      %c0_114 = arith.constant 0 : index
      %515 = vector.load %arg14[%c0_113, %c0_114] : memref<8x256xf32, #tpu.memory_space<vmem>>, vector<8x256xf32>
      tpu.vector_store %arg14[%c0_113, %c0_114], %514 {strides = array<i32>} : memref<8x256xf32, #tpu.memory_space<vmem>>, vector<8x256xf32>,
      %cst_115 = arith.constant 0.000000e+00 : f32
      %516 = vector.broadcast %cst_115 : f32 to vector<8x256xf32>
      %c0_116 = arith.constant 0 : index
      %c0_117 = arith.constant 0 : index
      %517 = vector.load %arg15[%c0_116, %c0_117] : memref<8x256xf32, #tpu.memory_space<vmem>>, vector<8x256xf32>
      tpu.vector_store %arg15[%c0_116, %c0_117], %516 {strides = array<i32>} : memref<8x256xf32, #tpu.memory_space<vmem>>, vector<8x256xf32>,
    } else {
    }
    %c0 = arith.constant 0 : index
    %c0_1 = arith.constant 0 : index
    %3 = vector.load %arg3[%c0, %c0_1] : memref<384x1024xbf16, #tpu.memory_space<vmem>>, vector<384x1024xbf16>
    %c0_2 = arith.constant 0 : index
    %c0_3 = arith.constant 0 : index
    %4 = vector.load %arg5[%c0_2, %c0_3] : memref<512x1024xbf16, #tpu.memory_space<vmem>>, vector<512x1024xbf16>
    %c0_4 = arith.constant 0 : index
    %c0_5 = arith.constant 0 : index
    %5 = vector.load %arg4[%c0_4, %c0_5] : memref<1x1024xf32, #tpu.memory_space<vmem>>, vector<1x1024xf32>
    %6 = vector.shape_cast %5 : vector<1x1024xf32> to vector<1x1024xf32>
    %7 = vector.broadcast %6 : vector<1x1024xf32> to vector<8x1024xf32>
    %c0_6 = arith.constant 0 : index
    %c0_7 = arith.constant 0 : index
    %8 = vector.load %arg6[%c0_6, %c0_7] : memref<1x1024xf32, #tpu.memory_space<vmem>>, vector<1x1024xf32>
    %9 = vector.shape_cast %8 : vector<1x1024xf32> to vector<1x1024xf32>
    %10 = vector.broadcast %9 : vector<1x1024xf32> to vector<8x1024xf32>
    %c0_8 = arith.constant 0 : index
    %c0_9 = arith.constant 0 : index
    %11 = vector.load %arg12[%c0_8, %c0_9] : memref<8x256xf32, #tpu.memory_space<vmem>>, vector<8x256xf32>
    %c0_10 = arith.constant 0 : index
    %c0_11 = arith.constant 0 : index
    %12 = vector.load %arg13[%c0_10, %c0_11] : memref<8x256xf32, #tpu.memory_space<vmem>>, vector<8x256xf32>
    %c0_12 = arith.constant 0 : index
    %c0_13 = arith.constant 0 : index
    %13 = vector.load %arg14[%c0_12, %c0_13] : memref<8x256xf32, #tpu.memory_space<vmem>>, vector<8x256xf32>
    %c0_14 = arith.constant 0 : index
    %c0_15 = arith.constant 0 : index
    %14 = vector.load %arg15[%c0_14, %c0_15] : memref<8x256xf32, #tpu.memory_space<vmem>>, vector<8x256xf32>
    %c0_i32_16 = arith.constant 0 : i32
    %15 = arith.index_cast %c0_i32_16 : i32 to index
    %c0_17 = arith.constant 0 : index
    %c0_18 = arith.constant 0 : index
    %16 = vector.load %arg2[%15, %c0_17, %c0_18] : memref<8x8x128xf32, #tpu.memory_space<vmem>>, vector<1x8x128xf32>
    %17 = vector.shape_cast %16 : vector<1x8x128xf32> to vector<8x128xf32>
    %18 = tpu.concatenate %17, %11 in 1 : vector<8x128xf32>, vector<8x256xf32> -> vector<8x384xf32>
    %19 = arith.truncf %18 : vector<8x384xf32> to vector<8x384xbf16>
    %cst = arith.constant dense<0.000000e+00> : vector<8x1024xf32>
    %20 = tpu.matmul %19, %3, %cst {dimension_numbers = #tpu.dot_dimension_numbers<[1], [0], [0], [1], [0, 0, 1, 1], [], []>} : vector<8x384xbf16>, vector<384x1024xbf16>, vector<8x1024xf32> -> vector<8x1024xf32>
    %21 = arith.addf %20, %7 : vector<8x1024xf32>
    %22 = vector.extract_strided_slice %21 {offsets = [0, 0], sizes = [8, 256], strides = [1, 1]} : vector<8x1024xf32> to vector<8x256xf32>
    %23 = arith.negf %22 : vector<8x256xf32>
    %24 = math.exp %23 : vector<8x256xf32>
    %cst_19 = arith.constant 1.000000e+00 : f32
    %25 = vector.broadcast %cst_19 : f32 to vector<8x256xf32>
    %26 = arith.addf %25, %24 : vector<8x256xf32>
    %27 = arith.divf %25, %26 : vector<8x256xf32>
    %28 = vector.extract_strided_slice %21 {offsets = [0, 256], sizes = [8, 256], strides = [1, 1]} : vector<8x1024xf32> to vector<8x256xf32>
    %29 = arith.negf %28 : vector<8x256xf32>
    %30 = math.exp %29 : vector<8x256xf32>
    %cst_20 = arith.constant 1.000000e+00 : f32
    %31 = vector.broadcast %cst_20 : f32 to vector<8x256xf32>
    %32 = arith.addf %31, %30 : vector<8x256xf32>
    %33 = arith.divf %31, %32 : vector<8x256xf32>
    %34 = vector.extract_strided_slice %21 {offsets = [0, 512], sizes = [8, 256], strides = [1, 1]} : vector<8x1024xf32> to vector<8x256xf32>
    %35 = math.tanh %34 : vector<8x256xf32>
    %36 = vector.extract_strided_slice %21 {offsets = [0, 768], sizes = [8, 256], strides = [1, 1]} : vector<8x1024xf32> to vector<8x256xf32>
    %37 = arith.negf %36 : vector<8x256xf32>
    %38 = math.exp %37 : vector<8x256xf32>
    %cst_21 = arith.constant 1.000000e+00 : f32
    %39 = vector.broadcast %cst_21 : f32 to vector<8x256xf32>
    %40 = arith.addf %39, %38 : vector<8x256xf32>
    %41 = arith.divf %39, %40 : vector<8x256xf32>
    %42 = arith.mulf %33, %12 : vector<8x256xf32>
    %43 = arith.mulf %27, %35 : vector<8x256xf32>
    %44 = arith.addf %42, %43 : vector<8x256xf32>
    %45 = math.tanh %44 : vector<8x256xf32>
    %46 = arith.mulf %41, %45 : vector<8x256xf32>
    %47 = tpu.concatenate %46, %13 in 1 : vector<8x256xf32>, vector<8x256xf32> -> vector<8x512xf32>
    %48 = arith.truncf %47 : vector<8x512xf32> to vector<8x512xbf16>
    %cst_22 = arith.constant dense<0.000000e+00> : vector<8x1024xf32>
    %49 = tpu.matmul %48, %4, %cst_22 {dimension_numbers = #tpu.dot_dimension_numbers<[1], [0], [0], [1], [0, 0, 1, 1], [], []>} : vector<8x512xbf16>, vector<512x1024xbf16>, vector<8x1024xf32> -> vector<8x1024xf32>
    %50 = arith.addf %49, %10 : vector<8x1024xf32>
    %51 = vector.extract_strided_slice %50 {offsets = [0, 0], sizes = [8, 256], strides = [1, 1]} : vector<8x1024xf32> to vector<8x256xf32>
    %52 = arith.negf %51 : vector<8x256xf32>
    %53 = math.exp %52 : vector<8x256xf32>
    %cst_23 = arith.constant 1.000000e+00 : f32
    %54 = vector.broadcast %cst_23 : f32 to vector<8x256xf32>
    %55 = arith.addf %54, %53 : vector<8x256xf32>
    %56 = arith.divf %54, %55 : vector<8x256xf32>
    %57 = vector.extract_strided_slice %50 {offsets = [0, 256], sizes = [8, 256], strides = [1, 1]} : vector<8x1024xf32> to vector<8x256xf32>
    %58 = arith.negf %57 : vector<8x256xf32>
    %59 = math.exp %58 : vector<8x256xf32>
    %cst_24 = arith.constant 1.000000e+00 : f32
    %60 = vector.broadcast %cst_24 : f32 to vector<8x256xf32>
    %61 = arith.addf %60, %59 : vector<8x256xf32>
    %62 = arith.divf %60, %61 : vector<8x256xf32>
    %63 = vector.extract_strided_slice %50 {offsets = [0, 512], sizes = [8, 256], strides = [1, 1]} : vector<8x1024xf32> to vector<8x256xf32>
    %64 = math.tanh %63 : vector<8x256xf32>
    %65 = vector.extract_strided_slice %50 {offsets = [0, 768], sizes = [8, 256], strides = [1, 1]} : vector<8x1024xf32> to vector<8x256xf32>
    %66 = arith.negf %65 : vector<8x256xf32>
    %67 = math.exp %66 : vector<8x256xf32>
    %cst_25 = arith.constant 1.000000e+00 : f32
    %68 = vector.broadcast %cst_25 : f32 to vector<8x256xf32>
    %69 = arith.addf %68, %67 : vector<8x256xf32>
    %70 = arith.divf %68, %69 : vector<8x256xf32>
    %71 = arith.mulf %62, %14 : vector<8x256xf32>
    %72 = arith.mulf %56, %64 : vector<8x256xf32>
    %73 = arith.addf %71, %72 : vector<8x256xf32>
    %74 = math.tanh %73 : vector<8x256xf32>
    %75 = arith.mulf %70, %74 : vector<8x256xf32>
    %c1_i32 = arith.constant 1 : i32
    %76 = arith.index_cast %c1_i32 : i32 to index
    %c0_26 = arith.constant 0 : index
    %c0_27 = arith.constant 0 : index
    %77 = vector.load %arg2[%76, %c0_26, %c0_27] : memref<8x8x128xf32, #tpu.memory_space<vmem>>, vector<1x8x128xf32>
    %78 = vector.shape_cast %77 : vector<1x8x128xf32> to vector<8x128xf32>
    %79 = tpu.concatenate %78, %46 in 1 : vector<8x128xf32>, vector<8x256xf32> -> vector<8x384xf32>
    %80 = arith.truncf %79 : vector<8x384xf32> to vector<8x384xbf16>
    %cst_28 = arith.constant dense<0.000000e+00> : vector<8x1024xf32>
    %81 = tpu.matmul %80, %3, %cst_28 {dimension_numbers = #tpu.dot_dimension_numbers<[1], [0], [0], [1], [0, 0, 1, 1], [], []>} : vector<8x384xbf16>, vector<384x1024xbf16>, vector<8x1024xf32> -> vector<8x1024xf32>
    %82 = arith.addf %81, %7 : vector<8x1024xf32>
    %83 = vector.extract_strided_slice %82 {offsets = [0, 0], sizes = [8, 256], strides = [1, 1]} : vector<8x1024xf32> to vector<8x256xf32>
    %84 = arith.negf %83 : vector<8x256xf32>
    %85 = math.exp %84 : vector<8x256xf32>
    %cst_29 = arith.constant 1.000000e+00 : f32
    %86 = vector.broadcast %cst_29 : f32 to vector<8x256xf32>
    %87 = arith.addf %86, %85 : vector<8x256xf32>
    %88 = arith.divf %86, %87 : vector<8x256xf32>
    %89 = vector.extract_strided_slice %82 {offsets = [0, 256], sizes = [8, 256], strides = [1, 1]} : vector<8x1024xf32> to vector<8x256xf32>
    %90 = arith.negf %89 : vector<8x256xf32>
    %91 = math.exp %90 : vector<8x256xf32>
    %cst_30 = arith.constant 1.000000e+00 : f32
    %92 = vector.broadcast %cst_30 : f32 to vector<8x256xf32>
    %93 = arith.addf %92, %91 : vector<8x256xf32>
    %94 = arith.divf %92, %93 : vector<8x256xf32>
    %95 = vector.extract_strided_slice %82 {offsets = [0, 512], sizes = [8, 256], strides = [1, 1]} : vector<8x1024xf32> to vector<8x256xf32>
    %96 = math.tanh %95 : vector<8x256xf32>
    %97 = vector.extract_strided_slice %82 {offsets = [0, 768], sizes = [8, 256], strides = [1, 1]} : vector<8x1024xf32> to vector<8x256xf32>
    %98 = arith.negf %97 : vector<8x256xf32>
    %99 = math.exp %98 : vector<8x256xf32>
    %cst_31 = arith.constant 1.000000e+00 : f32
    %100 = vector.broadcast %cst_31 : f32 to vector<8x256xf32>
    %101 = arith.addf %100, %99 : vector<8x256xf32>
    %102 = arith.divf %100, %101 : vector<8x256xf32>
    %103 = arith.mulf %94, %44 : vector<8x256xf32>
    %104 = arith.mulf %88, %96 : vector<8x256xf32>
    %105 = arith.addf %103, %104 : vector<8x256xf32>
    %106 = math.tanh %105 : vector<8x256xf32>
    %107 = arith.mulf %102, %106 : vector<8x256xf32>
    %108 = tpu.concatenate %107, %75 in 1 : vector<8x256xf32>, vector<8x256xf32> -> vector<8x512xf32>
    %109 = arith.truncf %108 : vector<8x512xf32> to vector<8x512xbf16>
    %cst_32 = arith.constant dense<0.000000e+00> : vector<8x1024xf32>
    %110 = tpu.matmul %109, %4, %cst_32 {dimension_numbers = #tpu.dot_dimension_numbers<[1], [0], [0], [1], [0, 0, 1, 1], [], []>} : vector<8x512xbf16>, vector<512x1024xbf16>, vector<8x1024xf32> -> vector<8x1024xf32>
    %111 = arith.addf %110, %10 : vector<8x1024xf32>
    %112 = vector.extract_strided_slice %111 {offsets = [0, 0], sizes = [8, 256], strides = [1, 1]} : vector<8x1024xf32> to vector<8x256xf32>
    %113 = arith.negf %112 : vector<8x256xf32>
    %114 = math.exp %113 : vector<8x256xf32>
    %cst_33 = arith.constant 1.000000e+00 : f32
    %115 = vector.broadcast %cst_33 : f32 to vector<8x256xf32>
    %116 = arith.addf %115, %114 : vector<8x256xf32>
    %117 = arith.divf %115, %116 : vector<8x256xf32>
    %118 = vector.extract_strided_slice %111 {offsets = [0, 256], sizes = [8, 256], strides = [1, 1]} : vector<8x1024xf32> to vector<8x256xf32>
    %119 = arith.negf %118 : vector<8x256xf32>
    %120 = math.exp %119 : vector<8x256xf32>
    %cst_34 = arith.constant 1.000000e+00 : f32
    %121 = vector.broadcast %cst_34 : f32 to vector<8x256xf32>
    %122 = arith.addf %121, %120 : vector<8x256xf32>
    %123 = arith.divf %121, %122 : vector<8x256xf32>
    %124 = vector.extract_strided_slice %111 {offsets = [0, 512], sizes = [8, 256], strides = [1, 1]} : vector<8x1024xf32> to vector<8x256xf32>
    %125 = math.tanh %124 : vector<8x256xf32>
    %126 = vector.extract_strided_slice %111 {offsets = [0, 768], sizes = [8, 256], strides = [1, 1]} : vector<8x1024xf32> to vector<8x256xf32>
    %127 = arith.negf %126 : vector<8x256xf32>
    %128 = math.exp %127 : vector<8x256xf32>
    %cst_35 = arith.constant 1.000000e+00 : f32
    %129 = vector.broadcast %cst_35 : f32 to vector<8x256xf32>
    %130 = arith.addf %129, %128 : vector<8x256xf32>
    %131 = arith.divf %129, %130 : vector<8x256xf32>
    %132 = arith.mulf %123, %73 : vector<8x256xf32>
    %133 = arith.mulf %117, %125 : vector<8x256xf32>
    %134 = arith.addf %132, %133 : vector<8x256xf32>
    %135 = math.tanh %134 : vector<8x256xf32>
    %136 = arith.mulf %131, %135 : vector<8x256xf32>
    %c2_i32 = arith.constant 2 : i32
    %137 = arith.index_cast %c2_i32 : i32 to index
    %c0_36 = arith.constant 0 : index
    %c0_37 = arith.constant 0 : index
    %138 = vector.load %arg2[%137, %c0_36, %c0_37] : memref<8x8x128xf32, #tpu.memory_space<vmem>>, vector<1x8x128xf32>
    %139 = vector.shape_cast %138 : vector<1x8x128xf32> to vector<8x128xf32>
    %140 = tpu.concatenate %139, %107 in 1 : vector<8x128xf32>, vector<8x256xf32> -> vector<8x384xf32>
    %141 = arith.truncf %140 : vector<8x384xf32> to vector<8x384xbf16>
    %cst_38 = arith.constant dense<0.000000e+00> : vector<8x1024xf32>
    %142 = tpu.matmul %141, %3, %cst_38 {dimension_numbers = #tpu.dot_dimension_numbers<[1], [0], [0], [1], [0, 0, 1, 1], [], []>} : vector<8x384xbf16>, vector<384x1024xbf16>, vector<8x1024xf32> -> vector<8x1024xf32>
    %143 = arith.addf %142, %7 : vector<8x1024xf32>
    %144 = vector.extract_strided_slice %143 {offsets = [0, 0], sizes = [8, 256], strides = [1, 1]} : vector<8x1024xf32> to vector<8x256xf32>
    %145 = arith.negf %144 : vector<8x256xf32>
    %146 = math.exp %145 : vector<8x256xf32>
    %cst_39 = arith.constant 1.000000e+00 : f32
    %147 = vector.broadcast %cst_39 : f32 to vector<8x256xf32>
    %148 = arith.addf %147, %146 : vector<8x256xf32>
    %149 = arith.divf %147, %148 : vector<8x256xf32>
    %150 = vector.extract_strided_slice %143 {offsets = [0, 256], sizes = [8, 256], strides = [1, 1]} : vector<8x1024xf32> to vector<8x256xf32>
    %151 = arith.negf %150 : vector<8x256xf32>
    %152 = math.exp %151 : vector<8x256xf32>
    %cst_40 = arith.constant 1.000000e+00 : f32
    %153 = vector.broadcast %cst_40 : f32 to vector<8x256xf32>
    %154 = arith.addf %153, %152 : vector<8x256xf32>
    %155 = arith.divf %153, %154 : vector<8x256xf32>
    %156 = vector.extract_strided_slice %143 {offsets = [0, 512], sizes = [8, 256], strides = [1, 1]} : vector<8x1024xf32> to vector<8x256xf32>
    %157 = math.tanh %156 : vector<8x256xf32>
    %158 = vector.extract_strided_slice %143 {offsets = [0, 768], sizes = [8, 256], strides = [1, 1]} : vector<8x1024xf32> to vector<8x256xf32>
    %159 = arith.negf %158 : vector<8x256xf32>
    %160 = math.exp %159 : vector<8x256xf32>
    %cst_41 = arith.constant 1.000000e+00 : f32
    %161 = vector.broadcast %cst_41 : f32 to vector<8x256xf32>
    %162 = arith.addf %161, %160 : vector<8x256xf32>
    %163 = arith.divf %161, %162 : vector<8x256xf32>
    %164 = arith.mulf %155, %105 : vector<8x256xf32>
    %165 = arith.mulf %149, %157 : vector<8x256xf32>
    %166 = arith.addf %164, %165 : vector<8x256xf32>
    %167 = math.tanh %166 : vector<8x256xf32>
    %168 = arith.mulf %163, %167 : vector<8x256xf32>
    %169 = tpu.concatenate %168, %136 in 1 : vector<8x256xf32>, vector<8x256xf32> -> vector<8x512xf32>
    %170 = arith.truncf %169 : vector<8x512xf32> to vector<8x512xbf16>
    %cst_42 = arith.constant dense<0.000000e+00> : vector<8x1024xf32>
    %171 = tpu.matmul %170, %4, %cst_42 {dimension_numbers = #tpu.dot_dimension_numbers<[1], [0], [0], [1], [0, 0, 1, 1], [], []>} : vector<8x512xbf16>, vector<512x1024xbf16>, vector<8x1024xf32> -> vector<8x1024xf32>
    %172 = arith.addf %171, %10 : vector<8x1024xf32>
    %173 = vector.extract_strided_slice %172 {offsets = [0, 0], sizes = [8, 256], strides = [1, 1]} : vector<8x1024xf32> to vector<8x256xf32>
    %174 = arith.negf %173 : vector<8x256xf32>
    %175 = math.exp %174 : vector<8x256xf32>
    %cst_43 = arith.constant 1.000000e+00 : f32
    %176 = vector.broadcast %cst_43 : f32 to vector<8x256xf32>
    %177 = arith.addf %176, %175 : vector<8x256xf32>
    %178 = arith.divf %176, %177 : vector<8x256xf32>
    %179 = vector.extract_strided_slice %172 {offsets = [0, 256], sizes = [8, 256], strides = [1, 1]} : vector<8x1024xf32> to vector<8x256xf32>
    %180 = arith.negf %179 : vector<8x256xf32>
    %181 = math.exp %180 : vector<8x256xf32>
    %cst_44 = arith.constant 1.000000e+00 : f32
    %182 = vector.broadcast %cst_44 : f32 to vector<8x256xf32>
    %183 = arith.addf %182, %181 : vector<8x256xf32>
    %184 = arith.divf %182, %183 : vector<8x256xf32>
    %185 = vector.extract_strided_slice %172 {offsets = [0, 512], sizes = [8, 256], strides = [1, 1]} : vector<8x1024xf32> to vector<8x256xf32>
    %186 = math.tanh %185 : vector<8x256xf32>
    %187 = vector.extract_strided_slice %172 {offsets = [0, 768], sizes = [8, 256], strides = [1, 1]} : vector<8x1024xf32> to vector<8x256xf32>
    %188 = arith.negf %187 : vector<8x256xf32>
    %189 = math.exp %188 : vector<8x256xf32>
    %cst_45 = arith.constant 1.000000e+00 : f32
    %190 = vector.broadcast %cst_45 : f32 to vector<8x256xf32>
    %191 = arith.addf %190, %189 : vector<8x256xf32>
    %192 = arith.divf %190, %191 : vector<8x256xf32>
    %193 = arith.mulf %184, %134 : vector<8x256xf32>
    %194 = arith.mulf %178, %186 : vector<8x256xf32>
    %195 = arith.addf %193, %194 : vector<8x256xf32>
    %196 = math.tanh %195 : vector<8x256xf32>
    %197 = arith.mulf %192, %196 : vector<8x256xf32>
    %c3_i32 = arith.constant 3 : i32
    %198 = arith.index_cast %c3_i32 : i32 to index
    %c0_46 = arith.constant 0 : index
    %c0_47 = arith.constant 0 : index
    %199 = vector.load %arg2[%198, %c0_46, %c0_47] : memref<8x8x128xf32, #tpu.memory_space<vmem>>, vector<1x8x128xf32>
    %200 = vector.shape_cast %199 : vector<1x8x128xf32> to vector<8x128xf32>
    %201 = tpu.concatenate %200, %168 in 1 : vector<8x128xf32>, vector<8x256xf32> -> vector<8x384xf32>
    %202 = arith.truncf %201 : vector<8x384xf32> to vector<8x384xbf16>
    %cst_48 = arith.constant dense<0.000000e+00> : vector<8x1024xf32>
    %203 = tpu.matmul %202, %3, %cst_48 {dimension_numbers = #tpu.dot_dimension_numbers<[1], [0], [0], [1], [0, 0, 1, 1], [], []>} : vector<8x384xbf16>, vector<384x1024xbf16>, vector<8x1024xf32> -> vector<8x1024xf32>
    %204 = arith.addf %203, %7 : vector<8x1024xf32>
    %205 = vector.extract_strided_slice %204 {offsets = [0, 0], sizes = [8, 256], strides = [1, 1]} : vector<8x1024xf32> to vector<8x256xf32>
    %206 = arith.negf %205 : vector<8x256xf32>
    %207 = math.exp %206 : vector<8x256xf32>
    %cst_49 = arith.constant 1.000000e+00 : f32
    %208 = vector.broadcast %cst_49 : f32 to vector<8x256xf32>
    %209 = arith.addf %208, %207 : vector<8x256xf32>
    %210 = arith.divf %208, %209 : vector<8x256xf32>
    %211 = vector.extract_strided_slice %204 {offsets = [0, 256], sizes = [8, 256], strides = [1, 1]} : vector<8x1024xf32> to vector<8x256xf32>
    %212 = arith.negf %211 : vector<8x256xf32>
    %213 = math.exp %212 : vector<8x256xf32>
    %cst_50 = arith.constant 1.000000e+00 : f32
    %214 = vector.broadcast %cst_50 : f32 to vector<8x256xf32>
    %215 = arith.addf %214, %213 : vector<8x256xf32>
    %216 = arith.divf %214, %215 : vector<8x256xf32>
    %217 = vector.extract_strided_slice %204 {offsets = [0, 512], sizes = [8, 256], strides = [1, 1]} : vector<8x1024xf32> to vector<8x256xf32>
    %218 = math.tanh %217 : vector<8x256xf32>
    %219 = vector.extract_strided_slice %204 {offsets = [0, 768], sizes = [8, 256], strides = [1, 1]} : vector<8x1024xf32> to vector<8x256xf32>
    %220 = arith.negf %219 : vector<8x256xf32>
    %221 = math.exp %220 : vector<8x256xf32>
    %cst_51 = arith.constant 1.000000e+00 : f32
    %222 = vector.broadcast %cst_51 : f32 to vector<8x256xf32>
    %223 = arith.addf %222, %221 : vector<8x256xf32>
    %224 = arith.divf %222, %223 : vector<8x256xf32>
    %225 = arith.mulf %216, %166 : vector<8x256xf32>
    %226 = arith.mulf %210, %218 : vector<8x256xf32>
    %227 = arith.addf %225, %226 : vector<8x256xf32>
    %228 = math.tanh %227 : vector<8x256xf32>
    %229 = arith.mulf %224, %228 : vector<8x256xf32>
    %230 = tpu.concatenate %229, %197 in 1 : vector<8x256xf32>, vector<8x256xf32> -> vector<8x512xf32>
    %231 = arith.truncf %230 : vector<8x512xf32> to vector<8x512xbf16>
    %cst_52 = arith.constant dense<0.000000e+00> : vector<8x1024xf32>
    %232 = tpu.matmul %231, %4, %cst_52 {dimension_numbers = #tpu.dot_dimension_numbers<[1], [0], [0], [1], [0, 0, 1, 1], [], []>} : vector<8x512xbf16>, vector<512x1024xbf16>, vector<8x1024xf32> -> vector<8x1024xf32>
    %233 = arith.addf %232, %10 : vector<8x1024xf32>
    %234 = vector.extract_strided_slice %233 {offsets = [0, 0], sizes = [8, 256], strides = [1, 1]} : vector<8x1024xf32> to vector<8x256xf32>
    %235 = arith.negf %234 : vector<8x256xf32>
    %236 = math.exp %235 : vector<8x256xf32>
    %cst_53 = arith.constant 1.000000e+00 : f32
    %237 = vector.broadcast %cst_53 : f32 to vector<8x256xf32>
    %238 = arith.addf %237, %236 : vector<8x256xf32>
    %239 = arith.divf %237, %238 : vector<8x256xf32>
    %240 = vector.extract_strided_slice %233 {offsets = [0, 256], sizes = [8, 256], strides = [1, 1]} : vector<8x1024xf32> to vector<8x256xf32>
    %241 = arith.negf %240 : vector<8x256xf32>
    %242 = math.exp %241 : vector<8x256xf32>
    %cst_54 = arith.constant 1.000000e+00 : f32
    %243 = vector.broadcast %cst_54 : f32 to vector<8x256xf32>
    %244 = arith.addf %243, %242 : vector<8x256xf32>
    %245 = arith.divf %243, %244 : vector<8x256xf32>
    %246 = vector.extract_strided_slice %233 {offsets = [0, 512], sizes = [8, 256], strides = [1, 1]} : vector<8x1024xf32> to vector<8x256xf32>
    %247 = math.tanh %246 : vector<8x256xf32>
    %248 = vector.extract_strided_slice %233 {offsets = [0, 768], sizes = [8, 256], strides = [1, 1]} : vector<8x1024xf32> to vector<8x256xf32>
    %249 = arith.negf %248 : vector<8x256xf32>
    %250 = math.exp %249 : vector<8x256xf32>
    %cst_55 = arith.constant 1.000000e+00 : f32
    %251 = vector.broadcast %cst_55 : f32 to vector<8x256xf32>
    %252 = arith.addf %251, %250 : vector<8x256xf32>
    %253 = arith.divf %251, %252 : vector<8x256xf32>
    %254 = arith.mulf %245, %195 : vector<8x256xf32>
    %255 = arith.mulf %239, %247 : vector<8x256xf32>
    %256 = arith.addf %254, %255 : vector<8x256xf32>
    %257 = math.tanh %256 : vector<8x256xf32>
    %258 = arith.mulf %253, %257 : vector<8x256xf32>
    %c4_i32 = arith.constant 4 : i32
    %259 = arith.index_cast %c4_i32 : i32 to index
    %c0_56 = arith.constant 0 : index
    %c0_57 = arith.constant 0 : index
    %260 = vector.load %arg2[%259, %c0_56, %c0_57] : memref<8x8x128xf32, #tpu.memory_space<vmem>>, vector<1x8x128xf32>
    %261 = vector.shape_cast %260 : vector<1x8x128xf32> to vector<8x128xf32>
    %262 = tpu.concatenate %261, %229 in 1 : vector<8x128xf32>, vector<8x256xf32> -> vector<8x384xf32>
    %263 = arith.truncf %262 : vector<8x384xf32> to vector<8x384xbf16>
    %cst_58 = arith.constant dense<0.000000e+00> : vector<8x1024xf32>
    %264 = tpu.matmul %263, %3, %cst_58 {dimension_numbers = #tpu.dot_dimension_numbers<[1], [0], [0], [1], [0, 0, 1, 1], [], []>} : vector<8x384xbf16>, vector<384x1024xbf16>, vector<8x1024xf32> -> vector<8x1024xf32>
    %265 = arith.addf %264, %7 : vector<8x1024xf32>
    %266 = vector.extract_strided_slice %265 {offsets = [0, 0], sizes = [8, 256], strides = [1, 1]} : vector<8x1024xf32> to vector<8x256xf32>
    %267 = arith.negf %266 : vector<8x256xf32>
    %268 = math.exp %267 : vector<8x256xf32>
    %cst_59 = arith.constant 1.000000e+00 : f32
    %269 = vector.broadcast %cst_59 : f32 to vector<8x256xf32>
    %270 = arith.addf %269, %268 : vector<8x256xf32>
    %271 = arith.divf %269, %270 : vector<8x256xf32>
    %272 = vector.extract_strided_slice %265 {offsets = [0, 256], sizes = [8, 256], strides = [1, 1]} : vector<8x1024xf32> to vector<8x256xf32>
    %273 = arith.negf %272 : vector<8x256xf32>
    %274 = math.exp %273 : vector<8x256xf32>
    %cst_60 = arith.constant 1.000000e+00 : f32
    %275 = vector.broadcast %cst_60 : f32 to vector<8x256xf32>
    %276 = arith.addf %275, %274 : vector<8x256xf32>
    %277 = arith.divf %275, %276 : vector<8x256xf32>
    %278 = vector.extract_strided_slice %265 {offsets = [0, 512], sizes = [8, 256], strides = [1, 1]} : vector<8x1024xf32> to vector<8x256xf32>
    %279 = math.tanh %278 : vector<8x256xf32>
    %280 = vector.extract_strided_slice %265 {offsets = [0, 768], sizes = [8, 256], strides = [1, 1]} : vector<8x1024xf32> to vector<8x256xf32>
    %281 = arith.negf %280 : vector<8x256xf32>
    %282 = math.exp %281 : vector<8x256xf32>
    %cst_61 = arith.constant 1.000000e+00 : f32
    %283 = vector.broadcast %cst_61 : f32 to vector<8x256xf32>
    %284 = arith.addf %283, %282 : vector<8x256xf32>
    %285 = arith.divf %283, %284 : vector<8x256xf32>
    %286 = arith.mulf %277, %227 : vector<8x256xf32>
    %287 = arith.mulf %271, %279 : vector<8x256xf32>
    %288 = arith.addf %286, %287 : vector<8x256xf32>
    %289 = math.tanh %288 : vector<8x256xf32>
    %290 = arith.mulf %285, %289 : vector<8x256xf32>
    %291 = tpu.concatenate %290, %258 in 1 : vector<8x256xf32>, vector<8x256xf32> -> vector<8x512xf32>
    %292 = arith.truncf %291 : vector<8x512xf32> to vector<8x512xbf16>
    %cst_62 = arith.constant dense<0.000000e+00> : vector<8x1024xf32>
    %293 = tpu.matmul %292, %4, %cst_62 {dimension_numbers = #tpu.dot_dimension_numbers<[1], [0], [0], [1], [0, 0, 1, 1], [], []>} : vector<8x512xbf16>, vector<512x1024xbf16>, vector<8x1024xf32> -> vector<8x1024xf32>
    %294 = arith.addf %293, %10 : vector<8x1024xf32>
    %295 = vector.extract_strided_slice %294 {offsets = [0, 0], sizes = [8, 256], strides = [1, 1]} : vector<8x1024xf32> to vector<8x256xf32>
    %296 = arith.negf %295 : vector<8x256xf32>
    %297 = math.exp %296 : vector<8x256xf32>
    %cst_63 = arith.constant 1.000000e+00 : f32
    %298 = vector.broadcast %cst_63 : f32 to vector<8x256xf32>
    %299 = arith.addf %298, %297 : vector<8x256xf32>
    %300 = arith.divf %298, %299 : vector<8x256xf32>
    %301 = vector.extract_strided_slice %294 {offsets = [0, 256], sizes = [8, 256], strides = [1, 1]} : vector<8x1024xf32> to vector<8x256xf32>
    %302 = arith.negf %301 : vector<8x256xf32>
    %303 = math.exp %302 : vector<8x256xf32>
    %cst_64 = arith.constant 1.000000e+00 : f32
    %304 = vector.broadcast %cst_64 : f32 to vector<8x256xf32>
    %305 = arith.addf %304, %303 : vector<8x256xf32>
    %306 = arith.divf %304, %305 : vector<8x256xf32>
    %307 = vector.extract_strided_slice %294 {offsets = [0, 512], sizes = [8, 256], strides = [1, 1]} : vector<8x1024xf32> to vector<8x256xf32>
    %308 = math.tanh %307 : vector<8x256xf32>
    %309 = vector.extract_strided_slice %294 {offsets = [0, 768], sizes = [8, 256], strides = [1, 1]} : vector<8x1024xf32> to vector<8x256xf32>
    %310 = arith.negf %309 : vector<8x256xf32>
    %311 = math.exp %310 : vector<8x256xf32>
    %cst_65 = arith.constant 1.000000e+00 : f32
    %312 = vector.broadcast %cst_65 : f32 to vector<8x256xf32>
    %313 = arith.addf %312, %311 : vector<8x256xf32>
    %314 = arith.divf %312, %313 : vector<8x256xf32>
    %315 = arith.mulf %306, %256 : vector<8x256xf32>
    %316 = arith.mulf %300, %308 : vector<8x256xf32>
    %317 = arith.addf %315, %316 : vector<8x256xf32>
    %318 = math.tanh %317 : vector<8x256xf32>
    %319 = arith.mulf %314, %318 : vector<8x256xf32>
    %c5_i32 = arith.constant 5 : i32
    %320 = arith.index_cast %c5_i32 : i32 to index
    %c0_66 = arith.constant 0 : index
    %c0_67 = arith.constant 0 : index
    %321 = vector.load %arg2[%320, %c0_66, %c0_67] : memref<8x8x128xf32, #tpu.memory_space<vmem>>, vector<1x8x128xf32>
    %322 = vector.shape_cast %321 : vector<1x8x128xf32> to vector<8x128xf32>
    %323 = tpu.concatenate %322, %290 in 1 : vector<8x128xf32>, vector<8x256xf32> -> vector<8x384xf32>
    %324 = arith.truncf %323 : vector<8x384xf32> to vector<8x384xbf16>
    %cst_68 = arith.constant dense<0.000000e+00> : vector<8x1024xf32>
    %325 = tpu.matmul %324, %3, %cst_68 {dimension_numbers = #tpu.dot_dimension_numbers<[1], [0], [0], [1], [0, 0, 1, 1], [], []>} : vector<8x384xbf16>, vector<384x1024xbf16>, vector<8x1024xf32> -> vector<8x1024xf32>
    %326 = arith.addf %325, %7 : vector<8x1024xf32>
    %327 = vector.extract_strided_slice %326 {offsets = [0, 0], sizes = [8, 256], strides = [1, 1]} : vector<8x1024xf32> to vector<8x256xf32>
    %328 = arith.negf %327 : vector<8x256xf32>
    %329 = math.exp %328 : vector<8x256xf32>
    %cst_69 = arith.constant 1.000000e+00 : f32
    %330 = vector.broadcast %cst_69 : f32 to vector<8x256xf32>
    %331 = arith.addf %330, %329 : vector<8x256xf32>
    %332 = arith.divf %330, %331 : vector<8x256xf32>
    %333 = vector.extract_strided_slice %326 {offsets = [0, 256], sizes = [8, 256], strides = [1, 1]} : vector<8x1024xf32> to vector<8x256xf32>
    %334 = arith.negf %333 : vector<8x256xf32>
    %335 = math.exp %334 : vector<8x256xf32>
    %cst_70 = arith.constant 1.000000e+00 : f32
    %336 = vector.broadcast %cst_70 : f32 to vector<8x256xf32>
    %337 = arith.addf %336, %335 : vector<8x256xf32>
    %338 = arith.divf %336, %337 : vector<8x256xf32>
    %339 = vector.extract_strided_slice %326 {offsets = [0, 512], sizes = [8, 256], strides = [1, 1]} : vector<8x1024xf32> to vector<8x256xf32>
    %340 = math.tanh %339 : vector<8x256xf32>
    %341 = vector.extract_strided_slice %326 {offsets = [0, 768], sizes = [8, 256], strides = [1, 1]} : vector<8x1024xf32> to vector<8x256xf32>
    %342 = arith.negf %341 : vector<8x256xf32>
    %343 = math.exp %342 : vector<8x256xf32>
    %cst_71 = arith.constant 1.000000e+00 : f32
    %344 = vector.broadcast %cst_71 : f32 to vector<8x256xf32>
    %345 = arith.addf %344, %343 : vector<8x256xf32>
    %346 = arith.divf %344, %345 : vector<8x256xf32>
    %347 = arith.mulf %338, %288 : vector<8x256xf32>
    %348 = arith.mulf %332, %340 : vector<8x256xf32>
    %349 = arith.addf %347, %348 : vector<8x256xf32>
    %350 = math.tanh %349 : vector<8x256xf32>
    %351 = arith.mulf %346, %350 : vector<8x256xf32>
    %352 = tpu.concatenate %351, %319 in 1 : vector<8x256xf32>, vector<8x256xf32> -> vector<8x512xf32>
    %353 = arith.truncf %352 : vector<8x512xf32> to vector<8x512xbf16>
    %cst_72 = arith.constant dense<0.000000e+00> : vector<8x1024xf32>
    %354 = tpu.matmul %353, %4, %cst_72 {dimension_numbers = #tpu.dot_dimension_numbers<[1], [0], [0], [1], [0, 0, 1, 1], [], []>} : vector<8x512xbf16>, vector<512x1024xbf16>, vector<8x1024xf32> -> vector<8x1024xf32>
    %355 = arith.addf %354, %10 : vector<8x1024xf32>
    %356 = vector.extract_strided_slice %355 {offsets = [0, 0], sizes = [8, 256], strides = [1, 1]} : vector<8x1024xf32> to vector<8x256xf32>
    %357 = arith.negf %356 : vector<8x256xf32>
    %358 = math.exp %357 : vector<8x256xf32>
    %cst_73 = arith.constant 1.000000e+00 : f32
    %359 = vector.broadcast %cst_73 : f32 to vector<8x256xf32>
    %360 = arith.addf %359, %358 : vector<8x256xf32>
    %361 = arith.divf %359, %360 : vector<8x256xf32>
    %362 = vector.extract_strided_slice %355 {offsets = [0, 256], sizes = [8, 256], strides = [1, 1]} : vector<8x1024xf32> to vector<8x256xf32>
    %363 = arith.negf %362 : vector<8x256xf32>
    %364 = math.exp %363 : vector<8x256xf32>
    %cst_74 = arith.constant 1.000000e+00 : f32
    %365 = vector.broadcast %cst_74 : f32 to vector<8x256xf32>
    %366 = arith.addf %365, %364 : vector<8x256xf32>
    %367 = arith.divf %365, %366 : vector<8x256xf32>
    %368 = vector.extract_strided_slice %355 {offsets = [0, 512], sizes = [8, 256], strides = [1, 1]} : vector<8x1024xf32> to vector<8x256xf32>
    %369 = math.tanh %368 : vector<8x256xf32>
    %370 = vector.extract_strided_slice %355 {offsets = [0, 768], sizes = [8, 256], strides = [1, 1]} : vector<8x1024xf32> to vector<8x256xf32>
    %371 = arith.negf %370 : vector<8x256xf32>
    %372 = math.exp %371 : vector<8x256xf32>
    %cst_75 = arith.constant 1.000000e+00 : f32
    %373 = vector.broadcast %cst_75 : f32 to vector<8x256xf32>
    %374 = arith.addf %373, %372 : vector<8x256xf32>
    %375 = arith.divf %373, %374 : vector<8x256xf32>
    %376 = arith.mulf %367, %317 : vector<8x256xf32>
    %377 = arith.mulf %361, %369 : vector<8x256xf32>
    %378 = arith.addf %376, %377 : vector<8x256xf32>
    %379 = math.tanh %378 : vector<8x256xf32>
    %380 = arith.mulf %375, %379 : vector<8x256xf32>
    %c6_i32 = arith.constant 6 : i32
    %381 = arith.index_cast %c6_i32 : i32 to index
    %c0_76 = arith.constant 0 : index
    %c0_77 = arith.constant 0 : index
    %382 = vector.load %arg2[%381, %c0_76, %c0_77] : memref<8x8x128xf32, #tpu.memory_space<vmem>>, vector<1x8x128xf32>
    %383 = vector.shape_cast %382 : vector<1x8x128xf32> to vector<8x128xf32>
    %384 = tpu.concatenate %383, %351 in 1 : vector<8x128xf32>, vector<8x256xf32> -> vector<8x384xf32>
    %385 = arith.truncf %384 : vector<8x384xf32> to vector<8x384xbf16>
    %cst_78 = arith.constant dense<0.000000e+00> : vector<8x1024xf32>
    %386 = tpu.matmul %385, %3, %cst_78 {dimension_numbers = #tpu.dot_dimension_numbers<[1], [0], [0], [1], [0, 0, 1, 1], [], []>} : vector<8x384xbf16>, vector<384x1024xbf16>, vector<8x1024xf32> -> vector<8x1024xf32>
    %387 = arith.addf %386, %7 : vector<8x1024xf32>
    %388 = vector.extract_strided_slice %387 {offsets = [0, 0], sizes = [8, 256], strides = [1, 1]} : vector<8x1024xf32> to vector<8x256xf32>
    %389 = arith.negf %388 : vector<8x256xf32>
    %390 = math.exp %389 : vector<8x256xf32>
    %cst_79 = arith.constant 1.000000e+00 : f32
    %391 = vector.broadcast %cst_79 : f32 to vector<8x256xf32>
    %392 = arith.addf %391, %390 : vector<8x256xf32>
    %393 = arith.divf %391, %392 : vector<8x256xf32>
    %394 = vector.extract_strided_slice %387 {offsets = [0, 256], sizes = [8, 256], strides = [1, 1]} : vector<8x1024xf32> to vector<8x256xf32>
    %395 = arith.negf %394 : vector<8x256xf32>
    %396 = math.exp %395 : vector<8x256xf32>
    %cst_80 = arith.constant 1.000000e+00 : f32
    %397 = vector.broadcast %cst_80 : f32 to vector<8x256xf32>
    %398 = arith.addf %397, %396 : vector<8x256xf32>
    %399 = arith.divf %397, %398 : vector<8x256xf32>
    %400 = vector.extract_strided_slice %387 {offsets = [0, 512], sizes = [8, 256], strides = [1, 1]} : vector<8x1024xf32> to vector<8x256xf32>
    %401 = math.tanh %400 : vector<8x256xf32>
    %402 = vector.extract_strided_slice %387 {offsets = [0, 768], sizes = [8, 256], strides = [1, 1]} : vector<8x1024xf32> to vector<8x256xf32>
    %403 = arith.negf %402 : vector<8x256xf32>
    %404 = math.exp %403 : vector<8x256xf32>
    %cst_81 = arith.constant 1.000000e+00 : f32
    %405 = vector.broadcast %cst_81 : f32 to vector<8x256xf32>
    %406 = arith.addf %405, %404 : vector<8x256xf32>
    %407 = arith.divf %405, %406 : vector<8x256xf32>
    %408 = arith.mulf %399, %349 : vector<8x256xf32>
    %409 = arith.mulf %393, %401 : vector<8x256xf32>
    %410 = arith.addf %408, %409 : vector<8x256xf32>
    %411 = math.tanh %410 : vector<8x256xf32>
    %412 = arith.mulf %407, %411 : vector<8x256xf32>
    %413 = tpu.concatenate %412, %380 in 1 : vector<8x256xf32>, vector<8x256xf32> -> vector<8x512xf32>
    %414 = arith.truncf %413 : vector<8x512xf32> to vector<8x512xbf16>
    %cst_82 = arith.constant dense<0.000000e+00> : vector<8x1024xf32>
    %415 = tpu.matmul %414, %4, %cst_82 {dimension_numbers = #tpu.dot_dimension_numbers<[1], [0], [0], [1], [0, 0, 1, 1], [], []>} : vector<8x512xbf16>, vector<512x1024xbf16>, vector<8x1024xf32> -> vector<8x1024xf32>
    %416 = arith.addf %415, %10 : vector<8x1024xf32>
    %417 = vector.extract_strided_slice %416 {offsets = [0, 0], sizes = [8, 256], strides = [1, 1]} : vector<8x1024xf32> to vector<8x256xf32>
    %418 = arith.negf %417 : vector<8x256xf32>
    %419 = math.exp %418 : vector<8x256xf32>
    %cst_83 = arith.constant 1.000000e+00 : f32
    %420 = vector.broadcast %cst_83 : f32 to vector<8x256xf32>
    %421 = arith.addf %420, %419 : vector<8x256xf32>
    %422 = arith.divf %420, %421 : vector<8x256xf32>
    %423 = vector.extract_strided_slice %416 {offsets = [0, 256], sizes = [8, 256], strides = [1, 1]} : vector<8x1024xf32> to vector<8x256xf32>
    %424 = arith.negf %423 : vector<8x256xf32>
    %425 = math.exp %424 : vector<8x256xf32>
    %cst_84 = arith.constant 1.000000e+00 : f32
    %426 = vector.broadcast %cst_84 : f32 to vector<8x256xf32>
    %427 = arith.addf %426, %425 : vector<8x256xf32>
    %428 = arith.divf %426, %427 : vector<8x256xf32>
    %429 = vector.extract_strided_slice %416 {offsets = [0, 512], sizes = [8, 256], strides = [1, 1]} : vector<8x1024xf32> to vector<8x256xf32>
    %430 = math.tanh %429 : vector<8x256xf32>
    %431 = vector.extract_strided_slice %416 {offsets = [0, 768], sizes = [8, 256], strides = [1, 1]} : vector<8x1024xf32> to vector<8x256xf32>
    %432 = arith.negf %431 : vector<8x256xf32>
    %433 = math.exp %432 : vector<8x256xf32>
    %cst_85 = arith.constant 1.000000e+00 : f32
    %434 = vector.broadcast %cst_85 : f32 to vector<8x256xf32>
    %435 = arith.addf %434, %433 : vector<8x256xf32>
    %436 = arith.divf %434, %435 : vector<8x256xf32>
    %437 = arith.mulf %428, %378 : vector<8x256xf32>
    %438 = arith.mulf %422, %430 : vector<8x256xf32>
    %439 = arith.addf %437, %438 : vector<8x256xf32>
    %440 = math.tanh %439 : vector<8x256xf32>
    %441 = arith.mulf %436, %440 : vector<8x256xf32>
    %c7_i32 = arith.constant 7 : i32
    %442 = arith.index_cast %c7_i32 : i32 to index
    %c0_86 = arith.constant 0 : index
    %c0_87 = arith.constant 0 : index
    %443 = vector.load %arg2[%442, %c0_86, %c0_87] : memref<8x8x128xf32, #tpu.memory_space<vmem>>, vector<1x8x128xf32>
    %444 = vector.shape_cast %443 : vector<1x8x128xf32> to vector<8x128xf32>
    %445 = tpu.concatenate %444, %412 in 1 : vector<8x128xf32>, vector<8x256xf32> -> vector<8x384xf32>
    %446 = arith.truncf %445 : vector<8x384xf32> to vector<8x384xbf16>
    %cst_88 = arith.constant dense<0.000000e+00> : vector<8x1024xf32>
    %447 = tpu.matmul %446, %3, %cst_88 {dimension_numbers = #tpu.dot_dimension_numbers<[1], [0], [0], [1], [0, 0, 1, 1], [], []>} : vector<8x384xbf16>, vector<384x1024xbf16>, vector<8x1024xf32> -> vector<8x1024xf32>
    %448 = arith.addf %447, %7 : vector<8x1024xf32>
    %449 = vector.extract_strided_slice %448 {offsets = [0, 0], sizes = [8, 256], strides = [1, 1]} : vector<8x1024xf32> to vector<8x256xf32>
    %450 = arith.negf %449 : vector<8x256xf32>
    %451 = math.exp %450 : vector<8x256xf32>
    %cst_89 = arith.constant 1.000000e+00 : f32
    %452 = vector.broadcast %cst_89 : f32 to vector<8x256xf32>
    %453 = arith.addf %452, %451 : vector<8x256xf32>
    %454 = arith.divf %452, %453 : vector<8x256xf32>
    %455 = vector.extract_strided_slice %448 {offsets = [0, 256], sizes = [8, 256], strides = [1, 1]} : vector<8x1024xf32> to vector<8x256xf32>
    %456 = arith.negf %455 : vector<8x256xf32>
    %457 = math.exp %456 : vector<8x256xf32>
    %cst_90 = arith.constant 1.000000e+00 : f32
    %458 = vector.broadcast %cst_90 : f32 to vector<8x256xf32>
    %459 = arith.addf %458, %457 : vector<8x256xf32>
    %460 = arith.divf %458, %459 : vector<8x256xf32>
    %461 = vector.extract_strided_slice %448 {offsets = [0, 512], sizes = [8, 256], strides = [1, 1]} : vector<8x1024xf32> to vector<8x256xf32>
    %462 = math.tanh %461 : vector<8x256xf32>
    %463 = vector.extract_strided_slice %448 {offsets = [0, 768], sizes = [8, 256], strides = [1, 1]} : vector<8x1024xf32> to vector<8x256xf32>
    %464 = arith.negf %463 : vector<8x256xf32>
    %465 = math.exp %464 : vector<8x256xf32>
    %cst_91 = arith.constant 1.000000e+00 : f32
    %466 = vector.broadcast %cst_91 : f32 to vector<8x256xf32>
    %467 = arith.addf %466, %465 : vector<8x256xf32>
    %468 = arith.divf %466, %467 : vector<8x256xf32>
    %469 = arith.mulf %460, %410 : vector<8x256xf32>
    %470 = arith.mulf %454, %462 : vector<8x256xf32>
    %471 = arith.addf %469, %470 : vector<8x256xf32>
    %472 = math.tanh %471 : vector<8x256xf32>
    %473 = arith.mulf %468, %472 : vector<8x256xf32>
    %474 = tpu.concatenate %473, %441 in 1 : vector<8x256xf32>, vector<8x256xf32> -> vector<8x512xf32>
    %475 = arith.truncf %474 : vector<8x512xf32> to vector<8x512xbf16>
    %cst_92 = arith.constant dense<0.000000e+00> : vector<8x1024xf32>
    %476 = tpu.matmul %475, %4, %cst_92 {dimension_numbers = #tpu.dot_dimension_numbers<[1], [0], [0], [1], [0, 0, 1, 1], [], []>} : vector<8x512xbf16>, vector<512x1024xbf16>, vector<8x1024xf32> -> vector<8x1024xf32>
    %477 = arith.addf %476, %10 : vector<8x1024xf32>
    %478 = vector.extract_strided_slice %477 {offsets = [0, 0], sizes = [8, 256], strides = [1, 1]} : vector<8x1024xf32> to vector<8x256xf32>
    %479 = arith.negf %478 : vector<8x256xf32>
    %480 = math.exp %479 : vector<8x256xf32>
    %cst_93 = arith.constant 1.000000e+00 : f32
    %481 = vector.broadcast %cst_93 : f32 to vector<8x256xf32>
    %482 = arith.addf %481, %480 : vector<8x256xf32>
    %483 = arith.divf %481, %482 : vector<8x256xf32>
    %484 = vector.extract_strided_slice %477 {offsets = [0, 256], sizes = [8, 256], strides = [1, 1]} : vector<8x1024xf32> to vector<8x256xf32>
    %485 = arith.negf %484 : vector<8x256xf32>
    %486 = math.exp %485 : vector<8x256xf32>
    %cst_94 = arith.constant 1.000000e+00 : f32
    %487 = vector.broadcast %cst_94 : f32 to vector<8x256xf32>
    %488 = arith.addf %487, %486 : vector<8x256xf32>
    %489 = arith.divf %487, %488 : vector<8x256xf32>
    %490 = vector.extract_strided_slice %477 {offsets = [0, 512], sizes = [8, 256], strides = [1, 1]} : vector<8x1024xf32> to vector<8x256xf32>
    %491 = math.tanh %490 : vector<8x256xf32>
    %492 = vector.extract_strided_slice %477 {offsets = [0, 768], sizes = [8, 256], strides = [1, 1]} : vector<8x1024xf32> to vector<8x256xf32>
    %493 = arith.negf %492 : vector<8x256xf32>
    %494 = math.exp %493 : vector<8x256xf32>
    %cst_95 = arith.constant 1.000000e+00 : f32
    %495 = vector.broadcast %cst_95 : f32 to vector<8x256xf32>
    %496 = arith.addf %495, %494 : vector<8x256xf32>
    %497 = arith.divf %495, %496 : vector<8x256xf32>
    %498 = arith.mulf %489, %439 : vector<8x256xf32>
    %499 = arith.mulf %483, %491 : vector<8x256xf32>
    %500 = arith.addf %498, %499 : vector<8x256xf32>
    %501 = math.tanh %500 : vector<8x256xf32>
    %502 = arith.mulf %497, %501 : vector<8x256xf32>
    %c8_i32 = arith.constant 8 : i32
    %c0_96 = arith.constant 0 : index
    %c0_97 = arith.constant 0 : index
    %503 = vector.load %arg12[%c0_96, %c0_97] : memref<8x256xf32, #tpu.memory_space<vmem>>, vector<8x256xf32>
    tpu.vector_store %arg12[%c0_96, %c0_97], %473 {strides = array<i32>} : memref<8x256xf32, #tpu.memory_space<vmem>>, vector<8x256xf32>,
    %c0_98 = arith.constant 0 : index
    %c0_99 = arith.constant 0 : index
    %504 = vector.load %arg13[%c0_98, %c0_99] : memref<8x256xf32, #tpu.memory_space<vmem>>, vector<8x256xf32>
    tpu.vector_store %arg13[%c0_98, %c0_99], %471 {strides = array<i32>} : memref<8x256xf32, #tpu.memory_space<vmem>>, vector<8x256xf32>,
    %c0_100 = arith.constant 0 : index
    %c0_101 = arith.constant 0 : index
    %505 = vector.load %arg14[%c0_100, %c0_101] : memref<8x256xf32, #tpu.memory_space<vmem>>, vector<8x256xf32>
    tpu.vector_store %arg14[%c0_100, %c0_101], %502 {strides = array<i32>} : memref<8x256xf32, #tpu.memory_space<vmem>>, vector<8x256xf32>,
    %c0_102 = arith.constant 0 : index
    %c0_103 = arith.constant 0 : index
    %506 = vector.load %arg15[%c0_102, %c0_103] : memref<8x256xf32, #tpu.memory_space<vmem>>, vector<8x256xf32>
    tpu.vector_store %arg15[%c0_102, %c0_103], %500 {strides = array<i32>} : memref<8x256xf32, #tpu.memory_space<vmem>>, vector<8x256xf32>,
    %c0_i32_104 = arith.constant 0 : i32
    %507 = arith.cmpi eq, %arg1, %c0_i32_104 : i32
    %508 = arith.extui %507 : i1 to i32
    %c0_i32_105 = arith.constant 0 : i32
    %509 = arith.cmpi ne, %508, %c0_i32_105 : i32
    scf.if %509 {
      %510 = arith.truncf %502 : vector<8x256xf32> to vector<8x256xbf16>
      %c0_106 = arith.constant 0 : index
      %c0_107 = arith.constant 0 : index
      %511 = vector.load %arg7[%c0_106, %c0_107] : memref<256x128xbf16, #tpu.memory_space<vmem>>, vector<256x128xbf16>
      %cst_108 = arith.constant dense<0.000000e+00> : vector<8x128xf32>
      %512 = tpu.matmul %510, %511, %cst_108 {dimension_numbers = #tpu.dot_dimension_numbers<[1], [0], [0], [1], [0, 0, 1, 1], [], []>} : vector<8x256xbf16>, vector<256x128xbf16>, vector<8x128xf32> -> vector<8x128xf32>
      %c0_109 = arith.constant 0 : index
      %c0_110 = arith.constant 0 : index
      %513 = vector.load %arg8[%c0_109, %c0_110] : memref<1x128xf32, #tpu.memory_space<vmem>>, vector<1x128xf32>
      %514 = vector.broadcast %513 : vector<1x128xf32> to vector<8x128xf32>
      %515 = arith.addf %512, %514 : vector<8x128xf32>
      %c0_111 = arith.constant 0 : index
      %c0_112 = arith.constant 0 : index
      %516 = vector.load %arg9[%c0_111, %c0_112] : memref<8x128xf32, #tpu.memory_space<vmem>>, vector<8x128xf32>
      tpu.vector_store %arg9[%c0_111, %c0_112], %515 {strides = array<i32>} : memref<8x128xf32, #tpu.memory_space<vmem>>, vector<8x128xf32>,
      %c0_113 = arith.constant 0 : index
      %c0_114 = arith.constant 0 : index
      %c0_115 = arith.constant 0 : index
      %517 = vector.load %arg10[%c0_113, %c0_114, %c0_115] : memref<2x8x256xf32, #tpu.memory_space<vmem>>, vector<1x8x256xf32>
      %518 = vector.shape_cast %517 : vector<1x8x256xf32> to vector<8x256xf32>
      %519 = vector.shape_cast %473 : vector<8x256xf32> to vector<1x8x256xf32>
      tpu.vector_store %arg10[%c0_113, %c0_114, %c0_115], %519 {strides = array<i32>} : memref<2x8x256xf32, #tpu.memory_space<vmem>>, vector<1x8x256xf32>,
      %c1 = arith.constant 1 : index
      %c0_116 = arith.constant 0 : index
      %c0_117 = arith.constant 0 : index
      %520 = vector.load %arg10[%c1, %c0_116, %c0_117] : memref<2x8x256xf32, #tpu.memory_space<vmem>>, vector<1x8x256xf32>
      %521 = vector.shape_cast %520 : vector<1x8x256xf32> to vector<8x256xf32>
      %522 = vector.shape_cast %502 : vector<8x256xf32> to vector<1x8x256xf32>
      tpu.vector_store %arg10[%c1, %c0_116, %c0_117], %522 {strides = array<i32>} : memref<2x8x256xf32, #tpu.memory_space<vmem>>, vector<1x8x256xf32>,
      %c0_118 = arith.constant 0 : index
      %c0_119 = arith.constant 0 : index
      %c0_120 = arith.constant 0 : index
      %523 = vector.load %arg11[%c0_118, %c0_119, %c0_120] : memref<2x8x256xf32, #tpu.memory_space<vmem>>, vector<1x8x256xf32>
      %524 = vector.shape_cast %523 : vector<1x8x256xf32> to vector<8x256xf32>
      %525 = vector.shape_cast %471 : vector<8x256xf32> to vector<1x8x256xf32>
      tpu.vector_store %arg11[%c0_118, %c0_119, %c0_120], %525 {strides = array<i32>} : memref<2x8x256xf32, #tpu.memory_space<vmem>>, vector<1x8x256xf32>,
      %c1_121 = arith.constant 1 : index
      %c0_122 = arith.constant 0 : index
      %c0_123 = arith.constant 0 : index
      %526 = vector.load %arg11[%c1_121, %c0_122, %c0_123] : memref<2x8x256xf32, #tpu.memory_space<vmem>>, vector<1x8x256xf32>
      %527 = vector.shape_cast %526 : vector<1x8x256xf32> to vector<8x256xf32>
      %528 = vector.shape_cast %500 : vector<8x256xf32> to vector<1x8x256xf32>
      tpu.vector_store %arg11[%c1_121, %c0_122, %c0_123], %528 {strides = array<i32>} : memref<2x8x256xf32, #tpu.memory_space<vmem>>, vector<1x8x256xf32>,
    } else {
    }
    return
  }
  func.func @transform_0(%arg0: i32, %arg1: i32) -> (i32, i32, i32) {
    %c0_i32 = arith.constant 0 : i32
    %c0_i32_0 = arith.constant 0 : i32
    return %arg1, %arg0, %c0_i32 : i32, i32, i32
  }
  func.func @transform_1(%arg0: i32, %arg1: i32) -> (i32, i32) {
    %c0_i32 = arith.constant 0 : i32
    %c0_i32_0 = arith.constant 0 : i32
    %c0_i32_1 = arith.constant 0 : i32
    return %c0_i32, %c0_i32_0 : i32, i32
  }
  func.func @transform_2(%arg0: i32, %arg1: i32) -> (i32, i32) {
    %c0_i32 = arith.constant 0 : i32
    %c0_i32_0 = arith.constant 0 : i32
    %c0_i32_1 = arith.constant 0 : i32
    return %c0_i32, %c0_i32_0 : i32, i32
  }
  func.func @transform_3(%arg0: i32, %arg1: i32) -> (i32, i32) {
    %c0_i32 = arith.constant 0 : i32
    %c0_i32_0 = arith.constant 0 : i32
    %c0_i32_1 = arith.constant 0 : i32
    return %c0_i32, %c0_i32_0 : i32, i32
  }
  func.func @transform_4(%arg0: i32, %arg1: i32) -> (i32, i32) {
    %c0_i32 = arith.constant 0 : i32
    %c0_i32_0 = arith.constant 0 : i32
    %c0_i32_1 = arith.constant 0 : i32
    return %c0_i32, %c0_i32_0 : i32, i32
  }
  func.func @transform_5(%arg0: i32, %arg1: i32) -> (i32, i32) {
    %c0_i32 = arith.constant 0 : i32
    %c0_i32_0 = arith.constant 0 : i32
    %c0_i32_1 = arith.constant 0 : i32
    return %c0_i32, %c0_i32_0 : i32, i32
  }
  func.func @transform_6(%arg0: i32, %arg1: i32) -> (i32, i32) {
    %c0_i32 = arith.constant 0 : i32
    %c0_i32_0 = arith.constant 0 : i32
    %c0_i32_1 = arith.constant 0 : i32
    return %c0_i32, %c0_i32_0 : i32, i32
  }
  func.func @transform_7(%arg0: i32, %arg1: i32) -> (i32, i32) {
    %c0_i32 = arith.constant 0 : i32
    %c0_i32_0 = arith.constant 0 : i32
    return %arg0, %c0_i32 : i32, i32
  }
  func.func @transform_8(%arg0: i32, %arg1: i32) -> (i32, i32, i32) {
    %c0_i32 = arith.constant 0 : i32
    %c0_i32_0 = arith.constant 0 : i32
    %c0_i32_1 = arith.constant 0 : i32
    return %c0_i32, %arg0, %c0_i32_0 : i32, i32, i32
  }
  func.func @transform_9(%arg0: i32, %arg1: i32) -> (i32, i32, i32) {
    %c0_i32 = arith.constant 0 : i32
    %c0_i32_0 = arith.constant 0 : i32
    %c0_i32_1 = arith.constant 0 : i32
    return %c0_i32, %arg0, %c0_i32_0 : i32, i32, i32
  }
}

</mosaic_0001>

<llo_original>
// kernel: tpu_custom_call.1
$region0: #{tpu_custom_call.1}
  #allocation0 [shape = 'u32[]', space=smem, size = 0x4, offset = 0x4, fixed_abs, tag = 'smem constant byte address 0x4 - core index']
  #allocation1 [shape = 'u32[144,128]{1,0:T(1,128)}', space=vmem, size = 0x12000, scoped, tag = 'internal scratch']
  #allocation2 [shape = 'f32[8,256]{1,0:T(8,128)}', space=vmem, size = 0x2000, scoped, tag = 'scratch operand']
  #allocation3 [shape = 'f32[8,256]{1,0:T(8,128)}', space=vmem, size = 0x2000, scoped, tag = 'scratch operand']
  #allocation4 [shape = 'f32[8,256]{1,0:T(8,128)}', space=vmem, size = 0x2000, scoped, tag = 'scratch operand']
  #allocation5 [shape = 'f32[8,256]{1,0:T(8,128)}', space=vmem, size = 0x2000, scoped, tag = 'scratch operand']
  %s0 = inlined_call_operand.hbm [shape: f32[8,8,128], index: 0, kind: input, shape index: {}]
  %s1 = inlined_call_operand.hbm [shape: bf16[384,1024], index: 1, kind: input, shape index: {}]
  %s2 = inlined_call_operand.hbm [shape: f32[1,1024], index: 2, kind: input, shape index: {}]
  %s3 = inlined_call_operand.hbm [shape: bf16[512,1024], index: 3, kind: input, shape index: {}]
  %s4 = inlined_call_operand.vmem [shape: f32[1,1024], index: 4, kind: input, shape index: {}]
  %s5 = inlined_call_operand.hbm [shape: bf16[256,128], index: 5, kind: input, shape index: {}]
  %s6 = inlined_call_operand.vmem [shape: f32[1,128], index: 6, kind: input, shape index: {}]
  %s7 = inlined_call_operand.hbm [shape: f32[8,128], index: 7, kind: output, shape index: {0}]
  %s8 = inlined_call_operand.hbm [shape: f32[2,8,256], index: 8, kind: output, shape index: {1}]
  %s9 = inlined_call_operand.hbm [shape: f32[2,8,256], index: 9, kind: output, shape index: {2}]
  %10 = xla_tuple %s7, %s8, %s9
  %s11 = sld [smem:[#allocation0]]
  $region82: #{tpu_custom_call.1} parent=0
    _
  %s13 = ssub.s32 1, %s11
  %s14 = scalar_select 0, %s13, %s11
  $region1: #{tpu_custom_call.1} parent=0
    #allocation6 [shape = 'u8[32768]{0}', space=vmem, size = 0x8000, scoped, tag = 'input window, operand 0, single buffered']
    #allocation7 [shape = 's32[1]{0}', space=sflag, size = 0x4, scoped, tag = 'scoped memory for tpu_custom_call.1']
    #allocation8 [shape = 's32[1]{0}', space=sflag, size = 0x4, scoped, tag = 'scoped memory for tpu_custom_call.1']
    #allocation9 [shape = 'u8[786432]{0}', space=vmem, size = 0xc0000, scoped, tag = 'input window, operand 1, single buffered']
    #allocation10 [shape = 's32[1]{0}', space=sflag, size = 0x4, scoped, tag = 'scoped memory for tpu_custom_call.1']
    #allocation11 [shape = 'u8[4096]{0}', space=vmem, size = 0x1000, scoped, tag = 'input window, operand 2, single buffered']
    #allocation12 [shape = 'u8[1048576]{0}', space=vmem, size = 0x100000, scoped, tag = 'input window, operand 3, single buffered']
    #allocation13 [shape = 's32[1]{0}', space=sflag, size = 0x4, scoped, tag = 'scoped memory for tpu_custom_call.1']
    #allocation14 [shape = 'u8[65536]{0}', space=vmem, size = 0x10000, scoped, tag = 'input window, operand 5, single buffered']
    #allocation15 [shape = 'u8[4096]{0}', space=vmem, size = 0x1000, scoped, tag = 'output window, operand 0, single buffered']
    #allocation16 [shape = 'u8[16384]{0}', space=vmem, size = 0x4000, scoped, tag = 'output window, operand 1, single buffered']
    #allocation17 [shape = 's32[1]{0}', space=sflag, size = 0x4, scoped, tag = 'scoped memory for tpu_custom_call.1']
    #allocation18 [shape = 'u8[16384]{0}', space=vmem, size = 0x4000, scoped, tag = 'output window, operand 2, single buffered']
    %15 = vsyncpa [#allocation7], 0
    %16 = vsyncpa [#allocation10], 0
    %17 = vsyncpa [#allocation13], 0
    %18 = vsyncpa [#allocation8], 0
    %19 = vsyncpa [#allocation17], 0
    // Predicated region
    $region2: #{tpu_custom_call.1} parent=1 // pred_check
      _
    $region3: #{tpu_custom_call.1} parent=1 // pred_check_branch
      %21 = sbr.rel (0) target = $region5
    $region4: #{tpu_custom_call.1} parent=1 // pred_region
      %s23 = ssub.s32 1024, 1024
      %24 = vsyncadd [#allocation7], %s23
      %s25 = sshll.u32 [#allocation6], 4
      %s26 = int_to_ptr.vmem [resolvable:$true] %s25
      %31 = dma.hbm_to_vmem [thread:$0]  %s0, 1024, %s26, [#allocation7], 128, 128, 8
    $region5: #{tpu_custom_call.1} parent=1 // pred_fallthru
      _
    // Predicated region
    $region6: #{tpu_custom_call.1} parent=1 // pred_check
      _
    $region7: #{tpu_custom_call.1} parent=1 // pred_check_branch
      %33 = sbr.rel (0) target = $region9
    $region8: #{tpu_custom_call.1} parent=1 // pred_region
      %s35 = ssub.s32 24576, 24576
      %36 = vsyncadd [#allocation10], %s35
      %s37 = sshll.u32 [#allocation9], 4
      %s38 = int_to_ptr.vmem [resolvable:$true] %s37
      %43 = dma.hbm_to_vmem [thread:$0]  %s1, 24576, %s38, [#allocation10], 512, 512, 32
    $region9: #{tpu_custom_call.1} parent=1 // pred_fallthru
      _
    // Predicated region
    $region10: #{tpu_custom_call.1} parent=1 // pred_check
      _
    $region11: #{tpu_custom_call.1} parent=1 // pred_check_branch
      %45 = sbr.rel (0) target = $region13
    $region12: #{tpu_custom_call.1} parent=1 // pred_region
      %s47 = ssub.s32 128, 128
      %48 = vsyncadd [#allocation10], %s47
      %s50 = sshll.u32 [#allocation11], 4
      %s51 = int_to_ptr.vmem [resolvable:$true] %s50
      %53 = dma.hbm_to_vmem [thread:$0]  %s2, 128, %s51, [#allocation10]
    $region13: #{tpu_custom_call.1} parent=1 // pred_fallthru
      _
    // Predicated region
    $region14: #{tpu_custom_call.1} parent=1 // pred_check
      _
    $region15: #{tpu_custom_call.1} parent=1 // pred_check_branch
      %55 = sbr.rel (0) target = $region17
    $region16: #{tpu_custom_call.1} parent=1 // pred_region
      %s57 = ssub.s32 32768, 32768
      %58 = vsyncadd [#allocation13], %s57
      %s59 = sshll.u32 [#allocation12], 4
      %s60 = int_to_ptr.vmem [resolvable:$true] %s59
      %65 = dma.hbm_to_vmem [thread:$0]  %s3, 32768, %s60, [#allocation13], 512, 512, 32
    $region17: #{tpu_custom_call.1} parent=1 // pred_fallthru
      _
    // Predicated region
    $region18: #{tpu_custom_call.1} parent=1 // pred_check
      _
    $region19: #{tpu_custom_call.1} parent=1 // pred_check_branch
      %67 = sbr.rel (0) target = $region21
    $region20: #{tpu_custom_call.1} parent=1 // pred_region
      _
    $region21: #{tpu_custom_call.1} parent=1 // pred_fallthru
      _
    // Predicated region
    $region22: #{tpu_custom_call.1} parent=1 // pred_check
      _
    $region23: #{tpu_custom_call.1} parent=1 // pred_check_branch
      %69 = sbr.rel (0) target = $region25
    $region24: #{tpu_custom_call.1} parent=1 // pred_region
      %s71 = ssub.s32 2048, 2048
      %72 = vsyncadd [#allocation13], %s71
      %s73 = sshll.u32 [#allocation14], 4
      %s74 = int_to_ptr.vmem [resolvable:$true] %s73
      %79 = dma.hbm_to_vmem [thread:$0]  %s5, 2048, %s74, [#allocation13], 64, 64, 4
    $region25: #{tpu_custom_call.1} parent=1 // pred_fallthru
      _
    // Predicated region
    $region26: #{tpu_custom_call.1} parent=1 // pred_check
      _
    $region27: #{tpu_custom_call.1} parent=1 // pred_check_branch
      %81 = sbr.rel (0) target = $region29
    $region28: #{tpu_custom_call.1} parent=1 // pred_region
      _
    $region29: #{tpu_custom_call.1} parent=1 // pred_fallthru
      _
    // Predicated region
    $region30: #{tpu_custom_call.1} parent=1 // pred_check
      _
    $region31: #{tpu_custom_call.1} parent=1 // pred_check_branch
      %83 = sbr.rel (0) target = $region33
    $region32: #{tpu_custom_call.1} parent=1 // pred_region
      %84 = dma.done [#allocation7], 1024
    $region33: #{tpu_custom_call.1} parent=1 // pred_fallthru
      _
    // Predicated region
    $region34: #{tpu_custom_call.1} parent=1 // pred_check
      _
    $region35: #{tpu_custom_call.1} parent=1 // pred_check_branch
      %86 = sbr.rel (0) target = $region37
    $region36: #{tpu_custom_call.1} parent=1 // pred_region
      %87 = dma.done [#allocation10], 24576
    $region37: #{tpu_custom_call.1} parent=1 // pred_fallthru
      _
    // Predicated region
    $region38: #{tpu_custom_call.1} parent=1 // pred_check
      _
    $region39: #{tpu_custom_call.1} parent=1 // pred_check_branch
      %89 = sbr.rel (0) target = $region41
    $region40: #{tpu_custom_call.1} parent=1 // pred_region
      %90 = dma.done [#allocation10], 128
    $region41: #{tpu_custom_call.1} parent=1 // pred_fallthru
      _
    // Predicated region
    $region42: #{tpu_custom_call.1} parent=1 // pred_check
      _
    $region43: #{tpu_custom_call.1} parent=1 // pred_check_branch
      %92 = sbr.rel (0) target = $region45
    $region44: #{tpu_custom_call.1} parent=1 // pred_region
      %93 = dma.done [#allocation13], 32768
    $region45: #{tpu_custom_call.1} parent=1 // pred_fallthru
      _
    // Predicated region
    $region46: #{tpu_custom_call.1} parent=1 // pred_check
      _
    $region47: #{tpu_custom_call.1} parent=1 // pred_check_branch
      %95 = sbr.rel (0) target = $region49
    $region48: #{tpu_custom_call.1} parent=1 // pred_region
      %96 = dma.done [#allocation13], 2048
    $region49: #{tpu_custom_call.1} parent=1 // pred_fallthru
      _
    %p98 = scmp.eq.s32.totalorder 0, 0
    // Predicated region
    $region50: #{tpu_custom_call.1} parent=1 // pred_check
      %p99 = pneg %p98
    $region51: #{tpu_custom_call.1} parent=1 // pred_check_branch
      %101 = sbr.rel (%p99) target = $region53
    $region52: #{tpu_custom_call.1} parent=1 // pred_region
      %102 = vst [vmem:[#allocation2] sm:$0xff] 0.0
      %103 = vst [vmem:[#allocation2 + $0x8] sm:$0xff] 0.0
      %104 = vst [vmem:[#allocation3] sm:$0xff] 0.0
      %105 = vst [vmem:[#allocation3 + $0x8] sm:$0xff] 0.0
      %106 = vst [vmem:[#allocation4] sm:$0xff] 0.0
      %107 = vst [vmem:[#allocation4 + $0x8] sm:$0xff] 0.0
      %108 = vst [vmem:[#allocation5] sm:$0xff] 0.0
      %109 = vst [vmem:[#allocation5 + $0x8] sm:$0xff] 0.0
    $region53: #{tpu_custom_call.1} parent=1 // pred_fallthru
      _
    %v110 = vld [vmem:[#allocation9] sm:$0xff]
    %v111 = vld [vmem:[#allocation9 + $0x8] sm:$0xff]
    %v112 = vld [vmem:[#allocation9 + $0x10] sm:$0xff]
    %v113 = vld [vmem:[#allocation9 + $0x18] sm:$0xff]
    %v114 = vld [vmem:[#allocation9 + $0x20] sm:$0xff]
    %v115 = vld [vmem:[#allocation9 + $0x28] sm:$0xff]
    %v116 = vld [vmem:[#allocation9 + $0x30] sm:$0xff]
    %v117 = vld [vmem:[#allocation9 + $0x38] sm:$0xff]
    %v118 = vld [vmem:[#allocation9 + $0x40] sm:$0xff]
    %v119 = vld [vmem:[#allocation9 + $0x48] sm:$0xff]
    %v120 = vld [vmem:[#allocation9 + $0x50] sm:$0xff]
    %v121 = vld [vmem:[#allocation9 + $0x58] sm:$0xff]
    %v122 = vld [vmem:[#allocation9 + $0x60] sm:$0xff]
    %v123 = vld [vmem:[#allocation9 + $0x68] sm:$0xff]
    %v124 = vld [vmem:[#allocation9 + $0x70] sm:$0xff]
    %v125 = vld [vmem:[#allocation9 + $0x78] sm:$0xff]
    %v126 = vld [vmem:[#allocation9 + $0x80] sm:$0xff]
    %v127 = vld [vmem:[#allocation9 + $0x88] sm:$0xff]
    %v128 = vld [vmem:[#allocation9 + $0x90] sm:$0xff]
    %v129 = vld [vmem:[#allocation9 + $0x98] sm:$0xff]
    %v130 = vld [vmem:[#allocation9 + $0xa0] sm:$0xff]
    %v131 = vld [vmem:[#allocation9 + $0xa8] sm:$0xff]
    %v132 = vld [vmem:[#allocation9 + $0xb0] sm:$0xff]
    %v133 = vld [vmem:[#allocation9 + $0xb8] sm:$0xff]
    %v134 = vld [vmem:[#allocation9 + $0xc0] sm:$0xff]
    %v135 = vld [vmem:[#allocation9 + $0xc8] sm:$0xff]
    %v136 = vld [vmem:[#allocation9 + $0xd0] sm:$0xff]
    %v137 = vld [vmem:[#allocation9 + $0xd8] sm:$0xff]
    %v138 = vld [vmem:[#allocation9 + $0xe0] sm:$0xff]
    %v139 = vld [vmem:[#allocation9 + $0xe8] sm:$0xff]
    %v140 = vld [vmem:[#allocation9 + $0xf0] sm:$0xff]
    %v141 = vld [vmem:[#allocation9 + $0xf8] sm:$0xff]
    %v142 = vld [vmem:[#allocation9 + $0x100] sm:$0xff]
    %v143 = vld [vmem:[#allocation9 + $0x108] sm:$0xff]
    %v144 = vld [vmem:[#allocation9 + $0x110] sm:$0xff]
    %v145 = vld [vmem:[#allocation9 + $0x118] sm:$0xff]
    %v146 = vld [vmem:[#allocation9 + $0x120] sm:$0xff]
    %v147 = vld [vmem:[#allocation9 + $0x128] sm:$0xff]
    %v148 = vld [vmem:[#allocation9 + $0x130] sm:$0xff]
    %v149 = vld [vmem:[#allocation9 + $0x138] sm:$0xff]
    %v150 = vld [vmem:[#allocation9 + $0x140] sm:$0xff]
    %v151 = vld [vmem:[#allocation9 + $0x148] sm:$0xff]
    %v152 = vld [vmem:[#allocation9 + $0x150] sm:$0xff]
    %v153 = vld [vmem:[#allocation9 + $0x158] sm:$0xff]
    %v154 = vld [vmem:[#allocation9 + $0x160] sm:$0xff]
    %v155 = vld [vmem:[#allocation9 + $0x168] sm:$0xff]
    %v156 = vld [vmem:[#allocation9 + $0x170] sm:$0xff]
    %v157 = vld [vmem:[#allocation9 + $0x178] sm:$0xff]
    %v158 = vld [vmem:[#allocation9 + $0x180] sm:$0xff]
    %v159 = vld [vmem:[#allocation9 + $0x188] sm:$0xff]
    %v160 = vld [vmem:[#allocation9 + $0x190] sm:$0xff]
    %v161 = vld [vmem:[#allocation9 + $0x198] sm:$0xff]
    %v162 = vld [vmem:[#allocation9 + $0x1a0] sm:$0xff]
    %v163 = vld [vmem:[#allocation9 + $0x1a8] sm:$0xff]
    %v164 = vld [vmem:[#allocation9 + $0x1b0] sm:$0xff]
    %v165 = vld [vmem:[#allocation9 + $0x1b8] sm:$0xff]
    %v166 = vld [vmem:[#allocation9 + $0x1c0] sm:$0xff]
    %v167 = vld [vmem:[#allocation9 + $0x1c8] sm:$0xff]
    %v168 = vld [vmem:[#allocation9 + $0x1d0] sm:$0xff]
    %v169 = vld [vmem:[#allocation9 + $0x1d8] sm:$0xff]
    %v170 = vld [vmem:[#allocation9 + $0x1e0] sm:$0xff]
    %v171 = vld [vmem:[#allocation9 + $0x1e8] sm:$0xff]
    %v172 = vld [vmem:[#allocation9 + $0x1f0] sm:$0xff]
    %v173 = vld [vmem:[#allocation9 + $0x1f8] sm:$0xff]
    %v174 = vld [vmem:[#allocation9 + $0x200] sm:$0xff]
    %v175 = vld [vmem:[#allocation9 + $0x208] sm:$0xff]
    %v176 = vld [vmem:[#allocation9 + $0x210] sm:$0xff]
    %v177 = vld [vmem:[#allocation9 + $0x218] sm:$0xff]
    %v178 = vld [vmem:[#allocation9 + $0x220] sm:$0xff]
    %v179 = vld [vmem:[#allocation9 + $0x228] sm:$0xff]
    %v180 = vld [vmem:[#allocation9 + $0x230] sm:$0xff]
    %v181 = vld [vmem:[#allocation9 + $0x238] sm:$0xff]
    %v182 = vld [vmem:[#allocation9 + $0x240] sm:$0xff]
    %v183 = vld [vmem:[#allocation9 + $0x248] sm:$0xff]
    %v184 = vld [vmem:[#allocation9 + $0x250] sm:$0xff]
    %v185 = vld [vmem:[#allocation9 + $0x258] sm:$0xff]
    %v186 = vld [vmem:[#allocation9 + $0x260] sm:$0xff]
    %v187 = vld [vmem:[#allocation9 + $0x268] sm:$0xff]
    %v188 = vld [vmem:[#allocation9 + $0x270] sm:$0xff]
    %v189 = vld [vmem:[#allocation9 + $0x278] sm:$0xff]
    %v190 = vld [vmem:[#allocation9 + $0x280] sm:$0xff]
    %v191 = vld [vmem:[#allocation9 + $0x288] sm:$0xff]
    %v192 = vld [vmem:[#allocation9 + $0x290] sm:$0xff]
    %v193 = vld [vmem:[#allocation9 + $0x298] sm:$0xff]
    %v194 = vld [vmem:[#allocation9 + $0x2a0] sm:$0xff]
    %v195 = vld [vmem:[#allocation9 + $0x2a8] sm:$0xff]
    %v196 = vld [vmem:[#allocation9 + $0x2b0] sm:$0xff]
    %v197 = vld [vmem:[#allocation9 + $0x2b8] sm:$0xff]
    %v198 = vld [vmem:[#allocation9 + $0x2c0] sm:$0xff]
    %v199 = vld [vmem:[#allocation9 + $0x2c8] sm:$0xff]
    %v200 = vld [vmem:[#allocation9 + $0x2d0] sm:$0xff]
    %v201 = vld [vmem:[#allocation9 + $0x2d8] sm:$0xff]
    %v202 = vld [vmem:[#allocation9 + $0x2e0] sm:$0xff]
    %v203 = vld [vmem:[#allocation9 + $0x2e8] sm:$0xff]
    %v204 = vld [vmem:[#allocation9 + $0x2f0] sm:$0xff]
    %v205 = vld [vmem:[#allocation9 + $0x2f8] sm:$0xff]
    %v206 = vld [vmem:[#allocation9 + $0x300] sm:$0xff]
    %v207 = vld [vmem:[#allocation9 + $0x308] sm:$0xff]
    %v208 = vld [vmem:[#allocation9 + $0x310] sm:$0xff]
    %v209 = vld [vmem:[#allocation9 + $0x318] sm:$0xff]
    %v210 = vld [vmem:[#allocation9 + $0x320] sm:$0xff]
    %v211 = vld [vmem:[#allocation9 + $0x328] sm:$0xff]
    %v212 = vld [vmem:[#allocation9 + $0x330] sm:$0xff]
    %v213 = vld [vmem:[#allocation9 + $0x338] sm:$0xff]
    %v214 = vld [vmem:[#allocation9 + $0x340] sm:$0xff]
    %v215 = vld [vmem:[#allocation9 + $0x348] sm:$0xff]
    %v216 = vld [vmem:[#allocation9 + $0x350] sm:$0xff]
    %v217 = vld [vmem:[#allocation9 + $0x358] sm:$0xff]
    %v218 = vld [vmem:[#allocation9 + $0x360] sm:$0xff]
    %v219 = vld [vmem:[#allocation9 + $0x368] sm:$0xff]
    %v220 = vld [vmem:[#allocation9 + $0x370] sm:$0xff]
    %v221 = vld [vmem:[#allocation9 + $0x378] sm:$0xff]
    %v222 = vld [vmem:[#allocation9 + $0x380] sm:$0xff]
    %v223 = vld [vmem:[#allocation9 + $0x388] sm:$0xff]
    %v224 = vld [vmem:[#allocation9 + $0x390] sm:$0xff]
    %v225 = vld [vmem:[#allocation9 + $0x398] sm:$0xff]
    %v226 = vld [vmem:[#allocation9 + $0x3a0] sm:$0xff]
    %v227 = vld [vmem:[#allocation9 + $0x3a8] sm:$0xff]
    %v228 = vld [vmem:[#allocation9 + $0x3b0] sm:$0xff]
    %v229 = vld [vmem:[#allocation9 + $0x3b8] sm:$0xff]
    %v230 = vld [vmem:[#allocation9 + $0x3c0] sm:$0xff]
    %v231 = vld [vmem:[#allocation9 + $0x3c8] sm:$0xff]
    %v232 = vld [vmem:[#allocation9 + $0x3d0] sm:$0xff]
    %v233 = vld [vmem:[#allocation9 + $0x3d8] sm:$0xff]
    %v234 = vld [vmem:[#allocation9 + $0x3e0] sm:$0xff]
    %v235 = vld [vmem:[#allocation9 + $0x3e8] sm:$0xff]
    %v236 = vld [vmem:[#allocation9 + $0x3f0] sm:$0xff]
    %v237 = vld [vmem:[#allocation9 + $0x3f8] sm:$0xff]
    %v238 = vld [vmem:[#allocation9 + $0x400] sm:$0xff]
    %v239 = vld [vmem:[#allocation9 + $0x408] sm:$0xff]
    %v240 = vld [vmem:[#allocation9 + $0x410] sm:$0xff]
    %v241 = vld [vmem:[#allocation9 + $0x418] sm:$0xff]
    %v242 = vld [vmem:[#allocation9 + $0x420] sm:$0xff]
    %v243 = vld [vmem:[#allocation9 + $0x428] sm:$0xff]
    %v244 = vld [vmem:[#allocation9 + $0x430] sm:$0xff]
    %v245 = vld [vmem:[#allocation9 + $0x438] sm:$0xff]
    %v246 = vld [vmem:[#allocation9 + $0x440] sm:$0xff]
    %v247 = vld [vmem:[#allocation9 + $0x448] sm:$0xff]
    %v248 = vld [vmem:[#allocation9 + $0x450] sm:$0xff]
    %v249 = vld [vmem:[#allocation9 + $0x458] sm:$0xff]
    %v250 = vld [vmem:[#allocation9 + $0x460] sm:$0xff]
    %v251 = vld [vmem:[#allocation9 + $0x468] sm:$0xff]
    %v252 = vld [vmem:[#allocation9 + $0x470] sm:$0xff]
    %v253 = vld [vmem:[#allocation9 + $0x478] sm:$0xff]
    %v254 = vld [vmem:[#allocation9 + $0x480] sm:$0xff]
    %v255 = vld [vmem:[#allocation9 + $0x488] sm:$0xff]
    %v256 = vld [vmem:[#allocation9 + $0x490] sm:$0xff]
    %v257 = vld [vmem:[#allocation9 + $0x498] sm:$0xff]
    %v258 = vld [vmem:[#allocation9 + $0x4a0] sm:$0xff]
    %v259 = vld [vmem:[#allocation9 + $0x4a8] sm:$0xff]
    %v260 = vld [vmem:[#allocation9 + $0x4b0] sm:$0xff]
    %v261 = vld [vmem:[#allocation9 + $0x4b8] sm:$0xff]
    %v262 = vld [vmem:[#allocation9 + $0x4c0] sm:$0xff]
    %v263 = vld [vmem:[#allocation9 + $0x4c8] sm:$0xff]
    %v264 = vld [vmem:[#allocation9 + $0x4d0] sm:$0xff]
    %v265 = vld [vmem:[#allocation9 + $0x4d8] sm:$0xff]
    %v266 = vld [vmem:[#allocation9 + $0x4e0] sm:$0xff]
    %v267 = vld [vmem:[#allocation9 + $0x4e8] sm:$0xff]
    %v268 = vld [vmem:[#allocation9 + $0x4f0] sm:$0xff]
    %v269 = vld [vmem:[#allocation9 + $0x4f8] sm:$0xff]
    %v270 = vld [vmem:[#allocation9 + $0x500] sm:$0xff]
    %v271 = vld [vmem:[#allocation9 + $0x508] sm:$0xff]
    %v272 = vld [vmem:[#allocation9 + $0x510] sm:$0xff]
    %v273 = vld [vmem:[#allocation9 + $0x518] sm:$0xff]
    %v274 = vld [vmem:[#allocation9 + $0x520] sm:$0xff]
    %v275 = vld [vmem:[#allocation9 + $0x528] sm:$0xff]
    %v276 = vld [vmem:[#allocation9 + $0x530] sm:$0xff]
    %v277 = vld [vmem:[#allocation9 + $0x538] sm:$0xff]
    %v278 = vld [vmem:[#allocation9 + $0x540] sm:$0xff]
    %v279 = vld [vmem:[#allocation9 + $0x548] sm:$0xff]
    %v280 = vld [vmem:[#allocation9 + $0x550] sm:$0xff]
    %v281 = vld [vmem:[#allocation9 + $0x558] sm:$0xff]
    %v282 = vld [vmem:[#allocation9 + $0x560] sm:$0xff]
    %v283 = vld [vmem:[#allocation9 + $0x568] sm:$0xff]
    %v284 = vld [vmem:[#allocation9 + $0x570] sm:$0xff]
    %v285 = vld [vmem:[#allocation9 + $0x578] sm:$0xff]
    %v286 = vld [vmem:[#allocation9 + $0x580] sm:$0xff]
    %v287 = vld [vmem:[#allocation9 + $0x588] sm:$0xff]
    %v288 = vld [vmem:[#allocation9 + $0x590] sm:$0xff]
    %v289 = vld [vmem:[#allocation9 + $0x598] sm:$0xff]
    %v290 = vld [vmem:[#allocation9 + $0x5a0] sm:$0xff]
    %v291 = vld [vmem:[#allocation9 + $0x5a8] sm:$0xff]
    %v292 = vld [vmem:[#allocation9 + $0x5b0] sm:$0xff]
    %v293 = vld [vmem:[#allocation9 + $0x5b8] sm:$0xff]
    %v294 = vld [vmem:[#allocation9 + $0x5c0] sm:$0xff]
    %v295 = vld [vmem:[#allocation9 + $0x5c8] sm:$0xff]
    %v296 = vld [vmem:[#allocation9 + $0x5d0] sm:$0xff]
    %v297 = vld [vmem:[#allocation9 + $0x5d8] sm:$0xff]
    %v298 = vld [vmem:[#allocation9 + $0x5e0] sm:$0xff]
    %v299 = vld [vmem:[#allocation9 + $0x5e8] sm:$0xff]
    %v300 = vld [vmem:[#allocation9 + $0x5f0] sm:$0xff]
    %v301 = vld [vmem:[#allocation9 + $0x5f8] sm:$0xff]
    %v302 = vld [vmem:[#allocation12] sm:$0xff]
    %v303 = vld [vmem:[#allocation12 + $0x8] sm:$0xff]
    %v304 = vld [vmem:[#allocation12 + $0x10] sm:$0xff]
    %v305 = vld [vmem:[#allocation12 + $0x18] sm:$0xff]
    %v306 = vld [vmem:[#allocation12 + $0x20] sm:$0xff]
    %v307 = vld [vmem:[#allocation12 + $0x28] sm:$0xff]
    %v308 = vld [vmem:[#allocation12 + $0x30] sm:$0xff]
    %v309 = vld [vmem:[#allocation12 + $0x38] sm:$0xff]
    %v310 = vld [vmem:[#allocation12 + $0x40] sm:$0xff]
    %v311 = vld [vmem:[#allocation12 + $0x48] sm:$0xff]
    %v312 = vld [vmem:[#allocation12 + $0x50] sm:$0xff]
    %v313 = vld [vmem:[#allocation12 + $0x58] sm:$0xff]
    %v314 = vld [vmem:[#allocation12 + $0x60] sm:$0xff]
    %v315 = vld [vmem:[#allocation12 + $0x68] sm:$0xff]
    %v316 = vld [vmem:[#allocation12 + $0x70] sm:$0xff]
    %v317 = vld [vmem:[#allocation12 + $0x78] sm:$0xff]
    %v318 = vld [vmem:[#allocation12 + $0x80] sm:$0xff]
    %v319 = vld [vmem:[#allocation12 + $0x88] sm:$0xff]
    %v320 = vld [vmem:[#allocation12 + $0x90] sm:$0xff]
    %v321 = vld [vmem:[#allocation12 + $0x98] sm:$0xff]
    %v322 = vld [vmem:[#allocation12 + $0xa0] sm:$0xff]
    %v323 = vld [vmem:[#allocation12 + $0xa8] sm:$0xff]
    %v324 = vld [vmem:[#allocation12 + $0xb0] sm:$0xff]
    %v325 = vld [vmem:[#allocation12 + $0xb8] sm:$0xff]
    %v326 = vld [vmem:[#allocation12 + $0xc0] sm:$0xff]
    %v327 = vld [vmem:[#allocation12 + $0xc8] sm:$0xff]
    %v328 = vld [vmem:[#allocation12 + $0xd0] sm:$0xff]
    %v329 = vld [vmem:[#allocation12 + $0xd8] sm:$0xff]
    %v330 = vld [vmem:[#allocation12 + $0xe0] sm:$0xff]
    %v331 = vld [vmem:[#allocation12 + $0xe8] sm:$0xff]
    %v332 = vld [vmem:[#allocation12 + $0xf0] sm:$0xff]
    %v333 = vld [vmem:[#allocation12 + $0xf8] sm:$0xff]
    %v334 = vld [vmem:[#allocation12 + $0x100] sm:$0xff]
    %v335 = vld [vmem:[#allocation12 + $0x108] sm:$0xff]
    %v336 = vld [vmem:[#allocation12 + $0x110] sm:$0xff]
    %v337 = vld [vmem:[#allocation12 + $0x118] sm:$0xff]
    %v338 = vld [vmem:[#allocation12 + $0x120] sm:$0xff]
    %v339 = vld [vmem:[#allocation12 + $0x128] sm:$0xff]
    %v340 = vld [vmem:[#allocation12 + $0x130] sm:$0xff]
    %v341 = vld [vmem:[#allocation12 + $0x138] sm:$0xff]
    %v342 = vld [vmem:[#allocation12 + $0x140] sm:$0xff]
    %v343 = vld [vmem:[#allocation12 + $0x148] sm:$0xff]
    %v344 = vld [vmem:[#allocation12 + $0x150] sm:$0xff]
    %v345 = vld [vmem:[#allocation12 + $0x158] sm:$0xff]
    %v346 = vld [vmem:[#allocation12 + $0x160] sm:$0xff]
    %v347 = vld [vmem:[#allocation12 + $0x168] sm:$0xff]
    %v348 = vld [vmem:[#allocation12 + $0x170] sm:$0xff]
    %v349 = vld [vmem:[#allocation12 + $0x178] sm:$0xff]
    %v350 = vld [vmem:[#allocation12 + $0x180] sm:$0xff]
    %v351 = vld [vmem:[#allocation12 + $0x188] sm:$0xff]
    %v352 = vld [vmem:[#allocation12 + $0x190] sm:$0xff]
    %v353 = vld [vmem:[#allocation12 + $0x198] sm:$0xff]
    %v354 = vld [vmem:[#allocation12 + $0x1a0] sm:$0xff]
    %v355 = vld [vmem:[#allocation12 + $0x1a8] sm:$0xff]
    %v356 = vld [vmem:[#allocation12 + $0x1b0] sm:$0xff]
    %v357 = vld [vmem:[#allocation12 + $0x1b8] sm:$0xff]
    %v358 = vld [vmem:[#allocation12 + $0x1c0] sm:$0xff]
    %v359 = vld [vmem:[#allocation12 + $0x1c8] sm:$0xff]
    %v360 = vld [vmem:[#allocation12 + $0x1d0] sm:$0xff]
    %v361 = vld [vmem:[#allocation12 + $0x1d8] sm:$0xff]
    %v362 = vld [vmem:[#allocation12 + $0x1e0] sm:$0xff]
    %v363 = vld [vmem:[#allocation12 + $0x1e8] sm:$0xff]
    %v364 = vld [vmem:[#allocation12 + $0x1f0] sm:$0xff]
    %v365 = vld [vmem:[#allocation12 + $0x1f8] sm:$0xff]
    %v366 = vld [vmem:[#allocation12 + $0x200] sm:$0xff]
    %v367 = vld [vmem:[#allocation12 + $0x208] sm:$0xff]
    %v368 = vld [vmem:[#allocation12 + $0x210] sm:$0xff]
    %v369 = vld [vmem:[#allocation12 + $0x218] sm:$0xff]
    %v370 = vld [vmem:[#allocation12 + $0x220] sm:$0xff]
    %v371 = vld [vmem:[#allocation12 + $0x228] sm:$0xff]
    %v372 = vld [vmem:[#allocation12 + $0x230] sm:$0xff]
    %v373 = vld [vmem:[#allocation12 + $0x238] sm:$0xff]
    %v374 = vld [vmem:[#allocation12 + $0x240] sm:$0xff]
    %v375 = vld [vmem:[#allocation12 + $0x248] sm:$0xff]
    %v376 = vld [vmem:[#allocation12 + $0x250] sm:$0xff]
    %v377 = vld [vmem:[#allocation12 + $0x258] sm:$0xff]
    %v378 = vld [vmem:[#allocation12 + $0x260] sm:$0xff]
    %v379 = vld [vmem:[#allocation12 + $0x268] sm:$0xff]
    %v380 = vld [vmem:[#allocation12 + $0x270] sm:$0xff]
    %v381 = vld [vmem:[#allocation12 + $0x278] sm:$0xff]
    %v382 = vld [vmem:[#allocation12 + $0x280] sm:$0xff]
    %v383 = vld [vmem:[#allocation12 + $0x288] sm:$0xff]
    %v384 = vld [vmem:[#allocation12 + $0x290] sm:$0xff]
    %v385 = vld [vmem:[#allocation12 + $0x298] sm:$0xff]
    %v386 = vld [vmem:[#allocation12 + $0x2a0] sm:$0xff]
    %v387 = vld [vmem:[#allocation12 + $0x2a8] sm:$0xff]
    %v388 = vld [vmem:[#allocation12 + $0x2b0] sm:$0xff]
    %v389 = vld [vmem:[#allocation12 + $0x2b8] sm:$0xff]
    %v390 = vld [vmem:[#allocation12 + $0x2c0] sm:$0xff]
    %v391 = vld [vmem:[#allocation12 + $0x2c8] sm:$0xff]
    %v392 = vld [vmem:[#allocation12 + $0x2d0] sm:$0xff]
    %v393 = vld [vmem:[#allocation12 + $0x2d8] sm:$0xff]
    %v394 = vld [vmem:[#allocation12 + $0x2e0] sm:$0xff]
    %v395 = vld [vmem:[#allocation12 + $0x2e8] sm:$0xff]
    %v396 = vld [vmem:[#allocation12 + $0x2f0] sm:$0xff]
    %v397 = vld [vmem:[#allocation12 + $0x2f8] sm:$0xff]
    %v398 = vld [vmem:[#allocation12 + $0x300] sm:$0xff]
    %v399 = vld [vmem:[#allocation12 + $0x308] sm:$0xff]
    %v400 = vld [vmem:[#allocation12 + $0x310] sm:$0xff]
    %v401 = vld [vmem:[#allocation12 + $0x318] sm:$0xff]
    %v402 = vld [vmem:[#allocation12 + $0x320] sm:$0xff]
    %v403 = vld [vmem:[#allocation12 + $0x328] sm:$0xff]
    %v404 = vld [vmem:[#allocation12 + $0x330] sm:$0xff]
    %v405 = vld [vmem:[#allocation12 + $0x338] sm:$0xff]
    %v406 = vld [vmem:[#allocation12 + $0x340] sm:$0xff]
    %v407 = vld [vmem:[#allocation12 + $0x348] sm:$0xff]
    %v408 = vld [vmem:[#allocation12 + $0x350] sm:$0xff]
    %v409 = vld [vmem:[#allocation12 + $0x358] sm:$0xff]
    %v410 = vld [vmem:[#allocation12 + $0x360] sm:$0xff]
    %v411 = vld [vmem:[#allocation12 + $0x368] sm:$0xff]
    %v412 = vld [vmem:[#allocation12 + $0x370] sm:$0xff]
    %v413 = vld [vmem:[#allocation12 + $0x378] sm:$0xff]
    %v414 = vld [vmem:[#allocation12 + $0x380] sm:$0xff]
    %v415 = vld [vmem:[#allocation12 + $0x388] sm:$0xff]
    %v416 = vld [vmem:[#allocation12 + $0x390] sm:$0xff]
    %v417 = vld [vmem:[#allocation12 + $0x398] sm:$0xff]
    %v418 = vld [vmem:[#allocation12 + $0x3a0] sm:$0xff]
    %v419 = vld [vmem:[#allocation12 + $0x3a8] sm:$0xff]
    %v420 = vld [vmem:[#allocation12 + $0x3b0] sm:$0xff]
    %v421 = vld [vmem:[#allocation12 + $0x3b8] sm:$0xff]
    %v422 = vld [vmem:[#allocation12 + $0x3c0] sm:$0xff]
    %v423 = vld [vmem:[#allocation12 + $0x3c8] sm:$0xff]
    %v424 = vld [vmem:[#allocation12 + $0x3d0] sm:$0xff]
    %v425 = vld [vmem:[#allocation12 + $0x3d8] sm:$0xff]
    %v426 = vld [vmem:[#allocation12 + $0x3e0] sm:$0xff]
    %v427 = vld [vmem:[#allocation12 + $0x3e8] sm:$0xff]
    %v428 = vld [vmem:[#allocation12 + $0x3f0] sm:$0xff]
    %v429 = vld [vmem:[#allocation12 + $0x3f8] sm:$0xff]
    %v430 = vld [vmem:[#allocation12 + $0x400] sm:$0xff]
    %v431 = vld [vmem:[#allocation12 + $0x408] sm:$0xff]
    %v432 = vld [vmem:[#allocation12 + $0x410] sm:$0xff]
    %v433 = vld [vmem:[#allocation12 + $0x418] sm:$0xff]
    %v434 = vld [vmem:[#allocation12 + $0x420] sm:$0xff]
    %v435 = vld [vmem:[#allocation12 + $0x428] sm:$0xff]
    %v436 = vld [vmem:[#allocation12 + $0x430] sm:$0xff]
    %v437 = vld [vmem:[#allocation12 + $0x438] sm:$0xff]
    %v438 = vld [vmem:[#allocation12 + $0x440] sm:$0xff]
    %v439 = vld [vmem:[#allocation12 + $0x448] sm:$0xff]
    %v440 = vld [vmem:[#allocation12 + $0x450] sm:$0xff]
    %v441 = vld [vmem:[#allocation12 + $0x458] sm:$0xff]
    %v442 = vld [vmem:[#allocation12 + $0x460] sm:$0xff]
    %v443 = vld [vmem:[#allocation12 + $0x468] sm:$0xff]
    %v444 = vld [vmem:[#allocation12 + $0x470] sm:$0xff]
    %v445 = vld [vmem:[#allocation12 + $0x478] sm:$0xff]
    %v446 = vld [vmem:[#allocation12 + $0x480] sm:$0xff]
    %v447 = vld [vmem:[#allocation12 + $0x488] sm:$0xff]
    %v448 = vld [vmem:[#allocation12 + $0x490] sm:$0xff]
    %v449 = vld [vmem:[#allocation12 + $0x498] sm:$0xff]
    %v450 = vld [vmem:[#allocation12 + $0x4a0] sm:$0xff]
    %v451 = vld [vmem:[#allocation12 + $0x4a8] sm:$0xff]
    %v452 = vld [vmem:[#allocation12 + $0x4b0] sm:$0xff]
    %v453 = vld [vmem:[#allocation12 + $0x4b8] sm:$0xff]
    %v454 = vld [vmem:[#allocation12 + $0x4c0] sm:$0xff]
    %v455 = vld [vmem:[#allocation12 + $0x4c8] sm:$0xff]
    %v456 = vld [vmem:[#allocation12 + $0x4d0] sm:$0xff]
    %v457 = vld [vmem:[#allocation12 + $0x4d8] sm:$0xff]
    %v458 = vld [vmem:[#allocation12 + $0x4e0] sm:$0xff]
    %v459 = vld [vmem:[#allocation12 + $0x4e8] sm:$0xff]
    %v460 = vld [vmem:[#allocation12 + $0x4f0] sm:$0xff]
    %v461 = vld [vmem:[#allocation12 + $0x4f8] sm:$0xff]
    %v462 = vld [vmem:[#allocation12 + $0x500] sm:$0xff]
    %v463 = vld [vmem:[#allocation12 + $0x508] sm:$0xff]
    %v464 = vld [vmem:[#allocation12 + $0x510] sm:$0xff]
    %v465 = vld [vmem:[#allocation12 + $0x518] sm:$0xff]
    %v466 = vld [vmem:[#allocation12 + $0x520] sm:$0xff]
    %v467 = vld [vmem:[#allocation12 + $0x528] sm:$0xff]
    %v468 = vld [vmem:[#allocation12 + $0x530] sm:$0xff]
    %v469 = vld [vmem:[#allocation12 + $0x538] sm:$0xff]
    %v470 = vld [vmem:[#allocation12 + $0x540] sm:$0xff]
    %v471 = vld [vmem:[#allocation12 + $0x548] sm:$0xff]
    %v472 = vld [vmem:[#allocation12 + $0x550] sm:$0xff]
    %v473 = vld [vmem:[#allocation12 + $0x558] sm:$0xff]
    %v474 = vld [vmem:[#allocation12 + $0x560] sm:$0xff]
    %v475 = vld [vmem:[#allocation12 + $0x568] sm:$0xff]
    %v476 = vld [vmem:[#allocation12 + $0x570] sm:$0xff]
    %v477 = vld [vmem:[#allocation12 + $0x578] sm:$0xff]
    %v478 = vld [vmem:[#allocation12 + $0x580] sm:$0xff]
    %v479 = vld [vmem:[#allocation12 + $0x588] sm:$0xff]
    %v480 = vld [vmem:[#allocation12 + $0x590] sm:$0xff]
    %v481 = vld [vmem:[#allocation12 + $0x598] sm:$0xff]
    %v482 = vld [vmem:[#allocation12 + $0x5a0] sm:$0xff]
    %v483 = vld [vmem:[#allocation12 + $0x5a8] sm:$0xff]
    %v484 = vld [vmem:[#allocation12 + $0x5b0] sm:$0xff]
    %v485 = vld [vmem:[#allocation12 + $0x5b8] sm:$0xff]
    %v486 = vld [vmem:[#allocation12 + $0x5c0] sm:$0xff]
    %v487 = vld [vmem:[#allocation12 + $0x5c8] sm:$0xff]
    %v488 = vld [vmem:[#allocation12 + $0x5d0] sm:$0xff]
    %v489 = vld [vmem:[#allocation12 + $0x5d8] sm:$0xff]
    %v490 = vld [vmem:[#allocation12 + $0x5e0] sm:$0xff]
    %v491 = vld [vmem:[#allocation12 + $0x5e8] sm:$0xff]
    %v492 = vld [vmem:[#allocation12 + $0x5f0] sm:$0xff]
    %v493 = vld [vmem:[#allocation12 + $0x5f8] sm:$0xff]
    %v494 = vld [vmem:[#allocation12 + $0x600] sm:$0xff]
    %v495 = vld [vmem:[#allocation12 + $0x608] sm:$0xff]
    %v496 = vld [vmem:[#allocation12 + $0x610] sm:$0xff]
    %v497 = vld [vmem:[#allocation12 + $0x618] sm:$0xff]
    %v498 = vld [vmem:[#allocation12 + $0x620] sm:$0xff]
    %v499 = vld [vmem:[#allocation12 + $0x628] sm:$0xff]
    %v500 = vld [vmem:[#allocation12 + $0x630] sm:$0xff]
    %v501 = vld [vmem:[#allocation12 + $0x638] sm:$0xff]
    %v502 = vld [vmem:[#allocation12 + $0x640] sm:$0xff]
    %v503 = vld [vmem:[#allocation12 + $0x648] sm:$0xff]
    %v504 = vld [vmem:[#allocation12 + $0x650] sm:$0xff]
    %v505 = vld [vmem:[#allocation12 + $0x658] sm:$0xff]
    %v506 = vld [vmem:[#allocation12 + $0x660] sm:$0xff]
    %v507 = vld [vmem:[#allocation12 + $0x668] sm:$0xff]
    %v508 = vld [vmem:[#allocation12 + $0x670] sm:$0xff]
    %v509 = vld [vmem:[#allocation12 + $0x678] sm:$0xff]
    %v510 = vld [vmem:[#allocation12 + $0x680] sm:$0xff]
    %v511 = vld [vmem:[#allocation12 + $0x688] sm:$0xff]
    %v512 = vld [vmem:[#allocation12 + $0x690] sm:$0xff]
    %v513 = vld [vmem:[#allocation12 + $0x698] sm:$0xff]
    %v514 = vld [vmem:[#allocation12 + $0x6a0] sm:$0xff]
    %v515 = vld [vmem:[#allocation12 + $0x6a8] sm:$0xff]
    %v516 = vld [vmem:[#allocation12 + $0x6b0] sm:$0xff]
    %v517 = vld [vmem:[#allocation12 + $0x6b8] sm:$0xff]
    %v518 = vld [vmem:[#allocation12 + $0x6c0] sm:$0xff]
    %v519 = vld [vmem:[#allocation12 + $0x6c8] sm:$0xff]
    %v520 = vld [vmem:[#allocation12 + $0x6d0] sm:$0xff]
    %v521 = vld [vmem:[#allocation12 + $0x6d8] sm:$0xff]
    %v522 = vld [vmem:[#allocation12 + $0x6e0] sm:$0xff]
    %v523 = vld [vmem:[#allocation12 + $0x6e8] sm:$0xff]
    %v524 = vld [vmem:[#allocation12 + $0x6f0] sm:$0xff]
    %v525 = vld [vmem:[#allocation12 + $0x6f8] sm:$0xff]
    %v526 = vld [vmem:[#allocation12 + $0x700] sm:$0xff]
    %v527 = vld [vmem:[#allocation12 + $0x708] sm:$0xff]
    %v528 = vld [vmem:[#allocation12 + $0x710] sm:$0xff]
    %v529 = vld [vmem:[#allocation12 + $0x718] sm:$0xff]
    %v530 = vld [vmem:[#allocation12 + $0x720] sm:$0xff]
    %v531 = vld [vmem:[#allocation12 + $0x728] sm:$0xff]
    %v532 = vld [vmem:[#allocation12 + $0x730] sm:$0xff]
    %v533 = vld [vmem:[#allocation12 + $0x738] sm:$0xff]
    %v534 = vld [vmem:[#allocation12 + $0x740] sm:$0xff]
    %v535 = vld [vmem:[#allocation12 + $0x748] sm:$0xff]
    %v536 = vld [vmem:[#allocation12 + $0x750] sm:$0xff]
    %v537 = vld [vmem:[#allocation12 + $0x758] sm:$0xff]
    %v538 = vld [vmem:[#allocation12 + $0x760] sm:$0xff]
    %v539 = vld [vmem:[#allocation12 + $0x768] sm:$0xff]
    %v540 = vld [vmem:[#allocation12 + $0x770] sm:$0xff]
    %v541 = vld [vmem:[#allocation12 + $0x778] sm:$0xff]
    %v542 = vld [vmem:[#allocation12 + $0x780] sm:$0xff]
    %v543 = vld [vmem:[#allocation12 + $0x788] sm:$0xff]
    %v544 = vld [vmem:[#allocation12 + $0x790] sm:$0xff]
    %v545 = vld [vmem:[#allocation12 + $0x798] sm:$0xff]
    %v546 = vld [vmem:[#allocation12 + $0x7a0] sm:$0xff]
    %v547 = vld [vmem:[#allocation12 + $0x7a8] sm:$0xff]
    %v548 = vld [vmem:[#allocation12 + $0x7b0] sm:$0xff]
    %v549 = vld [vmem:[#allocation12 + $0x7b8] sm:$0xff]
    %v550 = vld [vmem:[#allocation12 + $0x7c0] sm:$0xff]
    %v551 = vld [vmem:[#allocation12 + $0x7c8] sm:$0xff]
    %v552 = vld [vmem:[#allocation12 + $0x7d0] sm:$0xff]
    %v553 = vld [vmem:[#allocation12 + $0x7d8] sm:$0xff]
    %v554 = vld [vmem:[#allocation12 + $0x7e0] sm:$0xff]
    %v555 = vld [vmem:[#allocation12 + $0x7e8] sm:$0xff]
    %v556 = vld [vmem:[#allocation12 + $0x7f0] sm:$0xff]
    %v557 = vld [vmem:[#allocation12 + $0x7f8] sm:$0xff]
    %v558 = vld [vmem:[#allocation11] sm:$0xff]
    %v560 = vlaneseq
    %v561 = vshrl.u32 %v560, 7
    %v562 = vsub.s32 0, %v561
    %v563 = vrot.slane %v558, %v562
    %v564 = vlaneseq
    %v565 = vshrl.u32 %v564, 7
    %v566 = vsub.s32 1, %v565
    %v567 = vrot.slane %v558, %v566
    %v568 = vlaneseq
    %v569 = vshrl.u32 %v568, 7
    %v570 = vsub.s32 2, %v569
    %v571 = vrot.slane %v558, %v570
    %v572 = vlaneseq
    %v573 = vshrl.u32 %v572, 7
    %v574 = vsub.s32 3, %v573
    %v575 = vrot.slane %v558, %v574
    %v576 = vlaneseq
    %v577 = vshrl.u32 %v576, 7
    %v578 = vsub.s32 4, %v577
    %v579 = vrot.slane %v558, %v578
    %v580 = vlaneseq
    %v581 = vshrl.u32 %v580, 7
    %v582 = vsub.s32 5, %v581
    %v583 = vrot.slane %v558, %v582
    %v584 = vlaneseq
    %v585 = vshrl.u32 %v584, 7
    %v586 = vsub.s32 6, %v585
    %v587 = vrot.slane %v558, %v586
    %v588 = vlaneseq
    %v589 = vshrl.u32 %v588, 7
    %v590 = vsub.s32 7, %v589
    %v591 = vrot.slane %v558, %v590
    %v600 = vld [vmem:[%s4] sm:$0xff]
    %v602 = vlaneseq
    %v603 = vshrl.u32 %v602, 7
    %v604 = vsub.s32 0, %v603
    %v605 = vrot.slane %v600, %v604
    %v606 = vlaneseq
    %v607 = vshrl.u32 %v606, 7
    %v608 = vsub.s32 1, %v607
    %v609 = vrot.slane %v600, %v608
    %v610 = vlaneseq
    %v611 = vshrl.u32 %v610, 7
    %v612 = vsub.s32 2, %v611
    %v613 = vrot.slane %v600, %v612
    %v614 = vlaneseq
    %v615 = vshrl.u32 %v614, 7
    %v616 = vsub.s32 3, %v615
    %v617 = vrot.slane %v600, %v616
    %v618 = vlaneseq
    %v619 = vshrl.u32 %v618, 7
    %v620 = vsub.s32 4, %v619
    %v621 = vrot.slane %v600, %v620
    %v622 = vlaneseq
    %v623 = vshrl.u32 %v622, 7
    %v624 = vsub.s32 5, %v623
    %v625 = vrot.slane %v600, %v624
    %v626 = vlaneseq
    %v627 = vshrl.u32 %v626, 7
    %v628 = vsub.s32 6, %v627
    %v629 = vrot.slane %v600, %v628
    %v630 = vlaneseq
    %v631 = vshrl.u32 %v630, 7
    %v632 = vsub.s32 7, %v631
    %v633 = vrot.slane %v600, %v632
    %v642 = vld [vmem:[#allocation2] sm:$0xff]
    %v643 = vld [vmem:[#allocation2 + $0x8] sm:$0xff]
    %v644 = vld [vmem:[#allocation3] sm:$0xff]
    %v645 = vld [vmem:[#allocation3 + $0x8] sm:$0xff]
    %v646 = vld [vmem:[#allocation4] sm:$0xff]
    %v647 = vld [vmem:[#allocation4 + $0x8] sm:$0xff]
    %v648 = vld [vmem:[#allocation5] sm:$0xff]
    %v649 = vld [vmem:[#allocation5 + $0x8] sm:$0xff]
    %v650 = vld [vmem:[#allocation6] sm:$0xff]
    %v651 = vpack.c.bf16 %v650, %v650
    %v652 = vpack.c.bf16 %v642, %v642
    %v653 = vpack.c.bf16 %v643, %v643
    %v846 = vunpack.c.l.b16 %v110
    %v847 = vunpack.c.h.b16 %v110
    %v848 = vunpack.c.l.b16 %v111
    %v849 = vunpack.c.h.b16 %v111
    %v850 = vunpack.c.l.b16 %v112
    %v851 = vunpack.c.h.b16 %v112
    %v852 = vunpack.c.l.b16 %v113
    %v853 = vunpack.c.h.b16 %v113
    %v854 = vunpack.c.l.b16 %v114
    %v855 = vunpack.c.h.b16 %v114
    %v856 = vunpack.c.l.b16 %v115
    %v857 = vunpack.c.h.b16 %v115
    %v858 = vunpack.c.l.b16 %v116
    %v859 = vunpack.c.h.b16 %v116
    %v860 = vunpack.c.l.b16 %v117
    %v861 = vunpack.c.h.b16 %v117
    %v862 = vunpack.c.l.b16 %v118
    %v863 = vunpack.c.h.b16 %v118
    %v864 = vunpack.c.l.b16 %v119
    %v865 = vunpack.c.h.b16 %v119
    %v866 = vunpack.c.l.b16 %v120
    %v867 = vunpack.c.h.b16 %v120
    %v868 = vunpack.c.l.b16 %v121
    %v869 = vunpack.c.h.b16 %v121
    %v870 = vunpack.c.l.b16 %v122
    %v871 = vunpack.c.h.b16 %v122
    %v872 = vunpack.c.l.b16 %v123
    %v873 = vunpack.c.h.b16 %v123
    %v874 = vunpack.c.l.b16 %v124
    %v875 = vunpack.c.h.b16 %v124
    %v876 = vunpack.c.l.b16 %v125
    %v877 = vunpack.c.h.b16 %v125
    %v878 = vunpack.c.l.b16 %v126
    %v879 = vunpack.c.h.b16 %v126
    %v880 = vunpack.c.l.b16 %v127
    %v881 = vunpack.c.h.b16 %v127
    %v882 = vunpack.c.l.b16 %v128
    %v883 = vunpack.c.h.b16 %v128
    %v884 = vunpack.c.l.b16 %v129
    %v885 = vunpack.c.h.b16 %v129
    %v886 = vunpack.c.l.b16 %v130
    %v887 = vunpack.c.h.b16 %v130
    %v888 = vunpack.c.l.b16 %v131
    %v889 = vunpack.c.h.b16 %v131
    %v890 = vunpack.c.l.b16 %v132
    %v891 = vunpack.c.h.b16 %v132
    %v892 = vunpack.c.l.b16 %v133
    %v893 = vunpack.c.h.b16 %v133
    %v894 = vunpack.c.l.b16 %v134
    %v895 = vunpack.c.h.b16 %v134
    %v896 = vunpack.c.l.b16 %v135
    %v897 = vunpack.c.h.b16 %v135
    %v898 = vunpack.c.l.b16 %v136
    %v899 = vunpack.c.h.b16 %v136
    %v900 = vunpack.c.l.b16 %v137
    %v901 = vunpack.c.h.b16 %v137
    %v902 = vunpack.c.l.b16 %v138
    %v903 = vunpack.c.h.b16 %v138
    %v904 = vunpack.c.l.b16 %v139
    %v905 = vunpack.c.h.b16 %v139
    %v906 = vunpack.c.l.b16 %v140
    %v907 = vunpack.c.h.b16 %v140
    %v908 = vunpack.c.l.b16 %v141
    %v909 = vunpack.c.h.b16 %v141
    %v910 = vunpack.c.l.b16 %v142
    %v911 = vunpack.c.h.b16 %v142
    %v912 = vunpack.c.l.b16 %v143
    %v913 = vunpack.c.h.b16 %v143
    %v914 = vunpack.c.l.b16 %v144
    %v915 = vunpack.c.h.b16 %v144
    %v916 = vunpack.c.l.b16 %v145
    %v917 = vunpack.c.h.b16 %v145
    %v918 = vunpack.c.l.b16 %v146
    %v919 = vunpack.c.h.b16 %v146
    %v920 = vunpack.c.l.b16 %v147
    %v921 = vunpack.c.h.b16 %v147
    %v922 = vunpack.c.l.b16 %v148
    %v923 = vunpack.c.h.b16 %v148
    %v924 = vunpack.c.l.b16 %v149
    %v925 = vunpack.c.h.b16 %v149
    %v926 = vunpack.c.l.b16 %v150
    %v927 = vunpack.c.h.b16 %v150
    %v928 = vunpack.c.l.b16 %v151
    %v929 = vunpack.c.h.b16 %v151
    %v930 = vunpack.c.l.b16 %v152
    %v931 = vunpack.c.h.b16 %v152
    %v932 = vunpack.c.l.b16 %v153
    %v933 = vunpack.c.h.b16 %v153
    %v934 = vunpack.c.l.b16 %v154
    %v935 = vunpack.c.h.b16 %v154
    %v936 = vunpack.c.l.b16 %v155
    %v937 = vunpack.c.h.b16 %v155
    %v938 = vunpack.c.l.b16 %v156
    %v939 = vunpack.c.h.b16 %v156
    %v940 = vunpack.c.l.b16 %v157
    %v941 = vunpack.c.h.b16 %v157
    %v942 = vunpack.c.l.b16 %v158
    %v943 = vunpack.c.h.b16 %v158
    %v944 = vunpack.c.l.b16 %v159
    %v945 = vunpack.c.h.b16 %v159
    %v946 = vunpack.c.l.b16 %v160
    %v947 = vunpack.c.h.b16 %v160
    %v948 = vunpack.c.l.b16 %v161
    %v949 = vunpack.c.h.b16 %v161
    %v950 = vunpack.c.l.b16 %v162
    %v951 = vunpack.c.h.b16 %v162
    %v952 = vunpack.c.l.b16 %v163
    %v953 = vunpack.c.h.b16 %v163
    %v954 = vunpack.c.l.b16 %v164
    %v955 = vunpack.c.h.b16 %v164
    %v956 = vunpack.c.l.b16 %v165
    %v957 = vunpack.c.h.b16 %v165
    %v958 = vunpack.c.l.b16 %v166
    %v959 = vunpack.c.h.b16 %v166
    %v960 = vunpack.c.l.b16 %v167
    %v961 = vunpack.c.h.b16 %v167
    %v962 = vunpack.c.l.b16 %v168
    %v963 = vunpack.c.h.b16 %v168
    %v964 = vunpack.c.l.b16 %v169
    %v965 = vunpack.c.h.b16 %v169
    %v966 = vunpack.c.l.b16 %v170
    %v967 = vunpack.c.h.b16 %v170
    %v968 = vunpack.c.l.b16 %v171
    %v969 = vunpack.c.h.b16 %v171
    %v970 = vunpack.c.l.b16 %v172
    %v971 = vunpack.c.h.b16 %v172
    %v972 = vunpack.c.l.b16 %v173
    %v973 = vunpack.c.h.b16 %v173
    %v974 = vunpack.c.l.b16 %v174
    %v975 = vunpack.c.h.b16 %v174
    %v976 = vunpack.c.l.b16 %v175
    %v977 = vunpack.c.h.b16 %v175
    %v978 = vunpack.c.l.b16 %v176
    %v979 = vunpack.c.h.b16 %v176
    %v980 = vunpack.c.l.b16 %v177
    %v981 = vunpack.c.h.b16 %v177
    %v982 = vunpack.c.l.b16 %v178
    %v983 = vunpack.c.h.b16 %v178
    %v984 = vunpack.c.l.b16 %v179
    %v985 = vunpack.c.h.b16 %v179
    %v986 = vunpack.c.l.b16 %v180
    %v987 = vunpack.c.h.b16 %v180
    %v988 = vunpack.c.l.b16 %v181
    %v989 = vunpack.c.h.b16 %v181
    %v990 = vunpack.c.l.b16 %v182
    %v991 = vunpack.c.h.b16 %v182
    %v992 = vunpack.c.l.b16 %v183
    %v993 = vunpack.c.h.b16 %v183
    %v994 = vunpack.c.l.b16 %v184
    %v995 = vunpack.c.h.b16 %v184
    %v996 = vunpack.c.l.b16 %v185
    %v997 = vunpack.c.h.b16 %v185
    %v998 = vunpack.c.l.b16 %v186
    %v999 = vunpack.c.h.b16 %v186
    %v1000 = vunpack.c.l.b16 %v187
    %v1001 = vunpack.c.h.b16 %v187
    %v1002 = vunpack.c.l.b16 %v188
    %v1003 = vunpack.c.h.b16 %v188
    %v1004 = vunpack.c.l.b16 %v189
    %v1005 = vunpack.c.h.b16 %v189
    %v1006 = vunpack.c.l.b16 %v190
    %v1007 = vunpack.c.h.b16 %v190
    %v1008 = vunpack.c.l.b16 %v191
    %v1009 = vunpack.c.h.b16 %v191
    %v1010 = vunpack.c.l.b16 %v192
    %v1011 = vunpack.c.h.b16 %v192
    %v1012 = vunpack.c.l.b16 %v193
    %v1013 = vunpack.c.h.b16 %v193
    %v1014 = vunpack.c.l.b16 %v194
    %v1015 = vunpack.c.h.b16 %v194
    %v1016 = vunpack.c.l.b16 %v195
    %v1017 = vunpack.c.h.b16 %v195
    %v1018 = vunpack.c.l.b16 %v196
    %v1019 = vunpack.c.h.b16 %v196
    %v1020 = vunpack.c.l.b16 %v197
    %v1021 = vunpack.c.h.b16 %v197
    %v1022 = vunpack.c.l.b16 %v198
    %v1023 = vunpack.c.h.b16 %v198
    %v1024 = vunpack.c.l.b16 %v199
    %v1025 = vunpack.c.h.b16 %v199
    %v1026 = vunpack.c.l.b16 %v200
    %v1027 = vunpack.c.h.b16 %v200
    %v1028 = vunpack.c.l.b16 %v201
    %v1029 = vunpack.c.h.b16 %v201
    %v1030 = vunpack.c.l.b16 %v202
    %v1031 = vunpack.c.h.b16 %v202
    %v1032 = vunpack.c.l.b16 %v203
    %v1033 = vunpack.c.h.b16 %v203
    %v1034 = vunpack.c.l.b16 %v204
    %v1035 = vunpack.c.h.b16 %v204
    %v1036 = vunpack.c.l.b16 %v205
    %v1037 = vunpack.c.h.b16 %v205
    %v1038 = vunpack.c.l.b16 %v206
    %v1039 = vunpack.c.h.b16 %v206
    %v1040 = vunpack.c.l.b16 %v207
    %v1041 = vunpack.c.h.b16 %v207
    %v1042 = vunpack.c.l.b16 %v208
    %v1043 = vunpack.c.h.b16 %v208
    %v1044 = vunpack.c.l.b16 %v209
    %v1045 = vunpack.c.h.b16 %v209
    %v1046 = vunpack.c.l.b16 %v210
    %v1047 = vunpack.c.h.b16 %v210
    %v1048 = vunpack.c.l.b16 %v211
    %v1049 = vunpack.c.h.b16 %v211
    %v1050 = vunpack.c.l.b16 %v212
    %v1051 = vunpack.c.h.b16 %v212
    %v1052 = vunpack.c.l.b16 %v213
    %v1053 = vunpack.c.h.b16 %v213
    %v1054 = vunpack.c.l.b16 %v214
    %v1055 = vunpack.c.h.b16 %v214
    %v1056 = vunpack.c.l.b16 %v215
    %v1057 = vunpack.c.h.b16 %v215
    %v1058 = vunpack.c.l.b16 %v216
    %v1059 = vunpack.c.h.b16 %v216
    %v1060 = vunpack.c.l.b16 %v217
    %v1061 = vunpack.c.h.b16 %v217
    %v1062 = vunpack.c.l.b16 %v218
    %v1063 = vunpack.c.h.b16 %v218
    %v1064 = vunpack.c.l.b16 %v219
    %v1065 = vunpack.c.h.b16 %v219
    %v1066 = vunpack.c.l.b16 %v220
    %v1067 = vunpack.c.h.b16 %v220
    %v1068 = vunpack.c.l.b16 %v221
    %v1069 = vunpack.c.h.b16 %v221
    %v1070 = vunpack.c.l.b16 %v222
    %v1071 = vunpack.c.h.b16 %v222
    %v1072 = vunpack.c.l.b16 %v223
    %v1073 = vunpack.c.h.b16 %v223
    %v1074 = vunpack.c.l.b16 %v224
    %v1075 = vunpack.c.h.b16 %v224
    %v1076 = vunpack.c.l.b16 %v225
    %v1077 = vunpack.c.h.b16 %v225
    %v1078 = vunpack.c.l.b16 %v226
    %v1079 = vunpack.c.h.b16 %v226
    %v1080 = vunpack.c.l.b16 %v227
    %v1081 = vunpack.c.h.b16 %v227
    %v1082 = vunpack.c.l.b16 %v228
    %v1083 = vunpack.c.h.b16 %v228
    %v1084 = vunpack.c.l.b16 %v229
    %v1085 = vunpack.c.h.b16 %v229
    %v1086 = vunpack.c.l.b16 %v230
    %v1087 = vunpack.c.h.b16 %v230
    %v1088 = vunpack.c.l.b16 %v231
    %v1089 = vunpack.c.h.b16 %v231
    %v1090 = vunpack.c.l.b16 %v232
    %v1091 = vunpack.c.h.b16 %v232
    %v1092 = vunpack.c.l.b16 %v233
    %v1093 = vunpack.c.h.b16 %v233
    %v1094 = vunpack.c.l.b16 %v234
    %v1095 = vunpack.c.h.b16 %v234
    %v1096 = vunpack.c.l.b16 %v235
    %v1097 = vunpack.c.h.b16 %v235
    %v1098 = vunpack.c.l.b16 %v236
    %v1099 = vunpack.c.h.b16 %v236
    %v1100 = vunpack.c.l.b16 %v237
    %v1101 = vunpack.c.h.b16 %v237
    %v1102 = vunpack.c.l.b16 %v238
    %v1103 = vunpack.c.h.b16 %v238
    %v1104 = vunpack.c.l.b16 %v239
    %v1105 = vunpack.c.h.b16 %v239
    %v1106 = vunpack.c.l.b16 %v240
    %v1107 = vunpack.c.h.b16 %v240
    %v1108 = vunpack.c.l.b16 %v241
    %v1109 = vunpack.c.h.b16 %v241
    %v1110 = vunpack.c.l.b16 %v242
    %v1111 = vunpack.c.h.b16 %v242
    %v1112 = vunpack.c.l.b16 %v243
    %v1113 = vunpack.c.h.b16 %v243
    %v1114 = vunpack.c.l.b16 %v244
    %v1115 = vunpack.c.h.b16 %v244
    %v1116 = vunpack.c.l.b16 %v245
    %v1117 = vunpack.c.h.b16 %v245
    %v1118 = vunpack.c.l.b16 %v246
    %v1119 = vunpack.c.h.b16 %v246
    %v1120 = vunpack.c.l.b16 %v247
    %v1121 = vunpack.c.h.b16 %v247
    %v1122 = vunpack.c.l.b16 %v248
    %v1123 = vunpack.c.h.b16 %v248
    %v1124 = vunpack.c.l.b16 %v249
    %v1125 = vunpack.c.h.b16 %v249
    %v1126 = vunpack.c.l.b16 %v250
    %v1127 = vunpack.c.h.b16 %v250
    %v1128 = vunpack.c.l.b16 %v251
    %v1129 = vunpack.c.h.b16 %v251
    %v1130 = vunpack.c.l.b16 %v252
    %v1131 = vunpack.c.h.b16 %v252
    %v1132 = vunpack.c.l.b16 %v253
    %v1133 = vunpack.c.h.b16 %v253
    %v1134 = vunpack.c.l.b16 %v254
    %v1135 = vunpack.c.h.b16 %v254
    %v1136 = vunpack.c.l.b16 %v255
    %v1137 = vunpack.c.h.b16 %v255
    %v1138 = vunpack.c.l.b16 %v256
    %v1139 = vunpack.c.h.b16 %v256
    %v1140 = vunpack.c.l.b16 %v257
    %v1141 = vunpack.c.h.b16 %v257
    %v1142 = vunpack.c.l.b16 %v258
    %v1143 = vunpack.c.h.b16 %v258
    %v1144 = vunpack.c.l.b16 %v259
    %v1145 = vunpack.c.h.b16 %v259
    %v1146 = vunpack.c.l.b16 %v260
    %v1147 = vunpack.c.h.b16 %v260
    %v1148 = vunpack.c.l.b16 %v261
    %v1149 = vunpack.c.h.b16 %v261
    %v1150 = vunpack.c.l.b16 %v262
    %v1151 = vunpack.c.h.b16 %v262
    %v1152 = vunpack.c.l.b16 %v263
    %v1153 = vunpack.c.h.b16 %v263
    %v1154 = vunpack.c.l.b16 %v264
    %v1155 = vunpack.c.h.b16 %v264
    %v1156 = vunpack.c.l.b16 %v265
    %v1157 = vunpack.c.h.b16 %v265
    %v1158 = vunpack.c.l.b16 %v266
    %v1159 = vunpack.c.h.b16 %v266
    %v1160 = vunpack.c.l.b16 %v267
    %v1161 = vunpack.c.h.b16 %v267
    %v1162 = vunpack.c.l.b16 %v268
    %v1163 = vunpack.c.h.b16 %v268
    %v1164 = vunpack.c.l.b16 %v269
    %v1165 = vunpack.c.h.b16 %v269
    %v1166 = vunpack.c.l.b16 %v270
    %v1167 = vunpack.c.h.b16 %v270
    %v1168 = vunpack.c.l.b16 %v271
    %v1169 = vunpack.c.h.b16 %v271
    %v1170 = vunpack.c.l.b16 %v272
    %v1171 = vunpack.c.h.b16 %v272
    %v1172 = vunpack.c.l.b16 %v273
    %v1173 = vunpack.c.h.b16 %v273
    %v1174 = vunpack.c.l.b16 %v274
    %v1175 = vunpack.c.h.b16 %v274
    %v1176 = vunpack.c.l.b16 %v275
    %v1177 = vunpack.c.h.b16 %v275
    %v1178 = vunpack.c.l.b16 %v276
    %v1179 = vunpack.c.h.b16 %v276
    %v1180 = vunpack.c.l.b16 %v277
    %v1181 = vunpack.c.h.b16 %v277
    %v1182 = vunpack.c.l.b16 %v278
    %v1183 = vunpack.c.h.b16 %v278
    %v1184 = vunpack.c.l.b16 %v279
    %v1185 = vunpack.c.h.b16 %v279
    %v1186 = vunpack.c.l.b16 %v280
    %v1187 = vunpack.c.h.b16 %v280
    %v1188 = vunpack.c.l.b16 %v281
    %v1189 = vunpack.c.h.b16 %v281
    %v1190 = vunpack.c.l.b16 %v282
    %v1191 = vunpack.c.h.b16 %v282
    %v1192 = vunpack.c.l.b16 %v283
    %v1193 = vunpack.c.h.b16 %v283
    %v1194 = vunpack.c.l.b16 %v284
    %v1195 = vunpack.c.h.b16 %v284
    %v1196 = vunpack.c.l.b16 %v285
    %v1197 = vunpack.c.h.b16 %v285
    %v1198 = vunpack.c.l.b16 %v286
    %v1199 = vunpack.c.h.b16 %v286
    %v1200 = vunpack.c.l.b16 %v287
    %v1201 = vunpack.c.h.b16 %v287
    %v1202 = vunpack.c.l.b16 %v288
    %v1203 = vunpack.c.h.b16 %v288
    %v1204 = vunpack.c.l.b16 %v289
    %v1205 = vunpack.c.h.b16 %v289
    %v1206 = vunpack.c.l.b16 %v290
    %v1207 = vunpack.c.h.b16 %v290
    %v1208 = vunpack.c.l.b16 %v291
    %v1209 = vunpack.c.h.b16 %v291
    %v1210 = vunpack.c.l.b16 %v292
    %v1211 = vunpack.c.h.b16 %v292
    %v1212 = vunpack.c.l.b16 %v293
    %v1213 = vunpack.c.h.b16 %v293
    %v1214 = vunpack.c.l.b16 %v294
    %v1215 = vunpack.c.h.b16 %v294
    %v1216 = vunpack.c.l.b16 %v295
    %v1217 = vunpack.c.h.b16 %v295
    %v1218 = vunpack.c.l.b16 %v296
    %v1219 = vunpack.c.h.b16 %v296
    %v1220 = vunpack.c.l.b16 %v297
    %v1221 = vunpack.c.h.b16 %v297
    %v1222 = vunpack.c.l.b16 %v298
    %v1223 = vunpack.c.h.b16 %v298
    %v1224 = vunpack.c.l.b16 %v299
    %v1225 = vunpack.c.h.b16 %v299
    %v1226 = vunpack.c.l.b16 %v300
    %v1227 = vunpack.c.h.b16 %v300
    %v1228 = vunpack.c.l.b16 %v301
    %v1229 = vunpack.c.h.b16 %v301
    %v1230 = vpack.c.b16 %v854, %v846
    %v1231 = vpack.c.b16 %v855, %v847
    %v1232 = vpack.c.b16 %v856, %v848
    %v1233 = vpack.c.b16 %v857, %v849
    %v1234 = vpack.c.b16 %v858, %v850
    %v1235 = vpack.c.b16 %v859, %v851
    %v1236 = vpack.c.b16 %v860, %v852
    %v1237 = vpack.c.b16 %v861, %v853
    %v1238 = vpack.c.b16 %v870, %v862
    %v1239 = vpack.c.b16 %v871, %v863
    %v1240 = vpack.c.b16 %v872, %v864
    %v1241 = vpack.c.b16 %v873, %v865
    %v1242 = vpack.c.b16 %v874, %v866
    %v1243 = vpack.c.b16 %v875, %v867
    %v1244 = vpack.c.b16 %v876, %v868
    %v1245 = vpack.c.b16 %v877, %v869
    %v1246 = vpack.c.b16 %v886, %v878
    %v1247 = vpack.c.b16 %v887, %v879
    %v1248 = vpack.c.b16 %v888, %v880
    %v1249 = vpack.c.b16 %v889, %v881
    %v1250 = vpack.c.b16 %v890, %v882
    %v1251 = vpack.c.b16 %v891, %v883
    %v1252 = vpack.c.b16 %v892, %v884
    %v1253 = vpack.c.b16 %v893, %v885
    %v1254 = vpack.c.b16 %v902, %v894
    %v1255 = vpack.c.b16 %v903, %v895
    %v1256 = vpack.c.b16 %v904, %v896
    %v1257 = vpack.c.b16 %v905, %v897
    %v1258 = vpack.c.b16 %v906, %v898
    %v1259 = vpack.c.b16 %v907, %v899
    %v1260 = vpack.c.b16 %v908, %v900
    %v1261 = vpack.c.b16 %v909, %v901
    %v1262 = vpack.c.b16 %v918, %v910
    %v1263 = vpack.c.b16 %v919, %v911
    %v1264 = vpack.c.b16 %v920, %v912
    %v1265 = vpack.c.b16 %v921, %v913
    %v1266 = vpack.c.b16 %v922, %v914
    %v1267 = vpack.c.b16 %v923, %v915
    %v1268 = vpack.c.b16 %v924, %v916
    %v1269 = vpack.c.b16 %v925, %v917
    %v1270 = vpack.c.b16 %v934, %v926
    %v1271 = vpack.c.b16 %v935, %v927
    %v1272 = vpack.c.b16 %v936, %v928
    %v1273 = vpack.c.b16 %v937, %v929
    %v1274 = vpack.c.b16 %v938, %v930
    %v1275 = vpack.c.b16 %v939, %v931
    %v1276 = vpack.c.b16 %v940, %v932
    %v1277 = vpack.c.b16 %v941, %v933
    %v1278 = vpack.c.b16 %v950, %v942
    %v1279 = vpack.c.b16 %v951, %v943
    %v1280 = vpack.c.b16 %v952, %v944
    %v1281 = vpack.c.b16 %v953, %v945
    %v1282 = vpack.c.b16 %v954, %v946
    %v1283 = vpack.c.b16 %v955, %v947
    %v1284 = vpack.c.b16 %v956, %v948
    %v1285 = vpack.c.b16 %v957, %v949
    %v1286 = vpack.c.b16 %v966, %v958
    %v1287 = vpack.c.b16 %v967, %v959
    %v1288 = vpack.c.b16 %v968, %v960
    %v1289 = vpack.c.b16 %v969, %v961
    %v1290 = vpack.c.b16 %v970, %v962
    %v1291 = vpack.c.b16 %v971, %v963
    %v1292 = vpack.c.b16 %v972, %v964
    %v1293 = vpack.c.b16 %v973, %v965
    %v1294 = vpack.c.b16 %v982, %v974
    %v1295 = vpack.c.b16 %v983, %v975
    %v1296 = vpack.c.b16 %v984, %v976
    %v1297 = vpack.c.b16 %v985, %v977
    %v1298 = vpack.c.b16 %v986, %v978
    %v1299 = vpack.c.b16 %v987, %v979
    %v1300 = vpack.c.b16 %v988, %v980
    %v1301 = vpack.c.b16 %v989, %v981
    %v1302 = vpack.c.b16 %v998, %v990
    %v1303 = vpack.c.b16 %v999, %v991
    %v1304 = vpack.c.b16 %v1000, %v992
    %v1305 = vpack.c.b16 %v1001, %v993
    %v1306 = vpack.c.b16 %v1002, %v994
    %v1307 = vpack.c.b16 %v1003, %v995
    %v1308 = vpack.c.b16 %v1004, %v996
    %v1309 = vpack.c.b16 %v1005, %v997
    %v1310 = vpack.c.b16 %v1014, %v1006
    %v1311 = vpack.c.b16 %v1015, %v1007
    %v1312 = vpack.c.b16 %v1016, %v1008
    %v1313 = vpack.c.b16 %v1017, %v1009
    %v1314 = vpack.c.b16 %v1018, %v1010
    %v1315 = vpack.c.b16 %v1019, %v1011
    %v1316 = vpack.c.b16 %v1020, %v1012
    %v1317 = vpack.c.b16 %v1021, %v1013
    %v1318 = vpack.c.b16 %v1030, %v1022
    %v1319 = vpack.c.b16 %v1031, %v1023
    %v1320 = vpack.c.b16 %v1032, %v1024
    %v1321 = vpack.c.b16 %v1033, %v1025
    %v1322 = vpack.c.b16 %v1034, %v1026
    %v1323 = vpack.c.b16 %v1035, %v1027
    %v1324 = vpack.c.b16 %v1036, %v1028
    %v1325 = vpack.c.b16 %v1037, %v1029
    %v1326 = vpack.c.b16 %v1046, %v1038
    %v1327 = vpack.c.b16 %v1047, %v1039
    %v1328 = vpack.c.b16 %v1048, %v1040
    %v1329 = vpack.c.b16 %v1049, %v1041
    %v1330 = vpack.c.b16 %v1050, %v1042
    %v1331 = vpack.c.b16 %v1051, %v1043
    %v1332 = vpack.c.b16 %v1052, %v1044
    %v1333 = vpack.c.b16 %v1053, %v1045
    %v1334 = vpack.c.b16 %v1062, %v1054
    %v1335 = vpack.c.b16 %v1063, %v1055
    %v1336 = vpack.c.b16 %v1064, %v1056
    %v1337 = vpack.c.b16 %v1065, %v1057
    %v1338 = vpack.c.b16 %v1066, %v1058
    %v1339 = vpack.c.b16 %v1067, %v1059
    %v1340 = vpack.c.b16 %v1068, %v1060
    %v1341 = vpack.c.b16 %v1069, %v1061
    %v1342 = vpack.c.b16 %v1078, %v1070
    %v1343 = vpack.c.b16 %v1079, %v1071
    %v1344 = vpack.c.b16 %v1080, %v1072
    %v1345 = vpack.c.b16 %v1081, %v1073
    %v1346 = vpack.c.b16 %v1082, %v1074
    %v1347 = vpack.c.b16 %v1083, %v1075
    %v1348 = vpack.c.b16 %v1084, %v1076
    %v1349 = vpack.c.b16 %v1085, %v1077
    %v1350 = vpack.c.b16 %v1094, %v1086
    %v1351 = vpack.c.b16 %v1095, %v1087
    %v1352 = vpack.c.b16 %v1096, %v1088
    %v1353 = vpack.c.b16 %v1097, %v1089
    %v1354 = vpack.c.b16 %v1098, %v1090
    %v1355 = vpack.c.b16 %v1099, %v1091
    %v1356 = vpack.c.b16 %v1100, %v1092
    %v1357 = vpack.c.b16 %v1101, %v1093
    %v1358 = vpack.c.b16 %v1110, %v1102
    %v1359 = vpack.c.b16 %v1111, %v1103
    %v1360 = vpack.c.b16 %v1112, %v1104
    %v1361 = vpack.c.b16 %v1113, %v1105
    %v1362 = vpack.c.b16 %v1114, %v1106
    %v1363 = vpack.c.b16 %v1115, %v1107
    %v1364 = vpack.c.b16 %v1116, %v1108
    %v1365 = vpack.c.b16 %v1117, %v1109
    %v1366 = vpack.c.b16 %v1126, %v1118
    %v1367 = vpack.c.b16 %v1127, %v1119
    %v1368 = vpack.c.b16 %v1128, %v1120
    %v1369 = vpack.c.b16 %v1129, %v1121
    %v1370 = vpack.c.b16 %v1130, %v1122
    %v1371 = vpack.c.b16 %v1131, %v1123
    %v1372 = vpack.c.b16 %v1132, %v1124
    %v1373 = vpack.c.b16 %v1133, %v1125
    %v1374 = vpack.c.b16 %v1142, %v1134
    %v1375 = vpack.c.b16 %v1143, %v1135
    %v1376 = vpack.c.b16 %v1144, %v1136
    %v1377 = vpack.c.b16 %v1145, %v1137
    %v1378 = vpack.c.b16 %v1146, %v1138
    %v1379 = vpack.c.b16 %v1147, %v1139
    %v1380 = vpack.c.b16 %v1148, %v1140
    %v1381 = vpack.c.b16 %v1149, %v1141
    %v1382 = vpack.c.b16 %v1158, %v1150
    %v1383 = vpack.c.b16 %v1159, %v1151
    %v1384 = vpack.c.b16 %v1160, %v1152
    %v1385 = vpack.c.b16 %v1161, %v1153
    %v1386 = vpack.c.b16 %v1162, %v1154
    %v1387 = vpack.c.b16 %v1163, %v1155
    %v1388 = vpack.c.b16 %v1164, %v1156
    %v1389 = vpack.c.b16 %v1165, %v1157
    %v1390 = vpack.c.b16 %v1174, %v1166
    %v1391 = vpack.c.b16 %v1175, %v1167
    %v1392 = vpack.c.b16 %v1176, %v1168
    %v1393 = vpack.c.b16 %v1177, %v1169
    %v1394 = vpack.c.b16 %v1178, %v1170
    %v1395 = vpack.c.b16 %v1179, %v1171
    %v1396 = vpack.c.b16 %v1180, %v1172
    %v1397 = vpack.c.b16 %v1181, %v1173
    %v1398 = vpack.c.b16 %v1190, %v1182
    %v1399 = vpack.c.b16 %v1191, %v1183
    %v1400 = vpack.c.b16 %v1192, %v1184
    %v1401 = vpack.c.b16 %v1193, %v1185
    %v1402 = vpack.c.b16 %v1194, %v1186
    %v1403 = vpack.c.b16 %v1195, %v1187
    %v1404 = vpack.c.b16 %v1196, %v1188
    %v1405 = vpack.c.b16 %v1197, %v1189
    %v1406 = vpack.c.b16 %v1206, %v1198
    %v1407 = vpack.c.b16 %v1207, %v1199
    %v1408 = vpack.c.b16 %v1208, %v1200
    %v1409 = vpack.c.b16 %v1209, %v1201
    %v1410 = vpack.c.b16 %v1210, %v1202
    %v1411 = vpack.c.b16 %v1211, %v1203
    %v1412 = vpack.c.b16 %v1212, %v1204
    %v1413 = vpack.c.b16 %v1213, %v1205
    %v1414 = vpack.c.b16 %v1222, %v1214
    %v1415 = vpack.c.b16 %v1223, %v1215
    %v1416 = vpack.c.b16 %v1224, %v1216
    %v1417 = vpack.c.b16 %v1225, %v1217
    %v1418 = vpack.c.b16 %v1226, %v1218
    %v1419 = vpack.c.b16 %v1227, %v1219
    %v1420 = vpack.c.b16 %v1228, %v1220
    %v1421 = vpack.c.b16 %v1229, %v1221
    %1614 = vmatprep.subr.bf16.mxu0 %v1231
    %1615 = vmatpush1.bf16.msra.mxu0 %v1230
    %1616 = vmatprep.subr.bf16.mxu0 %v1239
    %1617 = vmatpush1.bf16.msra.mxu0 %v1238
    %1618 = vmatprep.subr.bf16.mxu0 %v1247
    %1619 = vmatpush1.bf16.msra.mxu0 %v1246
    %1620 = vmatprep.subr.bf16.mxu0 %v1255
    %1621 = vmatpush1.bf16.msra.mxu0 %v1254
    %1622 = vmatprep.subr.bf16.mxu0 %v1263
    %1623 = vmatpush1.bf16.msra.mxu0 %v1262
    %1624 = vmatprep.subr.bf16.mxu0 %v1271
    %1625 = vmatpush1.bf16.msra.mxu0 %v1270
    %1626 = vmatprep.subr.bf16.mxu0 %v1279
    %1627 = vmatpush1.bf16.msra.mxu0 %v1278
    %1628 = vmatprep.subr.bf16.mxu0 %v1287
    %1629 = vmatpush1.bf16.msra.mxu0 %v1286
    %1630 = vmatprep.subr.bf16.mxu0 %v1295
    %1631 = vmatpush1.bf16.msra.mxu0 %v1294
    %1632 = vmatprep.subr.bf16.mxu0 %v1303
    %1633 = vmatpush1.bf16.msra.mxu0 %v1302
    %1634 = vmatprep.subr.bf16.mxu0 %v1311
    %1635 = vmatpush1.bf16.msra.mxu0 %v1310
    %1636 = vmatprep.subr.bf16.mxu0 %v1319
    %1637 = vmatpush1.bf16.msra.mxu0 %v1318
    %1638 = vmatprep.subr.bf16.mxu0 %v1327
    %1639 = vmatpush1.bf16.msra.mxu0 %v1326
    %1640 = vmatprep.subr.bf16.mxu0 %v1335
    %1641 = vmatpush1.bf16.msra.mxu0 %v1334
    %1642 = vmatprep.subr.bf16.mxu0 %v1343
    %1643 = vmatpush1.bf16.msra.mxu0 %v1342
    %1644 = vmatprep.subr.bf16.mxu0 %v1351
    %1645 = vmatpush1.bf16.msra.mxu0 %v1350
    %1646 = vmatprep.mubr.bf16.mxu0 %v652
    %1647 = vmatmul.mubr.bf16.gmra.mrb[0].mxu0 %v651
    %v1648 = vpop.f32.mrb[0].mxu0
    %v1649 = vadd.f32 %v563, %v1648
    %v1650 = vpop.f32.mrb[0].mxu0
    %v1651 = vadd.f32 %v567, %v1650
    %v1652 = vpop.f32.mrb[0].mxu0
    %v1653 = vpop.f32.mrb[0].mxu0
    %1654 = vdwg.mxu0
    %1655 = vmatprep.subr.bf16.mxu0 %v1359
    %1656 = vmatpush1.bf16.msra.mxu0 %v1358
    %1657 = vmatprep.subr.bf16.mxu0 %v1367
    %1658 = vmatpush1.bf16.msra.mxu0 %v1366
    %1659 = vmatprep.subr.bf16.mxu0 %v1375
    %1660 = vmatpush1.bf16.msra.mxu0 %v1374
    %1661 = vmatprep.subr.bf16.mxu0 %v1383
    %1662 = vmatpush1.bf16.msra.mxu0 %v1382
    %1663 = vmatprep.subr.bf16.mxu0 %v1391
    %1664 = vmatpush1.bf16.msra.mxu0 %v1390
    %1665 = vmatprep.subr.bf16.mxu0 %v1399
    %1666 = vmatpush1.bf16.msra.mxu0 %v1398
    %1667 = vmatprep.subr.bf16.mxu0 %v1407
    %1668 = vmatpush1.bf16.msra.mxu0 %v1406
    %1669 = vmatprep.subr.bf16.mxu0 %v1415
    %1670 = vmatpush1.bf16.msra.mxu0 %v1414
    %1671 = vmatprep.subr.bf16.mxu0 0
    %1672 = vmatpush1.bf16.msra.mxu0 0
    %1673 = vmatprep.subr.bf16.mxu0 0
    %1674 = vmatpush1.bf16.msra.mxu0 0
    %1675 = vmatprep.subr.bf16.mxu0 0
    %1676 = vmatpush1.bf16.msra.mxu0 0
    %1677 = vmatprep.subr.bf16.mxu0 0
    %1678 = vmatpush1.bf16.msra.mxu0 0
    %1679 = vmatprep.subr.bf16.mxu0 0
    %1680 = vmatpush1.bf16.msra.mxu0 0
    %1681 = vmatprep.subr.bf16.mxu0 0
    %1682 = vmatpush1.bf16.msra.mxu0 0
    %1683 = vmatprep.subr.bf16.mxu0 0
    %1684 = vmatpush1.bf16.msra.mxu0 0
    %1685 = vmatprep.subr.bf16.mxu0 0
    %1686 = vmatpush1.bf16.msra.mxu0 0
    %1687 = vmatprep.mubr.bf16.mxu0 0
    %1688 = vmatmul.mubr.bf16.gmra.mrb[0].mxu0 %v653
    %v1689 = vpop.f32.mrb[0].mxu0
    %v1690 = vadd.f32 %v1649, %v1689
    %v1691 = vpop.f32.mrb[0].mxu0
    %v1692 = vadd.f32 %v1651, %v1691
    %v1693 = vpop.f32.mrb[0].mxu0
    %v1694 = vpop.f32.mrb[0].mxu0
    %1695 = vdwg.mxu0
    %1696 = vmatprep.subr.bf16.mxu0 %v1233
    %1697 = vmatpush1.bf16.msra.mxu0 %v1232
    %1698 = vmatprep.subr.bf16.mxu0 %v1241
    %1699 = vmatpush1.bf16.msra.mxu0 %v1240
    %1700 = vmatprep.subr.bf16.mxu0 %v1249
    %1701 = vmatpush1.bf16.msra.mxu0 %v1248
    %1702 = vmatprep.subr.bf16.mxu0 %v1257
    %1703 = vmatpush1.bf16.msra.mxu0 %v1256
    %1704 = vmatprep.subr.bf16.mxu0 %v1265
    %1705 = vmatpush1.bf16.msra.mxu0 %v1264
    %1706 = vmatprep.subr.bf16.mxu0 %v1273
    %1707 = vmatpush1.bf16.msra.mxu0 %v1272
    %1708 = vmatprep.subr.bf16.mxu0 %v1281
    %1709 = vmatpush1.bf16.msra.mxu0 %v1280
    %1710 = vmatprep.subr.bf16.mxu0 %v1289
    %1711 = vmatpush1.bf16.msra.mxu0 %v1288
    %1712 = vmatprep.subr.bf16.mxu0 %v1297
    %1713 = vmatpush1.bf16.msra.mxu0 %v1296
    %1714 = vmatprep.subr.bf16.mxu0 %v1305
    %1715 = vmatpush1.bf16.msra.mxu0 %v1304
    %1716 = vmatprep.subr.bf16.mxu0 %v1313
    %1717 = vmatpush1.bf16.msra.mxu0 %v1312
    %1718 = vmatprep.subr.bf16.mxu0 %v1321
    %1719 = vmatpush1.bf16.msra.mxu0 %v1320
    %1720 = vmatprep.subr.bf16.mxu0 %v1329
    %1721 = vmatpush1.bf16.msra.mxu0 %v1328
    %1722 = vmatprep.subr.bf16.mxu0 %v1337
    %1723 = vmatpush1.bf16.msra.mxu0 %v1336
    %1724 = vmatprep.subr.bf16.mxu0 %v1345
    %1725 = vmatpush1.bf16.msra.mxu0 %v1344
    %1726 = vmatprep.subr.bf16.mxu0 %v1353
    %1727 = vmatpush1.bf16.msra.mxu0 %v1352
    %1728 = vmatprep.mubr.bf16.mxu0 %v652
    %1729 = vmatmul.mubr.bf16.gmra.mrb[0].mxu0 %v651
    %v1730 = vpop.f32.mrb[0].mxu0
    %v1731 = vadd.f32 %v571, %v1730
    %v1732 = vpop.f32.mrb[0].mxu0
    %v1733 = vadd.f32 %v575, %v1732
    %v1734 = vpop.f32.mrb[0].mxu0
    %v1735 = vpop.f32.mrb[0].mxu0
    %1736 = vdwg.mxu0
    %1737 = vmatprep.subr.bf16.mxu0 %v1361
    %1738 = vmatpush1.bf16.msra.mxu0 %v1360
    %1739 = vmatprep.subr.bf16.mxu0 %v1369
    %1740 = vmatpush1.bf16.msra.mxu0 %v1368
    %1741 = vmatprep.subr.bf16.mxu0 %v1377
    %1742 = vmatpush1.bf16.msra.mxu0 %v1376
    %1743 = vmatprep.subr.bf16.mxu0 %v1385
    %1744 = vmatpush1.bf16.msra.mxu0 %v1384
    %1745 = vmatprep.subr.bf16.mxu0 %v1393
    %1746 = vmatpush1.bf16.msra.mxu0 %v1392
    %1747 = vmatprep.subr.bf16.mxu0 %v1401
    %1748 = vmatpush1.bf16.msra.mxu0 %v1400
    %1749 = vmatprep.subr.bf16.mxu0 %v1409
    %1750 = vmatpush1.bf16.msra.mxu0 %v1408
    %1751 = vmatprep.subr.bf16.mxu0 %v1417
    %1752 = vmatpush1.bf16.msra.mxu0 %v1416
    %1753 = vmatprep.subr.bf16.mxu0 0
    %1754 = vmatpush1.bf16.msra.mxu0 0
    %1755 = vmatprep.subr.bf16.mxu0 0
    %1756 = vmatpush1.bf16.msra.mxu0 0
    %1757 = vmatprep.subr.bf16.mxu0 0
    %1758 = vmatpush1.bf16.msra.mxu0 0
    %1759 = vmatprep.subr.bf16.mxu0 0
    %1760 = vmatpush1.bf16.msra.mxu0 0
    %1761 = vmatprep.subr.bf16.mxu0 0
    %1762 = vmatpush1.bf16.msra.mxu0 0
    %1763 = vmatprep.subr.bf16.mxu0 0
    %1764 = vmatpush1.bf16.msra.mxu0 0
    %1765 = vmatprep.subr.bf16.mxu0 0
    %1766 = vmatpush1.bf16.msra.mxu0 0
    %1767 = vmatprep.subr.bf16.mxu0 0
    %1768 = vmatpush1.bf16.msra.mxu0 0
    %1769 = vmatprep.mubr.bf16.mxu0 0
    %1770 = vmatmul.mubr.bf16.gmra.mrb[0].mxu0 %v653
    %v1771 = vpop.f32.mrb[0].mxu0
    %v1772 = vadd.f32 %v1731, %v1771
    %v1773 = vpop.f32.mrb[0].mxu0
    %v1774 = vadd.f32 %v1733, %v1773
    %v1775 = vpop.f32.mrb[0].mxu0
    %v1776 = vpop.f32.mrb[0].mxu0
    %1777 = vdwg.mxu0
    %1778 = vmatprep.subr.bf16.mxu0 %v1235
    %1779 = vmatpush1.bf16.msra.mxu0 %v1234
    %1780 = vmatprep.subr.bf16.mxu0 %v1243
    %1781 = vmatpush1.bf16.msra.mxu0 %v1242
    %1782 = vmatprep.subr.bf16.mxu0 %v1251
    %1783 = vmatpush1.bf16.msra.mxu0 %v1250
    %1784 = vmatprep.subr.bf16.mxu0 %v1259
    %1785 = vmatpush1.bf16.msra.mxu0 %v1258
    %1786 = vmatprep.subr.bf16.mxu0 %v1267
    %1787 = vmatpush1.bf16.msra.mxu0 %v1266
    %1788 = vmatprep.subr.bf16.mxu0 %v1275
    %1789 = vmatpush1.bf16.msra.mxu0 %v1274
    %1790 = vmatprep.subr.bf16.mxu0 %v1283
    %1791 = vmatpush1.bf16.msra.mxu0 %v1282
    %1792 = vmatprep.subr.bf16.mxu0 %v1291
    %1793 = vmatpush1.bf16.msra.mxu0 %v1290
    %1794 = vmatprep.subr.bf16.mxu0 %v1299
    %1795 = vmatpush1.bf16.msra.mxu0 %v1298
    %1796 = vmatprep.subr.bf16.mxu0 %v1307
    %1797 = vmatpush1.bf16.msra.mxu0 %v1306
    %1798 = vmatprep.subr.bf16.mxu0 %v1315
    %1799 = vmatpush1.bf16.msra.mxu0 %v1314
    %1800 = vmatprep.subr.bf16.mxu0 %v1323
    %1801 = vmatpush1.bf16.msra.mxu0 %v1322
    %1802 = vmatprep.subr.bf16.mxu0 %v1331
    %1803 = vmatpush1.bf16.msra.mxu0 %v1330
    %1804 = vmatprep.subr.bf16.mxu0 %v1339
    %1805 = vmatpush1.bf16.msra.mxu0 %v1338
    %1806 = vmatprep.subr.bf16.mxu0 %v1347
    %1807 = vmatpush1.bf16.msra.mxu0 %v1346
    %1808 = vmatprep.subr.bf16.mxu0 %v1355
    %1809 = vmatpush1.bf16.msra.mxu0 %v1354
    %1810 = vmatprep.mubr.bf16.mxu0 %v652
    %1811 = vmatmul.mubr.bf16.gmra.mrb[0].mxu0 %v651
    %v1812 = vpop.f32.mrb[0].mxu0
    %v1813 = vadd.f32 %v579, %v1812
    %v1814 = vpop.f32.mrb[0].mxu0
    %v1815 = vadd.f32 %v583, %v1814
    %v1816 = vpop.f32.mrb[0].mxu0
    %v1817 = vpop.f32.mrb[0].mxu0
    %1818 = vdwg.mxu0
    %1819 = vmatprep.subr.bf16.mxu0 %v1363
    %1820 = vmatpush1.bf16.msra.mxu0 %v1362
    %1821 = vmatprep.subr.bf16.mxu0 %v1371
    %1822 = vmatpush1.bf16.msra.mxu0 %v1370
    %1823 = vmatprep.subr.bf16.mxu0 %v1379
    %1824 = vmatpush1.bf16.msra.mxu0 %v1378
    %1825 = vmatprep.subr.bf16.mxu0 %v1387
    %1826 = vmatpush1.bf16.msra.mxu0 %v1386
    %1827 = vmatprep.subr.bf16.mxu0 %v1395
    %1828 = vmatpush1.bf16.msra.mxu0 %v1394
    %1829 = vmatprep.subr.bf16.mxu0 %v1403
    %1830 = vmatpush1.bf16.msra.mxu0 %v1402
    %1831 = vmatprep.subr.bf16.mxu0 %v1411
    %1832 = vmatpush1.bf16.msra.mxu0 %v1410
    %1833 = vmatprep.subr.bf16.mxu0 %v1419
    %1834 = vmatpush1.bf16.msra.mxu0 %v1418
    %1835 = vmatprep.subr.bf16.mxu0 0
    %1836 = vmatpush1.bf16.msra.mxu0 0
    %1837 = vmatprep.subr.bf16.mxu0 0
    %1838 = vmatpush1.bf16.msra.mxu0 0
    %1839 = vmatprep.subr.bf16.mxu0 0
    %1840 = vmatpush1.bf16.msra.mxu0 0
    %1841 = vmatprep.subr.bf16.mxu0 0
    %1842 = vmatpush1.bf16.msra.mxu0 0
    %1843 = vmatprep.subr.bf16.mxu0 0
    %1844 = vmatpush1.bf16.msra.mxu0 0
    %1845 = vmatprep.subr.bf16.mxu0 0
    %1846 = vmatpush1.bf16.msra.mxu0 0
    %1847 = vmatprep.subr.bf16.mxu0 0
    %1848 = vmatpush1.bf16.msra.mxu0 0
    %1849 = vmatprep.subr.bf16.mxu0 0
    %1850 = vmatpush1.bf16.msra.mxu0 0
    %1851 = vmatprep.mubr.bf16.mxu0 0
    %1852 = vmatmul.mubr.bf16.gmra.mrb[0].mxu0 %v653
    %v1853 = vpop.f32.mrb[0].mxu0
    %v1854 = vadd.f32 %v1813, %v1853
    %v1855 = vpop.f32.mrb[0].mxu0
    %v1856 = vadd.f32 %v1815, %v1855
    %v1857 = vpop.f32.mrb[0].mxu0
    %v1858 = vpop.f32.mrb[0].mxu0
    %1859 = vdwg.mxu0
    %1860 = vmatprep.subr.bf16.mxu0 %v1237
    %1861 = vmatpush1.bf16.msra.mxu0 %v1236
    %1862 = vmatprep.subr.bf16.mxu0 %v1245
    %1863 = vmatpush1.bf16.msra.mxu0 %v1244
    %1864 = vmatprep.subr.bf16.mxu0 %v1253
    %1865 = vmatpush1.bf16.msra.mxu0 %v1252
    %1866 = vmatprep.subr.bf16.mxu0 %v1261
    %1867 = vmatpush1.bf16.msra.mxu0 %v1260
    %1868 = vmatprep.subr.bf16.mxu0 %v1269
    %1869 = vmatpush1.bf16.msra.mxu0 %v1268
    %1870 = vmatprep.subr.bf16.mxu0 %v1277
    %1871 = vmatpush1.bf16.msra.mxu0 %v1276
    %1872 = vmatprep.subr.bf16.mxu0 %v1285
    %1873 = vmatpush1.bf16.msra.mxu0 %v1284
    %1874 = vmatprep.subr.bf16.mxu0 %v1293
    %1875 = vmatpush1.bf16.msra.mxu0 %v1292
    %1876 = vmatprep.subr.bf16.mxu0 %v1301
    %1877 = vmatpush1.bf16.msra.mxu0 %v1300
    %1878 = vmatprep.subr.bf16.mxu0 %v1309
    %1879 = vmatpush1.bf16.msra.mxu0 %v1308
    %1880 = vmatprep.subr.bf16.mxu0 %v1317
    %1881 = vmatpush1.bf16.msra.mxu0 %v1316
    %1882 = vmatprep.subr.bf16.mxu0 %v1325
    %1883 = vmatpush1.bf16.msra.mxu0 %v1324
    %1884 = vmatprep.subr.bf16.mxu0 %v1333
    %1885 = vmatpush1.bf16.msra.mxu0 %v1332
    %1886 = vmatprep.subr.bf16.mxu0 %v1341
    %1887 = vmatpush1.bf16.msra.mxu0 %v1340
    %1888 = vmatprep.subr.bf16.mxu0 %v1349
    %1889 = vmatpush1.bf16.msra.mxu0 %v1348
    %1890 = vmatprep.subr.bf16.mxu0 %v1357
    %1891 = vmatpush1.bf16.msra.mxu0 %v1356
    %1892 = vmatprep.mubr.bf16.mxu0 %v652
    %1893 = vmatmul.mubr.bf16.gmra.mrb[0].mxu0 %v651
    %v1894 = vpop.f32.mrb[0].mxu0
    %v1895 = vadd.f32 %v587, %v1894
    %v1896 = vpop.f32.mrb[0].mxu0
    %v1897 = vadd.f32 %v591, %v1896
    %v1898 = vpop.f32.mrb[0].mxu0
    %v1899 = vpop.f32.mrb[0].mxu0
    %1900 = vdwg.mxu0
    %1901 = vmatprep.subr.bf16.mxu0 %v1365
    %1902 = vmatpush1.bf16.msra.mxu0 %v1364
    %1903 = vmatprep.subr.bf16.mxu0 %v1373
    %1904 = vmatpush1.bf16.msra.mxu0 %v1372
    %1905 = vmatprep.subr.bf16.mxu0 %v1381
    %1906 = vmatpush1.bf16.msra.mxu0 %v1380
    %1907 = vmatprep.subr.bf16.mxu0 %v1389
    %1908 = vmatpush1.bf16.msra.mxu0 %v1388
    %1909 = vmatprep.subr.bf16.mxu0 %v1397
    %1910 = vmatpush1.bf16.msra.mxu0 %v1396
    %1911 = vmatprep.subr.bf16.mxu0 %v1405
    %1912 = vmatpush1.bf16.msra.mxu0 %v1404
    %1913 = vmatprep.subr.bf16.mxu0 %v1413
    %1914 = vmatpush1.bf16.msra.mxu0 %v1412
    %1915 = vmatprep.subr.bf16.mxu0 %v1421
    %1916 = vmatpush1.bf16.msra.mxu0 %v1420
    %1917 = vmatprep.subr.bf16.mxu0 0
    %1918 = vmatpush1.bf16.msra.mxu0 0
    %1919 = vmatprep.subr.bf16.mxu0 0
    %1920 = vmatpush1.bf16.msra.mxu0 0
    %1921 = vmatprep.subr.bf16.mxu0 0
    %1922 = vmatpush1.bf16.msra.mxu0 0
    %1923 = vmatprep.subr.bf16.mxu0 0
    %1924 = vmatpush1.bf16.msra.mxu0 0
    %1925 = vmatprep.subr.bf16.mxu0 0
    %1926 = vmatpush1.bf16.msra.mxu0 0
    %1927 = vmatprep.subr.bf16.mxu0 0
    %1928 = vmatpush1.bf16.msra.mxu0 0
    %1929 = vmatprep.subr.bf16.mxu0 0
    %1930 = vmatpush1.bf16.msra.mxu0 0
    %1931 = vmatprep.subr.bf16.mxu0 0
    %1932 = vmatpush1.bf16.msra.mxu0 0
    %1933 = vmatprep.mubr.bf16.mxu0 0
    %1934 = vmatmul.mubr.bf16.gmra.mrb[0].mxu0 %v653
    %v1935 = vpop.f32.mrb[0].mxu0
    %v1936 = vadd.f32 %v1895, %v1935
    %v1937 = vpop.f32.mrb[0].mxu0
    %v1938 = vadd.f32 %v1897, %v1937
    %v1939 = vpop.f32.mrb[0].mxu0
    %v1940 = vpop.f32.mrb[0].mxu0
    %1941 = vdwg.mxu0
    %v1942 = vxor.u32 %v1690, 2147483648
    %v1943 = vxor.u32 %v1692, 2147483648
    %v1944 = vmul.f32 %v1942, 1.442695
    %v1945 = vpow.pop %v1944
    %v1946 = vmul.f32 %v1943, 1.442695
    %v1947 = vpow.pop %v1946
    %v1948 = vadd.f32 %v1945, 1.0
    %v1949 = vadd.f32 %v1947, 1.0
    %v1950 = vrcp.pop %v1948
    %v1951 = vmul.f32 1.0, %v1950
    %v1952 = vrcp.pop %v1949
    %v1953 = vmul.f32 1.0, %v1952
    %v1954 = vxor.u32 %v1772, 2147483648
    %v1955 = vxor.u32 %v1774, 2147483648
    %v1956 = vmul.f32 %v1954, 1.442695
    %v1957 = vpow.pop %v1956
    %v1958 = vmul.f32 %v1955, 1.442695
    %v1959 = vpow.pop %v1958
    %v1960 = vadd.f32 %v1957, 1.0
    %v1961 = vadd.f32 %v1959, 1.0
    %v1962 = vrcp.pop %v1960
    %v1963 = vmul.f32 1.0, %v1962
    %v1964 = vrcp.pop %v1961
    %v1965 = vmul.f32 1.0, %v1964
    %v1966 = vtanh.pop %v1854
    %v1967 = vtanh.pop %v1856
    %v1968 = vxor.u32 %v1936, 2147483648
    %v1969 = vxor.u32 %v1938, 2147483648
    %v1970 = vmul.f32 %v1968, 1.442695
    %v1971 = vpow.pop %v1970
    %v1972 = vmul.f32 %v1969, 1.442695
    %v1973 = vpow.pop %v1972
    %v1974 = vadd.f32 %v1971, 1.0
    %v1975 = vadd.f32 %v1973, 1.0
    %v1976 = vrcp.pop %v1974
    %v1977 = vmul.f32 1.0, %v1976
    %v1978 = vrcp.pop %v1975
    %v1979 = vmul.f32 1.0, %v1978
    %v1980 = vmul.f32 %v1963, %v644
    %v1981 = vmul.f32 %v1965, %v645
    %v1982 = vmul.f32 %v1951, %v1966
    %v1983 = vmul.f32 %v1953, %v1967
    %v1984 = vadd.f32 %v1980, %v1982
    %v1985 = vadd.f32 %v1981, %v1983
    %v1986 = vtanh.pop %v1984
    %v1987 = vtanh.pop %v1985
    %v1988 = vmul.f32 %v1977, %v1986
    %v1989 = vmul.f32 %v1979, %v1987
    %v1990 = vpack.c.bf16 %v1988, %v1988
    %v1991 = vpack.c.bf16 %v1989, %v1989
    %v1992 = vpack.c.bf16 %v646, %v646
    %v1993 = vpack.c.bf16 %v647, %v647
    %v2250 = vunpack.c.l.b16 %v302
    %v2251 = vunpack.c.h.b16 %v302
    %v2252 = vunpack.c.l.b16 %v303
    %v2253 = vunpack.c.h.b16 %v303
    %v2254 = vunpack.c.l.b16 %v304
    %v2255 = vunpack.c.h.b16 %v304
    %v2256 = vunpack.c.l.b16 %v305
    %v2257 = vunpack.c.h.b16 %v305
    %v2258 = vunpack.c.l.b16 %v306
    %v2259 = vunpack.c.h.b16 %v306
    %v2260 = vunpack.c.l.b16 %v307
    %v2261 = vunpack.c.h.b16 %v307
    %v2262 = vunpack.c.l.b16 %v308
    %v2263 = vunpack.c.h.b16 %v308
    %v2264 = vunpack.c.l.b16 %v309
    %v2265 = vunpack.c.h.b16 %v309
    %v2266 = vunpack.c.l.b16 %v310
    %v2267 = vunpack.c.h.b16 %v310
    %v2268 = vunpack.c.l.b16 %v311
    %v2269 = vunpack.c.h.b16 %v311
    %v2270 = vunpack.c.l.b16 %v312
    %v2271 = vunpack.c.h.b16 %v312
    %v2272 = vunpack.c.l.b16 %v313
    %v2273 = vunpack.c.h.b16 %v313
    %v2274 = vunpack.c.l.b16 %v314
    %v2275 = vunpack.c.h.b16 %v314
    %v2276 = vunpack.c.l.b16 %v315
    %v2277 = vunpack.c.h.b16 %v315
    %v2278 = vunpack.c.l.b16 %v316
    %v2279 = vunpack.c.h.b16 %v316
    %v2280 = vunpack.c.l.b16 %v317
    %v2281 = vunpack.c.h.b16 %v317
    %v2282 = vunpack.c.l.b16 %v318
    %v2283 = vunpack.c.h.b16 %v318
    %v2284 = vunpack.c.l.b16 %v319
    %v2285 = vunpack.c.h.b16 %v319
    %v2286 = vunpack.c.l.b16 %v320
    %v2287 = vunpack.c.h.b16 %v320
    %v2288 = vunpack.c.l.b16 %v321
    %v2289 = vunpack.c.h.b16 %v321
    %v2290 = vunpack.c.l.b16 %v322
    %v2291 = vunpack.c.h.b16 %v322
    %v2292 = vunpack.c.l.b16 %v323
    %v2293 = vunpack.c.h.b16 %v323
    %v2294 = vunpack.c.l.b16 %v324
    %v2295 = vunpack.c.h.b16 %v324
    %v2296 = vunpack.c.l.b16 %v325
    %v2297 = vunpack.c.h.b16 %v325
    %v2298 = vunpack.c.l.b16 %v326
    %v2299 = vunpack.c.h.b16 %v326
    %v2300 = vunpack.c.l.b16 %v327
    %v2301 = vunpack.c.h.b16 %v327
    %v2302 = vunpack.c.l.b16 %v328
    %v2303 = vunpack.c.h.b16 %v328
    %v2304 = vunpack.c.l.b16 %v329
    %v2305 = vunpack.c.h.b16 %v329
    %v2306 = vunpack.c.l.b16 %v330
    %v2307 = vunpack.c.h.b16 %v330
    %v2308 = vunpack.c.l.b16 %v331
    %v2309 = vunpack.c.h.b16 %v331
    %v2310 = vunpack.c.l.b16 %v332
    %v2311 = vunpack.c.h.b16 %v332
    %v2312 = vunpack.c.l.b16 %v333
    %v2313 = vunpack.c.h.b16 %v333
    %v2314 = vunpack.c.l.b16 %v334
    %v2315 = vunpack.c.h.b16 %v334
    %v2316 = vunpack.c.l.b16 %v335
    %v2317 = vunpack.c.h.b16 %v335
    %v2318 = vunpack.c.l.b16 %v336
    %v2319 = vunpack.c.h.b16 %v336
    %v2320 = vunpack.c.l.b16 %v337
    %v2321 = vunpack.c.h.b16 %v337
    %v2322 = vunpack.c.l.b16 %v338
    %v2323 = vunpack.c.h.b16 %v338
    %v2324 = vunpack.c.l.b16 %v339
    %v2325 = vunpack.c.h.b16 %v339
    %v2326 = vunpack.c.l.b16 %v340
    %v2327 = vunpack.c.h.b16 %v340
    %v2328 = vunpack.c.l.b16 %v341
    %v2329 = vunpack.c.h.b16 %v341
    %v2330 = vunpack.c.l.b16 %v342
    %v2331 = vunpack.c.h.b16 %v342
    %v2332 = vunpack.c.l.b16 %v343
    %v2333 = vunpack.c.h.b16 %v343
    %v2334 = vunpack.c.l.b16 %v344
    %v2335 = vunpack.c.h.b16 %v344
    %v2336 = vunpack.c.l.b16 %v345
    %v2337 = vunpack.c.h.b16 %v345
    %v2338 = vunpack.c.l.b16 %v346
    %v2339 = vunpack.c.h.b16 %v346
    %v2340 = vunpack.c.l.b16 %v347
    %v2341 = vunpack.c.h.b16 %v347
    %v2342 = vunpack.c.l.b16 %v348
    %v2343 = vunpack.c.h.b16 %v348
    %v2344 = vunpack.c.l.b16 %v349
    %v2345 = vunpack.c.h.b16 %v349
    %v2346 = vunpack.c.l.b16 %v350
    %v2347 = vunpack.c.h.b16 %v350
    %v2348 = vunpack.c.l.b16 %v351
    %v2349 = vunpack.c.h.b16 %v351
    %v2350 = vunpack.c.l.b16 %v352
    %v2351 = vunpack.c.h.b16 %v352
    %v2352 = vunpack.c.l.b16 %v353
    %v2353 = vunpack.c.h.b16 %v353
    %v2354 = vunpack.c.l.b16 %v354
    %v2355 = vunpack.c.h.b16 %v354
    %v2356 = vunpack.c.l.b16 %v355
    %v2357 = vunpack.c.h.b16 %v355
    %v2358 = vunpack.c.l.b16 %v356
    %v2359 = vunpack.c.h.b16 %v356
    %v2360 = vunpack.c.l.b16 %v357
    %v2361 = vunpack.c.h.b16 %v357
    %v2362 = vunpack.c.l.b16 %v358
    %v2363 = vunpack.c.h.b16 %v358
    %v2364 = vunpack.c.l.b16 %v359
    %v2365 = vunpack.c.h.b16 %v359
    %v2366 = vunpack.c.l.b16 %v360
    %v2367 = vunpack.c.h.b16 %v360
    %v2368 = vunpack.c.l.b16 %v361
    %v2369 = vunpack.c.h.b16 %v361
    %v2370 = vunpack.c.l.b16 %v362
    %v2371 = vunpack.c.h.b16 %v362
    %v2372 = vunpack.c.l.b16 %v363
    %v2373 = vunpack.c.h.b16 %v363
    %v2374 = vunpack.c.l.b16 %v364
    %v2375 = vunpack.c.h.b16 %v364
    %v2376 = vunpack.c.l.b16 %v365
    %v2377 = vunpack.c.h.b16 %v365
    %v2378 = vunpack.c.l.b16 %v366
    %v2379 = vunpack.c.h.b16 %v366
    %v2380 = vunpack.c.l.b16 %v367
    %v2381 = vunpack.c.h.b16 %v367
    %v2382 = vunpack.c.l.b16 %v368
    %v2383 = vunpack.c.h.b16 %v368
    %v2384 = vunpack.c.l.b16 %v369
    %v2385 = vunpack.c.h.b16 %v369
    %v2386 = vunpack.c.l.b16 %v370
    %v2387 = vunpack.c.h.b16 %v370
    %v2388 = vunpack.c.l.b16 %v371
    %v2389 = vunpack.c.h.b16 %v371
    %v2390 = vunpack.c.l.b16 %v372
    %v2391 = vunpack.c.h.b16 %v372
    %v2392 = vunpack.c.l.b16 %v373
    %v2393 = vunpack.c.h.b16 %v373
    %v2394 = vunpack.c.l.b16 %v374
    %v2395 = vunpack.c.h.b16 %v374
    %v2396 = vunpack.c.l.b16 %v375
    %v2397 = vunpack.c.h.b16 %v375
    %v2398 = vunpack.c.l.b16 %v376
    %v2399 = vunpack.c.h.b16 %v376
    %v2400 = vunpack.c.l.b16 %v377
    %v2401 = vunpack.c.h.b16 %v377
    %v2402 = vunpack.c.l.b16 %v378
    %v2403 = vunpack.c.h.b16 %v378
    %v2404 = vunpack.c.l.b16 %v379
    %v2405 = vunpack.c.h.b16 %v379
    %v2406 = vunpack.c.l.b16 %v380
    %v2407 = vunpack.c.h.b16 %v380
    %v2408 = vunpack.c.l.b16 %v381
    %v2409 = vunpack.c.h.b16 %v381
    %v2410 = vunpack.c.l.b16 %v382
    %v2411 = vunpack.c.h.b16 %v382
    %v2412 = vunpack.c.l.b16 %v383
    %v2413 = vunpack.c.h.b16 %v383
    %v2414 = vunpack.c.l.b16 %v384
    %v2415 = vunpack.c.h.b16 %v384
    %v2416 = vunpack.c.l.b16 %v385
    %v2417 = vunpack.c.h.b16 %v385
    %v2418 = vunpack.c.l.b16 %v386
    %v2419 = vunpack.c.h.b16 %v386
    %v2420 = vunpack.c.l.b16 %v387
    %v2421 = vunpack.c.h.b16 %v387
    %v2422 = vunpack.c.l.b16 %v388
    %v2423 = vunpack.c.h.b16 %v388
    %v2424 = vunpack.c.l.b16 %v389
    %v2425 = vunpack.c.h.b16 %v389
    %v2426 = vunpack.c.l.b16 %v390
    %v2427 = vunpack.c.h.b16 %v390
    %v2428 = vunpack.c.l.b16 %v391
    %v2429 = vunpack.c.h.b16 %v391
    %v2430 = vunpack.c.l.b16 %v392
    %v2431 = vunpack.c.h.b16 %v392
    %v2432 = vunpack.c.l.b16 %v393
    %v2433 = vunpack.c.h.b16 %v393
    %v2434 = vunpack.c.l.b16 %v394
    %v2435 = vunpack.c.h.b16 %v394
    %v2436 = vunpack.c.l.b16 %v395
    %v2437 = vunpack.c.h.b16 %v395
    %v2438 = vunpack.c.l.b16 %v396
    %v2439 = vunpack.c.h.b16 %v396
    %v2440 = vunpack.c.l.b16 %v397
    %v2441 = vunpack.c.h.b16 %v397
    %v2442 = vunpack.c.l.b16 %v398
    %v2443 = vunpack.c.h.b16 %v398
    %v2444 = vunpack.c.l.b16 %v399
    %v2445 = vunpack.c.h.b16 %v399
    %v2446 = vunpack.c.l.b16 %v400
    %v2447 = vunpack.c.h.b16 %v400
    %v2448 = vunpack.c.l.b16 %v401
    %v2449 = vunpack.c.h.b16 %v401
    %v2450 = vunpack.c.l.b16 %v402
    %v2451 = vunpack.c.h.b16 %v402
    %v2452 = vunpack.c.l.b16 %v403
    %v2453 = vunpack.c.h.b16 %v403
    %v2454 = vunpack.c.l.b16 %v404
    %v2455 = vunpack.c.h.b16 %v404
    %v2456 = vunpack.c.l.b16 %v405
    %v2457 = vunpack.c.h.b16 %v405
    %v2458 = vunpack.c.l.b16 %v406
    %v2459 = vunpack.c.h.b16 %v406
    %v2460 = vunpack.c.l.b16 %v407
    %v2461 = vunpack.c.h.b16 %v407
    %v2462 = vunpack.c.l.b16 %v408
    %v2463 = vunpack.c.h.b16 %v408
    %v2464 = vunpack.c.l.b16 %v409
    %v2465 = vunpack.c.h.b16 %v409
    %v2466 = vunpack.c.l.b16 %v410
    %v2467 = vunpack.c.h.b16 %v410
    %v2468 = vunpack.c.l.b16 %v411
    %v2469 = vunpack.c.h.b16 %v411
    %v2470 = vunpack.c.l.b16 %v412
    %v2471 = vunpack.c.h.b16 %v412
    %v2472 = vunpack.c.l.b16 %v413
    %v2473 = vunpack.c.h.b16 %v413
    %v2474 = vunpack.c.l.b16 %v414
    %v2475 = vunpack.c.h.b16 %v414
    %v2476 = vunpack.c.l.b16 %v415
    %v2477 = vunpack.c.h.b16 %v415
    %v2478 = vunpack.c.l.b16 %v416
    %v2479 = vunpack.c.h.b16 %v416
    %v2480 = vunpack.c.l.b16 %v417
    %v2481 = vunpack.c.h.b16 %v417
    %v2482 = vunpack.c.l.b16 %v418
    %v2483 = vunpack.c.h.b16 %v418
    %v2484 = vunpack.c.l.b16 %v419
    %v2485 = vunpack.c.h.b16 %v419
    %v2486 = vunpack.c.l.b16 %v420
    %v2487 = vunpack.c.h.b16 %v420
    %v2488 = vunpack.c.l.b16 %v421
    %v2489 = vunpack.c.h.b16 %v421
    %v2490 = vunpack.c.l.b16 %v422
    %v2491 = vunpack.c.h.b16 %v422
    %v2492 = vunpack.c.l.b16 %v423
    %v2493 = vunpack.c.h.b16 %v423
    %v2494 = vunpack.c.l.b16 %v424
    %v2495 = vunpack.c.h.b16 %v424
    %v2496 = vunpack.c.l.b16 %v425
    %v2497 = vunpack.c.h.b16 %v425
    %v2498 = vunpack.c.l.b16 %v426
    %v2499 = vunpack.c.h.b16 %v426
    %v2500 = vunpack.c.l.b16 %v427
    %v2501 = vunpack.c.h.b16 %v427
    %v2502 = vunpack.c.l.b16 %v428
    %v2503 = vunpack.c.h.b16 %v428
    %v2504 = vunpack.c.l.b16 %v429
    %v2505 = vunpack.c.h.b16 %v429
    %v2506 = vunpack.c.l.b16 %v430
    %v2507 = vunpack.c.h.b16 %v430
    %v2508 = vunpack.c.l.b16 %v431
    %v2509 = vunpack.c.h.b16 %v431
    %v2510 = vunpack.c.l.b16 %v432
    %v2511 = vunpack.c.h.b16 %v432
    %v2512 = vunpack.c.l.b16 %v433
    %v2513 = vunpack.c.h.b16 %v433
    %v2514 = vunpack.c.l.b16 %v434
    %v2515 = vunpack.c.h.b16 %v434
    %v2516 = vunpack.c.l.b16 %v435
    %v2517 = vunpack.c.h.b16 %v435
    %v2518 = vunpack.c.l.b16 %v436
    %v2519 = vunpack.c.h.b16 %v436
    %v2520 = vunpack.c.l.b16 %v437
    %v2521 = vunpack.c.h.b16 %v437
    %v2522 = vunpack.c.l.b16 %v438
    %v2523 = vunpack.c.h.b16 %v438
    %v2524 = vunpack.c.l.b16 %v439
    %v2525 = vunpack.c.h.b16 %v439
    %v2526 = vunpack.c.l.b16 %v440
    %v2527 = vunpack.c.h.b16 %v440
    %v2528 = vunpack.c.l.b16 %v441
    %v2529 = vunpack.c.h.b16 %v441
    %v2530 = vunpack.c.l.b16 %v442
    %v2531 = vunpack.c.h.b16 %v442
    %v2532 = vunpack.c.l.b16 %v443
    %v2533 = vunpack.c.h.b16 %v443
    %v2534 = vunpack.c.l.b16 %v444
    %v2535 = vunpack.c.h.b16 %v444
    %v2536 = vunpack.c.l.b16 %v445
    %v2537 = vunpack.c.h.b16 %v445
    %v2538 = vunpack.c.l.b16 %v446
    %v2539 = vunpack.c.h.b16 %v446
    %v2540 = vunpack.c.l.b16 %v447
    %v2541 = vunpack.c.h.b16 %v447
    %v2542 = vunpack.c.l.b16 %v448
    %v2543 = vunpack.c.h.b16 %v448
    %v2544 = vunpack.c.l.b16 %v449
    %v2545 = vunpack.c.h.b16 %v449
    %v2546 = vunpack.c.l.b16 %v450
    %v2547 = vunpack.c.h.b16 %v450
    %v2548 = vunpack.c.l.b16 %v451
    %v2549 = vunpack.c.h.b16 %v451
    %v2550 = vunpack.c.l.b16 %v452
    %v2551 = vunpack.c.h.b16 %v452
    %v2552 = vunpack.c.l.b16 %v453
    %v2553 = vunpack.c.h.b16 %v453
    %v2554 = vunpack.c.l.b16 %v454
    %v2555 = vunpack.c.h.b16 %v454
    %v2556 = vunpack.c.l.b16 %v455
    %v2557 = vunpack.c.h.b16 %v455
    %v2558 = vunpack.c.l.b16 %v456
    %v2559 = vunpack.c.h.b16 %v456
    %v2560 = vunpack.c.l.b16 %v457
    %v2561 = vunpack.c.h.b16 %v457
    %v2562 = vunpack.c.l.b16 %v458
    %v2563 = vunpack.c.h.b16 %v458
    %v2564 = vunpack.c.l.b16 %v459
    %v2565 = vunpack.c.h.b16 %v459
    %v2566 = vunpack.c.l.b16 %v460
    %v2567 = vunpack.c.h.b16 %v460
    %v2568 = vunpack.c.l.b16 %v461
    %v2569 = vunpack.c.h.b16 %v461
    %v2570 = vunpack.c.l.b16 %v462
    %v2571 = vunpack.c.h.b16 %v462
    %v2572 = vunpack.c.l.b16 %v463
    %v2573 = vunpack.c.h.b16 %v463
    %v2574 = vunpack.c.l.b16 %v464
    %v2575 = vunpack.c.h.b16 %v464
    %v2576 = vunpack.c.l.b16 %v465
    %v2577 = vunpack.c.h.b16 %v465
    %v2578 = vunpack.c.l.b16 %v466
    %v2579 = vunpack.c.h.b16 %v466
    %v2580 = vunpack.c.l.b16 %v467
    %v2581 = vunpack.c.h.b16 %v467
    %v2582 = vunpack.c.l.b16 %v468
    %v2583 = vunpack.c.h.b16 %v468
    %v2584 = vunpack.c.l.b16 %v469
    %v2585 = vunpack.c.h.b16 %v469
    %v2586 = vunpack.c.l.b16 %v470
    %v2587 = vunpack.c.h.b16 %v470
    %v2588 = vunpack.c.l.b16 %v471
    %v2589 = vunpack.c.h.b16 %v471
    %v2590 = vunpack.c.l.b16 %v472
    %v2591 = vunpack.c.h.b16 %v472
    %v2592 = vunpack.c.l.b16 %v473
    %v2593 = vunpack.c.h.b16 %v473
    %v2594 = vunpack.c.l.b16 %v474
    %v2595 = vunpack.c.h.b16 %v474
    %v2596 = vunpack.c.l.b16 %v475
    %v2597 = vunpack.c.h.b16 %v475
    %v2598 = vunpack.c.l.b16 %v476
    %v2599 = vunpack.c.h.b16 %v476
    %v2600 = vunpack.c.l.b16 %v477
    %v2601 = vunpack.c.h.b16 %v477
    %v2602 = vunpack.c.l.b16 %v478
    %v2603 = vunpack.c.h.b16 %v478
    %v2604 = vunpack.c.l.b16 %v479
    %v2605 = vunpack.c.h.b16 %v479
    %v2606 = vunpack.c.l.b16 %v480
    %v2607 = vunpack.c.h.b16 %v480
    %v2608 = vunpack.c.l.b16 %v481
    %v2609 = vunpack.c.h.b16 %v481
    %v2610 = vunpack.c.l.b16 %v482
    %v2611 = vunpack.c.h.b16 %v482
    %v2612 = vunpack.c.l.b16 %v483
    %v2613 = vunpack.c.h.b16 %v483
    %v2614 = vunpack.c.l.b16 %v484
    %v2615 = vunpack.c.h.b16 %v484
    %v2616 = vunpack.c.l.b16 %v485
    %v2617 = vunpack.c.h.b16 %v485
    %v2618 = vunpack.c.l.b16 %v486
    %v2619 = vunpack.c.h.b16 %v486
    %v2620 = vunpack.c.l.b16 %v487
    %v2621 = vunpack.c.h.b16 %v487
    %v2622 = vunpack.c.l.b16 %v488
    %v2623 = vunpack.c.h.b16 %v488
    %v2624 = vunpack.c.l.b16 %v489
    %v2625 = vunpack.c.h.b16 %v489
    %v2626 = vunpack.c.l.b16 %v490
    %v2627 = vunpack.c.h.b16 %v490
    %v2628 = vunpack.c.l.b16 %v491
    %v2629 = vunpack.c.h.b16 %v491
    %v2630 = vunpack.c.l.b16 %v492
    %v2631 = vunpack.c.h.b16 %v492
    %v2632 = vunpack.c.l.b16 %v493
    %v2633 = vunpack.c.h.b16 %v493
    %v2634 = vunpack.c.l.b16 %v494
    %v2635 = vunpack.c.h.b16 %v494
    %v2636 = vunpack.c.l.b16 %v495
    %v2637 = vunpack.c.h.b16 %v495
    %v2638 = vunpack.c.l.b16 %v496
    %v2639 = vunpack.c.h.b16 %v496
    %v2640 = vunpack.c.l.b16 %v497
    %v2641 = vunpack.c.h.b16 %v497
    %v2642 = vunpack.c.l.b16 %v498
    %v2643 = vunpack.c.h.b16 %v498
    %v2644 = vunpack.c.l.b16 %v499
    %v2645 = vunpack.c.h.b16 %v499
    %v2646 = vunpack.c.l.b16 %v500
    %v2647 = vunpack.c.h.b16 %v500
    %v2648 = vunpack.c.l.b16 %v501
    %v2649 = vunpack.c.h.b16 %v501
    %v2650 = vunpack.c.l.b16 %v502
    %v2651 = vunpack.c.h.b16 %v502
    %v2652 = vunpack.c.l.b16 %v503
    %v2653 = vunpack.c.h.b16 %v503
    %v2654 = vunpack.c.l.b16 %v504
    %v2655 = vunpack.c.h.b16 %v504
    %v2656 = vunpack.c.l.b16 %v505
    %v2657 = vunpack.c.h.b16 %v505
    %v2658 = vunpack.c.l.b16 %v506
    %v2659 = vunpack.c.h.b16 %v506
    %v2660 = vunpack.c.l.b16 %v507
    %v2661 = vunpack.c.h.b16 %v507
    %v2662 = vunpack.c.l.b16 %v508
    %v2663 = vunpack.c.h.b16 %v508
    %v2664 = vunpack.c.l.b16 %v509
    %v2665 = vunpack.c.h.b16 %v509
    %v2666 = vunpack.c.l.b16 %v510
    %v2667 = vunpack.c.h.b16 %v510
    %v2668 = vunpack.c.l.b16 %v511
    %v2669 = vunpack.c.h.b16 %v511
    %v2670 = vunpack.c.l.b16 %v512
    %v2671 = vunpack.c.h.b16 %v512
    %v2672 = vunpack.c.l.b16 %v513
    %v2673 = vunpack.c.h.b16 %v513
    %v2674 = vunpack.c.l.b16 %v514
    %v2675 = vunpack.c.h.b16 %v514
    %v2676 = vunpack.c.l.b16 %v515
    %v2677 = vunpack.c.h.b16 %v515
    %v2678 = vunpack.c.l.b16 %v516
    %v2679 = vunpack.c.h.b16 %v516
    %v2680 = vunpack.c.l.b16 %v517
    %v2681 = vunpack.c.h.b16 %v517
    %v2682 = vunpack.c.l.b16 %v518
    %v2683 = vunpack.c.h.b16 %v518
    %v2684 = vunpack.c.l.b16 %v519
    %v2685 = vunpack.c.h.b16 %v519
    %v2686 = vunpack.c.l.b16 %v520
    %v2687 = vunpack.c.h.b16 %v520
    %v2688 = vunpack.c.l.b16 %v521
    %v2689 = vunpack.c.h.b16 %v521
    %v2690 = vunpack.c.l.b16 %v522
    %v2691 = vunpack.c.h.b16 %v522
    %v2692 = vunpack.c.l.b16 %v523
    %v2693 = vunpack.c.h.b16 %v523
    %v2694 = vunpack.c.l.b16 %v524
    %v2695 = vunpack.c.h.b16 %v524
    %v2696 = vunpack.c.l.b16 %v525
    %v2697 = vunpack.c.h.b16 %v525
    %v2698 = vunpack.c.l.b16 %v526
    %v2699 = vunpack.c.h.b16 %v526
    %v2700 = vunpack.c.l.b16 %v527
    %v2701 = vunpack.c.h.b16 %v527
    %v2702 = vunpack.c.l.b16 %v528
    %v2703 = vunpack.c.h.b16 %v528
    %v2704 = vunpack.c.l.b16 %v529
    %v2705 = vunpack.c.h.b16 %v529
    %v2706 = vunpack.c.l.b16 %v530
    %v2707 = vunpack.c.h.b16 %v530
    %v2708 = vunpack.c.l.b16 %v531
    %v2709 = vunpack.c.h.b16 %v531
    %v2710 = vunpack.c.l.b16 %v532
    %v2711 = vunpack.c.h.b16 %v532
    %v2712 = vunpack.c.l.b16 %v533
    %v2713 = vunpack.c.h.b16 %v533
    %v2714 = vunpack.c.l.b16 %v534
    %v2715 = vunpack.c.h.b16 %v534
    %v2716 = vunpack.c.l.b16 %v535
    %v2717 = vunpack.c.h.b16 %v535
    %v2718 = vunpack.c.l.b16 %v536
    %v2719 = vunpack.c.h.b16 %v536
    %v2720 = vunpack.c.l.b16 %v537
    %v2721 = vunpack.c.h.b16 %v537
    %v2722 = vunpack.c.l.b16 %v538
    %v2723 = vunpack.c.h.b16 %v538
    %v2724 = vunpack.c.l.b16 %v539
    %v2725 = vunpack.c.h.b16 %v539
    %v2726 = vunpack.c.l.b16 %v540
    %v2727 = vunpack.c.h.b16 %v540
    %v2728 = vunpack.c.l.b16 %v541
    %v2729 = vunpack.c.h.b16 %v541
    %v2730 = vunpack.c.l.b16 %v542
    %v2731 = vunpack.c.h.b16 %v542
    %v2732 = vunpack.c.l.b16 %v543
    %v2733 = vunpack.c.h.b16 %v543
    %v2734 = vunpack.c.l.b16 %v544
    %v2735 = vunpack.c.h.b16 %v544
    %v2736 = vunpack.c.l.b16 %v545
    %v2737 = vunpack.c.h.b16 %v545
    %v2738 = vunpack.c.l.b16 %v546
    %v2739 = vunpack.c.h.b16 %v546
    %v2740 = vunpack.c.l.b16 %v547
    %v2741 = vunpack.c.h.b16 %v547
    %v2742 = vunpack.c.l.b16 %v548
    %v2743 = vunpack.c.h.b16 %v548
    %v2744 = vunpack.c.l.b16 %v549
    %v2745 = vunpack.c.h.b16 %v549
    %v2746 = vunpack.c.l.b16 %v550
    %v2747 = vunpack.c.h.b16 %v550
    %v2748 = vunpack.c.l.b16 %v551
    %v2749 = vunpack.c.h.b16 %v551
    %v2750 = vunpack.c.l.b16 %v552
    %v2751 = vunpack.c.h.b16 %v552
    %v2752 = vunpack.c.l.b16 %v553
    %v2753 = vunpack.c.h.b16 %v553
    %v2754 = vunpack.c.l.b16 %v554
    %v2755 = vunpack.c.h.b16 %v554
    %v2756 = vunpack.c.l.b16 %v555
    %v2757 = vunpack.c.h.b16 %v555
    %v2758 = vunpack.c.l.b16 %v556
    %v2759 = vunpack.c.h.b16 %v556
    %v2760 = vunpack.c.l.b16 %v557
    %v2761 = vunpack.c.h.b16 %v557
    %v2762 = vpack.c.b16 %v2258, %v2250
    %v2763 = vpack.c.b16 %v2259, %v2251
    %v2764 = vpack.c.b16 %v2260, %v2252
    %v2765 = vpack.c.b16 %v2261, %v2253
    %v2766 = vpack.c.b16 %v2262, %v2254
    %v2767 = vpack.c.b16 %v2263, %v2255
    %v2768 = vpack.c.b16 %v2264, %v2256
    %v2769 = vpack.c.b16 %v2265, %v2257
    %v2770 = vpack.c.b16 %v2274, %v2266
    %v2771 = vpack.c.b16 %v2275, %v2267
    %v2772 = vpack.c.b16 %v2276, %v2268
    %v2773 = vpack.c.b16 %v2277, %v2269
    %v2774 = vpack.c.b16 %v2278, %v2270
    %v2775 = vpack.c.b16 %v2279, %v2271
    %v2776 = vpack.c.b16 %v2280, %v2272
    %v2777 = vpack.c.b16 %v2281, %v2273
    %v2778 = vpack.c.b16 %v2290, %v2282
    %v2779 = vpack.c.b16 %v2291, %v2283
    %v2780 = vpack.c.b16 %v2292, %v2284
    %v2781 = vpack.c.b16 %v2293, %v2285
    %v2782 = vpack.c.b16 %v2294, %v2286
    %v2783 = vpack.c.b16 %v2295, %v2287
    %v2784 = vpack.c.b16 %v2296, %v2288
    %v2785 = vpack.c.b16 %v2297, %v2289
    %v2786 = vpack.c.b16 %v2306, %v2298
    %v2787 = vpack.c.b16 %v2307, %v2299
    %v2788 = vpack.c.b16 %v2308, %v2300
    %v2789 = vpack.c.b16 %v2309, %v2301
    %v2790 = vpack.c.b16 %v2310, %v2302
    %v2791 = vpack.c.b16 %v2311, %v2303
    %v2792 = vpack.c.b16 %v2312, %v2304
    %v2793 = vpack.c.b16 %v2313, %v2305
    %v2794 = vpack.c.b16 %v2322, %v2314
    %v2795 = vpack.c.b16 %v2323, %v2315
    %v2796 = vpack.c.b16 %v2324, %v2316
    %v2797 = vpack.c.b16 %v2325, %v2317
    %v2798 = vpack.c.b16 %v2326, %v2318
    %v2799 = vpack.c.b16 %v2327, %v2319
    %v2800 = vpack.c.b16 %v2328, %v2320
    %v2801 = vpack.c.b16 %v2329, %v2321
    %v2802 = vpack.c.b16 %v2338, %v2330
    %v2803 = vpack.c.b16 %v2339, %v2331
    %v2804 = vpack.c.b16 %v2340, %v2332
    %v2805 = vpack.c.b16 %v2341, %v2333
    %v2806 = vpack.c.b16 %v2342, %v2334
    %v2807 = vpack.c.b16 %v2343, %v2335
    %v2808 = vpack.c.b16 %v2344, %v2336
    %v2809 = vpack.c.b16 %v2345, %v2337
    %v2810 = vpack.c.b16 %v2354, %v2346
    %v2811 = vpack.c.b16 %v2355, %v2347
    %v2812 = vpack.c.b16 %v2356, %v2348
    %v2813 = vpack.c.b16 %v2357, %v2349
    %v2814 = vpack.c.b16 %v2358, %v2350
    %v2815 = vpack.c.b16 %v2359, %v2351
    %v2816 = vpack.c.b16 %v2360, %v2352
    %v2817 = vpack.c.b16 %v2361, %v2353
    %v2818 = vpack.c.b16 %v2370, %v2362
    %v2819 = vpack.c.b16 %v2371, %v2363
    %v2820 = vpack.c.b16 %v2372, %v2364
    %v2821 = vpack.c.b16 %v2373, %v2365
    %v2822 = vpack.c.b16 %v2374, %v2366
    %v2823 = vpack.c.b16 %v2375, %v2367
    %v2824 = vpack.c.b16 %v2376, %v2368
    %v2825 = vpack.c.b16 %v2377, %v2369
    %v2826 = vpack.c.b16 %v2386, %v2378
    %v2827 = vpack.c.b16 %v2387, %v2379
    %v2828 = vpack.c.b16 %v2388, %v2380
    %v2829 = vpack.c.b16 %v2389, %v2381
    %v2830 = vpack.c.b16 %v2390, %v2382
    %v2831 = vpack.c.b16 %v2391, %v2383
    %v2832 = vpack.c.b16 %v2392, %v2384
    %v2833 = vpack.c.b16 %v2393, %v2385
    %v2834 = vpack.c.b16 %v2402, %v2394
    %v2835 = vpack.c.b16 %v2403, %v2395
    %v2836 = vpack.c.b16 %v2404, %v2396
    %v2837 = vpack.c.b16 %v2405, %v2397
    %v2838 = vpack.c.b16 %v2406, %v2398
    %v2839 = vpack.c.b16 %v2407, %v2399
    %v2840 = vpack.c.b16 %v2408, %v2400
    %v2841 = vpack.c.b16 %v2409, %v2401
    %v2842 = vpack.c.b16 %v2418, %v2410
    %v2843 = vpack.c.b16 %v2419, %v2411
    %v2844 = vpack.c.b16 %v2420, %v2412
    %v2845 = vpack.c.b16 %v2421, %v2413
    %v2846 = vpack.c.b16 %v2422, %v2414
    %v2847 = vpack.c.b16 %v2423, %v2415
    %v2848 = vpack.c.b16 %v2424, %v2416
    %v2849 = vpack.c.b16 %v2425, %v2417
    %v2850 = vpack.c.b16 %v2434, %v2426
    %v2851 = vpack.c.b16 %v2435, %v2427
    %v2852 = vpack.c.b16 %v2436, %v2428
    %v2853 = vpack.c.b16 %v2437, %v2429
    %v2854 = vpack.c.b16 %v2438, %v2430
    %v2855 = vpack.c.b16 %v2439, %v2431
    %v2856 = vpack.c.b16 %v2440, %v2432
    %v2857 = vpack.c.b16 %v2441, %v2433
    %v2858 = vpack.c.b16 %v2450, %v2442
    %v2859 = vpack.c.b16 %v2451, %v2443
    %v2860 = vpack.c.b16 %v2452, %v2444
    %v2861 = vpack.c.b16 %v2453, %v2445
    %v2862 = vpack.c.b16 %v2454, %v2446
    %v2863 = vpack.c.b16 %v2455, %v2447
    %v2864 = vpack.c.b16 %v2456, %v2448
    %v2865 = vpack.c.b16 %v2457, %v2449
    %v2866 = vpack.c.b16 %v2466, %v2458
    %v2867 = vpack.c.b16 %v2467, %v2459
    %v2868 = vpack.c.b16 %v2468, %v2460
    %v2869 = vpack.c.b16 %v2469, %v2461
    %v2870 = vpack.c.b16 %v2470, %v2462
    %v2871 = vpack.c.b16 %v2471, %v2463
    %v2872 = vpack.c.b16 %v2472, %v2464
    %v2873 = vpack.c.b16 %v2473, %v2465
    %v2874 = vpack.c.b16 %v2482, %v2474
    %v2875 = vpack.c.b16 %v2483, %v2475
    %v2876 = vpack.c.b16 %v2484, %v2476
    %v2877 = vpack.c.b16 %v2485, %v2477
    %v2878 = vpack.c.b16 %v2486, %v2478
    %v2879 = vpack.c.b16 %v2487, %v2479
    %v2880 = vpack.c.b16 %v2488, %v2480
    %v2881 = vpack.c.b16 %v2489, %v2481
    %v2882 = vpack.c.b16 %v2498, %v2490
    %v2883 = vpack.c.b16 %v2499, %v2491
    %v2884 = vpack.c.b16 %v2500, %v2492
    %v2885 = vpack.c.b16 %v2501, %v2493
    %v2886 = vpack.c.b16 %v2502, %v2494
    %v2887 = vpack.c.b16 %v2503, %v2495
    %v2888 = vpack.c.b16 %v2504, %v2496
    %v2889 = vpack.c.b16 %v2505, %v2497
    %v2890 = vpack.c.b16 %v2514, %v2506
    %v2891 = vpack.c.b16 %v2515, %v2507
    %v2892 = vpack.c.b16 %v2516, %v2508
    %v2893 = vpack.c.b16 %v2517, %v2509
    %v2894 = vpack.c.b16 %v2518, %v2510
    %v2895 = vpack.c.b16 %v2519, %v2511
    %v2896 = vpack.c.b16 %v2520, %v2512
    %v2897 = vpack.c.b16 %v2521, %v2513
    %v2898 = vpack.c.b16 %v2530, %v2522
    %v2899 = vpack.c.b16 %v2531, %v2523
    %v2900 = vpack.c.b16 %v2532, %v2524
    %v2901 = vpack.c.b16 %v2533, %v2525
    %v2902 = vpack.c.b16 %v2534, %v2526
    %v2903 = vpack.c.b16 %v2535, %v2527
    %v2904 = vpack.c.b16 %v2536, %v2528
    %v2905 = vpack.c.b16 %v2537, %v2529
    %v2906 = vpack.c.b16 %v2546, %v2538
    %v2907 = vpack.c.b16 %v2547, %v2539
    %v2908 = vpack.c.b16 %v2548, %v2540
    %v2909 = vpack.c.b16 %v2549, %v2541
    %v2910 = vpack.c.b16 %v2550, %v2542
    %v2911 = vpack.c.b16 %v2551, %v2543
    %v2912 = vpack.c.b16 %v2552, %v2544
    %v2913 = vpack.c.b16 %v2553, %v2545
    %v2914 = vpack.c.b16 %v2562, %v2554
    %v2915 = vpack.c.b16 %v2563, %v2555
    %v2916 = vpack.c.b16 %v2564, %v2556
    %v2917 = vpack.c.b16 %v2565, %v2557
    %v2918 = vpack.c.b16 %v2566, %v2558
    %v2919 = vpack.c.b16 %v2567, %v2559
    %v2920 = vpack.c.b16 %v2568, %v2560
    %v2921 = vpack.c.b16 %v2569, %v2561
    %v2922 = vpack.c.b16 %v2578, %v2570
    %v2923 = vpack.c.b16 %v2579, %v2571
    %v2924 = vpack.c.b16 %v2580, %v2572
    %v2925 = vpack.c.b16 %v2581, %v2573
    %v2926 = vpack.c.b16 %v2582, %v2574
    %v2927 = vpack.c.b16 %v2583, %v2575
    %v2928 = vpack.c.b16 %v2584, %v2576
    %v2929 = vpack.c.b16 %v2585, %v2577
    %v2930 = vpack.c.b16 %v2594, %v2586
    %v2931 = vpack.c.b16 %v2595, %v2587
    %v2932 = vpack.c.b16 %v2596, %v2588
    %v2933 = vpack.c.b16 %v2597, %v2589
    %v2934 = vpack.c.b16 %v2598, %v2590
    %v2935 = vpack.c.b16 %v2599, %v2591
    %v2936 = vpack.c.b16 %v2600, %v2592
    %v2937 = vpack.c.b16 %v2601, %v2593
    %v2938 = vpack.c.b16 %v2610, %v2602
    %v2939 = vpack.c.b16 %v2611, %v2603
    %v2940 = vpack.c.b16 %v2612, %v2604
    %v2941 = vpack.c.b16 %v2613, %v2605
    %v2942 = vpack.c.b16 %v2614, %v2606
    %v2943 = vpack.c.b16 %v2615, %v2607
    %v2944 = vpack.c.b16 %v2616, %v2608
    %v2945 = vpack.c.b16 %v2617, %v2609
    %v2946 = vpack.c.b16 %v2626, %v2618
    %v2947 = vpack.c.b16 %v2627, %v2619
    %v2948 = vpack.c.b16 %v2628, %v2620
    %v2949 = vpack.c.b16 %v2629, %v2621
    %v2950 = vpack.c.b16 %v2630, %v2622
    %v2951 = vpack.c.b16 %v2631, %v2623
    %v2952 = vpack.c.b16 %v2632, %v2624
    %v2953 = vpack.c.b16 %v2633, %v2625
    %v2954 = vpack.c.b16 %v2642, %v2634
    %v2955 = vpack.c.b16 %v2643, %v2635
    %v2956 = vpack.c.b16 %v2644, %v2636
    %v2957 = vpack.c.b16 %v2645, %v2637
    %v2958 = vpack.c.b16 %v2646, %v2638
    %v2959 = vpack.c.b16 %v2647, %v2639
    %v2960 = vpack.c.b16 %v2648, %v2640
    %v2961 = vpack.c.b16 %v2649, %v2641
    %v2962 = vpack.c.b16 %v2658, %v2650
    %v2963 = vpack.c.b16 %v2659, %v2651
    %v2964 = vpack.c.b16 %v2660, %v2652
    %v2965 = vpack.c.b16 %v2661, %v2653
    %v2966 = vpack.c.b16 %v2662, %v2654
    %v2967 = vpack.c.b16 %v2663, %v2655
    %v2968 = vpack.c.b16 %v2664, %v2656
    %v2969 = vpack.c.b16 %v2665, %v2657
    %v2970 = vpack.c.b16 %v2674, %v2666
    %v2971 = vpack.c.b16 %v2675, %v2667
    %v2972 = vpack.c.b16 %v2676, %v2668
    %v2973 = vpack.c.b16 %v2677, %v2669
    %v2974 = vpack.c.b16 %v2678, %v2670
    %v2975 = vpack.c.b16 %v2679, %v2671
    %v2976 = vpack.c.b16 %v2680, %v2672
    %v2977 = vpack.c.b16 %v2681, %v2673
    %v2978 = vpack.c.b16 %v2690, %v2682
    %v2979 = vpack.c.b16 %v2691, %v2683
    %v2980 = vpack.c.b16 %v2692, %v2684
    %v2981 = vpack.c.b16 %v2693, %v2685
    %v2982 = vpack.c.b16 %v2694, %v2686
    %v2983 = vpack.c.b16 %v2695, %v2687
    %v2984 = vpack.c.b16 %v2696, %v2688
    %v2985 = vpack.c.b16 %v2697, %v2689
    %v2986 = vpack.c.b16 %v2706, %v2698
    %v2987 = vpack.c.b16 %v2707, %v2699
    %v2988 = vpack.c.b16 %v2708, %v2700
    %v2989 = vpack.c.b16 %v2709, %v2701
    %v2990 = vpack.c.b16 %v2710, %v2702
    %v2991 = vpack.c.b16 %v2711, %v2703
    %v2992 = vpack.c.b16 %v2712, %v2704
    %v2993 = vpack.c.b16 %v2713, %v2705
    %v2994 = vpack.c.b16 %v2722, %v2714
    %v2995 = vpack.c.b16 %v2723, %v2715
    %v2996 = vpack.c.b16 %v2724, %v2716
    %v2997 = vpack.c.b16 %v2725, %v2717
    %v2998 = vpack.c.b16 %v2726, %v2718
    %v2999 = vpack.c.b16 %v2727, %v2719
    %v3000 = vpack.c.b16 %v2728, %v2720
    %v3001 = vpack.c.b16 %v2729, %v2721
    %v3002 = vpack.c.b16 %v2738, %v2730
    %v3003 = vpack.c.b16 %v2739, %v2731
    %v3004 = vpack.c.b16 %v2740, %v2732
    %v3005 = vpack.c.b16 %v2741, %v2733
    %v3006 = vpack.c.b16 %v2742, %v2734
    %v3007 = vpack.c.b16 %v2743, %v2735
    %v3008 = vpack.c.b16 %v2744, %v2736
    %v3009 = vpack.c.b16 %v2745, %v2737
    %v3010 = vpack.c.b16 %v2754, %v2746
    %v3011 = vpack.c.b16 %v2755, %v2747
    %v3012 = vpack.c.b16 %v2756, %v2748
    %v3013 = vpack.c.b16 %v2757, %v2749
    %v3014 = vpack.c.b16 %v2758, %v2750
    %v3015 = vpack.c.b16 %v2759, %v2751
    %v3016 = vpack.c.b16 %v2760, %v2752
    %v3017 = vpack.c.b16 %v2761, %v2753
    %3274 = vmatprep.subr.bf16.mxu0 %v2763
    %3275 = vmatpush1.bf16.msra.mxu0 %v2762
    %3276 = vmatprep.subr.bf16.mxu0 %v2771
    %3277 = vmatpush1.bf16.msra.mxu0 %v2770
    %3278 = vmatprep.subr.bf16.mxu0 %v2779
    %3279 = vmatpush1.bf16.msra.mxu0 %v2778
    %3280 = vmatprep.subr.bf16.mxu0 %v2787
    %3281 = vmatpush1.bf16.msra.mxu0 %v2786
    %3282 = vmatprep.subr.bf16.mxu0 %v2795
    %3283 = vmatpush1.bf16.msra.mxu0 %v2794
    %3284 = vmatprep.subr.bf16.mxu0 %v2803
    %3285 = vmatpush1.bf16.msra.mxu0 %v2802
    %3286 = vmatprep.subr.bf16.mxu0 %v2811
    %3287 = vmatpush1.bf16.msra.mxu0 %v2810
    %3288 = vmatprep.subr.bf16.mxu0 %v2819
    %3289 = vmatpush1.bf16.msra.mxu0 %v2818
    %3290 = vmatprep.subr.bf16.mxu0 %v2827
    %3291 = vmatpush1.bf16.msra.mxu0 %v2826
    %3292 = vmatprep.subr.bf16.mxu0 %v2835
    %3293 = vmatpush1.bf16.msra.mxu0 %v2834
    %3294 = vmatprep.subr.bf16.mxu0 %v2843
    %3295 = vmatpush1.bf16.msra.mxu0 %v2842
    %3296 = vmatprep.subr.bf16.mxu0 %v2851
    %3297 = vmatpush1.bf16.msra.mxu0 %v2850
    %3298 = vmatprep.subr.bf16.mxu0 %v2859
    %3299 = vmatpush1.bf16.msra.mxu0 %v2858
    %3300 = vmatprep.subr.bf16.mxu0 %v2867
    %3301 = vmatpush1.bf16.msra.mxu0 %v2866
    %3302 = vmatprep.subr.bf16.mxu0 %v2875
    %3303 = vmatpush1.bf16.msra.mxu0 %v2874
    %3304 = vmatprep.subr.bf16.mxu0 %v2883
    %3305 = vmatpush1.bf16.msra.mxu0 %v2882
    %3306 = vmatprep.mubr.bf16.mxu0 %v1991
    %3307 = vmatmul.mubr.bf16.gmra.mrb[0].mxu0 %v1990
    %v3308 = vpop.f32.mrb[0].mxu0
    %v3309 = vadd.f32 %v605, %v3308
    %v3310 = vpop.f32.mrb[0].mxu0
    %v3311 = vadd.f32 %v609, %v3310
    %v3312 = vpop.f32.mrb[0].mxu0
    %v3313 = vpop.f32.mrb[0].mxu0
    %3314 = vdwg.mxu0
    %3315 = vmatprep.subr.bf16.mxu0 %v2891
    %3316 = vmatpush1.bf16.msra.mxu0 %v2890
    %3317 = vmatprep.subr.bf16.mxu0 %v2899
    %3318 = vmatpush1.bf16.msra.mxu0 %v2898
    %3319 = vmatprep.subr.bf16.mxu0 %v2907
    %3320 = vmatpush1.bf16.msra.mxu0 %v2906
    %3321 = vmatprep.subr.bf16.mxu0 %v2915
    %3322 = vmatpush1.bf16.msra.mxu0 %v2914
    %3323 = vmatprep.subr.bf16.mxu0 %v2923
    %3324 = vmatpush1.bf16.msra.mxu0 %v2922
    %3325 = vmatprep.subr.bf16.mxu0 %v2931
    %3326 = vmatpush1.bf16.msra.mxu0 %v2930
    %3327 = vmatprep.subr.bf16.mxu0 %v2939
    %3328 = vmatpush1.bf16.msra.mxu0 %v2938
    %3329 = vmatprep.subr.bf16.mxu0 %v2947
    %3330 = vmatpush1.bf16.msra.mxu0 %v2946
    %3331 = vmatprep.subr.bf16.mxu0 %v2955
    %3332 = vmatpush1.bf16.msra.mxu0 %v2954
    %3333 = vmatprep.subr.bf16.mxu0 %v2963
    %3334 = vmatpush1.bf16.msra.mxu0 %v2962
    %3335 = vmatprep.subr.bf16.mxu0 %v2971
    %3336 = vmatpush1.bf16.msra.mxu0 %v2970
    %3337 = vmatprep.subr.bf16.mxu0 %v2979
    %3338 = vmatpush1.bf16.msra.mxu0 %v2978
    %3339 = vmatprep.subr.bf16.mxu0 %v2987
    %3340 = vmatpush1.bf16.msra.mxu0 %v2986
    %3341 = vmatprep.subr.bf16.mxu0 %v2995
    %3342 = vmatpush1.bf16.msra.mxu0 %v2994
    %3343 = vmatprep.subr.bf16.mxu0 %v3003
    %3344 = vmatpush1.bf16.msra.mxu0 %v3002
    %3345 = vmatprep.subr.bf16.mxu0 %v3011
    %3346 = vmatpush1.bf16.msra.mxu0 %v3010
    %3347 = vmatprep.mubr.bf16.mxu0 %v1993
    %3348 = vmatmul.mubr.bf16.gmra.mrb[0].mxu0 %v1992
    %v3349 = vpop.f32.mrb[0].mxu0
    %v3350 = vadd.f32 %v3309, %v3349
    %v3351 = vpop.f32.mrb[0].mxu0
    %v3352 = vadd.f32 %v3311, %v3351
    %v3353 = vpop.f32.mrb[0].mxu0
    %v3354 = vpop.f32.mrb[0].mxu0
    %3355 = vdwg.mxu0
    %3356 = vmatprep.subr.bf16.mxu0 %v2765
    %3357 = vmatpush1.bf16.msra.mxu0 %v2764
    %3358 = vmatprep.subr.bf16.mxu0 %v2773
    %3359 = vmatpush1.bf16.msra.mxu0 %v2772
    %3360 = vmatprep.subr.bf16.mxu0 %v2781
    %3361 = vmatpush1.bf16.msra.mxu0 %v2780
    %3362 = vmatprep.subr.bf16.mxu0 %v2789
    %3363 = vmatpush1.bf16.msra.mxu0 %v2788
    %3364 = vmatprep.subr.bf16.mxu0 %v2797
    %3365 = vmatpush1.bf16.msra.mxu0 %v2796
    %3366 = vmatprep.subr.bf16.mxu0 %v2805
    %3367 = vmatpush1.bf16.msra.mxu0 %v2804
    %3368 = vmatprep.subr.bf16.mxu0 %v2813
    %3369 = vmatpush1.bf16.msra.mxu0 %v2812
    %3370 = vmatprep.subr.bf16.mxu0 %v2821
    %3371 = vmatpush1.bf16.msra.mxu0 %v2820
    %3372 = vmatprep.subr.bf16.mxu0 %v2829
    %3373 = vmatpush1.bf16.msra.mxu0 %v2828
    %3374 = vmatprep.subr.bf16.mxu0 %v2837
    %3375 = vmatpush1.bf16.msra.mxu0 %v2836
    %3376 = vmatprep.subr.bf16.mxu0 %v2845
    %3377 = vmatpush1.bf16.msra.mxu0 %v2844
    %3378 = vmatprep.subr.bf16.mxu0 %v2853
    %3379 = vmatpush1.bf16.msra.mxu0 %v2852
    %3380 = vmatprep.subr.bf16.mxu0 %v2861
    %3381 = vmatpush1.bf16.msra.mxu0 %v2860
    %3382 = vmatprep.subr.bf16.mxu0 %v2869
    %3383 = vmatpush1.bf16.msra.mxu0 %v2868
    %3384 = vmatprep.subr.bf16.mxu0 %v2877
    %3385 = vmatpush1.bf16.msra.mxu0 %v2876
    %3386 = vmatprep.subr.bf16.mxu0 %v2885
    %3387 = vmatpush1.bf16.msra.mxu0 %v2884
    %3388 = vmatprep.mubr.bf16.mxu0 %v1991
    %3389 = vmatmul.mubr.bf16.gmra.mrb[0].mxu0 %v1990
    %v3390 = vpop.f32.mrb[0].mxu0
    %v3391 = vadd.f32 %v613, %v3390
    %v3392 = vpop.f32.mrb[0].mxu0
    %v3393 = vadd.f32 %v617, %v3392
    %v3394 = vpop.f32.mrb[0].mxu0
    %v3395 = vpop.f32.mrb[0].mxu0
    %3396 = vdwg.mxu0
    %3397 = vmatprep.subr.bf16.mxu0 %v2893
    %3398 = vmatpush1.bf16.msra.mxu0 %v2892
    %3399 = vmatprep.subr.bf16.mxu0 %v2901
    %3400 = vmatpush1.bf16.msra.mxu0 %v2900
    %3401 = vmatprep.subr.bf16.mxu0 %v2909
    %3402 = vmatpush1.bf16.msra.mxu0 %v2908
    %3403 = vmatprep.subr.bf16.mxu0 %v2917
    %3404 = vmatpush1.bf16.msra.mxu0 %v2916
    %3405 = vmatprep.subr.bf16.mxu0 %v2925
    %3406 = vmatpush1.bf16.msra.mxu0 %v2924
    %3407 = vmatprep.subr.bf16.mxu0 %v2933
    %3408 = vmatpush1.bf16.msra.mxu0 %v2932
    %3409 = vmatprep.subr.bf16.mxu0 %v2941
    %3410 = vmatpush1.bf16.msra.mxu0 %v2940
    %3411 = vmatprep.subr.bf16.mxu0 %v2949
    %3412 = vmatpush1.bf16.msra.mxu0 %v2948
    %3413 = vmatprep.subr.bf16.mxu0 %v2957
    %3414 = vmatpush1.bf16.msra.mxu0 %v2956
    %3415 = vmatprep.subr.bf16.mxu0 %v2965
    %3416 = vmatpush1.bf16.msra.mxu0 %v2964
    %3417 = vmatprep.subr.bf16.mxu0 %v2973
    %3418 = vmatpush1.bf16.msra.mxu0 %v2972
    %3419 = vmatprep.subr.bf16.mxu0 %v2981
    %3420 = vmatpush1.bf16.msra.mxu0 %v2980
    %3421 = vmatprep.subr.bf16.mxu0 %v2989
    %3422 = vmatpush1.bf16.msra.mxu0 %v2988
    %3423 = vmatprep.subr.bf16.mxu0 %v2997
    %3424 = vmatpush1.bf16.msra.mxu0 %v2996
    %3425 = vmatprep.subr.bf16.mxu0 %v3005
    %3426 = vmatpush1.bf16.msra.mxu0 %v3004
    %3427 = vmatprep.subr.bf16.mxu0 %v3013
    %3428 = vmatpush1.bf16.msra.mxu0 %v3012
    %3429 = vmatprep.mubr.bf16.mxu0 %v1993
    %3430 = vmatmul.mubr.bf16.gmra.mrb[0].mxu0 %v1992
    %v3431 = vpop.f32.mrb[0].mxu0
    %v3432 = vadd.f32 %v3391, %v3431
    %v3433 = vpop.f32.mrb[0].mxu0
    %v3434 = vadd.f32 %v3393, %v3433
    %v3435 = vpop.f32.mrb[0].mxu0
    %v3436 = vpop.f32.mrb[0].mxu0
    %3437 = vdwg.mxu0
    %3438 = vmatprep.subr.bf16.mxu0 %v2767
    %3439 = vmatpush1.bf16.msra.mxu0 %v2766
    %3440 = vmatprep.subr.bf16.mxu0 %v2775
    %3441 = vmatpush1.bf16.msra.mxu0 %v2774
    %3442 = vmatprep.subr.bf16.mxu0 %v2783
    %3443 = vmatpush1.bf16.msra.mxu0 %v2782
    %3444 = vmatprep.subr.bf16.mxu0 %v2791
    %3445 = vmatpush1.bf16.msra.mxu0 %v2790
    %3446 = vmatprep.subr.bf16.mxu0 %v2799
    %3447 = vmatpush1.bf16.msra.mxu0 %v2798
    %3448 = vmatprep.subr.bf16.mxu0 %v2807
    %3449 = vmatpush1.bf16.msra.mxu0 %v2806
    %3450 = vmatprep.subr.bf16.mxu0 %v2815
    %3451 = vmatpush1.bf16.msra.mxu0 %v2814
    %3452 = vmatprep.subr.bf16.mxu0 %v2823
    %3453 = vmatpush1.bf16.msra.mxu0 %v2822
    %3454 = vmatprep.subr.bf16.mxu0 %v2831
    %3455 = vmatpush1.bf16.msra.mxu0 %v2830
    %3456 = vmatprep.subr.bf16.mxu0 %v2839
    %3457 = vmatpush1.bf16.msra.mxu0 %v2838
    %3458 = vmatprep.subr.bf16.mxu0 %v2847
    %3459 = vmatpush1.bf16.msra.mxu0 %v2846
    %3460 = vmatprep.subr.bf16.mxu0 %v2855
    %3461 = vmatpush1.bf16.msra.mxu0 %v2854
    %3462 = vmatprep.subr.bf16.mxu0 %v2863
    %3463 = vmatpush1.bf16.msra.mxu0 %v2862
    %3464 = vmatprep.subr.bf16.mxu0 %v2871
    %3465 = vmatpush1.bf16.msra.mxu0 %v2870
    %3466 = vmatprep.subr.bf16.mxu0 %v2879
    %3467 = vmatpush1.bf16.msra.mxu0 %v2878
    %3468 = vmatprep.subr.bf16.mxu0 %v2887
    %3469 = vmatpush1.bf16.msra.mxu0 %v2886
    %3470 = vmatprep.mubr.bf16.mxu0 %v1991
    %3471 = vmatmul.mubr.bf16.gmra.mrb[0].mxu0 %v1990
    %v3472 = vpop.f32.mrb[0].mxu0
    %v3473 = vadd.f32 %v621, %v3472
    %v3474 = vpop.f32.mrb[0].mxu0
    %v3475 = vadd.f32 %v625, %v3474
    %v3476 = vpop.f32.mrb[0].mxu0
    %v3477 = vpop.f32.mrb[0].mxu0
    %3478 = vdwg.mxu0
    %3479 = vmatprep.subr.bf16.mxu0 %v2895
    %3480 = vmatpush1.bf16.msra.mxu0 %v2894
    %3481 = vmatprep.subr.bf16.mxu0 %v2903
    %3482 = vmatpush1.bf16.msra.mxu0 %v2902
    %3483 = vmatprep.subr.bf16.mxu0 %v2911
    %3484 = vmatpush1.bf16.msra.mxu0 %v2910
    %3485 = vmatprep.subr.bf16.mxu0 %v2919
    %3486 = vmatpush1.bf16.msra.mxu0 %v2918
    %3487 = vmatprep.subr.bf16.mxu0 %v2927
    %3488 = vmatpush1.bf16.msra.mxu0 %v2926
    %3489 = vmatprep.subr.bf16.mxu0 %v2935
    %3490 = vmatpush1.bf16.msra.mxu0 %v2934
    %3491 = vmatprep.subr.bf16.mxu0 %v2943
    %3492 = vmatpush1.bf16.msra.mxu0 %v2942
    %3493 = vmatprep.subr.bf16.mxu0 %v2951
    %3494 = vmatpush1.bf16.msra.mxu0 %v2950
    %3495 = vmatprep.subr.bf16.mxu0 %v2959
    %3496 = vmatpush1.bf16.msra.mxu0 %v2958
    %3497 = vmatprep.subr.bf16.mxu0 %v2967
    %3498 = vmatpush1.bf16.msra.mxu0 %v2966
    %3499 = vmatprep.subr.bf16.mxu0 %v2975
    %3500 = vmatpush1.bf16.msra.mxu0 %v2974
    %3501 = vmatprep.subr.bf16.mxu0 %v2983
    %3502 = vmatpush1.bf16.msra.mxu0 %v2982
    %3503 = vmatprep.subr.bf16.mxu0 %v2991
    %3504 = vmatpush1.bf16.msra.mxu0 %v2990
    %3505 = vmatprep.subr.bf16.mxu0 %v2999
    %3506 = vmatpush1.bf16.msra.mxu0 %v2998
    %3507 = vmatprep.subr.bf16.mxu0 %v3007
    %3508 = vmatpush1.bf16.msra.mxu0 %v3006
    %3509 = vmatprep.subr.bf16.mxu0 %v3015
    %3510 = vmatpush1.bf16.msra.mxu0 %v3014
    %3511 = vmatprep.mubr.bf16.mxu0 %v1993
    %3512 = vmatmul.mubr.bf16.gmra.mrb[0].mxu0 %v1992
    %v3513 = vpop.f32.mrb[0].mxu0
    %v3514 = vadd.f32 %v3473, %v3513
    %v3515 = vpop.f32.mrb[0].mxu0
    %v3516 = vadd.f32 %v3475, %v3515
    %v3517 = vpop.f32.mrb[0].mxu0
    %v3518 = vpop.f32.mrb[0].mxu0
    %3519 = vdwg.mxu0
    %3520 = vmatprep.subr.bf16.mxu0 %v2769
    %3521 = vmatpush1.bf16.msra.mxu0 %v2768
    %3522 = vmatprep.subr.bf16.mxu0 %v2777
    %3523 = vmatpush1.bf16.msra.mxu0 %v2776
    %3524 = vmatprep.subr.bf16.mxu0 %v2785
    %3525 = vmatpush1.bf16.msra.mxu0 %v2784
    %3526 = vmatprep.subr.bf16.mxu0 %v2793
    %3527 = vmatpush1.bf16.msra.mxu0 %v2792
    %3528 = vmatprep.subr.bf16.mxu0 %v2801
    %3529 = vmatpush1.bf16.msra.mxu0 %v2800
    %3530 = vmatprep.subr.bf16.mxu0 %v2809
    %3531 = vmatpush1.bf16.msra.mxu0 %v2808
    %3532 = vmatprep.subr.bf16.mxu0 %v2817
    %3533 = vmatpush1.bf16.msra.mxu0 %v2816
    %3534 = vmatprep.subr.bf16.mxu0 %v2825
    %3535 = vmatpush1.bf16.msra.mxu0 %v2824
    %3536 = vmatprep.subr.bf16.mxu0 %v2833
    %3537 = vmatpush1.bf16.msra.mxu0 %v2832
    %3538 = vmatprep.subr.bf16.mxu0 %v2841
    %3539 = vmatpush1.bf16.msra.mxu0 %v2840
    %3540 = vmatprep.subr.bf16.mxu0 %v2849
    %3541 = vmatpush1.bf16.msra.mxu0 %v2848
    %3542 = vmatprep.subr.bf16.mxu0 %v2857
    %3543 = vmatpush1.bf16.msra.mxu0 %v2856
    %3544 = vmatprep.subr.bf16.mxu0 %v2865
    %3545 = vmatpush1.bf16.msra.mxu0 %v2864
    %3546 = vmatprep.subr.bf16.mxu0 %v2873
    %3547 = vmatpush1.bf16.msra.mxu0 %v2872
    %3548 = vmatprep.subr.bf16.mxu0 %v2881
    %3549 = vmatpush1.bf16.msra.mxu0 %v2880
    %3550 = vmatprep.subr.bf16.mxu0 %v2889
    %3551 = vmatpush1.bf16.msra.mxu0 %v2888
    %3552 = vmatprep.mubr.bf16.mxu0 %v1991
    %3553 = vmatmul.mubr.bf16.gmra.mrb[0].mxu0 %v1990
    %v3554 = vpop.f32.mrb[0].mxu0
    %v3555 = vadd.f32 %v629, %v3554
    %v3556 = vpop.f32.mrb[0].mxu0
    %v3557 = vadd.f32 %v633, %v3556
    %v3558 = vpop.f32.mrb[0].mxu0
    %v3559 = vpop.f32.mrb[0].mxu0
    %3560 = vdwg.mxu0
    %3561 = vmatprep.subr.bf16.mxu0 %v2897
    %3562 = vmatpush1.bf16.msra.mxu0 %v2896
    %3563 = vmatprep.subr.bf16.mxu0 %v2905
    %3564 = vmatpush1.bf16.msra.mxu0 %v2904
    %3565 = vmatprep.subr.bf16.mxu0 %v2913
    %3566 = vmatpush1.bf16.msra.mxu0 %v2912
    %3567 = vmatprep.subr.bf16.mxu0 %v2921
    %3568 = vmatpush1.bf16.msra.mxu0 %v2920
    %3569 = vmatprep.subr.bf16.mxu0 %v2929
    %3570 = vmatpush1.bf16.msra.mxu0 %v2928
    %3571 = vmatprep.subr.bf16.mxu0 %v2937
    %3572 = vmatpush1.bf16.msra.mxu0 %v2936
    %3573 = vmatprep.subr.bf16.mxu0 %v2945
    %3574 = vmatpush1.bf16.msra.mxu0 %v2944
    %3575 = vmatprep.subr.bf16.mxu0 %v2953
    %3576 = vmatpush1.bf16.msra.mxu0 %v2952
    %3577 = vmatprep.subr.bf16.mxu0 %v2961
    %3578 = vmatpush1.bf16.msra.mxu0 %v2960
    %3579 = vmatprep.subr.bf16.mxu0 %v2969
    %3580 = vmatpush1.bf16.msra.mxu0 %v2968
    %3581 = vmatprep.subr.bf16.mxu0 %v2977
    %3582 = vmatpush1.bf16.msra.mxu0 %v2976
    %3583 = vmatprep.subr.bf16.mxu0 %v2985
    %3584 = vmatpush1.bf16.msra.mxu0 %v2984
    %3585 = vmatprep.subr.bf16.mxu0 %v2993
    %3586 = vmatpush1.bf16.msra.mxu0 %v2992
    %3587 = vmatprep.subr.bf16.mxu0 %v3001
    %3588 = vmatpush1.bf16.msra.mxu0 %v3000
    %3589 = vmatprep.subr.bf16.mxu0 %v3009
    %3590 = vmatpush1.bf16.msra.mxu0 %v3008
    %3591 = vmatprep.subr.bf16.mxu0 %v3017
    %3592 = vmatpush1.bf16.msra.mxu0 %v3016
    %3593 = vmatprep.mubr.bf16.mxu0 %v1993
    %3594 = vmatmul.mubr.bf16.gmra.mrb[0].mxu0 %v1992
    %v3595 = vpop.f32.mrb[0].mxu0
    %v3596 = vadd.f32 %v3555, %v3595
    %v3597 = vpop.f32.mrb[0].mxu0
    %v3598 = vadd.f32 %v3557, %v3597
    %v3599 = vpop.f32.mrb[0].mxu0
    %v3600 = vpop.f32.mrb[0].mxu0
    %3601 = vdwg.mxu0
    %v3602 = vxor.u32 %v3350, 2147483648
    %v3603 = vxor.u32 %v3352, 2147483648
    %v3604 = vmul.f32 %v3602, 1.442695
    %v3605 = vpow.pop %v3604
    %v3606 = vmul.f32 %v3603, 1.442695
    %v3607 = vpow.pop %v3606
    %v3608 = vadd.f32 %v3605, 1.0
    %v3609 = vadd.f32 %v3607, 1.0
    %v3610 = vrcp.pop %v3608
    %v3611 = vmul.f32 1.0, %v3610
    %v3612 = vrcp.pop %v3609
    %v3613 = vmul.f32 1.0, %v3612
    %v3614 = vxor.u32 %v3432, 2147483648
    %v3615 = vxor.u32 %v3434, 2147483648
    %v3616 = vmul.f32 %v3614, 1.442695
    %v3617 = vpow.pop %v3616
    %v3618 = vmul.f32 %v3615, 1.442695
    %v3619 = vpow.pop %v3618
    %v3620 = vadd.f32 %v3617, 1.0
    %v3621 = vadd.f32 %v3619, 1.0
    %v3622 = vrcp.pop %v3620
    %v3623 = vmul.f32 1.0, %v3622
    %v3624 = vrcp.pop %v3621
    %v3625 = vmul.f32 1.0, %v3624
    %v3626 = vtanh.pop %v3514
    %v3627 = vtanh.pop %v3516
    %v3628 = vxor.u32 %v3596, 2147483648
    %v3629 = vxor.u32 %v3598, 2147483648
    %v3630 = vmul.f32 %v3628, 1.442695
    %v3631 = vpow.pop %v3630
    %v3632 = vmul.f32 %v3629, 1.442695
    %v3633 = vpow.pop %v3632
    %v3634 = vadd.f32 %v3631, 1.0
    %v3635 = vadd.f32 %v3633, 1.0
    %v3636 = vrcp.pop %v3634
    %v3637 = vmul.f32 1.0, %v3636
    %v3638 = vrcp.pop %v3635
    %v3639 = vmul.f32 1.0, %v3638
    %v3640 = vmul.f32 %v3623, %v648
    %v3641 = vmul.f32 %v3625, %v649
    %v3642 = vmul.f32 %v3611, %v3626
    %v3643 = vmul.f32 %v3613, %v3627
    %v3644 = vadd.f32 %v3640, %v3642
    %v3645 = vadd.f32 %v3641, %v3643
    %v3646 = vtanh.pop %v3644
    %v3647 = vtanh.pop %v3645
    %v3648 = vmul.f32 %v3637, %v3646
    %v3649 = vmul.f32 %v3639, %v3647
    %s3650 = scalar_lea.vmem [#allocation6], 8
    %v3651 = vld [vmem:[%s3650] sm:$0xff]
    %v3652 = vpack.c.bf16 %v3651, %v3651
    %3653 = vmatprep.subr.bf16.mxu0 %v1231
    %3654 = vmatpush1.bf16.msra.mxu0 %v1230
    %3655 = vmatprep.subr.bf16.mxu0 %v1239
    %3656 = vmatpush1.bf16.msra.mxu0 %v1238
    %3657 = vmatprep.subr.bf16.mxu0 %v1247
    %3658 = vmatpush1.bf16.msra.mxu0 %v1246
    %3659 = vmatprep.subr.bf16.mxu0 %v1255
    %3660 = vmatpush1.bf16.msra.mxu0 %v1254
    %3661 = vmatprep.subr.bf16.mxu0 %v1263
    %3662 = vmatpush1.bf16.msra.mxu0 %v1262
    %3663 = vmatprep.subr.bf16.mxu0 %v1271
    %3664 = vmatpush1.bf16.msra.mxu0 %v1270
    %3665 = vmatprep.subr.bf16.mxu0 %v1279
    %3666 = vmatpush1.bf16.msra.mxu0 %v1278
    %3667 = vmatprep.subr.bf16.mxu0 %v1287
    %3668 = vmatpush1.bf16.msra.mxu0 %v1286
    %3669 = vmatprep.subr.bf16.mxu0 %v1295
    %3670 = vmatpush1.bf16.msra.mxu0 %v1294
    %3671 = vmatprep.subr.bf16.mxu0 %v1303
    %3672 = vmatpush1.bf16.msra.mxu0 %v1302
    %3673 = vmatprep.subr.bf16.mxu0 %v1311
    %3674 = vmatpush1.bf16.msra.mxu0 %v1310
    %3675 = vmatprep.subr.bf16.mxu0 %v1319
    %3676 = vmatpush1.bf16.msra.mxu0 %v1318
    %3677 = vmatprep.subr.bf16.mxu0 %v1327
    %3678 = vmatpush1.bf16.msra.mxu0 %v1326
    %3679 = vmatprep.subr.bf16.mxu0 %v1335
    %3680 = vmatpush1.bf16.msra.mxu0 %v1334
    %3681 = vmatprep.subr.bf16.mxu0 %v1343
    %3682 = vmatpush1.bf16.msra.mxu0 %v1342
    %3683 = vmatprep.subr.bf16.mxu0 %v1351
    %3684 = vmatpush1.bf16.msra.mxu0 %v1350
    %3685 = vmatprep.mubr.bf16.mxu0 %v1990
    %3686 = vmatmul.mubr.bf16.gmra.mrb[0].mxu0 %v3652
    %v3687 = vpop.f32.mrb[0].mxu0
    %v3688 = vadd.f32 %v563, %v3687
    %v3689 = vpop.f32.mrb[0].mxu0
    %v3690 = vadd.f32 %v567, %v3689
    %v3691 = vpop.f32.mrb[0].mxu0
    %v3692 = vpop.f32.mrb[0].mxu0
    %3693 = vdwg.mxu0
    %3694 = vmatprep.subr.bf16.mxu0 %v1359
    %3695 = vmatpush1.bf16.msra.mxu0 %v1358
    %3696 = vmatprep.subr.bf16.mxu0 %v1367
    %3697 = vmatpush1.bf16.msra.mxu0 %v1366
    %3698 = vmatprep.subr.bf16.mxu0 %v1375
    %3699 = vmatpush1.bf16.msra.mxu0 %v1374
    %3700 = vmatprep.subr.bf16.mxu0 %v1383
    %3701 = vmatpush1.bf16.msra.mxu0 %v1382
    %3702 = vmatprep.subr.bf16.mxu0 %v1391
    %3703 = vmatpush1.bf16.msra.mxu0 %v1390
    %3704 = vmatprep.subr.bf16.mxu0 %v1399
    %3705 = vmatpush1.bf16.msra.mxu0 %v1398
    %3706 = vmatprep.subr.bf16.mxu0 %v1407
    %3707 = vmatpush1.bf16.msra.mxu0 %v1406
    %3708 = vmatprep.subr.bf16.mxu0 %v1415
    %3709 = vmatpush1.bf16.msra.mxu0 %v1414
    %3710 = vmatprep.subr.bf16.mxu0 0
    %3711 = vmatpush1.bf16.msra.mxu0 0
    %3712 = vmatprep.subr.bf16.mxu0 0
    %3713 = vmatpush1.bf16.msra.mxu0 0
    %3714 = vmatprep.subr.bf16.mxu0 0
    %3715 = vmatpush1.bf16.msra.mxu0 0
    %3716 = vmatprep.subr.bf16.mxu0 0
    %3717 = vmatpush1.bf16.msra.mxu0 0
    %3718 = vmatprep.subr.bf16.mxu0 0
    %3719 = vmatpush1.bf16.msra.mxu0 0
    %3720 = vmatprep.subr.bf16.mxu0 0
    %3721 = vmatpush1.bf16.msra.mxu0 0
    %3722 = vmatprep.subr.bf16.mxu0 0
    %3723 = vmatpush1.bf16.msra.mxu0 0
    %3724 = vmatprep.subr.bf16.mxu0 0
    %3725 = vmatpush1.bf16.msra.mxu0 0
    %3726 = vmatprep.mubr.bf16.mxu0 0
    %3727 = vmatmul.mubr.bf16.gmra.mrb[0].mxu0 %v1991
    %v3728 = vpop.f32.mrb[0].mxu0
    %v3729 = vadd.f32 %v3688, %v3728
    %v3730 = vpop.f32.mrb[0].mxu0
    %v3731 = vadd.f32 %v3690, %v3730
    %v3732 = vpop.f32.mrb[0].mxu0
    %v3733 = vpop.f32.mrb[0].mxu0
    %3734 = vdwg.mxu0
    %3735 = vmatprep.subr.bf16.mxu0 %v1233
    %3736 = vmatpush1.bf16.msra.mxu0 %v1232
    %3737 = vmatprep.subr.bf16.mxu0 %v1241
    %3738 = vmatpush1.bf16.msra.mxu0 %v1240
    %3739 = vmatprep.subr.bf16.mxu0 %v1249
    %3740 = vmatpush1.bf16.msra.mxu0 %v1248
    %3741 = vmatprep.subr.bf16.mxu0 %v1257
    %3742 = vmatpush1.bf16.msra.mxu0 %v1256
    %3743 = vmatprep.subr.bf16.mxu0 %v1265
    %3744 = vmatpush1.bf16.msra.mxu0 %v1264
    %3745 = vmatprep.subr.bf16.mxu0 %v1273
    %3746 = vmatpush1.bf16.msra.mxu0 %v1272
    %3747 = vmatprep.subr.bf16.mxu0 %v1281
    %3748 = vmatpush1.bf16.msra.mxu0 %v1280
    %3749 = vmatprep.subr.bf16.mxu0 %v1289
    %3750 = vmatpush1.bf16.msra.mxu0 %v1288
    %3751 = vmatprep.subr.bf16.mxu0 %v1297
    %3752 = vmatpush1.bf16.msra.mxu0 %v1296
    %3753 = vmatprep.subr.bf16.mxu0 %v1305
    %3754 = vmatpush1.bf16.msra.mxu0 %v1304
    %3755 = vmatprep.subr.bf16.mxu0 %v1313
    %3756 = vmatpush1.bf16.msra.mxu0 %v1312
    %3757 = vmatprep.subr.bf16.mxu0 %v1321
    %3758 = vmatpush1.bf16.msra.mxu0 %v1320
    %3759 = vmatprep.subr.bf16.mxu0 %v1329
    %3760 = vmatpush1.bf16.msra.mxu0 %v1328
    %3761 = vmatprep.subr.bf16.mxu0 %v1337
    %3762 = vmatpush1.bf16.msra.mxu0 %v1336
    %3763 = vmatprep.subr.bf16.mxu0 %v1345
    %3764 = vmatpush1.bf16.msra.mxu0 %v1344
    %3765 = vmatprep.subr.bf16.mxu0 %v1353
    %3766 = vmatpush1.bf16.msra.mxu0 %v1352
    %3767 = vmatprep.mubr.bf16.mxu0 %v1990
    %3768 = vmatmul.mubr.bf16.gmra.mrb[0].mxu0 %v3652
    %v3769 = vpop.f32.mrb[0].mxu0
    %v3770 = vadd.f32 %v571, %v3769
    %v3771 = vpop.f32.mrb[0].mxu0
    %v3772 = vadd.f32 %v575, %v3771
    %v3773 = vpop.f32.mrb[0].mxu0
    %v3774 = vpop.f32.mrb[0].mxu0
    %3775 = vdwg.mxu0
    %3776 = vmatprep.subr.bf16.mxu0 %v1361
    %3777 = vmatpush1.bf16.msra.mxu0 %v1360
    %3778 = vmatprep.subr.bf16.mxu0 %v1369
    %3779 = vmatpush1.bf16.msra.mxu0 %v1368
    %3780 = vmatprep.subr.bf16.mxu0 %v1377
    %3781 = vmatpush1.bf16.msra.mxu0 %v1376
    %3782 = vmatprep.subr.bf16.mxu0 %v1385
    %3783 = vmatpush1.bf16.msra.mxu0 %v1384
    %3784 = vmatprep.subr.bf16.mxu0 %v1393
    %3785 = vmatpush1.bf16.msra.mxu0 %v1392
    %3786 = vmatprep.subr.bf16.mxu0 %v1401
    %3787 = vmatpush1.bf16.msra.mxu0 %v1400
    %3788 = vmatprep.subr.bf16.mxu0 %v1409
    %3789 = vmatpush1.bf16.msra.mxu0 %v1408
    %3790 = vmatprep.subr.bf16.mxu0 %v1417
    %3791 = vmatpush1.bf16.msra.mxu0 %v1416
    %3792 = vmatprep.subr.bf16.mxu0 0
    %3793 = vmatpush1.bf16.msra.mxu0 0
    %3794 = vmatprep.subr.bf16.mxu0 0
    %3795 = vmatpush1.bf16.msra.mxu0 0
    %3796 = vmatprep.subr.bf16.mxu0 0
    %3797 = vmatpush1.bf16.msra.mxu0 0
    %3798 = vmatprep.subr.bf16.mxu0 0
    %3799 = vmatpush1.bf16.msra.mxu0 0
    %3800 = vmatprep.subr.bf16.mxu0 0
    %3801 = vmatpush1.bf16.msra.mxu0 0
    %3802 = vmatprep.subr.bf16.mxu0 0
    %3803 = vmatpush1.bf16.msra.mxu0 0
    %3804 = vmatprep.subr.bf16.mxu0 0
    %3805 = vmatpush1.bf16.msra.mxu0 0
    %3806 = vmatprep.subr.bf16.mxu0 0
    %3807 = vmatpush1.bf16.msra.mxu0 0
    %3808 = vmatprep.mubr.bf16.mxu0 0
    %3809 = vmatmul.mubr.bf16.gmra.mrb[0].mxu0 %v1991
    %v3810 = vpop.f32.mrb[0].mxu0
    %v3811 = vadd.f32 %v3770, %v3810
    %v3812 = vpop.f32.mrb[0].mxu0
    %v3813 = vadd.f32 %v3772, %v3812
    %v3814 = vpop.f32.mrb[0].mxu0
    %v3815 = vpop.f32.mrb[0].mxu0
    %3816 = vdwg.mxu0
    %3817 = vmatprep.subr.bf16.mxu0 %v1235
    %3818 = vmatpush1.bf16.msra.mxu0 %v1234
    %3819 = vmatprep.subr.bf16.mxu0 %v1243
    %3820 = vmatpush1.bf16.msra.mxu0 %v1242
    %3821 = vmatprep.subr.bf16.mxu0 %v1251
    %3822 = vmatpush1.bf16.msra.mxu0 %v1250
    %3823 = vmatprep.subr.bf16.mxu0 %v1259
    %3824 = vmatpush1.bf16.msra.mxu0 %v1258
    %3825 = vmatprep.subr.bf16.mxu0 %v1267
    %3826 = vmatpush1.bf16.msra.mxu0 %v1266
    %3827 = vmatprep.subr.bf16.mxu0 %v1275
    %3828 = vmatpush1.bf16.msra.mxu0 %v1274
    %3829 = vmatprep.subr.bf16.mxu0 %v1283
    %3830 = vmatpush1.bf16.msra.mxu0 %v1282
    %3831 = vmatprep.subr.bf16.mxu0 %v1291
    %3832 = vmatpush1.bf16.msra.mxu0 %v1290
    %3833 = vmatprep.subr.bf16.mxu0 %v1299
    %3834 = vmatpush1.bf16.msra.mxu0 %v1298
    %3835 = vmatprep.subr.bf16.mxu0 %v1307
    %3836 = vmatpush1.bf16.msra.mxu0 %v1306
    %3837 = vmatprep.subr.bf16.mxu0 %v1315
    %3838 = vmatpush1.bf16.msra.mxu0 %v1314
    %3839 = vmatprep.subr.bf16.mxu0 %v1323
    %3840 = vmatpush1.bf16.msra.mxu0 %v1322
    %3841 = vmatprep.subr.bf16.mxu0 %v1331
    %3842 = vmatpush1.bf16.msra.mxu0 %v1330
    %3843 = vmatprep.subr.bf16.mxu0 %v1339
    %3844 = vmatpush1.bf16.msra.mxu0 %v1338
    %3845 = vmatprep.subr.bf16.mxu0 %v1347
    %3846 = vmatpush1.bf16.msra.mxu0 %v1346
    %3847 = vmatprep.subr.bf16.mxu0 %v1355
    %3848 = vmatpush1.bf16.msra.mxu0 %v1354
    %3849 = vmatprep.mubr.bf16.mxu0 %v1990
    %3850 = vmatmul.mubr.bf16.gmra.mrb[0].mxu0 %v3652
    %v3851 = vpop.f32.mrb[0].mxu0
    %v3852 = vadd.f32 %v579, %v3851
    %v3853 = vpop.f32.mrb[0].mxu0
    %v3854 = vadd.f32 %v583, %v3853
    %v3855 = vpop.f32.mrb[0].mxu0
    %v3856 = vpop.f32.mrb[0].mxu0
    %3857 = vdwg.mxu0
    %3858 = vmatprep.subr.bf16.mxu0 %v1363
    %3859 = vmatpush1.bf16.msra.mxu0 %v1362
    %3860 = vmatprep.subr.bf16.mxu0 %v1371
    %3861 = vmatpush1.bf16.msra.mxu0 %v1370
    %3862 = vmatprep.subr.bf16.mxu0 %v1379
    %3863 = vmatpush1.bf16.msra.mxu0 %v1378
    %3864 = vmatprep.subr.bf16.mxu0 %v1387
    %3865 = vmatpush1.bf16.msra.mxu0 %v1386
    %3866 = vmatprep.subr.bf16.mxu0 %v1395
    %3867 = vmatpush1.bf16.msra.mxu0 %v1394
    %3868 = vmatprep.subr.bf16.mxu0 %v1403
    %3869 = vmatpush1.bf16.msra.mxu0 %v1402
    %3870 = vmatprep.subr.bf16.mxu0 %v1411
    %3871 = vmatpush1.bf16.msra.mxu0 %v1410
    %3872 = vmatprep.subr.bf16.mxu0 %v1419
    %3873 = vmatpush1.bf16.msra.mxu0 %v1418
    %3874 = vmatprep.subr.bf16.mxu0 0
    %3875 = vmatpush1.bf16.msra.mxu0 0
    %3876 = vmatprep.subr.bf16.mxu0 0
    %3877 = vmatpush1.bf16.msra.mxu0 0
    %3878 = vmatprep.subr.bf16.mxu0 0
    %3879 = vmatpush1.bf16.msra.mxu0 0
    %3880 = vmatprep.subr.bf16.mxu0 0
    %3881 = vmatpush1.bf16.msra.mxu0 0
    %3882 = vmatprep.subr.bf16.mxu0 0
    %3883 = vmatpush1.bf16.msra.mxu0 0
    %3884 = vmatprep.subr.bf16.mxu0 0
    %3885 = vmatpush1.bf16.msra.mxu0 0
    %3886 = vmatprep.subr.bf16.mxu0 0
    %3887 = vmatpush1.bf16.msra.mxu0 0
    %3888 = vmatprep.subr.bf16.mxu0 0
    %3889 = vmatpush1.bf16.msra.mxu0 0
    %3890 = vmatprep.mubr.bf16.mxu0 0
    %3891 = vmatmul.mubr.bf16.gmra.mrb[0].mxu0 %v1991
    %v3892 = vpop.f32.mrb[0].mxu0
    %v3893 = vadd.f32 %v3852, %v3892
    %v3894 = vpop.f32.mrb[0].mxu0
    %v3895 = vadd.f32 %v3854, %v3894
    %v3896 = vpop.f32.mrb[0].mxu0
    %v3897 = vpop.f32.mrb[0].mxu0
    %3898 = vdwg.mxu0
    %3899 = vmatprep.subr.bf16.mxu0 %v1237
    %3900 = vmatpush1.bf16.msra.mxu0 %v1236
    %3901 = vmatprep.subr.bf16.mxu0 %v1245
    %3902 = vmatpush1.bf16.msra.mxu0 %v1244
    %3903 = vmatprep.subr.bf16.mxu0 %v1253
    %3904 = vmatpush1.bf16.msra.mxu0 %v1252
    %3905 = vmatprep.subr.bf16.mxu0 %v1261
    %3906 = vmatpush1.bf16.msra.mxu0 %v1260
    %3907 = vmatprep.subr.bf16.mxu0 %v1269
    %3908 = vmatpush1.bf16.msra.mxu0 %v1268
    %3909 = vmatprep.subr.bf16.mxu0 %v1277
    %3910 = vmatpush1.bf16.msra.mxu0 %v1276
    %3911 = vmatprep.subr.bf16.mxu0 %v1285
    %3912 = vmatpush1.bf16.msra.mxu0 %v1284
    %3913 = vmatprep.subr.bf16.mxu0 %v1293
    %3914 = vmatpush1.bf16.msra.mxu0 %v1292
    %3915 = vmatprep.subr.bf16.mxu0 %v1301
    %3916 = vmatpush1.bf16.msra.mxu0 %v1300
    %3917 = vmatprep.subr.bf16.mxu0 %v1309
    %3918 = vmatpush1.bf16.msra.mxu0 %v1308
    %3919 = vmatprep.subr.bf16.mxu0 %v1317
    %3920 = vmatpush1.bf16.msra.mxu0 %v1316
    %3921 = vmatprep.subr.bf16.mxu0 %v1325
    %3922 = vmatpush1.bf16.msra.mxu0 %v1324
    %3923 = vmatprep.subr.bf16.mxu0 %v1333
    %3924 = vmatpush1.bf16.msra.mxu0 %v1332
    %3925 = vmatprep.subr.bf16.mxu0 %v1341
    %3926 = vmatpush1.bf16.msra.mxu0 %v1340
    %3927 = vmatprep.subr.bf16.mxu0 %v1349
    %3928 = vmatpush1.bf16.msra.mxu0 %v1348
    %3929 = vmatprep.subr.bf16.mxu0 %v1357
    %3930 = vmatpush1.bf16.msra.mxu0 %v1356
    %3931 = vmatprep.mubr.bf16.mxu0 %v1990
    %3932 = vmatmul.mubr.bf16.gmra.mrb[0].mxu0 %v3652
    %v3933 = vpop.f32.mrb[0].mxu0
    %v3934 = vadd.f32 %v587, %v3933
    %v3935 = vpop.f32.mrb[0].mxu0
    %v3936 = vadd.f32 %v591, %v3935
    %v3937 = vpop.f32.mrb[0].mxu0
    %v3938 = vpop.f32.mrb[0].mxu0
    %3939 = vdwg.mxu0
    %3940 = vmatprep.subr.bf16.mxu0 %v1365
    %3941 = vmatpush1.bf16.msra.mxu0 %v1364
    %3942 = vmatprep.subr.bf16.mxu0 %v1373
    %3943 = vmatpush1.bf16.msra.mxu0 %v1372
    %3944 = vmatprep.subr.bf16.mxu0 %v1381
    %3945 = vmatpush1.bf16.msra.mxu0 %v1380
    %3946 = vmatprep.subr.bf16.mxu0 %v1389
    %3947 = vmatpush1.bf16.msra.mxu0 %v1388
    %3948 = vmatprep.subr.bf16.mxu0 %v1397
    %3949 = vmatpush1.bf16.msra.mxu0 %v1396
    %3950 = vmatprep.subr.bf16.mxu0 %v1405
    %3951 = vmatpush1.bf16.msra.mxu0 %v1404
    %3952 = vmatprep.subr.bf16.mxu0 %v1413
    %3953 = vmatpush1.bf16.msra.mxu0 %v1412
    %3954 = vmatprep.subr.bf16.mxu0 %v1421
    %3955 = vmatpush1.bf16.msra.mxu0 %v1420
    %3956 = vmatprep.subr.bf16.mxu0 0
    %3957 = vmatpush1.bf16.msra.mxu0 0
    %3958 = vmatprep.subr.bf16.mxu0 0
    %3959 = vmatpush1.bf16.msra.mxu0 0
    %3960 = vmatprep.subr.bf16.mxu0 0
    %3961 = vmatpush1.bf16.msra.mxu0 0
    %3962 = vmatprep.subr.bf16.mxu0 0
    %3963 = vmatpush1.bf16.msra.mxu0 0
    %3964 = vmatprep.subr.bf16.mxu0 0
    %3965 = vmatpush1.bf16.msra.mxu0 0
    %3966 = vmatprep.subr.bf16.mxu0 0
    %3967 = vmatpush1.bf16.msra.mxu0 0
    %3968 = vmatprep.subr.bf16.mxu0 0
    %3969 = vmatpush1.bf16.msra.mxu0 0
    %3970 = vmatprep.subr.bf16.mxu0 0
    %3971 = vmatpush1.bf16.msra.mxu0 0
    %3972 = vmatprep.mubr.bf16.mxu0 0
    %3973 = vmatmul.mubr.bf16.gmra.mrb[0].mxu0 %v1991
    %v3974 = vpop.f32.mrb[0].mxu0
    %v3975 = vadd.f32 %v3934, %v3974
    %v3976 = vpop.f32.mrb[0].mxu0
    %v3977 = vadd.f32 %v3936, %v3976
    %v3978 = vpop.f32.mrb[0].mxu0
    %v3979 = vpop.f32.mrb[0].mxu0
    %3980 = vdwg.mxu0
    %v3981 = vxor.u32 %v3729, 2147483648
    %v3982 = vxor.u32 %v3731, 2147483648
    %v3983 = vmul.f32 %v3981, 1.442695
    %v3984 = vpow.pop %v3983
    %v3985 = vmul.f32 %v3982, 1.442695
    %v3986 = vpow.pop %v3985
    %v3987 = vadd.f32 %v3984, 1.0
    %v3988 = vadd.f32 %v3986, 1.0
    %v3989 = vrcp.pop %v3987
    %v3990 = vmul.f32 1.0, %v3989
    %v3991 = vrcp.pop %v3988
    %v3992 = vmul.f32 1.0, %v3991
    %v3993 = vxor.u32 %v3811, 2147483648
    %v3994 = vxor.u32 %v3813, 2147483648
    %v3995 = vmul.f32 %v3993, 1.442695
    %v3996 = vpow.pop %v3995
    %v3997 = vmul.f32 %v3994, 1.442695
    %v3998 = vpow.pop %v3997
    %v3999 = vadd.f32 %v3996, 1.0
    %v4000 = vadd.f32 %v3998, 1.0
    %v4001 = vrcp.pop %v3999
    %v4002 = vmul.f32 1.0, %v4001
    %v4003 = vrcp.pop %v4000
    %v4004 = vmul.f32 1.0, %v4003
    %v4005 = vtanh.pop %v3893
    %v4006 = vtanh.pop %v3895
    %v4007 = vxor.u32 %v3975, 2147483648
    %v4008 = vxor.u32 %v3977, 2147483648
    %v4009 = vmul.f32 %v4007, 1.442695
    %v4010 = vpow.pop %v4009
    %v4011 = vmul.f32 %v4008, 1.442695
    %v4012 = vpow.pop %v4011
    %v4013 = vadd.f32 %v4010, 1.0
    %v4014 = vadd.f32 %v4012, 1.0
    %v4015 = vrcp.pop %v4013
    %v4016 = vmul.f32 1.0, %v4015
    %v4017 = vrcp.pop %v4014
    %v4018 = vmul.f32 1.0, %v4017
    %v4019 = vmul.f32 %v4002, %v1984
    %v4020 = vmul.f32 %v4004, %v1985
    %v4021 = vmul.f32 %v3990, %v4005
    %v4022 = vmul.f32 %v3992, %v4006
    %v4023 = vadd.f32 %v4019, %v4021
    %v4024 = vadd.f32 %v4020, %v4022
    %v4025 = vtanh.pop %v4023
    %v4026 = vtanh.pop %v4024
    %v4027 = vmul.f32 %v4016, %v4025
    %v4028 = vmul.f32 %v4018, %v4026
    %v4029 = vpack.c.bf16 %v4027, %v4027
    %v4030 = vpack.c.bf16 %v4028, %v4028
    %v4031 = vpack.c.bf16 %v3648, %v3648
    %v4032 = vpack.c.bf16 %v3649, %v3649
    %4033 = vmatprep.subr.bf16.mxu0 %v2763
    %4034 = vmatpush1.bf16.msra.mxu0 %v2762
    %4035 = vmatprep.subr.bf16.mxu0 %v2771
    %4036 = vmatpush1.bf16.msra.mxu0 %v2770
    %4037 = vmatprep.subr.bf16.mxu0 %v2779
    %4038 = vmatpush1.bf16.msra.mxu0 %v2778
    %4039 = vmatprep.subr.bf16.mxu0 %v2787
    %4040 = vmatpush1.bf16.msra.mxu0 %v2786
    %4041 = vmatprep.subr.bf16.mxu0 %v2795
    %4042 = vmatpush1.bf16.msra.mxu0 %v2794
    %4043 = vmatprep.subr.bf16.mxu0 %v2803
    %4044 = vmatpush1.bf16.msra.mxu0 %v2802
    %4045 = vmatprep.subr.bf16.mxu0 %v2811
    %4046 = vmatpush1.bf16.msra.mxu0 %v2810
    %4047 = vmatprep.subr.bf16.mxu0 %v2819
    %4048 = vmatpush1.bf16.msra.mxu0 %v2818
    %4049 = vmatprep.subr.bf16.mxu0 %v2827
    %4050 = vmatpush1.bf16.msra.mxu0 %v2826
    %4051 = vmatprep.subr.bf16.mxu0 %v2835
    %4052 = vmatpush1.bf16.msra.mxu0 %v2834
    %4053 = vmatprep.subr.bf16.mxu0 %v2843
    %4054 = vmatpush1.bf16.msra.mxu0 %v2842
    %4055 = vmatprep.subr.bf16.mxu0 %v2851
    %4056 = vmatpush1.bf16.msra.mxu0 %v2850
    %4057 = vmatprep.subr.bf16.mxu0 %v2859
    %4058 = vmatpush1.bf16.msra.mxu0 %v2858
    %4059 = vmatprep.subr.bf16.mxu0 %v2867
    %4060 = vmatpush1.bf16.msra.mxu0 %v2866
    %4061 = vmatprep.subr.bf16.mxu0 %v2875
    %4062 = vmatpush1.bf16.msra.mxu0 %v2874
    %4063 = vmatprep.subr.bf16.mxu0 %v2883
    %4064 = vmatpush1.bf16.msra.mxu0 %v2882
    %4065 = vmatprep.mubr.bf16.mxu0 %v4030
    %4066 = vmatmul.mubr.bf16.gmra.mrb[0].mxu0 %v4029
    %v4067 = vpop.f32.mrb[0].mxu0
    %v4068 = vadd.f32 %v605, %v4067
    %v4069 = vpop.f32.mrb[0].mxu0
    %v4070 = vadd.f32 %v609, %v4069
    %v4071 = vpop.f32.mrb[0].mxu0
    %v4072 = vpop.f32.mrb[0].mxu0
    %4073 = vdwg.mxu0
    %4074 = vmatprep.subr.bf16.mxu0 %v2891
    %4075 = vmatpush1.bf16.msra.mxu0 %v2890
    %4076 = vmatprep.subr.bf16.mxu0 %v2899
    %4077 = vmatpush1.bf16.msra.mxu0 %v2898
    %4078 = vmatprep.subr.bf16.mxu0 %v2907
    %4079 = vmatpush1.bf16.msra.mxu0 %v2906
    %4080 = vmatprep.subr.bf16.mxu0 %v2915
    %4081 = vmatpush1.bf16.msra.mxu0 %v2914
    %4082 = vmatprep.subr.bf16.mxu0 %v2923
    %4083 = vmatpush1.bf16.msra.mxu0 %v2922
    %4084 = vmatprep.subr.bf16.mxu0 %v2931
    %4085 = vmatpush1.bf16.msra.mxu0 %v2930
    %4086 = vmatprep.subr.bf16.mxu0 %v2939
    %4087 = vmatpush1.bf16.msra.mxu0 %v2938
    %4088 = vmatprep.subr.bf16.mxu0 %v2947
    %4089 = vmatpush1.bf16.msra.mxu0 %v2946
    %4090 = vmatprep.subr.bf16.mxu0 %v2955
    %4091 = vmatpush1.bf16.msra.mxu0 %v2954
    %4092 = vmatprep.subr.bf16.mxu0 %v2963
    %4093 = vmatpush1.bf16.msra.mxu0 %v2962
    %4094 = vmatprep.subr.bf16.mxu0 %v2971
    %4095 = vmatpush1.bf16.msra.mxu0 %v2970
    %4096 = vmatprep.subr.bf16.mxu0 %v2979
    %4097 = vmatpush1.bf16.msra.mxu0 %v2978
    %4098 = vmatprep.subr.bf16.mxu0 %v2987
    %4099 = vmatpush1.bf16.msra.mxu0 %v2986
    %4100 = vmatprep.subr.bf16.mxu0 %v2995
    %4101 = vmatpush1.bf16.msra.mxu0 %v2994
    %4102 = vmatprep.subr.bf16.mxu0 %v3003
    %4103 = vmatpush1.bf16.msra.mxu0 %v3002
    %4104 = vmatprep.subr.bf16.mxu0 %v3011
    %4105 = vmatpush1.bf16.msra.mxu0 %v3010
    %4106 = vmatprep.mubr.bf16.mxu0 %v4032
    %4107 = vmatmul.mubr.bf16.gmra.mrb[0].mxu0 %v4031
    %v4108 = vpop.f32.mrb[0].mxu0
    %v4109 = vadd.f32 %v4068, %v4108
    %v4110 = vpop.f32.mrb[0].mxu0
    %v4111 = vadd.f32 %v4070, %v4110
    %v4112 = vpop.f32.mrb[0].mxu0
    %v4113 = vpop.f32.mrb[0].mxu0
    %4114 = vdwg.mxu0
    %4115 = vmatprep.subr.bf16.mxu0 %v2765
    %4116 = vmatpush1.bf16.msra.mxu0 %v2764
    %4117 = vmatprep.subr.bf16.mxu0 %v2773
    %4118 = vmatpush1.bf16.msra.mxu0 %v2772
    %4119 = vmatprep.subr.bf16.mxu0 %v2781
    %4120 = vmatpush1.bf16.msra.mxu0 %v2780
    %4121 = vmatprep.subr.bf16.mxu0 %v2789
    %4122 = vmatpush1.bf16.msra.mxu0 %v2788
    %4123 = vmatprep.subr.bf16.mxu0 %v2797
    %4124 = vmatpush1.bf16.msra.mxu0 %v2796
    %4125 = vmatprep.subr.bf16.mxu0 %v2805
    %4126 = vmatpush1.bf16.msra.mxu0 %v2804
    %4127 = vmatprep.subr.bf16.mxu0 %v2813
    %4128 = vmatpush1.bf16.msra.mxu0 %v2812
    %4129 = vmatprep.subr.bf16.mxu0 %v2821
    %4130 = vmatpush1.bf16.msra.mxu0 %v2820
    %4131 = vmatprep.subr.bf16.mxu0 %v2829
    %4132 = vmatpush1.bf16.msra.mxu0 %v2828
    %4133 = vmatprep.subr.bf16.mxu0 %v2837
    %4134 = vmatpush1.bf16.msra.mxu0 %v2836
    %4135 = vmatprep.subr.bf16.mxu0 %v2845
    %4136 = vmatpush1.bf16.msra.mxu0 %v2844
    %4137 = vmatprep.subr.bf16.mxu0 %v2853
    %4138 = vmatpush1.bf16.msra.mxu0 %v2852
    %4139 = vmatprep.subr.bf16.mxu0 %v2861
    %4140 = vmatpush1.bf16.msra.mxu0 %v2860
    %4141 = vmatprep.subr.bf16.mxu0 %v2869
    %4142 = vmatpush1.bf16.msra.mxu0 %v2868
    %4143 = vmatprep.subr.bf16.mxu0 %v2877
    %4144 = vmatpush1.bf16.msra.mxu0 %v2876
    %4145 = vmatprep.subr.bf16.mxu0 %v2885
    %4146 = vmatpush1.bf16.msra.mxu0 %v2884
    %4147 = vmatprep.mubr.bf16.mxu0 %v4030
    %4148 = vmatmul.mubr.bf16.gmra.mrb[0].mxu0 %v4029
    %v4149 = vpop.f32.mrb[0].mxu0
    %v4150 = vadd.f32 %v613, %v4149
    %v4151 = vpop.f32.mrb[0].mxu0
    %v4152 = vadd.f32 %v617, %v4151
    %v4153 = vpop.f32.mrb[0].mxu0
    %v4154 = vpop.f32.mrb[0].mxu0
    %4155 = vdwg.mxu0
    %4156 = vmatprep.subr.bf16.mxu0 %v2893
    %4157 = vmatpush1.bf16.msra.mxu0 %v2892
    %4158 = vmatprep.subr.bf16.mxu0 %v2901
    %4159 = vmatpush1.bf16.msra.mxu0 %v2900
    %4160 = vmatprep.subr.bf16.mxu0 %v2909
    %4161 = vmatpush1.bf16.msra.mxu0 %v2908
    %4162 = vmatprep.subr.bf16.mxu0 %v2917
    %4163 = vmatpush1.bf16.msra.mxu0 %v2916
    %4164 = vmatprep.subr.bf16.mxu0 %v2925
    %4165 = vmatpush1.bf16.msra.mxu0 %v2924
    %4166 = vmatprep.subr.bf16.mxu0 %v2933
    %4167 = vmatpush1.bf16.msra.mxu0 %v2932
    %4168 = vmatprep.subr.bf16.mxu0 %v2941
    %4169 = vmatpush1.bf16.msra.mxu0 %v2940
    %4170 = vmatprep.subr.bf16.mxu0 %v2949
    %4171 = vmatpush1.bf16.msra.mxu0 %v2948
    %4172 = vmatprep.subr.bf16.mxu0 %v2957
    %4173 = vmatpush1.bf16.msra.mxu0 %v2956
    %4174 = vmatprep.subr.bf16.mxu0 %v2965
    %4175 = vmatpush1.bf16.msra.mxu0 %v2964
    %4176 = vmatprep.subr.bf16.mxu0 %v2973
    %4177 = vmatpush1.bf16.msra.mxu0 %v2972
    %4178 = vmatprep.subr.bf16.mxu0 %v2981
    %4179 = vmatpush1.bf16.msra.mxu0 %v2980
    %4180 = vmatprep.subr.bf16.mxu0 %v2989
    %4181 = vmatpush1.bf16.msra.mxu0 %v2988
    %4182 = vmatprep.subr.bf16.mxu0 %v2997
    %4183 = vmatpush1.bf16.msra.mxu0 %v2996
    %4184 = vmatprep.subr.bf16.mxu0 %v3005
    %4185 = vmatpush1.bf16.msra.mxu0 %v3004
    %4186 = vmatprep.subr.bf16.mxu0 %v3013
    %4187 = vmatpush1.bf16.msra.mxu0 %v3012
    %4188 = vmatprep.mubr.bf16.mxu0 %v4032
    %4189 = vmatmul.mubr.bf16.gmra.mrb[0].mxu0 %v4031
    %v4190 = vpop.f32.mrb[0].mxu0
    %v4191 = vadd.f32 %v4150, %v4190
    %v4192 = vpop.f32.mrb[0].mxu0
    %v4193 = vadd.f32 %v4152, %v4192
    %v4194 = vpop.f32.mrb[0].mxu0
    %v4195 = vpop.f32.mrb[0].mxu0
    %4196 = vdwg.mxu0
    %4197 = vmatprep.subr.bf16.mxu0 %v2767
    %4198 = vmatpush1.bf16.msra.mxu0 %v2766
    %4199 = vmatprep.subr.bf16.mxu0 %v2775
    %4200 = vmatpush1.bf16.msra.mxu0 %v2774
    %4201 = vmatprep.subr.bf16.mxu0 %v2783
    %4202 = vmatpush1.bf16.msra.mxu0 %v2782
    %4203 = vmatprep.subr.bf16.mxu0 %v2791
    %4204 = vmatpush1.bf16.msra.mxu0 %v2790
    %4205 = vmatprep.subr.bf16.mxu0 %v2799
    %4206 = vmatpush1.bf16.msra.mxu0 %v2798
    %4207 = vmatprep.subr.bf16.mxu0 %v2807
    %4208 = vmatpush1.bf16.msra.mxu0 %v2806
    %4209 = vmatprep.subr.bf16.mxu0 %v2815
    %4210 = vmatpush1.bf16.msra.mxu0 %v2814
    %4211 = vmatprep.subr.bf16.mxu0 %v2823
    %4212 = vmatpush1.bf16.msra.mxu0 %v2822
    %4213 = vmatprep.subr.bf16.mxu0 %v2831
    %4214 = vmatpush1.bf16.msra.mxu0 %v2830
    %4215 = vmatprep.subr.bf16.mxu0 %v2839
    %4216 = vmatpush1.bf16.msra.mxu0 %v2838
    %4217 = vmatprep.subr.bf16.mxu0 %v2847
    %4218 = vmatpush1.bf16.msra.mxu0 %v2846
    %4219 = vmatprep.subr.bf16.mxu0 %v2855
    %4220 = vmatpush1.bf16.msra.mxu0 %v2854
    %4221 = vmatprep.subr.bf16.mxu0 %v2863
    %4222 = vmatpush1.bf16.msra.mxu0 %v2862
    %4223 = vmatprep.subr.bf16.mxu0 %v2871
    %4224 = vmatpush1.bf16.msra.mxu0 %v2870
    %4225 = vmatprep.subr.bf16.mxu0 %v2879
    %4226 = vmatpush1.bf16.msra.mxu0 %v2878
    %4227 = vmatprep.subr.bf16.mxu0 %v2887
    %4228 = vmatpush1.bf16.msra.mxu0 %v2886
    %4229 = vmatprep.mubr.bf16.mxu0 %v4030
    %4230 = vmatmul.mubr.bf16.gmra.mrb[0].mxu0 %v4029
    %v4231 = vpop.f32.mrb[0].mxu0
    %v4232 = vadd.f32 %v621, %v4231
    %v4233 = vpop.f32.mrb[0].mxu0
    %v4234 = vadd.f32 %v625, %v4233
    %v4235 = vpop.f32.mrb[0].mxu0
    %v4236 = vpop.f32.mrb[0].mxu0
    %4237 = vdwg.mxu0
    %4238 = vmatprep.subr.bf16.mxu0 %v2895
    %4239 = vmatpush1.bf16.msra.mxu0 %v2894
    %4240 = vmatprep.subr.bf16.mxu0 %v2903
    %4241 = vmatpush1.bf16.msra.mxu0 %v2902
    %4242 = vmatprep.subr.bf16.mxu0 %v2911
    %4243 = vmatpush1.bf16.msra.mxu0 %v2910
    %4244 = vmatprep.subr.bf16.mxu0 %v2919
    %4245 = vmatpush1.bf16.msra.mxu0 %v2918
    %4246 = vmatprep.subr.bf16.mxu0 %v2927
    %4247 = vmatpush1.bf16.msra.mxu0 %v2926
    %4248 = vmatprep.subr.bf16.mxu0 %v2935
    %4249 = vmatpush1.bf16.msra.mxu0 %v2934
    %4250 = vmatprep.subr.bf16.mxu0 %v2943
    %4251 = vmatpush1.bf16.msra.mxu0 %v2942
    %4252 = vmatprep.subr.bf16.mxu0 %v2951
    %4253 = vmatpush1.bf16.msra.mxu0 %v2950
    %4254 = vmatprep.subr.bf16.mxu0 %v2959
    %4255 = vmatpush1.bf16.msra.mxu0 %v2958
    %4256 = vmatprep.subr.bf16.mxu0 %v2967
    %4257 = vmatpush1.bf16.msra.mxu0 %v2966
    %4258 = vmatprep.subr.bf16.mxu0 %v2975
    %4259 = vmatpush1.bf16.msra.mxu0 %v2974
    %4260 = vmatprep.subr.bf16.mxu0 %v2983
    %4261 = vmatpush1.bf16.msra.mxu0 %v2982
    %4262 = vmatprep.subr.bf16.mxu0 %v2991
    %4263 = vmatpush1.bf16.msra.mxu0 %v2990
    %4264 = vmatprep.subr.bf16.mxu0 %v2999
    %4265 = vmatpush1.bf16.msra.mxu0 %v2998
    %4266 = vmatprep.subr.bf16.mxu0 %v3007
    %4267 = vmatpush1.bf16.msra.mxu0 %v3006
    %4268 = vmatprep.subr.bf16.mxu0 %v3015
    %4269 = vmatpush1.bf16.msra.mxu0 %v3014
    %4270 = vmatprep.mubr.bf16.mxu0 %v4032
    %4271 = vmatmul.mubr.bf16.gmra.mrb[0].mxu0 %v4031
    %v4272 = vpop.f32.mrb[0].mxu0
    %v4273 = vadd.f32 %v4232, %v4272
    %v4274 = vpop.f32.mrb[0].mxu0
    %v4275 = vadd.f32 %v4234, %v4274
    %v4276 = vpop.f32.mrb[0].mxu0
    %v4277 = vpop.f32.mrb[0].mxu0
    %4278 = vdwg.mxu0
    %4279 = vmatprep.subr.bf16.mxu0 %v2769
    %4280 = vmatpush1.bf16.msra.mxu0 %v2768
    %4281 = vmatprep.subr.bf16.mxu0 %v2777
    %4282 = vmatpush1.bf16.msra.mxu0 %v2776
    %4283 = vmatprep.subr.bf16.mxu0 %v2785
    %4284 = vmatpush1.bf16.msra.mxu0 %v2784
    %4285 = vmatprep.subr.bf16.mxu0 %v2793
    %4286 = vmatpush1.bf16.msra.mxu0 %v2792
    %4287 = vmatprep.subr.bf16.mxu0 %v2801
    %4288 = vmatpush1.bf16.msra.mxu0 %v2800
    %4289 = vmatprep.subr.bf16.mxu0 %v2809
    %4290 = vmatpush1.bf16.msra.mxu0 %v2808
    %4291 = vmatprep.subr.bf16.mxu0 %v2817
    %4292 = vmatpush1.bf16.msra.mxu0 %v2816
    %4293 = vmatprep.subr.bf16.mxu0 %v2825
    %4294 = vmatpush1.bf16.msra.mxu0 %v2824
    %4295 = vmatprep.subr.bf16.mxu0 %v2833
    %4296 = vmatpush1.bf16.msra.mxu0 %v2832
    %4297 = vmatprep.subr.bf16.mxu0 %v2841
    %4298 = vmatpush1.bf16.msra.mxu0 %v2840
    %4299 = vmatprep.subr.bf16.mxu0 %v2849
    %4300 = vmatpush1.bf16.msra.mxu0 %v2848
    %4301 = vmatprep.subr.bf16.mxu0 %v2857
    %4302 = vmatpush1.bf16.msra.mxu0 %v2856
    %4303 = vmatprep.subr.bf16.mxu0 %v2865
    %4304 = vmatpush1.bf16.msra.mxu0 %v2864
    %4305 = vmatprep.subr.bf16.mxu0 %v2873
    %4306 = vmatpush1.bf16.msra.mxu0 %v2872
    %4307 = vmatprep.subr.bf16.mxu0 %v2881
    %4308 = vmatpush1.bf16.msra.mxu0 %v2880
    %4309 = vmatprep.subr.bf16.mxu0 %v2889
    %4310 = vmatpush1.bf16.msra.mxu0 %v2888
    %4311 = vmatprep.mubr.bf16.mxu0 %v4030
    %4312 = vmatmul.mubr.bf16.gmra.mrb[0].mxu0 %v4029
    %v4313 = vpop.f32.mrb[0].mxu0
    %v4314 = vadd.f32 %v629, %v4313
    %v4315 = vpop.f32.mrb[0].mxu0
    %v4316 = vadd.f32 %v633, %v4315
    %v4317 = vpop.f32.mrb[0].mxu0
    %v4318 = vpop.f32.mrb[0].mxu0
    %4319 = vdwg.mxu0
    %4320 = vmatprep.subr.bf16.mxu0 %v2897
    %4321 = vmatpush1.bf16.msra.mxu0 %v2896
    %4322 = vmatprep.subr.bf16.mxu0 %v2905
    %4323 = vmatpush1.bf16.msra.mxu0 %v2904
    %4324 = vmatprep.subr.bf16.mxu0 %v2913
    %4325 = vmatpush1.bf16.msra.mxu0 %v2912
    %4326 = vmatprep.subr.bf16.mxu0 %v2921
    %4327 = vmatpush1.bf16.msra.mxu0 %v2920
    %4328 = vmatprep.subr.bf16.mxu0 %v2929
    %4329 = vmatpush1.bf16.msra.mxu0 %v2928
    %4330 = vmatprep.subr.bf16.mxu0 %v2937
    %4331 = vmatpush1.bf16.msra.mxu0 %v2936
    %4332 = vmatprep.subr.bf16.mxu0 %v2945
    %4333 = vmatpush1.bf16.msra.mxu0 %v2944
    %4334 = vmatprep.subr.bf16.mxu0 %v2953
    %4335 = vmatpush1.bf16.msra.mxu0 %v2952
    %4336 = vmatprep.subr.bf16.mxu0 %v2961
    %4337 = vmatpush1.bf16.msra.mxu0 %v2960
    %4338 = vmatprep.subr.bf16.mxu0 %v2969
    %4339 = vmatpush1.bf16.msra.mxu0 %v2968
    %4340 = vmatprep.subr.bf16.mxu0 %v2977
    %4341 = vmatpush1.bf16.msra.mxu0 %v2976
    %4342 = vmatprep.subr.bf16.mxu0 %v2985
    %4343 = vmatpush1.bf16.msra.mxu0 %v2984
    %4344 = vmatprep.subr.bf16.mxu0 %v2993
    %4345 = vmatpush1.bf16.msra.mxu0 %v2992
    %4346 = vmatprep.subr.bf16.mxu0 %v3001
    %4347 = vmatpush1.bf16.msra.mxu0 %v3000
    %4348 = vmatprep.subr.bf16.mxu0 %v3009
    %4349 = vmatpush1.bf16.msra.mxu0 %v3008
    %4350 = vmatprep.subr.bf16.mxu0 %v3017
    %4351 = vmatpush1.bf16.msra.mxu0 %v3016
    %4352 = vmatprep.mubr.bf16.mxu0 %v4032
    %4353 = vmatmul.mubr.bf16.gmra.mrb[0].mxu0 %v4031
    %v4354 = vpop.f32.mrb[0].mxu0
    %v4355 = vadd.f32 %v4314, %v4354
    %v4356 = vpop.f32.mrb[0].mxu0
    %v4357 = vadd.f32 %v4316, %v4356
    %v4358 = vpop.f32.mrb[0].mxu0
    %v4359 = vpop.f32.mrb[0].mxu0
    %4360 = vdwg.mxu0
    %v4361 = vxor.u32 %v4109, 2147483648
    %v4362 = vxor.u32 %v4111, 2147483648
    %v4363 = vmul.f32 %v4361, 1.442695
    %v4364 = vpow.pop %v4363
    %v4365 = vmul.f32 %v4362, 1.442695
    %v4366 = vpow.pop %v4365
    %v4367 = vadd.f32 %v4364, 1.0
    %v4368 = vadd.f32 %v4366, 1.0
    %v4369 = vrcp.pop %v4367
    %v4370 = vmul.f32 1.0, %v4369
    %v4371 = vrcp.pop %v4368
    %v4372 = vmul.f32 1.0, %v4371
    %v4373 = vxor.u32 %v4191, 2147483648
    %v4374 = vxor.u32 %v4193, 2147483648
    %v4375 = vmul.f32 %v4373, 1.442695
    %v4376 = vpow.pop %v4375
    %v4377 = vmul.f32 %v4374, 1.442695
    %v4378 = vpow.pop %v4377
    %v4379 = vadd.f32 %v4376, 1.0
    %v4380 = vadd.f32 %v4378, 1.0
    %v4381 = vrcp.pop %v4379
    %v4382 = vmul.f32 1.0, %v4381
    %v4383 = vrcp.pop %v4380
    %v4384 = vmul.f32 1.0, %v4383
    %v4385 = vtanh.pop %v4273
    %v4386 = vtanh.pop %v4275
    %v4387 = vxor.u32 %v4355, 2147483648
    %v4388 = vxor.u32 %v4357, 2147483648
    %v4389 = vmul.f32 %v4387, 1.442695
    %v4390 = vpow.pop %v4389
    %v4391 = vmul.f32 %v4388, 1.442695
    %v4392 = vpow.pop %v4391
    %v4393 = vadd.f32 %v4390, 1.0
    %v4394 = vadd.f32 %v4392, 1.0
    %v4395 = vrcp.pop %v4393
    %v4396 = vmul.f32 1.0, %v4395
    %v4397 = vrcp.pop %v4394
    %v4398 = vmul.f32 1.0, %v4397
    %v4399 = vmul.f32 %v4382, %v3644
    %v4400 = vmul.f32 %v4384, %v3645
    %v4401 = vmul.f32 %v4370, %v4385
    %v4402 = vmul.f32 %v4372, %v4386
    %v4403 = vadd.f32 %v4399, %v4401
    %v4404 = vadd.f32 %v4400, %v4402
    %v4405 = vtanh.pop %v4403
    %v4406 = vtanh.pop %v4404
    %v4407 = vmul.f32 %v4396, %v4405
    %v4408 = vmul.f32 %v4398, %v4406
    %s4409 = scalar_lea.vmem [#allocation6], 16
    %v4410 = vld [vmem:[%s4409] sm:$0xff]
    %v4411 = vpack.c.bf16 %v4410, %v4410
    %4412 = vmatprep.subr.bf16.mxu0 %v1231
    %4413 = vmatpush1.bf16.msra.mxu0 %v1230
    %4414 = vmatprep.subr.bf16.mxu0 %v1239
    %4415 = vmatpush1.bf16.msra.mxu0 %v1238
    %4416 = vmatprep.subr.bf16.mxu0 %v1247
    %4417 = vmatpush1.bf16.msra.mxu0 %v1246
    %4418 = vmatprep.subr.bf16.mxu0 %v1255
    %4419 = vmatpush1.bf16.msra.mxu0 %v1254
    %4420 = vmatprep.subr.bf16.mxu0 %v1263
    %4421 = vmatpush1.bf16.msra.mxu0 %v1262
    %4422 = vmatprep.subr.bf16.mxu0 %v1271
    %4423 = vmatpush1.bf16.msra.mxu0 %v1270
    %4424 = vmatprep.subr.bf16.mxu0 %v1279
    %4425 = vmatpush1.bf16.msra.mxu0 %v1278
    %4426 = vmatprep.subr.bf16.mxu0 %v1287
    %4427 = vmatpush1.bf16.msra.mxu0 %v1286
    %4428 = vmatprep.subr.bf16.mxu0 %v1295
    %4429 = vmatpush1.bf16.msra.mxu0 %v1294
    %4430 = vmatprep.subr.bf16.mxu0 %v1303
    %4431 = vmatpush1.bf16.msra.mxu0 %v1302
    %4432 = vmatprep.subr.bf16.mxu0 %v1311
    %4433 = vmatpush1.bf16.msra.mxu0 %v1310
    %4434 = vmatprep.subr.bf16.mxu0 %v1319
    %4435 = vmatpush1.bf16.msra.mxu0 %v1318
    %4436 = vmatprep.subr.bf16.mxu0 %v1327
    %4437 = vmatpush1.bf16.msra.mxu0 %v1326
    %4438 = vmatprep.subr.bf16.mxu0 %v1335
    %4439 = vmatpush1.bf16.msra.mxu0 %v1334
    %4440 = vmatprep.subr.bf16.mxu0 %v1343
    %4441 = vmatpush1.bf16.msra.mxu0 %v1342
    %4442 = vmatprep.subr.bf16.mxu0 %v1351
    %4443 = vmatpush1.bf16.msra.mxu0 %v1350
    %4444 = vmatprep.mubr.bf16.mxu0 %v4029
    %4445 = vmatmul.mubr.bf16.gmra.mrb[0].mxu0 %v4411
    %v4446 = vpop.f32.mrb[0].mxu0
    %v4447 = vadd.f32 %v563, %v4446
    %v4448 = vpop.f32.mrb[0].mxu0
    %v4449 = vadd.f32 %v567, %v4448
    %v4450 = vpop.f32.mrb[0].mxu0
    %v4451 = vpop.f32.mrb[0].mxu0
    %4452 = vdwg.mxu0
    %4453 = vmatprep.subr.bf16.mxu0 %v1359
    %4454 = vmatpush1.bf16.msra.mxu0 %v1358
    %4455 = vmatprep.subr.bf16.mxu0 %v1367
    %4456 = vmatpush1.bf16.msra.mxu0 %v1366
    %4457 = vmatprep.subr.bf16.mxu0 %v1375
    %4458 = vmatpush1.bf16.msra.mxu0 %v1374
    %4459 = vmatprep.subr.bf16.mxu0 %v1383
    %4460 = vmatpush1.bf16.msra.mxu0 %v1382
    %4461 = vmatprep.subr.bf16.mxu0 %v1391
    %4462 = vmatpush1.bf16.msra.mxu0 %v1390
    %4463 = vmatprep.subr.bf16.mxu0 %v1399
    %4464 = vmatpush1.bf16.msra.mxu0 %v1398
    %4465 = vmatprep.subr.bf16.mxu0 %v1407
    %4466 = vmatpush1.bf16.msra.mxu0 %v1406
    %4467 = vmatprep.subr.bf16.mxu0 %v1415
    %4468 = vmatpush1.bf16.msra.mxu0 %v1414
    %4469 = vmatprep.subr.bf16.mxu0 0
    %4470 = vmatpush1.bf16.msra.mxu0 0
    %4471 = vmatprep.subr.bf16.mxu0 0
    %4472 = vmatpush1.bf16.msra.mxu0 0
    %4473 = vmatprep.subr.bf16.mxu0 0
    %4474 = vmatpush1.bf16.msra.mxu0 0
    %4475 = vmatprep.subr.bf16.mxu0 0
    %4476 = vmatpush1.bf16.msra.mxu0 0
    %4477 = vmatprep.subr.bf16.mxu0 0
    %4478 = vmatpush1.bf16.msra.mxu0 0
    %4479 = vmatprep.subr.bf16.mxu0 0
    %4480 = vmatpush1.bf16.msra.mxu0 0
    %4481 = vmatprep.subr.bf16.mxu0 0
    %4482 = vmatpush1.bf16.msra.mxu0 0
    %4483 = vmatprep.subr.bf16.mxu0 0
    %4484 = vmatpush1.bf16.msra.mxu0 0
    %4485 = vmatprep.mubr.bf16.mxu0 0
    %4486 = vmatmul.mubr.bf16.gmra.mrb[0].mxu0 %v4030
    %v4487 = vpop.f32.mrb[0].mxu0
    %v4488 = vadd.f32 %v4447, %v4487
    %v4489 = vpop.f32.mrb[0].mxu0
    %v4490 = vadd.f32 %v4449, %v4489
    %v4491 = vpop.f32.mrb[0].mxu0
    %v4492 = vpop.f32.mrb[0].mxu0
    %4493 = vdwg.mxu0
    %4494 = vmatprep.subr.bf16.mxu0 %v1233
    %4495 = vmatpush1.bf16.msra.mxu0 %v1232
    %4496 = vmatprep.subr.bf16.mxu0 %v1241
    %4497 = vmatpush1.bf16.msra.mxu0 %v1240
    %4498 = vmatprep.subr.bf16.mxu0 %v1249
    %4499 = vmatpush1.bf16.msra.mxu0 %v1248
    %4500 = vmatprep.subr.bf16.mxu0 %v1257
    %4501 = vmatpush1.bf16.msra.mxu0 %v1256
    %4502 = vmatprep.subr.bf16.mxu0 %v1265
    %4503 = vmatpush1.bf16.msra.mxu0 %v1264
    %4504 = vmatprep.subr.bf16.mxu0 %v1273
    %4505 = vmatpush1.bf16.msra.mxu0 %v1272
    %4506 = vmatprep.subr.bf16.mxu0 %v1281
    %4507 = vmatpush1.bf16.msra.mxu0 %v1280
    %4508 = vmatprep.subr.bf16.mxu0 %v1289
    %4509 = vmatpush1.bf16.msra.mxu0 %v1288
    %4510 = vmatprep.subr.bf16.mxu0 %v1297
    %4511 = vmatpush1.bf16.msra.mxu0 %v1296
    %4512 = vmatprep.subr.bf16.mxu0 %v1305
    %4513 = vmatpush1.bf16.msra.mxu0 %v1304
    %4514 = vmatprep.subr.bf16.mxu0 %v1313
    %4515 = vmatpush1.bf16.msra.mxu0 %v1312
    %4516 = vmatprep.subr.bf16.mxu0 %v1321
    %4517 = vmatpush1.bf16.msra.mxu0 %v1320
    %4518 = vmatprep.subr.bf16.mxu0 %v1329
    %4519 = vmatpush1.bf16.msra.mxu0 %v1328
    %4520 = vmatprep.subr.bf16.mxu0 %v1337
    %4521 = vmatpush1.bf16.msra.mxu0 %v1336
    %4522 = vmatprep.subr.bf16.mxu0 %v1345
    %4523 = vmatpush1.bf16.msra.mxu0 %v1344
    %4524 = vmatprep.subr.bf16.mxu0 %v1353
    %4525 = vmatpush1.bf16.msra.mxu0 %v1352
    %4526 = vmatprep.mubr.bf16.mxu0 %v4029
    %4527 = vmatmul.mubr.bf16.gmra.mrb[0].mxu0 %v4411
    %v4528 = vpop.f32.mrb[0].mxu0
    %v4529 = vadd.f32 %v571, %v4528
    %v4530 = vpop.f32.mrb[0].mxu0
    %v4531 = vadd.f32 %v575, %v4530
    %v4532 = vpop.f32.mrb[0].mxu0
    %v4533 = vpop.f32.mrb[0].mxu0
    %4534 = vdwg.mxu0
    %4535 = vmatprep.subr.bf16.mxu0 %v1361
    %4536 = vmatpush1.bf16.msra.mxu0 %v1360
    %4537 = vmatprep.subr.bf16.mxu0 %v1369
    %4538 = vmatpush1.bf16.msra.mxu0 %v1368
    %4539 = vmatprep.subr.bf16.mxu0 %v1377
    %4540 = vmatpush1.bf16.msra.mxu0 %v1376
    %4541 = vmatprep.subr.bf16.mxu0 %v1385
    %4542 = vmatpush1.bf16.msra.mxu0 %v1384
    %4543 = vmatprep.subr.bf16.mxu0 %v1393
    %4544 = vmatpush1.bf16.msra.mxu0 %v1392
    %4545 = vmatprep.subr.bf16.mxu0 %v1401
    %4546 = vmatpush1.bf16.msra.mxu0 %v1400
    %4547 = vmatprep.subr.bf16.mxu0 %v1409
    %4548 = vmatpush1.bf16.msra.mxu0 %v1408
    %4549 = vmatprep.subr.bf16.mxu0 %v1417
    %4550 = vmatpush1.bf16.msra.mxu0 %v1416
    %4551 = vmatprep.subr.bf16.mxu0 0
    %4552 = vmatpush1.bf16.msra.mxu0 0
    %4553 = vmatprep.subr.bf16.mxu0 0
    %4554 = vmatpush1.bf16.msra.mxu0 0
    %4555 = vmatprep.subr.bf16.mxu0 0
    %4556 = vmatpush1.bf16.msra.mxu0 0
    %4557 = vmatprep.subr.bf16.mxu0 0
    %4558 = vmatpush1.bf16.msra.mxu0 0
    %4559 = vmatprep.subr.bf16.mxu0 0
    %4560 = vmatpush1.bf16.msra.mxu0 0
    %4561 = vmatprep.subr.bf16.mxu0 0
    %4562 = vmatpush1.bf16.msra.mxu0 0
    %4563 = vmatprep.subr.bf16.mxu0 0
    %4564 = vmatpush1.bf16.msra.mxu0 0
    %4565 = vmatprep.subr.bf16.mxu0 0
    %4566 = vmatpush1.bf16.msra.mxu0 0
    %4567 = vmatprep.mubr.bf16.mxu0 0
    %4568 = vmatmul.mubr.bf16.gmra.mrb[0].mxu0 %v4030
    %v4569 = vpop.f32.mrb[0].mxu0
    %v4570 = vadd.f32 %v4529, %v4569
    %v4571 = vpop.f32.mrb[0].mxu0
    %v4572 = vadd.f32 %v4531, %v4571
    %v4573 = vpop.f32.mrb[0].mxu0
    %v4574 = vpop.f32.mrb[0].mxu0
    %4575 = vdwg.mxu0
    %4576 = vmatprep.subr.bf16.mxu0 %v1235
    %4577 = vmatpush1.bf16.msra.mxu0 %v1234
    %4578 = vmatprep.subr.bf16.mxu0 %v1243
    %4579 = vmatpush1.bf16.msra.mxu0 %v1242
    %4580 = vmatprep.subr.bf16.mxu0 %v1251
    %4581 = vmatpush1.bf16.msra.mxu0 %v1250
    %4582 = vmatprep.subr.bf16.mxu0 %v1259
    %4583 = vmatpush1.bf16.msra.mxu0 %v1258
    %4584 = vmatprep.subr.bf16.mxu0 %v1267
    %4585 = vmatpush1.bf16.msra.mxu0 %v1266
    %4586 = vmatprep.subr.bf16.mxu0 %v1275
    %4587 = vmatpush1.bf16.msra.mxu0 %v1274
    %4588 = vmatprep.subr.bf16.mxu0 %v1283
    %4589 = vmatpush1.bf16.msra.mxu0 %v1282
    %4590 = vmatprep.subr.bf16.mxu0 %v1291
    %4591 = vmatpush1.bf16.msra.mxu0 %v1290
    %4592 = vmatprep.subr.bf16.mxu0 %v1299
    %4593 = vmatpush1.bf16.msra.mxu0 %v1298
    %4594 = vmatprep.subr.bf16.mxu0 %v1307
    %4595 = vmatpush1.bf16.msra.mxu0 %v1306
    %4596 = vmatprep.subr.bf16.mxu0 %v1315
    %4597 = vmatpush1.bf16.msra.mxu0 %v1314
    %4598 = vmatprep.subr.bf16.mxu0 %v1323
    %4599 = vmatpush1.bf16.msra.mxu0 %v1322
    %4600 = vmatprep.subr.bf16.mxu0 %v1331
    %4601 = vmatpush1.bf16.msra.mxu0 %v1330
    %4602 = vmatprep.subr.bf16.mxu0 %v1339
    %4603 = vmatpush1.bf16.msra.mxu0 %v1338
    %4604 = vmatprep.subr.bf16.mxu0 %v1347
    %4605 = vmatpush1.bf16.msra.mxu0 %v1346
    %4606 = vmatprep.subr.bf16.mxu0 %v1355
    %4607 = vmatpush1.bf16.msra.mxu0 %v1354
    %4608 = vmatprep.mubr.bf16.mxu0 %v4029
    %4609 = vmatmul.mubr.bf16.gmra.mrb[0].mxu0 %v4411
    %v4610 = vpop.f32.mrb[0].mxu0
    %v4611 = vadd.f32 %v579, %v4610
    %v4612 = vpop.f32.mrb[0].mxu0
    %v4613 = vadd.f32 %v583, %v4612
    %v4614 = vpop.f32.mrb[0].mxu0
    %v4615 = vpop.f32.mrb[0].mxu0
    %4616 = vdwg.mxu0
    %4617 = vmatprep.subr.bf16.mxu0 %v1363
    %4618 = vmatpush1.bf16.msra.mxu0 %v1362
    %4619 = vmatprep.subr.bf16.mxu0 %v1371
    %4620 = vmatpush1.bf16.msra.mxu0 %v1370
    %4621 = vmatprep.subr.bf16.mxu0 %v1379
    %4622 = vmatpush1.bf16.msra.mxu0 %v1378
    %4623 = vmatprep.subr.bf16.mxu0 %v1387
    %4624 = vmatpush1.bf16.msra.mxu0 %v1386
    %4625 = vmatprep.subr.bf16.mxu0 %v1395
    %4626 = vmatpush1.bf16.msra.mxu0 %v1394
    %4627 = vmatprep.subr.bf16.mxu0 %v1403
    %4628 = vmatpush1.bf16.msra.mxu0 %v1402
    %4629 = vmatprep.subr.bf16.mxu0 %v1411
    %4630 = vmatpush1.bf16.msra.mxu0 %v1410
    %4631 = vmatprep.subr.bf16.mxu0 %v1419
    %4632 = vmatpush1.bf16.msra.mxu0 %v1418
    %4633 = vmatprep.subr.bf16.mxu0 0
    %4634 = vmatpush1.bf16.msra.mxu0 0
    %4635 = vmatprep.subr.bf16.mxu0 0
    %4636 = vmatpush1.bf16.msra.mxu0 0
    %4637 = vmatprep.subr.bf16.mxu0 0
    %4638 = vmatpush1.bf16.msra.mxu0 0
    %4639 = vmatprep.subr.bf16.mxu0 0
    %4640 = vmatpush1.bf16.msra.mxu0 0
    %4641 = vmatprep.subr.bf16.mxu0 0
    %4642 = vmatpush1.bf16.msra.mxu0 0
    %4643 = vmatprep.subr.bf16.mxu0 0
    %4644 = vmatpush1.bf16.msra.mxu0 0
    %4645 = vmatprep.subr.bf16.mxu0 0
    %4646 = vmatpush1.bf16.msra.mxu0 0
    %4647 = vmatprep.subr.bf16.mxu0 0
    %4648 = vmatpush1.bf16.msra.mxu0 0
    %4649 = vmatprep.mubr.bf16.mxu0 0
    %4650 = vmatmul.mubr.bf16.gmra.mrb[0].mxu0 %v4030
    %v4651 = vpop.f32.mrb[0].mxu0
    %v4652 = vadd.f32 %v4611, %v4651
    %v4653 = vpop.f32.mrb[0].mxu0
    %v4654 = vadd.f32 %v4613, %v4653
    %v4655 = vpop.f32.mrb[0].mxu0
    %v4656 = vpop.f32.mrb[0].mxu0
    %4657 = vdwg.mxu0
    %4658 = vmatprep.subr.bf16.mxu0 %v1237
    %4659 = vmatpush1.bf16.msra.mxu0 %v1236
    %4660 = vmatprep.subr.bf16.mxu0 %v1245
    %4661 = vmatpush1.bf16.msra.mxu0 %v1244
    %4662 = vmatprep.subr.bf16.mxu0 %v1253
    %4663 = vmatpush1.bf16.msra.mxu0 %v1252
    %4664 = vmatprep.subr.bf16.mxu0 %v1261
    %4665 = vmatpush1.bf16.msra.mxu0 %v1260
    %4666 = vmatprep.subr.bf16.mxu0 %v1269
    %4667 = vmatpush1.bf16.msra.mxu0 %v1268
    %4668 = vmatprep.subr.bf16.mxu0 %v1277
    %4669 = vmatpush1.bf16.msra.mxu0 %v1276
    %4670 = vmatprep.subr.bf16.mxu0 %v1285
    %4671 = vmatpush1.bf16.msra.mxu0 %v1284
    %4672 = vmatprep.subr.bf16.mxu0 %v1293
    %4673 = vmatpush1.bf16.msra.mxu0 %v1292
    %4674 = vmatprep.subr.bf16.mxu0 %v1301
    %4675 = vmatpush1.bf16.msra.mxu0 %v1300
    %4676 = vmatprep.subr.bf16.mxu0 %v1309
    %4677 = vmatpush1.bf16.msra.mxu0 %v1308
    %4678 = vmatprep.subr.bf16.mxu0 %v1317
    %4679 = vmatpush1.bf16.msra.mxu0 %v1316
    %4680 = vmatprep.subr.bf16.mxu0 %v1325
    %4681 = vmatpush1.bf16.msra.mxu0 %v1324
    %4682 = vmatprep.subr.bf16.mxu0 %v1333
    %4683 = vmatpush1.bf16.msra.mxu0 %v1332
    %4684 = vmatprep.subr.bf16.mxu0 %v1341
    %4685 = vmatpush1.bf16.msra.mxu0 %v1340
    %4686 = vmatprep.subr.bf16.mxu0 %v1349
    %4687 = vmatpush1.bf16.msra.mxu0 %v1348
    %4688 = vmatprep.subr.bf16.mxu0 %v1357
    %4689 = vmatpush1.bf16.msra.mxu0 %v1356
    %4690 = vmatprep.mubr.bf16.mxu0 %v4029
    %4691 = vmatmul.mubr.bf16.gmra.mrb[0].mxu0 %v4411
    %v4692 = vpop.f32.mrb[0].mxu0
    %v4693 = vadd.f32 %v587, %v4692
    %v4694 = vpop.f32.mrb[0].mxu0
    %v4695 = vadd.f32 %v591, %v4694
    %v4696 = vpop.f32.mrb[0].mxu0
    %v4697 = vpop.f32.mrb[0].mxu0
    %4698 = vdwg.mxu0
    %4699 = vmatprep.subr.bf16.mxu0 %v1365
    %4700 = vmatpush1.bf16.msra.mxu0 %v1364
    %4701 = vmatprep.subr.bf16.mxu0 %v1373
    %4702 = vmatpush1.bf16.msra.mxu0 %v1372
    %4703 = vmatprep.subr.bf16.mxu0 %v1381
    %4704 = vmatpush1.bf16.msra.mxu0 %v1380
    %4705 = vmatprep.subr.bf16.mxu0 %v1389
    %4706 = vmatpush1.bf16.msra.mxu0 %v1388
    %4707 = vmatprep.subr.bf16.mxu0 %v1397
    %4708 = vmatpush1.bf16.msra.mxu0 %v1396
    %4709 = vmatprep.subr.bf16.mxu0 %v1405
    %4710 = vmatpush1.bf16.msra.mxu0 %v1404
    %4711 = vmatprep.subr.bf16.mxu0 %v1413
    %4712 = vmatpush1.bf16.msra.mxu0 %v1412
    %4713 = vmatprep.subr.bf16.mxu0 %v1421
    %4714 = vmatpush1.bf16.msra.mxu0 %v1420
    %4715 = vmatprep.subr.bf16.mxu0 0
    %4716 = vmatpush1.bf16.msra.mxu0 0
    %4717 = vmatprep.subr.bf16.mxu0 0
    %4718 = vmatpush1.bf16.msra.mxu0 0
    %4719 = vmatprep.subr.bf16.mxu0 0
    %4720 = vmatpush1.bf16.msra.mxu0 0
    %4721 = vmatprep.subr.bf16.mxu0 0
    %4722 = vmatpush1.bf16.msra.mxu0 0
    %4723 = vmatprep.subr.bf16.mxu0 0
    %4724 = vmatpush1.bf16.msra.mxu0 0
    %4725 = vmatprep.subr.bf16.mxu0 0
    %4726 = vmatpush1.bf16.msra.mxu0 0
    %4727 = vmatprep.subr.bf16.mxu0 0
    %4728 = vmatpush1.bf16.msra.mxu0 0
    %4729 = vmatprep.subr.bf16.mxu0 0
    %4730 = vmatpush1.bf16.msra.mxu0 0
    %4731 = vmatprep.mubr.bf16.mxu0 0
    %4732 = vmatmul.mubr.bf16.gmra.mrb[0].mxu0 %v4030
    %v4733 = vpop.f32.mrb[0].mxu0
    %v4734 = vadd.f32 %v4693, %v4733
    %v4735 = vpop.f32.mrb[0].mxu0
    %v4736 = vadd.f32 %v4695, %v4735
    %v4737 = vpop.f32.mrb[0].mxu0
    %v4738 = vpop.f32.mrb[0].mxu0
    %4739 = vdwg.mxu0
    %v4740 = vxor.u32 %v4488, 2147483648
    %v4741 = vxor.u32 %v4490, 2147483648
    %v4742 = vmul.f32 %v4740, 1.442695
    %v4743 = vpow.pop %v4742
    %v4744 = vmul.f32 %v4741, 1.442695
    %v4745 = vpow.pop %v4744
    %v4746 = vadd.f32 %v4743, 1.0
    %v4747 = vadd.f32 %v4745, 1.0
    %v4748 = vrcp.pop %v4746
    %v4749 = vmul.f32 1.0, %v4748
    %v4750 = vrcp.pop %v4747
    %v4751 = vmul.f32 1.0, %v4750
    %v4752 = vxor.u32 %v4570, 2147483648
    %v4753 = vxor.u32 %v4572, 2147483648
    %v4754 = vmul.f32 %v4752, 1.442695
    %v4755 = vpow.pop %v4754
    %v4756 = vmul.f32 %v4753, 1.442695
    %v4757 = vpow.pop %v4756
    %v4758 = vadd.f32 %v4755, 1.0
    %v4759 = vadd.f32 %v4757, 1.0
    %v4760 = vrcp.pop %v4758
    %v4761 = vmul.f32 1.0, %v4760
    %v4762 = vrcp.pop %v4759
    %v4763 = vmul.f32 1.0, %v4762
    %v4764 = vtanh.pop %v4652
    %v4765 = vtanh.pop %v4654
    %v4766 = vxor.u32 %v4734, 2147483648
    %v4767 = vxor.u32 %v4736, 2147483648
    %v4768 = vmul.f32 %v4766, 1.442695
    %v4769 = vpow.pop %v4768
    %v4770 = vmul.f32 %v4767, 1.442695
    %v4771 = vpow.pop %v4770
    %v4772 = vadd.f32 %v4769, 1.0
    %v4773 = vadd.f32 %v4771, 1.0
    %v4774 = vrcp.pop %v4772
    %v4775 = vmul.f32 1.0, %v4774
    %v4776 = vrcp.pop %v4773
    %v4777 = vmul.f32 1.0, %v4776
    %v4778 = vmul.f32 %v4761, %v4023
    %v4779 = vmul.f32 %v4763, %v4024
    %v4780 = vmul.f32 %v4749, %v4764
    %v4781 = vmul.f32 %v4751, %v4765
    %v4782 = vadd.f32 %v4778, %v4780
    %v4783 = vadd.f32 %v4779, %v4781
    %v4784 = vtanh.pop %v4782
    %v4785 = vtanh.pop %v4783
    %v4786 = vmul.f32 %v4775, %v4784
    %v4787 = vmul.f32 %v4777, %v4785
    %v4788 = vpack.c.bf16 %v4786, %v4786
    %v4789 = vpack.c.bf16 %v4787, %v4787
    %v4790 = vpack.c.bf16 %v4407, %v4407
    %v4791 = vpack.c.bf16 %v4408, %v4408
    %4792 = vmatprep.subr.bf16.mxu0 %v2763
    %4793 = vmatpush1.bf16.msra.mxu0 %v2762
    %4794 = vmatprep.subr.bf16.mxu0 %v2771
    %4795 = vmatpush1.bf16.msra.mxu0 %v2770
    %4796 = vmatprep.subr.bf16.mxu0 %v2779
    %4797 = vmatpush1.bf16.msra.mxu0 %v2778
    %4798 = vmatprep.subr.bf16.mxu0 %v2787
    %4799 = vmatpush1.bf16.msra.mxu0 %v2786
    %4800 = vmatprep.subr.bf16.mxu0 %v2795
    %4801 = vmatpush1.bf16.msra.mxu0 %v2794
    %4802 = vmatprep.subr.bf16.mxu0 %v2803
    %4803 = vmatpush1.bf16.msra.mxu0 %v2802
    %4804 = vmatprep.subr.bf16.mxu0 %v2811
    %4805 = vmatpush1.bf16.msra.mxu0 %v2810
    %4806 = vmatprep.subr.bf16.mxu0 %v2819
    %4807 = vmatpush1.bf16.msra.mxu0 %v2818
    %4808 = vmatprep.subr.bf16.mxu0 %v2827
    %4809 = vmatpush1.bf16.msra.mxu0 %v2826
    %4810 = vmatprep.subr.bf16.mxu0 %v2835
    %4811 = vmatpush1.bf16.msra.mxu0 %v2834
    %4812 = vmatprep.subr.bf16.mxu0 %v2843
    %4813 = vmatpush1.bf16.msra.mxu0 %v2842
    %4814 = vmatprep.subr.bf16.mxu0 %v2851
    %4815 = vmatpush1.bf16.msra.mxu0 %v2850
    %4816 = vmatprep.subr.bf16.mxu0 %v2859
    %4817 = vmatpush1.bf16.msra.mxu0 %v2858
    %4818 = vmatprep.subr.bf16.mxu0 %v2867
    %4819 = vmatpush1.bf16.msra.mxu0 %v2866
    %4820 = vmatprep.subr.bf16.mxu0 %v2875
    %4821 = vmatpush1.bf16.msra.mxu0 %v2874
    %4822 = vmatprep.subr.bf16.mxu0 %v2883
    %4823 = vmatpush1.bf16.msra.mxu0 %v2882
    %4824 = vmatprep.mubr.bf16.mxu0 %v4789
    %4825 = vmatmul.mubr.bf16.gmra.mrb[0].mxu0 %v4788
    %v4826 = vpop.f32.mrb[0].mxu0
    %v4827 = vadd.f32 %v605, %v4826
    %v4828 = vpop.f32.mrb[0].mxu0
    %v4829 = vadd.f32 %v609, %v4828
    %v4830 = vpop.f32.mrb[0].mxu0
    %v4831 = vpop.f32.mrb[0].mxu0
    %4832 = vdwg.mxu0
    %4833 = vmatprep.subr.bf16.mxu0 %v2891
    %4834 = vmatpush1.bf16.msra.mxu0 %v2890
    %4835 = vmatprep.subr.bf16.mxu0 %v2899
    %4836 = vmatpush1.bf16.msra.mxu0 %v2898
    %4837 = vmatprep.subr.bf16.mxu0 %v2907
    %4838 = vmatpush1.bf16.msra.mxu0 %v2906
    %4839 = vmatprep.subr.bf16.mxu0 %v2915
    %4840 = vmatpush1.bf16.msra.mxu0 %v2914
    %4841 = vmatprep.subr.bf16.mxu0 %v2923
    %4842 = vmatpush1.bf16.msra.mxu0 %v2922
    %4843 = vmatprep.subr.bf16.mxu0 %v2931
    %4844 = vmatpush1.bf16.msra.mxu0 %v2930
    %4845 = vmatprep.subr.bf16.mxu0 %v2939
    %4846 = vmatpush1.bf16.msra.mxu0 %v2938
    %4847 = vmatprep.subr.bf16.mxu0 %v2947
    %4848 = vmatpush1.bf16.msra.mxu0 %v2946
    %4849 = vmatprep.subr.bf16.mxu0 %v2955
    %4850 = vmatpush1.bf16.msra.mxu0 %v2954
    %4851 = vmatprep.subr.bf16.mxu0 %v2963
    %4852 = vmatpush1.bf16.msra.mxu0 %v2962
    %4853 = vmatprep.subr.bf16.mxu0 %v2971
    %4854 = vmatpush1.bf16.msra.mxu0 %v2970
    %4855 = vmatprep.subr.bf16.mxu0 %v2979
    %4856 = vmatpush1.bf16.msra.mxu0 %v2978
    %4857 = vmatprep.subr.bf16.mxu0 %v2987
    %4858 = vmatpush1.bf16.msra.mxu0 %v2986
    %4859 = vmatprep.subr.bf16.mxu0 %v2995
    %4860 = vmatpush1.bf16.msra.mxu0 %v2994
    %4861 = vmatprep.subr.bf16.mxu0 %v3003
    %4862 = vmatpush1.bf16.msra.mxu0 %v3002
    %4863 = vmatprep.subr.bf16.mxu0 %v3011
    %4864 = vmatpush1.bf16.msra.mxu0 %v3010
    %4865 = vmatprep.mubr.bf16.mxu0 %v4791
    %4866 = vmatmul.mubr.bf16.gmra.mrb[0].mxu0 %v4790
    %v4867 = vpop.f32.mrb[0].mxu0
    %v4868 = vadd.f32 %v4827, %v4867
    %v4869 = vpop.f32.mrb[0].mxu0
    %v4870 = vadd.f32 %v4829, %v4869
    %v4871 = vpop.f32.mrb[0].mxu0
    %v4872 = vpop.f32.mrb[0].mxu0
    %4873 = vdwg.mxu0
    %4874 = vmatprep.subr.bf16.mxu0 %v2765
    %4875 = vmatpush1.bf16.msra.mxu0 %v2764
    %4876 = vmatprep.subr.bf16.mxu0 %v2773
    %4877 = vmatpush1.bf16.msra.mxu0 %v2772
    %4878 = vmatprep.subr.bf16.mxu0 %v2781
    %4879 = vmatpush1.bf16.msra.mxu0 %v2780
    %4880 = vmatprep.subr.bf16.mxu0 %v2789
    %4881 = vmatpush1.bf16.msra.mxu0 %v2788
    %4882 = vmatprep.subr.bf16.mxu0 %v2797
    %4883 = vmatpush1.bf16.msra.mxu0 %v2796
    %4884 = vmatprep.subr.bf16.mxu0 %v2805
    %4885 = vmatpush1.bf16.msra.mxu0 %v2804
    %4886 = vmatprep.subr.bf16.mxu0 %v2813
    %4887 = vmatpush1.bf16.msra.mxu0 %v2812
    %4888 = vmatprep.subr.bf16.mxu0 %v2821
    %4889 = vmatpush1.bf16.msra.mxu0 %v2820
    %4890 = vmatprep.subr.bf16.mxu0 %v2829
    %4891 = vmatpush1.bf16.msra.mxu0 %v2828
    %4892 = vmatprep.subr.bf16.mxu0 %v2837
    %4893 = vmatpush1.bf16.msra.mxu0 %v2836
    %4894 = vmatprep.subr.bf16.mxu0 %v2845
    %4895 = vmatpush1.bf16.msra.mxu0 %v2844
    %4896 = vmatprep.subr.bf16.mxu0 %v2853
    %4897 = vmatpush1.bf16.msra.mxu0 %v2852
    %4898 = vmatprep.subr.bf16.mxu0 %v2861
    %4899 = vmatpush1.bf16.msra.mxu0 %v2860
    %4900 = vmatprep.subr.bf16.mxu0 %v2869
    %4901 = vmatpush1.bf16.msra.mxu0 %v2868
    %4902 = vmatprep.subr.bf16.mxu0 %v2877
    %4903 = vmatpush1.bf16.msra.mxu0 %v2876
    %4904 = vmatprep.subr.bf16.mxu0 %v2885
    %4905 = vmatpush1.bf16.msra.mxu0 %v2884
    %4906 = vmatprep.mubr.bf16.mxu0 %v4789
    %4907 = vmatmul.mubr.bf16.gmra.mrb[0].mxu0 %v4788
    %v4908 = vpop.f32.mrb[0].mxu0
    %v4909 = vadd.f32 %v613, %v4908
    %v4910 = vpop.f32.mrb[0].mxu0
    %v4911 = vadd.f32 %v617, %v4910
    %v4912 = vpop.f32.mrb[0].mxu0
    %v4913 = vpop.f32.mrb[0].mxu0
    %4914 = vdwg.mxu0
    %4915 = vmatprep.subr.bf16.mxu0 %v2893
    %4916 = vmatpush1.bf16.msra.mxu0 %v2892
    %4917 = vmatprep.subr.bf16.mxu0 %v2901
    %4918 = vmatpush1.bf16.msra.mxu0 %v2900
    %4919 = vmatprep.subr.bf16.mxu0 %v2909
    %4920 = vmatpush1.bf16.msra.mxu0 %v2908
    %4921 = vmatprep.subr.bf16.mxu0 %v2917
    %4922 = vmatpush1.bf16.msra.mxu0 %v2916
    %4923 = vmatprep.subr.bf16.mxu0 %v2925
    %4924 = vmatpush1.bf16.msra.mxu0 %v2924
    %4925 = vmatprep.subr.bf16.mxu0 %v2933
    %4926 = vmatpush1.bf16.msra.mxu0 %v2932
    %4927 = vmatprep.subr.bf16.mxu0 %v2941
    %4928 = vmatpush1.bf16.msra.mxu0 %v2940
    %4929 = vmatprep.subr.bf16.mxu0 %v2949
    %4930 = vmatpush1.bf16.msra.mxu0 %v2948
    %4931 = vmatprep.subr.bf16.mxu0 %v2957
    %4932 = vmatpush1.bf16.msra.mxu0 %v2956
    %4933 = vmatprep.subr.bf16.mxu0 %v2965
    %4934 = vmatpush1.bf16.msra.mxu0 %v2964
    %4935 = vmatprep.subr.bf16.mxu0 %v2973
    %4936 = vmatpush1.bf16.msra.mxu0 %v2972
    %4937 = vmatprep.subr.bf16.mxu0 %v2981
    %4938 = vmatpush1.bf16.msra.mxu0 %v2980
    %4939 = vmatprep.subr.bf16.mxu0 %v2989
    %4940 = vmatpush1.bf16.msra.mxu0 %v2988
    %4941 = vmatprep.subr.bf16.mxu0 %v2997
    %4942 = vmatpush1.bf16.msra.mxu0 %v2996
    %4943 = vmatprep.subr.bf16.mxu0 %v3005
    %4944 = vmatpush1.bf16.msra.mxu0 %v3004
    %4945 = vmatprep.subr.bf16.mxu0 %v3013
    %4946 = vmatpush1.bf16.msra.mxu0 %v3012
    %4947 = vmatprep.mubr.bf16.mxu0 %v4791
    %4948 = vmatmul.mubr.bf16.gmra.mrb[0].mxu0 %v4790
    %v4949 = vpop.f32.mrb[0].mxu0
    %v4950 = vadd.f32 %v4909, %v4949
    %v4951 = vpop.f32.mrb[0].mxu0
    %v4952 = vadd.f32 %v4911, %v4951
    %v4953 = vpop.f32.mrb[0].mxu0
    %v4954 = vpop.f32.mrb[0].mxu0
    %4955 = vdwg.mxu0
    %4956 = vmatprep.subr.bf16.mxu0 %v2767
    %4957 = vmatpush1.bf16.msra.mxu0 %v2766
    %4958 = vmatprep.subr.bf16.mxu0 %v2775
    %4959 = vmatpush1.bf16.msra.mxu0 %v2774
    %4960 = vmatprep.subr.bf16.mxu0 %v2783
    %4961 = vmatpush1.bf16.msra.mxu0 %v2782
    %4962 = vmatprep.subr.bf16.mxu0 %v2791
    %4963 = vmatpush1.bf16.msra.mxu0 %v2790
    %4964 = vmatprep.subr.bf16.mxu0 %v2799
    %4965 = vmatpush1.bf16.msra.mxu0 %v2798
    %4966 = vmatprep.subr.bf16.mxu0 %v2807
    %4967 = vmatpush1.bf16.msra.mxu0 %v2806
    %4968 = vmatprep.subr.bf16.mxu0 %v2815
    %4969 = vmatpush1.bf16.msra.mxu0 %v2814
    %4970 = vmatprep.subr.bf16.mxu0 %v2823
    %4971 = vmatpush1.bf16.msra.mxu0 %v2822
    %4972 = vmatprep.subr.bf16.mxu0 %v2831
    %4973 = vmatpush1.bf16.msra.mxu0 %v2830
    %4974 = vmatprep.subr.bf16.mxu0 %v2839
    %4975 = vmatpush1.bf16.msra.mxu0 %v2838
    %4976 = vmatprep.subr.bf16.mxu0 %v2847
    %4977 = vmatpush1.bf16.msra.mxu0 %v2846
    %4978 = vmatprep.subr.bf16.mxu0 %v2855
    %4979 = vmatpush1.bf16.msra.mxu0 %v2854
    %4980 = vmatprep.subr.bf16.mxu0 %v2863
    %4981 = vmatpush1.bf16.msra.mxu0 %v2862
    %4982 = vmatprep.subr.bf16.mxu0 %v2871
    %4983 = vmatpush1.bf16.msra.mxu0 %v2870
    %4984 = vmatprep.subr.bf16.mxu0 %v2879
    %4985 = vmatpush1.bf16.msra.mxu0 %v2878
    %4986 = vmatprep.subr.bf16.mxu0 %v2887
    %4987 = vmatpush1.bf16.msra.mxu0 %v2886
    %4988 = vmatprep.mubr.bf16.mxu0 %v4789
    %4989 = vmatmul.mubr.bf16.gmra.mrb[0].mxu0 %v4788
    %v4990 = vpop.f32.mrb[0].mxu0
    %v4991 = vadd.f32 %v621, %v4990
    %v4992 = vpop.f32.mrb[0].mxu0
    %v4993 = vadd.f32 %v625, %v4992
    %v4994 = vpop.f32.mrb[0].mxu0
    %v4995 = vpop.f32.mrb[0].mxu0
    %4996 = vdwg.mxu0
    %4997 = vmatprep.subr.bf16.mxu0 %v2895
    %4998 = vmatpush1.bf16.msra.mxu0 %v2894
    %4999 = vmatprep.subr.bf16.mxu0 %v2903
    %5000 = vmatpush1.bf16.msra.mxu0 %v2902
    %5001 = vmatprep.subr.bf16.mxu0 %v2911
    %5002 = vmatpush1.bf16.msra.mxu0 %v2910
    %5003 = vmatprep.subr.bf16.mxu0 %v2919
    %5004 = vmatpush1.bf16.msra.mxu0 %v2918
    %5005 = vmatprep.subr.bf16.mxu0 %v2927
    %5006 = vmatpush1.bf16.msra.mxu0 %v2926
    %5007 = vmatprep.subr.bf16.mxu0 %v2935
    %5008 = vmatpush1.bf16.msra.mxu0 %v2934
    %5009 = vmatprep.subr.bf16.mxu0 %v2943
    %5010 = vmatpush1.bf16.msra.mxu0 %v2942
    %5011 = vmatprep.subr.bf16.mxu0 %v2951
    %5012 = vmatpush1.bf16.msra.mxu0 %v2950
    %5013 = vmatprep.subr.bf16.mxu0 %v2959
    %5014 = vmatpush1.bf16.msra.mxu0 %v2958
    %5015 = vmatprep.subr.bf16.mxu0 %v2967
    %5016 = vmatpush1.bf16.msra.mxu0 %v2966
    %5017 = vmatprep.subr.bf16.mxu0 %v2975
    %5018 = vmatpush1.bf16.msra.mxu0 %v2974
    %5019 = vmatprep.subr.bf16.mxu0 %v2983
    %5020 = vmatpush1.bf16.msra.mxu0 %v2982
    %5021 = vmatprep.subr.bf16.mxu0 %v2991
    %5022 = vmatpush1.bf16.msra.mxu0 %v2990
    %5023 = vmatprep.subr.bf16.mxu0 %v2999
    %5024 = vmatpush1.bf16.msra.mxu0 %v2998
    %5025 = vmatprep.subr.bf16.mxu0 %v3007
    %5026 = vmatpush1.bf16.msra.mxu0 %v3006
    %5027 = vmatprep.subr.bf16.mxu0 %v3015
    %5028 = vmatpush1.bf16.msra.mxu0 %v3014
    %5029 = vmatprep.mubr.bf16.mxu0 %v4791
    %5030 = vmatmul.mubr.bf16.gmra.mrb[0].mxu0 %v4790
    %v5031 = vpop.f32.mrb[0].mxu0
    %v5032 = vadd.f32 %v4991, %v5031
    %v5033 = vpop.f32.mrb[0].mxu0
    %v5034 = vadd.f32 %v4993, %v5033
    %v5035 = vpop.f32.mrb[0].mxu0
    %v5036 = vpop.f32.mrb[0].mxu0
    %5037 = vdwg.mxu0
    %5038 = vmatprep.subr.bf16.mxu0 %v2769
    %5039 = vmatpush1.bf16.msra.mxu0 %v2768
    %5040 = vmatprep.subr.bf16.mxu0 %v2777
    %5041 = vmatpush1.bf16.msra.mxu0 %v2776
    %5042 = vmatprep.subr.bf16.mxu0 %v2785
    %5043 = vmatpush1.bf16.msra.mxu0 %v2784
    %5044 = vmatprep.subr.bf16.mxu0 %v2793
    %5045 = vmatpush1.bf16.msra.mxu0 %v2792
    %5046 = vmatprep.subr.bf16.mxu0 %v2801
    %5047 = vmatpush1.bf16.msra.mxu0 %v2800
    %5048 = vmatprep.subr.bf16.mxu0 %v2809
    %5049 = vmatpush1.bf16.msra.mxu0 %v2808
    %5050 = vmatprep.subr.bf16.mxu0 %v2817
    %5051 = vmatpush1.bf16.msra.mxu0 %v2816
    %5052 = vmatprep.subr.bf16.mxu0 %v2825
    %5053 = vmatpush1.bf16.msra.mxu0 %v2824
    %5054 = vmatprep.subr.bf16.mxu0 %v2833
    %5055 = vmatpush1.bf16.msra.mxu0 %v2832
    %5056 = vmatprep.subr.bf16.mxu0 %v2841
    %5057 = vmatpush1.bf16.msra.mxu0 %v2840
    %5058 = vmatprep.subr.bf16.mxu0 %v2849
    %5059 = vmatpush1.bf16.msra.mxu0 %v2848
    %5060 = vmatprep.subr.bf16.mxu0 %v2857
    %5061 = vmatpush1.bf16.msra.mxu0 %v2856
    %5062 = vmatprep.subr.bf16.mxu0 %v2865
    %5063 = vmatpush1.bf16.msra.mxu0 %v2864
    %5064 = vmatprep.subr.bf16.mxu0 %v2873
    %5065 = vmatpush1.bf16.msra.mxu0 %v2872
    %5066 = vmatprep.subr.bf16.mxu0 %v2881
    %5067 = vmatpush1.bf16.msra.mxu0 %v2880
    %5068 = vmatprep.subr.bf16.mxu0 %v2889
    %5069 = vmatpush1.bf16.msra.mxu0 %v2888
    %5070 = vmatprep.mubr.bf16.mxu0 %v4789
    %5071 = vmatmul.mubr.bf16.gmra.mrb[0].mxu0 %v4788
    %v5072 = vpop.f32.mrb[0].mxu0
    %v5073 = vadd.f32 %v629, %v5072
    %v5074 = vpop.f32.mrb[0].mxu0
    %v5075 = vadd.f32 %v633, %v5074
    %v5076 = vpop.f32.mrb[0].mxu0
    %v5077 = vpop.f32.mrb[0].mxu0
    %5078 = vdwg.mxu0
    %5079 = vmatprep.subr.bf16.mxu0 %v2897
    %5080 = vmatpush1.bf16.msra.mxu0 %v2896
    %5081 = vmatprep.subr.bf16.mxu0 %v2905
    %5082 = vmatpush1.bf16.msra.mxu0 %v2904
    %5083 = vmatprep.subr.bf16.mxu0 %v2913
    %5084 = vmatpush1.bf16.msra.mxu0 %v2912
    %5085 = vmatprep.subr.bf16.mxu0 %v2921
    %5086 = vmatpush1.bf16.msra.mxu0 %v2920
    %5087 = vmatprep.subr.bf16.mxu0 %v2929
    %5088 = vmatpush1.bf16.msra.mxu0 %v2928
    %5089 = vmatprep.subr.bf16.mxu0 %v2937
    %5090 = vmatpush1.bf16.msra.mxu0 %v2936
    %5091 = vmatprep.subr.bf16.mxu0 %v2945
    %5092 = vmatpush1.bf16.msra.mxu0 %v2944
    %5093 = vmatprep.subr.bf16.mxu0 %v2953
    %5094 = vmatpush1.bf16.msra.mxu0 %v2952
    %5095 = vmatprep.subr.bf16.mxu0 %v2961
    %5096 = vmatpush1.bf16.msra.mxu0 %v2960
    %5097 = vmatprep.subr.bf16.mxu0 %v2969
    %5098 = vmatpush1.bf16.msra.mxu0 %v2968
    %5099 = vmatprep.subr.bf16.mxu0 %v2977
    %5100 = vmatpush1.bf16.msra.mxu0 %v2976
    %5101 = vmatprep.subr.bf16.mxu0 %v2985
    %5102 = vmatpush1.bf16.msra.mxu0 %v2984
    %5103 = vmatprep.subr.bf16.mxu0 %v2993
    %5104 = vmatpush1.bf16.msra.mxu0 %v2992
    %5105 = vmatprep.subr.bf16.mxu0 %v3001
    %5106 = vmatpush1.bf16.msra.mxu0 %v3000
    %5107 = vmatprep.subr.bf16.mxu0 %v3009
    %5108 = vmatpush1.bf16.msra.mxu0 %v3008
    %5109 = vmatprep.subr.bf16.mxu0 %v3017
    %5110 = vmatpush1.bf16.msra.mxu0 %v3016
    %5111 = vmatprep.mubr.bf16.mxu0 %v4791
    %5112 = vmatmul.mubr.bf16.gmra.mrb[0].mxu0 %v4790
    %v5113 = vpop.f32.mrb[0].mxu0
    %v5114 = vadd.f32 %v5073, %v5113
    %v5115 = vpop.f32.mrb[0].mxu0
    %v5116 = vadd.f32 %v5075, %v5115
    %v5117 = vpop.f32.mrb[0].mxu0
    %v5118 = vpop.f32.mrb[0].mxu0
    %5119 = vdwg.mxu0
    %v5120 = vxor.u32 %v4868, 2147483648
    %v5121 = vxor.u32 %v4870, 2147483648
    %v5122 = vmul.f32 %v5120, 1.442695
    %v5123 = vpow.pop %v5122
    %v5124 = vmul.f32 %v5121, 1.442695
    %v5125 = vpow.pop %v5124
    %v5126 = vadd.f32 %v5123, 1.0
    %v5127 = vadd.f32 %v5125, 1.0
    %v5128 = vrcp.pop %v5126
    %v5129 = vmul.f32 1.0, %v5128
    %v5130 = vrcp.pop %v5127
    %v5131 = vmul.f32 1.0, %v5130
    %v5132 = vxor.u32 %v4950, 2147483648
    %v5133 = vxor.u32 %v4952, 2147483648
    %v5134 = vmul.f32 %v5132, 1.442695
    %v5135 = vpow.pop %v5134
    %v5136 = vmul.f32 %v5133, 1.442695
    %v5137 = vpow.pop %v5136
    %v5138 = vadd.f32 %v5135, 1.0
    %v5139 = vadd.f32 %v5137, 1.0
    %v5140 = vrcp.pop %v5138
    %v5141 = vmul.f32 1.0, %v5140
    %v5142 = vrcp.pop %v5139
    %v5143 = vmul.f32 1.0, %v5142
    %v5144 = vtanh.pop %v5032
    %v5145 = vtanh.pop %v5034
    %v5146 = vxor.u32 %v5114, 2147483648
    %v5147 = vxor.u32 %v5116, 2147483648
    %v5148 = vmul.f32 %v5146, 1.442695
    %v5149 = vpow.pop %v5148
    %v5150 = vmul.f32 %v5147, 1.442695
    %v5151 = vpow.pop %v5150
    %v5152 = vadd.f32 %v5149, 1.0
    %v5153 = vadd.f32 %v5151, 1.0
    %v5154 = vrcp.pop %v5152
    %v5155 = vmul.f32 1.0, %v5154
    %v5156 = vrcp.pop %v5153
    %v5157 = vmul.f32 1.0, %v5156
    %v5158 = vmul.f32 %v5141, %v4403
    %v5159 = vmul.f32 %v5143, %v4404
    %v5160 = vmul.f32 %v5129, %v5144
    %v5161 = vmul.f32 %v5131, %v5145
    %v5162 = vadd.f32 %v5158, %v5160
    %v5163 = vadd.f32 %v5159, %v5161
    %v5164 = vtanh.pop %v5162
    %v5165 = vtanh.pop %v5163
    %v5166 = vmul.f32 %v5155, %v5164
    %v5167 = vmul.f32 %v5157, %v5165
    %s5168 = scalar_lea.vmem [#allocation6], 24
    %v5169 = vld [vmem:[%s5168] sm:$0xff]
    %v5170 = vpack.c.bf16 %v5169, %v5169
    %5171 = vmatprep.subr.bf16.mxu0 %v1231
    %5172 = vmatpush1.bf16.msra.mxu0 %v1230
    %5173 = vmatprep.subr.bf16.mxu0 %v1239
    %5174 = vmatpush1.bf16.msra.mxu0 %v1238
    %5175 = vmatprep.subr.bf16.mxu0 %v1247
    %5176 = vmatpush1.bf16.msra.mxu0 %v1246
    %5177 = vmatprep.subr.bf16.mxu0 %v1255
    %5178 = vmatpush1.bf16.msra.mxu0 %v1254
    %5179 = vmatprep.subr.bf16.mxu0 %v1263
    %5180 = vmatpush1.bf16.msra.mxu0 %v1262
    %5181 = vmatprep.subr.bf16.mxu0 %v1271
    %5182 = vmatpush1.bf16.msra.mxu0 %v1270
    %5183 = vmatprep.subr.bf16.mxu0 %v1279
    %5184 = vmatpush1.bf16.msra.mxu0 %v1278
    %5185 = vmatprep.subr.bf16.mxu0 %v1287
    %5186 = vmatpush1.bf16.msra.mxu0 %v1286
    %5187 = vmatprep.subr.bf16.mxu0 %v1295
    %5188 = vmatpush1.bf16.msra.mxu0 %v1294
    %5189 = vmatprep.subr.bf16.mxu0 %v1303
    %5190 = vmatpush1.bf16.msra.mxu0 %v1302
    %5191 = vmatprep.subr.bf16.mxu0 %v1311
    %5192 = vmatpush1.bf16.msra.mxu0 %v1310
    %5193 = vmatprep.subr.bf16.mxu0 %v1319
    %5194 = vmatpush1.bf16.msra.mxu0 %v1318
    %5195 = vmatprep.subr.bf16.mxu0 %v1327
    %5196 = vmatpush1.bf16.msra.mxu0 %v1326
    %5197 = vmatprep.subr.bf16.mxu0 %v1335
    %5198 = vmatpush1.bf16.msra.mxu0 %v1334
    %5199 = vmatprep.subr.bf16.mxu0 %v1343
    %5200 = vmatpush1.bf16.msra.mxu0 %v1342
    %5201 = vmatprep.subr.bf16.mxu0 %v1351
    %5202 = vmatpush1.bf16.msra.mxu0 %v1350
    %5203 = vmatprep.mubr.bf16.mxu0 %v4788
    %5204 = vmatmul.mubr.bf16.gmra.mrb[0].mxu0 %v5170
    %v5205 = vpop.f32.mrb[0].mxu0
    %v5206 = vadd.f32 %v563, %v5205
    %v5207 = vpop.f32.mrb[0].mxu0
    %v5208 = vadd.f32 %v567, %v5207
    %v5209 = vpop.f32.mrb[0].mxu0
    %v5210 = vpop.f32.mrb[0].mxu0
    %5211 = vdwg.mxu0
    %5212 = vmatprep.subr.bf16.mxu0 %v1359
    %5213 = vmatpush1.bf16.msra.mxu0 %v1358
    %5214 = vmatprep.subr.bf16.mxu0 %v1367
    %5215 = vmatpush1.bf16.msra.mxu0 %v1366
    %5216 = vmatprep.subr.bf16.mxu0 %v1375
    %5217 = vmatpush1.bf16.msra.mxu0 %v1374
    %5218 = vmatprep.subr.bf16.mxu0 %v1383
    %5219 = vmatpush1.bf16.msra.mxu0 %v1382
    %5220 = vmatprep.subr.bf16.mxu0 %v1391
    %5221 = vmatpush1.bf16.msra.mxu0 %v1390
    %5222 = vmatprep.subr.bf16.mxu0 %v1399
    %5223 = vmatpush1.bf16.msra.mxu0 %v1398
    %5224 = vmatprep.subr.bf16.mxu0 %v1407
    %5225 = vmatpush1.bf16.msra.mxu0 %v1406
    %5226 = vmatprep.subr.bf16.mxu0 %v1415
    %5227 = vmatpush1.bf16.msra.mxu0 %v1414
    %5228 = vmatprep.subr.bf16.mxu0 0
    %5229 = vmatpush1.bf16.msra.mxu0 0
    %5230 = vmatprep.subr.bf16.mxu0 0
    %5231 = vmatpush1.bf16.msra.mxu0 0
    %5232 = vmatprep.subr.bf16.mxu0 0
    %5233 = vmatpush1.bf16.msra.mxu0 0
    %5234 = vmatprep.subr.bf16.mxu0 0
    %5235 = vmatpush1.bf16.msra.mxu0 0
    %5236 = vmatprep.subr.bf16.mxu0 0
    %5237 = vmatpush1.bf16.msra.mxu0 0
    %5238 = vmatprep.subr.bf16.mxu0 0
    %5239 = vmatpush1.bf16.msra.mxu0 0
    %5240 = vmatprep.subr.bf16.mxu0 0
    %5241 = vmatpush1.bf16.msra.mxu0 0
    %5242 = vmatprep.subr.bf16.mxu0 0
    %5243 = vmatpush1.bf16.msra.mxu0 0
    %5244 = vmatprep.mubr.bf16.mxu0 0
    %5245 = vmatmul.mubr.bf16.gmra.mrb[0].mxu0 %v4789
    %v5246 = vpop.f32.mrb[0].mxu0
    %v5247 = vadd.f32 %v5206, %v5246
    %v5248 = vpop.f32.mrb[0].mxu0
    %v5249 = vadd.f32 %v5208, %v5248
    %v5250 = vpop.f32.mrb[0].mxu0
    %v5251 = vpop.f32.mrb[0].mxu0
    %5252 = vdwg.mxu0
    %5253 = vmatprep.subr.bf16.mxu0 %v1233
    %5254 = vmatpush1.bf16.msra.mxu0 %v1232
    %5255 = vmatprep.subr.bf16.mxu0 %v1241
    %5256 = vmatpush1.bf16.msra.mxu0 %v1240
    %5257 = vmatprep.subr.bf16.mxu0 %v1249
    %5258 = vmatpush1.bf16.msra.mxu0 %v1248
    %5259 = vmatprep.subr.bf16.mxu0 %v1257
    %5260 = vmatpush1.bf16.msra.mxu0 %v1256
    %5261 = vmatprep.subr.bf16.mxu0 %v1265
    %5262 = vmatpush1.bf16.msra.mxu0 %v1264
    %5263 = vmatprep.subr.bf16.mxu0 %v1273
    %5264 = vmatpush1.bf16.msra.mxu0 %v1272
    %5265 = vmatprep.subr.bf16.mxu0 %v1281
    %5266 = vmatpush1.bf16.msra.mxu0 %v1280
    %5267 = vmatprep.subr.bf16.mxu0 %v1289
    %5268 = vmatpush1.bf16.msra.mxu0 %v1288
    %5269 = vmatprep.subr.bf16.mxu0 %v1297
    %5270 = vmatpush1.bf16.msra.mxu0 %v1296
    %5271 = vmatprep.subr.bf16.mxu0 %v1305
    %5272 = vmatpush1.bf16.msra.mxu0 %v1304
    %5273 = vmatprep.subr.bf16.mxu0 %v1313
    %5274 = vmatpush1.bf16.msra.mxu0 %v1312
    %5275 = vmatprep.subr.bf16.mxu0 %v1321
    %5276 = vmatpush1.bf16.msra.mxu0 %v1320
    %5277 = vmatprep.subr.bf16.mxu0 %v1329
    %5278 = vmatpush1.bf16.msra.mxu0 %v1328
    %5279 = vmatprep.subr.bf16.mxu0 %v1337
    %5280 = vmatpush1.bf16.msra.mxu0 %v1336
    %5281 = vmatprep.subr.bf16.mxu0 %v1345
    %5282 = vmatpush1.bf16.msra.mxu0 %v1344
    %5283 = vmatprep.subr.bf16.mxu0 %v1353
    %5284 = vmatpush1.bf16.msra.mxu0 %v1352
    %5285 = vmatprep.mubr.bf16.mxu0 %v4788
    %5286 = vmatmul.mubr.bf16.gmra.mrb[0].mxu0 %v5170
    %v5287 = vpop.f32.mrb[0].mxu0
    %v5288 = vadd.f32 %v571, %v5287
    %v5289 = vpop.f32.mrb[0].mxu0
    %v5290 = vadd.f32 %v575, %v5289
    %v5291 = vpop.f32.mrb[0].mxu0
    %v5292 = vpop.f32.mrb[0].mxu0
    %5293 = vdwg.mxu0
    %5294 = vmatprep.subr.bf16.mxu0 %v1361
    %5295 = vmatpush1.bf16.msra.mxu0 %v1360
    %5296 = vmatprep.subr.bf16.mxu0 %v1369
    %5297 = vmatpush1.bf16.msra.mxu0 %v1368
    %5298 = vmatprep.subr.bf16.mxu0 %v1377
    %5299 = vmatpush1.bf16.msra.mxu0 %v1376
    %5300 = vmatprep.subr.bf16.mxu0 %v1385
    %5301 = vmatpush1.bf16.msra.mxu0 %v1384
    %5302 = vmatprep.subr.bf16.mxu0 %v1393
    %5303 = vmatpush1.bf16.msra.mxu0 %v1392
    %5304 = vmatprep.subr.bf16.mxu0 %v1401
    %5305 = vmatpush1.bf16.msra.mxu0 %v1400
    %5306 = vmatprep.subr.bf16.mxu0 %v1409
    %5307 = vmatpush1.bf16.msra.mxu0 %v1408
    %5308 = vmatprep.subr.bf16.mxu0 %v1417
    %5309 = vmatpush1.bf16.msra.mxu0 %v1416
    %5310 = vmatprep.subr.bf16.mxu0 0
    %5311 = vmatpush1.bf16.msra.mxu0 0
    %5312 = vmatprep.subr.bf16.mxu0 0
    %5313 = vmatpush1.bf16.msra.mxu0 0
    %5314 = vmatprep.subr.bf16.mxu0 0
    %5315 = vmatpush1.bf16.msra.mxu0 0
    %5316 = vmatprep.subr.bf16.mxu0 0
    %5317 = vmatpush1.bf16.msra.mxu0 0
    %5318 = vmatprep.subr.bf16.mxu0 0
    %5319 = vmatpush1.bf16.msra.mxu0 0
    %5320 = vmatprep.subr.bf16.mxu0 0
    %5321 = vmatpush1.bf16.msra.mxu0 0
    %5322 = vmatprep.subr.bf16.mxu0 0
    %5323 = vmatpush1.bf16.msra.mxu0 0
    %5324 = vmatprep.subr.bf16.mxu0 0
    %5325 = vmatpush1.bf16.msra.mxu0 0
    %5326 = vmatprep.mubr.bf16.mxu0 0
    %5327 = vmatmul.mubr.bf16.gmra.mrb[0].mxu0 %v4789
    %v5328 = vpop.f32.mrb[0].mxu0
    %v5329 = vadd.f32 %v5288, %v5328
    %v5330 = vpop.f32.mrb[0].mxu0
    %v5331 = vadd.f32 %v5290, %v5330
    %v5332 = vpop.f32.mrb[0].mxu0
    %v5333 = vpop.f32.mrb[0].mxu0
    %5334 = vdwg.mxu0
    %5335 = vmatprep.subr.bf16.mxu0 %v1235
    %5336 = vmatpush1.bf16.msra.mxu0 %v1234
    %5337 = vmatprep.subr.bf16.mxu0 %v1243
    %5338 = vmatpush1.bf16.msra.mxu0 %v1242
    %5339 = vmatprep.subr.bf16.mxu0 %v1251
    %5340 = vmatpush1.bf16.msra.mxu0 %v1250
    %5341 = vmatprep.subr.bf16.mxu0 %v1259
    %5342 = vmatpush1.bf16.msra.mxu0 %v1258
    %5343 = vmatprep.subr.bf16.mxu0 %v1267
    %5344 = vmatpush1.bf16.msra.mxu0 %v1266
    %5345 = vmatprep.subr.bf16.mxu0 %v1275
    %5346 = vmatpush1.bf16.msra.mxu0 %v1274
    %5347 = vmatprep.subr.bf16.mxu0 %v1283
    %5348 = vmatpush1.bf16.msra.mxu0 %v1282
    %5349 = vmatprep.subr.bf16.mxu0 %v1291
    %5350 = vmatpush1.bf16.msra.mxu0 %v1290
    %5351 = vmatprep.subr.bf16.mxu0 %v1299
    %5352 = vmatpush1.bf16.msra.mxu0 %v1298
    %5353 = vmatprep.subr.bf16.mxu0 %v1307
    %5354 = vmatpush1.bf16.msra.mxu0 %v1306
    %5355 = vmatprep.subr.bf16.mxu0 %v1315
    %5356 = vmatpush1.bf16.msra.mxu0 %v1314
    %5357 = vmatprep.subr.bf16.mxu0 %v1323
    %5358 = vmatpush1.bf16.msra.mxu0 %v1322
    %5359 = vmatprep.subr.bf16.mxu0 %v1331
    %5360 = vmatpush1.bf16.msra.mxu0 %v1330
    %5361 = vmatprep.subr.bf16.mxu0 %v1339
    %5362 = vmatpush1.bf16.msra.mxu0 %v1338
    %5363 = vmatprep.subr.bf16.mxu0 %v1347
    %5364 = vmatpush1.bf16.msra.mxu0 %v1346
    %5365 = vmatprep.subr.bf16.mxu0 %v1355
    %5366 = vmatpush1.bf16.msra.mxu0 %v1354
    %5367 = vmatprep.mubr.bf16.mxu0 %v4788
    %5368 = vmatmul.mubr.bf16.gmra.mrb[0].mxu0 %v5170
    %v5369 = vpop.f32.mrb[0].mxu0
    %v5370 = vadd.f32 %v579, %v5369
    %v5371 = vpop.f32.mrb[0].mxu0
    %v5372 = vadd.f32 %v583, %v5371
    %v5373 = vpop.f32.mrb[0].mxu0
    %v5374 = vpop.f32.mrb[0].mxu0
    %5375 = vdwg.mxu0
    %5376 = vmatprep.subr.bf16.mxu0 %v1363
    %5377 = vmatpush1.bf16.msra.mxu0 %v1362
    %5378 = vmatprep.subr.bf16.mxu0 %v1371
    %5379 = vmatpush1.bf16.msra.mxu0 %v1370
    %5380 = vmatprep.subr.bf16.mxu0 %v1379
    %5381 = vmatpush1.bf16.msra.mxu0 %v1378
    %5382 = vmatprep.subr.bf16.mxu0 %v1387
    %5383 = vmatpush1.bf16.msra.mxu0 %v1386
    %5384 = vmatprep.subr.bf16.mxu0 %v1395
    %5385 = vmatpush1.bf16.msra.mxu0 %v1394
    %5386 = vmatprep.subr.bf16.mxu0 %v1403
    %5387 = vmatpush1.bf16.msra.mxu0 %v1402
    %5388 = vmatprep.subr.bf16.mxu0 %v1411
    %5389 = vmatpush1.bf16.msra.mxu0 %v1410
    %5390 = vmatprep.subr.bf16.mxu0 %v1419
    %5391 = vmatpush1.bf16.msra.mxu0 %v1418
    %5392 = vmatprep.subr.bf16.mxu0 0
    %5393 = vmatpush1.bf16.msra.mxu0 0
    %5394 = vmatprep.subr.bf16.mxu0 0
    %5395 = vmatpush1.bf16.msra.mxu0 0
    %5396 = vmatprep.subr.bf16.mxu0 0
    %5397 = vmatpush1.bf16.msra.mxu0 0
    %5398 = vmatprep.subr.bf16.mxu0 0
    %5399 = vmatpush1.bf16.msra.mxu0 0
    %5400 = vmatprep.subr.bf16.mxu0 0
    %5401 = vmatpush1.bf16.msra.mxu0 0
    %5402 = vmatprep.subr.bf16.mxu0 0
    %5403 = vmatpush1.bf16.msra.mxu0 0
    %5404 = vmatprep.subr.bf16.mxu0 0
    %5405 = vmatpush1.bf16.msra.mxu0 0
    %5406 = vmatprep.subr.bf16.mxu0 0
    %5407 = vmatpush1.bf16.msra.mxu0 0
    %5408 = vmatprep.mubr.bf16.mxu0 0
    %5409 = vmatmul.mubr.bf16.gmra.mrb[0].mxu0 %v4789
    %v5410 = vpop.f32.mrb[0].mxu0
    %v5411 = vadd.f32 %v5370, %v5410
    %v5412 = vpop.f32.mrb[0].mxu0
    %v5413 = vadd.f32 %v5372, %v5412
    %v5414 = vpop.f32.mrb[0].mxu0
    %v5415 = vpop.f32.mrb[0].mxu0
    %5416 = vdwg.mxu0
    %5417 = vmatprep.subr.bf16.mxu0 %v1237
    %5418 = vmatpush1.bf16.msra.mxu0 %v1236
    %5419 = vmatprep.subr.bf16.mxu0 %v1245
    %5420 = vmatpush1.bf16.msra.mxu0 %v1244
    %5421 = vmatprep.subr.bf16.mxu0 %v1253
    %5422 = vmatpush1.bf16.msra.mxu0 %v1252
    %5423 = vmatprep.subr.bf16.mxu0 %v1261
    %5424 = vmatpush1.bf16.msra.mxu0 %v1260
    %5425 = vmatprep.subr.bf16.mxu0 %v1269
    %5426 = vmatpush1.bf16.msra.mxu0 %v1268
    %5427 = vmatprep.subr.bf16.mxu0 %v1277
    %5428 = vmatpush1.bf16.msra.mxu0 %v1276
    %5429 = vmatprep.subr.bf16.mxu0 %v1285
    %5430 = vmatpush1.bf16.msra.mxu0 %v1284
    %5431 = vmatprep.subr.bf16.mxu0 %v1293
    %5432 = vmatpush1.bf16.msra.mxu0 %v1292
    %5433 = vmatprep.subr.bf16.mxu0 %v1301
    %5434 = vmatpush1.bf16.msra.mxu0 %v1300
    %5435 = vmatprep.subr.bf16.mxu0 %v1309
    %5436 = vmatpush1.bf16.msra.mxu0 %v1308
    %5437 = vmatprep.subr.bf16.mxu0 %v1317
    %5438 = vmatpush1.bf16.msra.mxu0 %v1316
    %5439 = vmatprep.subr.bf16.mxu0 %v1325
    %5440 = vmatpush1.bf16.msra.mxu0 %v1324
    %5441 = vmatprep.subr.bf16.mxu0 %v1333
    %5442 = vmatpush1.bf16.msra.mxu0 %v1332
    %5443 = vmatprep.subr.bf16.mxu0 %v1341
    %5444 = vmatpush1.bf16.msra.mxu0 %v1340
    %5445 = vmatprep.subr.bf16.mxu0 %v1349
    %5446 = vmatpush1.bf16.msra.mxu0 %v1348
    %5447 = vmatprep.subr.bf16.mxu0 %v1357
    %5448 = vmatpush1.bf16.msra.mxu0 %v1356
    %5449 = vmatprep.mubr.bf16.mxu0 %v4788
    %5450 = vmatmul.mubr.bf16.gmra.mrb[0].mxu0 %v5170
    %v5451 = vpop.f32.mrb[0].mxu0
    %v5452 = vadd.f32 %v587, %v5451
    %v5453 = vpop.f32.mrb[0].mxu0
    %v5454 = vadd.f32 %v591, %v5453
    %v5455 = vpop.f32.mrb[0].mxu0
    %v5456 = vpop.f32.mrb[0].mxu0
    %5457 = vdwg.mxu0
    %5458 = vmatprep.subr.bf16.mxu0 %v1365
    %5459 = vmatpush1.bf16.msra.mxu0 %v1364
    %5460 = vmatprep.subr.bf16.mxu0 %v1373
    %5461 = vmatpush1.bf16.msra.mxu0 %v1372
    %5462 = vmatprep.subr.bf16.mxu0 %v1381
    %5463 = vmatpush1.bf16.msra.mxu0 %v1380
    %5464 = vmatprep.subr.bf16.mxu0 %v1389
    %5465 = vmatpush1.bf16.msra.mxu0 %v1388
    %5466 = vmatprep.subr.bf16.mxu0 %v1397
    %5467 = vmatpush1.bf16.msra.mxu0 %v1396
    %5468 = vmatprep.subr.bf16.mxu0 %v1405
    %5469 = vmatpush1.bf16.msra.mxu0 %v1404
    %5470 = vmatprep.subr.bf16.mxu0 %v1413
    %5471 = vmatpush1.bf16.msra.mxu0 %v1412
    %5472 = vmatprep.subr.bf16.mxu0 %v1421
    %5473 = vmatpush1.bf16.msra.mxu0 %v1420
    %5474 = vmatprep.subr.bf16.mxu0 0
    %5475 = vmatpush1.bf16.msra.mxu0 0
    %5476 = vmatprep.subr.bf16.mxu0 0
    %5477 = vmatpush1.bf16.msra.mxu0 0
    %5478 = vmatprep.subr.bf16.mxu0 0
    %5479 = vmatpush1.bf16.msra.mxu0 0
    %5480 = vmatprep.subr.bf16.mxu0 0
    %5481 = vmatpush1.bf16.msra.mxu0 0
    %5482 = vmatprep.subr.bf16.mxu0 0
    %5483 = vmatpush1.bf16.msra.mxu0 0
    %5484 = vmatprep.subr.bf16.mxu0 0
    %5485 = vmatpush1.bf16.msra.mxu0 0
    %5486 = vmatprep.subr.bf16.mxu0 0
    %5487 = vmatpush1.bf16.msra.mxu0 0
    %5488 = vmatprep.subr.bf16.mxu0 0
    %5489 = vmatpush1.bf16.msra.mxu0 0
    %5490 = vmatprep.mubr.bf16.mxu0 0
    %5491 = vmatmul.mubr.bf16.gmra.mrb[0].mxu0 %v4789
    %v5492 = vpop.f32.mrb[0].mxu0
    %v5493 = vadd.f32 %v5452, %v5492
    %v5494 = vpop.f32.mrb[0].mxu0
    %v5495 = vadd.f32 %v5454, %v5494
    %v5496 = vpop.f32.mrb[0].mxu0
    %v5497 = vpop.f32.mrb[0].mxu0
    %5498 = vdwg.mxu0
    %v5499 = vxor.u32 %v5247, 2147483648
    %v5500 = vxor.u32 %v5249, 2147483648
    %v5501 = vmul.f32 %v5499, 1.442695
    %v5502 = vpow.pop %v5501
    %v5503 = vmul.f32 %v5500, 1.442695
    %v5504 = vpow.pop %v5503
    %v5505 = vadd.f32 %v5502, 1.0
    %v5506 = vadd.f32 %v5504, 1.0
    %v5507 = vrcp.pop %v5505
    %v5508 = vmul.f32 1.0, %v5507
    %v5509 = vrcp.pop %v5506
    %v5510 = vmul.f32 1.0, %v5509
    %v5511 = vxor.u32 %v5329, 2147483648
    %v5512 = vxor.u32 %v5331, 2147483648
    %v5513 = vmul.f32 %v5511, 1.442695
    %v5514 = vpow.pop %v5513
    %v5515 = vmul.f32 %v5512, 1.442695
    %v5516 = vpow.pop %v5515
    %v5517 = vadd.f32 %v5514, 1.0
    %v5518 = vadd.f32 %v5516, 1.0
    %v5519 = vrcp.pop %v5517
    %v5520 = vmul.f32 1.0, %v5519
    %v5521 = vrcp.pop %v5518
    %v5522 = vmul.f32 1.0, %v5521
    %v5523 = vtanh.pop %v5411
    %v5524 = vtanh.pop %v5413
    %v5525 = vxor.u32 %v5493, 2147483648
    %v5526 = vxor.u32 %v5495, 2147483648
    %v5527 = vmul.f32 %v5525, 1.442695
    %v5528 = vpow.pop %v5527
    %v5529 = vmul.f32 %v5526, 1.442695
    %v5530 = vpow.pop %v5529
    %v5531 = vadd.f32 %v5528, 1.0
    %v5532 = vadd.f32 %v5530, 1.0
    %v5533 = vrcp.pop %v5531
    %v5534 = vmul.f32 1.0, %v5533
    %v5535 = vrcp.pop %v5532
    %v5536 = vmul.f32 1.0, %v5535
    %v5537 = vmul.f32 %v5520, %v4782
    %v5538 = vmul.f32 %v5522, %v4783
    %v5539 = vmul.f32 %v5508, %v5523
    %v5540 = vmul.f32 %v5510, %v5524
    %v5541 = vadd.f32 %v5537, %v5539
    %v5542 = vadd.f32 %v5538, %v5540
    %v5543 = vtanh.pop %v5541
    %v5544 = vtanh.pop %v5542
    %v5545 = vmul.f32 %v5534, %v5543
    %v5546 = vmul.f32 %v5536, %v5544
    %v5547 = vpack.c.bf16 %v5545, %v5545
    %v5548 = vpack.c.bf16 %v5546, %v5546
    %v5549 = vpack.c.bf16 %v5166, %v5166
    %v5550 = vpack.c.bf16 %v5167, %v5167
    %5551 = vmatprep.subr.bf16.mxu0 %v2763
    %5552 = vmatpush1.bf16.msra.mxu0 %v2762
    %5553 = vmatprep.subr.bf16.mxu0 %v2771
    %5554 = vmatpush1.bf16.msra.mxu0 %v2770
    %5555 = vmatprep.subr.bf16.mxu0 %v2779
    %5556 = vmatpush1.bf16.msra.mxu0 %v2778
    %5557 = vmatprep.subr.bf16.mxu0 %v2787
    %5558 = vmatpush1.bf16.msra.mxu0 %v2786
    %5559 = vmatprep.subr.bf16.mxu0 %v2795
    %5560 = vmatpush1.bf16.msra.mxu0 %v2794
    %5561 = vmatprep.subr.bf16.mxu0 %v2803
    %5562 = vmatpush1.bf16.msra.mxu0 %v2802
    %5563 = vmatprep.subr.bf16.mxu0 %v2811
    %5564 = vmatpush1.bf16.msra.mxu0 %v2810
    %5565 = vmatprep.subr.bf16.mxu0 %v2819
    %5566 = vmatpush1.bf16.msra.mxu0 %v2818
    %5567 = vmatprep.subr.bf16.mxu0 %v2827
    %5568 = vmatpush1.bf16.msra.mxu0 %v2826
    %5569 = vmatprep.subr.bf16.mxu0 %v2835
    %5570 = vmatpush1.bf16.msra.mxu0 %v2834
    %5571 = vmatprep.subr.bf16.mxu0 %v2843
    %5572 = vmatpush1.bf16.msra.mxu0 %v2842
    %5573 = vmatprep.subr.bf16.mxu0 %v2851
    %5574 = vmatpush1.bf16.msra.mxu0 %v2850
    %5575 = vmatprep.subr.bf16.mxu0 %v2859
    %5576 = vmatpush1.bf16.msra.mxu0 %v2858
    %5577 = vmatprep.subr.bf16.mxu0 %v2867
    %5578 = vmatpush1.bf16.msra.mxu0 %v2866
    %5579 = vmatprep.subr.bf16.mxu0 %v2875
    %5580 = vmatpush1.bf16.msra.mxu0 %v2874
    %5581 = vmatprep.subr.bf16.mxu0 %v2883
    %5582 = vmatpush1.bf16.msra.mxu0 %v2882
    %5583 = vmatprep.mubr.bf16.mxu0 %v5548
    %5584 = vmatmul.mubr.bf16.gmra.mrb[0].mxu0 %v5547
    %v5585 = vpop.f32.mrb[0].mxu0
    %v5586 = vadd.f32 %v605, %v5585
    %v5587 = vpop.f32.mrb[0].mxu0
    %v5588 = vadd.f32 %v609, %v5587
    %v5589 = vpop.f32.mrb[0].mxu0
    %v5590 = vpop.f32.mrb[0].mxu0
    %5591 = vdwg.mxu0
    %5592 = vmatprep.subr.bf16.mxu0 %v2891
    %5593 = vmatpush1.bf16.msra.mxu0 %v2890
    %5594 = vmatprep.subr.bf16.mxu0 %v2899
    %5595 = vmatpush1.bf16.msra.mxu0 %v2898
    %5596 = vmatprep.subr.bf16.mxu0 %v2907
    %5597 = vmatpush1.bf16.msra.mxu0 %v2906
    %5598 = vmatprep.subr.bf16.mxu0 %v2915
    %5599 = vmatpush1.bf16.msra.mxu0 %v2914
    %5600 = vmatprep.subr.bf16.mxu0 %v2923
    %5601 = vmatpush1.bf16.msra.mxu0 %v2922
    %5602 = vmatprep.subr.bf16.mxu0 %v2931
    %5603 = vmatpush1.bf16.msra.mxu0 %v2930
    %5604 = vmatprep.subr.bf16.mxu0 %v2939
    %5605 = vmatpush1.bf16.msra.mxu0 %v2938
    %5606 = vmatprep.subr.bf16.mxu0 %v2947
    %5607 = vmatpush1.bf16.msra.mxu0 %v2946
    %5608 = vmatprep.subr.bf16.mxu0 %v2955
    %5609 = vmatpush1.bf16.msra.mxu0 %v2954
    %5610 = vmatprep.subr.bf16.mxu0 %v2963
    %5611 = vmatpush1.bf16.msra.mxu0 %v2962
    %5612 = vmatprep.subr.bf16.mxu0 %v2971
    %5613 = vmatpush1.bf16.msra.mxu0 %v2970
    %5614 = vmatprep.subr.bf16.mxu0 %v2979
    %5615 = vmatpush1.bf16.msra.mxu0 %v2978
    %5616 = vmatprep.subr.bf16.mxu0 %v2987
    %5617 = vmatpush1.bf16.msra.mxu0 %v2986
    %5618 = vmatprep.subr.bf16.mxu0 %v2995
    %5619 = vmatpush1.bf16.msra.mxu0 %v2994
    %5620 = vmatprep.subr.bf16.mxu0 %v3003
    %5621 = vmatpush1.bf16.msra.mxu0 %v3002
    %5622 = vmatprep.subr.bf16.mxu0 %v3011
    %5623 = vmatpush1.bf16.msra.mxu0 %v3010
    %5624 = vmatprep.mubr.bf16.mxu0 %v5550
    %5625 = vmatmul.mubr.bf16.gmra.mrb[0].mxu0 %v5549
    %v5626 = vpop.f32.mrb[0].mxu0
    %v5627 = vadd.f32 %v5586, %v5626
    %v5628 = vpop.f32.mrb[0].mxu0
    %v5629 = vadd.f32 %v5588, %v5628
    %v5630 = vpop.f32.mrb[0].mxu0
    %v5631 = vpop.f32.mrb[0].mxu0
    %5632 = vdwg.mxu0
    %5633 = vmatprep.subr.bf16.mxu0 %v2765
    %5634 = vmatpush1.bf16.msra.mxu0 %v2764
    %5635 = vmatprep.subr.bf16.mxu0 %v2773
    %5636 = vmatpush1.bf16.msra.mxu0 %v2772
    %5637 = vmatprep.subr.bf16.mxu0 %v2781
    %5638 = vmatpush1.bf16.msra.mxu0 %v2780
    %5639 = vmatprep.subr.bf16.mxu0 %v2789
    %5640 = vmatpush1.bf16.msra.mxu0 %v2788
    %5641 = vmatprep.subr.bf16.mxu0 %v2797
    %5642 = vmatpush1.bf16.msra.mxu0 %v2796
    %5643 = vmatprep.subr.bf16.mxu0 %v2805
    %5644 = vmatpush1.bf16.msra.mxu0 %v2804
    %5645 = vmatprep.subr.bf16.mxu0 %v2813
    %5646 = vmatpush1.bf16.msra.mxu0 %v2812
    %5647 = vmatprep.subr.bf16.mxu0 %v2821
    %5648 = vmatpush1.bf16.msra.mxu0 %v2820
    %5649 = vmatprep.subr.bf16.mxu0 %v2829
    %5650 = vmatpush1.bf16.msra.mxu0 %v2828
    %5651 = vmatprep.subr.bf16.mxu0 %v2837
    %5652 = vmatpush1.bf16.msra.mxu0 %v2836
    %5653 = vmatprep.subr.bf16.mxu0 %v2845
    %5654 = vmatpush1.bf16.msra.mxu0 %v2844
    %5655 = vmatprep.subr.bf16.mxu0 %v2853
    %5656 = vmatpush1.bf16.msra.mxu0 %v2852
    %5657 = vmatprep.subr.bf16.mxu0 %v2861
    %5658 = vmatpush1.bf16.msra.mxu0 %v2860
    %5659 = vmatprep.subr.bf16.mxu0 %v2869
    %5660 = vmatpush1.bf16.msra.mxu0 %v2868
    %5661 = vmatprep.subr.bf16.mxu0 %v2877
    %5662 = vmatpush1.bf16.msra.mxu0 %v2876
    %5663 = vmatprep.subr.bf16.mxu0 %v2885
    %5664 = vmatpush1.bf16.msra.mxu0 %v2884
    %5665 = vmatprep.mubr.bf16.mxu0 %v5548
    %5666 = vmatmul.mubr.bf16.gmra.mrb[0].mxu0 %v5547
    %v5667 = vpop.f32.mrb[0].mxu0
    %v5668 = vadd.f32 %v613, %v5667
    %v5669 = vpop.f32.mrb[0].mxu0
    %v5670 = vadd.f32 %v617, %v5669
    %v5671 = vpop.f32.mrb[0].mxu0
    %v5672 = vpop.f32.mrb[0].mxu0
    %5673 = vdwg.mxu0
    %5674 = vmatprep.subr.bf16.mxu0 %v2893
    %5675 = vmatpush1.bf16.msra.mxu0 %v2892
    %5676 = vmatprep.subr.bf16.mxu0 %v2901
    %5677 = vmatpush1.bf16.msra.mxu0 %v2900
    %5678 = vmatprep.subr.bf16.mxu0 %v2909
    %5679 = vmatpush1.bf16.msra.mxu0 %v2908
    %5680 = vmatprep.subr.bf16.mxu0 %v2917
    %5681 = vmatpush1.bf16.msra.mxu0 %v2916
    %5682 = vmatprep.subr.bf16.mxu0 %v2925
    %5683 = vmatpush1.bf16.msra.mxu0 %v2924
    %5684 = vmatprep.subr.bf16.mxu0 %v2933
    %5685 = vmatpush1.bf16.msra.mxu0 %v2932
    %5686 = vmatprep.subr.bf16.mxu0 %v2941
    %5687 = vmatpush1.bf16.msra.mxu0 %v2940
    %5688 = vmatprep.subr.bf16.mxu0 %v2949
    %5689 = vmatpush1.bf16.msra.mxu0 %v2948
    %5690 = vmatprep.subr.bf16.mxu0 %v2957
    %5691 = vmatpush1.bf16.msra.mxu0 %v2956
    %5692 = vmatprep.subr.bf16.mxu0 %v2965
    %5693 = vmatpush1.bf16.msra.mxu0 %v2964
    %5694 = vmatprep.subr.bf16.mxu0 %v2973
    %5695 = vmatpush1.bf16.msra.mxu0 %v2972
    %5696 = vmatprep.subr.bf16.mxu0 %v2981
    %5697 = vmatpush1.bf16.msra.mxu0 %v2980
    %5698 = vmatprep.subr.bf16.mxu0 %v2989
    %5699 = vmatpush1.bf16.msra.mxu0 %v2988
    %5700 = vmatprep.subr.bf16.mxu0 %v2997
    %5701 = vmatpush1.bf16.msra.mxu0 %v2996
    %5702 = vmatprep.subr.bf16.mxu0 %v3005
    %5703 = vmatpush1.bf16.msra.mxu0 %v3004
    %5704 = vmatprep.subr.bf16.mxu0 %v3013
    %5705 = vmatpush1.bf16.msra.mxu0 %v3012
    %5706 = vmatprep.mubr.bf16.mxu0 %v5550
    %5707 = vmatmul.mubr.bf16.gmra.mrb[0].mxu0 %v5549
    %v5708 = vpop.f32.mrb[0].mxu0
    %v5709 = vadd.f32 %v5668, %v5708
    %v5710 = vpop.f32.mrb[0].mxu0
    %v5711 = vadd.f32 %v5670, %v5710
    %v5712 = vpop.f32.mrb[0].mxu0
    %v5713 = vpop.f32.mrb[0].mxu0
    %5714 = vdwg.mxu0
    %5715 = vmatprep.subr.bf16.mxu0 %v2767
    %5716 = vmatpush1.bf16.msra.mxu0 %v2766
    %5717 = vmatprep.subr.bf16.mxu0 %v2775
    %5718 = vmatpush1.bf16.msra.mxu0 %v2774
    %5719 = vmatprep.subr.bf16.mxu0 %v2783
    %5720 = vmatpush1.bf16.msra.mxu0 %v2782
    %5721 = vmatprep.subr.bf16.mxu0 %v2791
    %5722 = vmatpush1.bf16.msra.mxu0 %v2790
    %5723 = vmatprep.subr.bf16.mxu0 %v2799
    %5724 = vmatpush1.bf16.msra.mxu0 %v2798
    %5725 = vmatprep.subr.bf16.mxu0 %v2807
    %5726 = vmatpush1.bf16.msra.mxu0 %v2806
    %5727 = vmatprep.subr.bf16.mxu0 %v2815
    %5728 = vmatpush1.bf16.msra.mxu0 %v2814
    %5729 = vmatprep.subr.bf16.mxu0 %v2823
    %5730 = vmatpush1.bf16.msra.mxu0 %v2822
    %5731 = vmatprep.subr.bf16.mxu0 %v2831
    %5732 = vmatpush1.bf16.msra.mxu0 %v2830
    %5733 = vmatprep.subr.bf16.mxu0 %v2839
    %5734 = vmatpush1.bf16.msra.mxu0 %v2838
    %5735 = vmatprep.subr.bf16.mxu0 %v2847
    %5736 = vmatpush1.bf16.msra.mxu0 %v2846
    %5737 = vmatprep.subr.bf16.mxu0 %v2855
    %5738 = vmatpush1.bf16.msra.mxu0 %v2854
    %5739 = vmatprep.subr.bf16.mxu0 %v2863
    %5740 = vmatpush1.bf16.msra.mxu0 %v2862
    %5741 = vmatprep.subr.bf16.mxu0 %v2871
    %5742 = vmatpush1.bf16.msra.mxu0 %v2870
    %5743 = vmatprep.subr.bf16.mxu0 %v2879
    %5744 = vmatpush1.bf16.msra.mxu0 %v2878
    %5745 = vmatprep.subr.bf16.mxu0 %v2887
    %5746 = vmatpush1.bf16.msra.mxu0 %v2886
    %5747 = vmatprep.mubr.bf16.mxu0 %v5548
    %5748 = vmatmul.mubr.bf16.gmra.mrb[0].mxu0 %v5547
    %v5749 = vpop.f32.mrb[0].mxu0
    %v5750 = vadd.f32 %v621, %v5749
    %v5751 = vpop.f32.mrb[0].mxu0
    %v5752 = vadd.f32 %v625, %v5751
    %v5753 = vpop.f32.mrb[0].mxu0
    %v5754 = vpop.f32.mrb[0].mxu0
    %5755 = vdwg.mxu0
    %5756 = vmatprep.subr.bf16.mxu0 %v2895
    %5757 = vmatpush1.bf16.msra.mxu0 %v2894
    %5758 = vmatprep.subr.bf16.mxu0 %v2903
    %5759 = vmatpush1.bf16.msra.mxu0 %v2902
    %5760 = vmatprep.subr.bf16.mxu0 %v2911
    %5761 = vmatpush1.bf16.msra.mxu0 %v2910
    %5762 = vmatprep.subr.bf16.mxu0 %v2919
    %5763 = vmatpush1.bf16.msra.mxu0 %v2918
    %5764 = vmatprep.subr.bf16.mxu0 %v2927
    %5765 = vmatpush1.bf16.msra.mxu0 %v2926
    %5766 = vmatprep.subr.bf16.mxu0 %v2935
    %5767 = vmatpush1.bf16.msra.mxu0 %v2934
    %5768 = vmatprep.subr.bf16.mxu0 %v2943
    %5769 = vmatpush1.bf16.msra.mxu0 %v2942
    %5770 = vmatprep.subr.bf16.mxu0 %v2951
    %5771 = vmatpush1.bf16.msra.mxu0 %v2950
    %5772 = vmatprep.subr.bf16.mxu0 %v2959
    %5773 = vmatpush1.bf16.msra.mxu0 %v2958
    %5774 = vmatprep.subr.bf16.mxu0 %v2967
    %5775 = vmatpush1.bf16.msra.mxu0 %v2966
    %5776 = vmatprep.subr.bf16.mxu0 %v2975
    %5777 = vmatpush1.bf16.msra.mxu0 %v2974
    %5778 = vmatprep.subr.bf16.mxu0 %v2983
    %5779 = vmatpush1.bf16.msra.mxu0 %v2982
    %5780 = vmatprep.subr.bf16.mxu0 %v2991
    %5781 = vmatpush1.bf16.msra.mxu0 %v2990
    %5782 = vmatprep.subr.bf16.mxu0 %v2999
    %5783 = vmatpush1.bf16.msra.mxu0 %v2998
    %5784 = vmatprep.subr.bf16.mxu0 %v3007
    %5785 = vmatpush1.bf16.msra.mxu0 %v3006
    %5786 = vmatprep.subr.bf16.mxu0 %v3015
    %5787 = vmatpush1.bf16.msra.mxu0 %v3014
    %5788 = vmatprep.mubr.bf16.mxu0 %v5550
    %5789 = vmatmul.mubr.bf16.gmra.mrb[0].mxu0 %v5549
    %v5790 = vpop.f32.mrb[0].mxu0
    %v5791 = vadd.f32 %v5750, %v5790
    %v5792 = vpop.f32.mrb[0].mxu0
    %v5793 = vadd.f32 %v5752, %v5792
    %v5794 = vpop.f32.mrb[0].mxu0
    %v5795 = vpop.f32.mrb[0].mxu0
    %5796 = vdwg.mxu0
    %5797 = vmatprep.subr.bf16.mxu0 %v2769
    %5798 = vmatpush1.bf16.msra.mxu0 %v2768
    %5799 = vmatprep.subr.bf16.mxu0 %v2777
    %5800 = vmatpush1.bf16.msra.mxu0 %v2776
    %5801 = vmatprep.subr.bf16.mxu0 %v2785
    %5802 = vmatpush1.bf16.msra.mxu0 %v2784
    %5803 = vmatprep.subr.bf16.mxu0 %v2793
    %5804 = vmatpush1.bf16.msra.mxu0 %v2792
    %5805 = vmatprep.subr.bf16.mxu0 %v2801
    %5806 = vmatpush1.bf16.msra.mxu0 %v2800
    %5807 = vmatprep.subr.bf16.mxu0 %v2809
    %5808 = vmatpush1.bf16.msra.mxu0 %v2808
    %5809 = vmatprep.subr.bf16.mxu0 %v2817
    %5810 = vmatpush1.bf16.msra.mxu0 %v2816
    %5811 = vmatprep.subr.bf16.mxu0 %v2825
    %5812 = vmatpush1.bf16.msra.mxu0 %v2824
    %5813 = vmatprep.subr.bf16.mxu0 %v2833
    %5814 = vmatpush1.bf16.msra.mxu0 %v2832
    %5815 = vmatprep.subr.bf16.mxu0 %v2841
    %5816 = vmatpush1.bf16.msra.mxu0 %v2840
    %5817 = vmatprep.subr.bf16.mxu0 %v2849
    %5818 = vmatpush1.bf16.msra.mxu0 %v2848
    %5819 = vmatprep.subr.bf16.mxu0 %v2857
    %5820 = vmatpush1.bf16.msra.mxu0 %v2856
    %5821 = vmatprep.subr.bf16.mxu0 %v2865
    %5822 = vmatpush1.bf16.msra.mxu0 %v2864
    %5823 = vmatprep.subr.bf16.mxu0 %v2873
    %5824 = vmatpush1.bf16.msra.mxu0 %v2872
    %5825 = vmatprep.subr.bf16.mxu0 %v2881
    %5826 = vmatpush1.bf16.msra.mxu0 %v2880
    %5827 = vmatprep.subr.bf16.mxu0 %v2889
    %5828 = vmatpush1.bf16.msra.mxu0 %v2888
    %5829 = vmatprep.mubr.bf16.mxu0 %v5548
    %5830 = vmatmul.mubr.bf16.gmra.mrb[0].mxu0 %v5547
    %v5831 = vpop.f32.mrb[0].mxu0
    %v5832 = vadd.f32 %v629, %v5831
    %v5833 = vpop.f32.mrb[0].mxu0
    %v5834 = vadd.f32 %v633, %v5833
    %v5835 = vpop.f32.mrb[0].mxu0
    %v5836 = vpop.f32.mrb[0].mxu0
    %5837 = vdwg.mxu0
    %5838 = vmatprep.subr.bf16.mxu0 %v2897
    %5839 = vmatpush1.bf16.msra.mxu0 %v2896
    %5840 = vmatprep.subr.bf16.mxu0 %v2905
    %5841 = vmatpush1.bf16.msra.mxu0 %v2904
    %5842 = vmatprep.subr.bf16.mxu0 %v2913
    %5843 = vmatpush1.bf16.msra.mxu0 %v2912
    %5844 = vmatprep.subr.bf16.mxu0 %v2921
    %5845 = vmatpush1.bf16.msra.mxu0 %v2920
    %5846 = vmatprep.subr.bf16.mxu0 %v2929
    %5847 = vmatpush1.bf16.msra.mxu0 %v2928
    %5848 = vmatprep.subr.bf16.mxu0 %v2937
    %5849 = vmatpush1.bf16.msra.mxu0 %v2936
    %5850 = vmatprep.subr.bf16.mxu0 %v2945
    %5851 = vmatpush1.bf16.msra.mxu0 %v2944
    %5852 = vmatprep.subr.bf16.mxu0 %v2953
    %5853 = vmatpush1.bf16.msra.mxu0 %v2952
    %5854 = vmatprep.subr.bf16.mxu0 %v2961
    %5855 = vmatpush1.bf16.msra.mxu0 %v2960
    %5856 = vmatprep.subr.bf16.mxu0 %v2969
    %5857 = vmatpush1.bf16.msra.mxu0 %v2968
    %5858 = vmatprep.subr.bf16.mxu0 %v2977
    %5859 = vmatpush1.bf16.msra.mxu0 %v2976
    %5860 = vmatprep.subr.bf16.mxu0 %v2985
    %5861 = vmatpush1.bf16.msra.mxu0 %v2984
    %5862 = vmatprep.subr.bf16.mxu0 %v2993
    %5863 = vmatpush1.bf16.msra.mxu0 %v2992
    %5864 = vmatprep.subr.bf16.mxu0 %v3001
    %5865 = vmatpush1.bf16.msra.mxu0 %v3000
    %5866 = vmatprep.subr.bf16.mxu0 %v3009
    %5867 = vmatpush1.bf16.msra.mxu0 %v3008
    %5868 = vmatprep.subr.bf16.mxu0 %v3017
    %5869 = vmatpush1.bf16.msra.mxu0 %v3016
    %5870 = vmatprep.mubr.bf16.mxu0 %v5550
    %5871 = vmatmul.mubr.bf16.gmra.mrb[0].mxu0 %v5549
    %v5872 = vpop.f32.mrb[0].mxu0
    %v5873 = vadd.f32 %v5832, %v5872
    %v5874 = vpop.f32.mrb[0].mxu0
    %v5875 = vadd.f32 %v5834, %v5874
    %v5876 = vpop.f32.mrb[0].mxu0
    %v5877 = vpop.f32.mrb[0].mxu0
    %5878 = vdwg.mxu0
    %v5879 = vxor.u32 %v5627, 2147483648
    %v5880 = vxor.u32 %v5629, 2147483648
    %v5881 = vmul.f32 %v5879, 1.442695
    %v5882 = vpow.pop %v5881
    %v5883 = vmul.f32 %v5880, 1.442695
    %v5884 = vpow.pop %v5883
    %v5885 = vadd.f32 %v5882, 1.0
    %v5886 = vadd.f32 %v5884, 1.0
    %v5887 = vrcp.pop %v5885
    %v5888 = vmul.f32 1.0, %v5887
    %v5889 = vrcp.pop %v5886
    %v5890 = vmul.f32 1.0, %v5889
    %v5891 = vxor.u32 %v5709, 2147483648
    %v5892 = vxor.u32 %v5711, 2147483648
    %v5893 = vmul.f32 %v5891, 1.442695
    %v5894 = vpow.pop %v5893
    %v5895 = vmul.f32 %v5892, 1.442695
    %v5896 = vpow.pop %v5895
    %v5897 = vadd.f32 %v5894, 1.0
    %v5898 = vadd.f32 %v5896, 1.0
    %v5899 = vrcp.pop %v5897
    %v5900 = vmul.f32 1.0, %v5899
    %v5901 = vrcp.pop %v5898
    %v5902 = vmul.f32 1.0, %v5901
    %v5903 = vtanh.pop %v5791
    %v5904 = vtanh.pop %v5793
    %v5905 = vxor.u32 %v5873, 2147483648
    %v5906 = vxor.u32 %v5875, 2147483648
    %v5907 = vmul.f32 %v5905, 1.442695
    %v5908 = vpow.pop %v5907
    %v5909 = vmul.f32 %v5906, 1.442695
    %v5910 = vpow.pop %v5909
    %v5911 = vadd.f32 %v5908, 1.0
    %v5912 = vadd.f32 %v5910, 1.0
    %v5913 = vrcp.pop %v5911
    %v5914 = vmul.f32 1.0, %v5913
    %v5915 = vrcp.pop %v5912
    %v5916 = vmul.f32 1.0, %v5915
    %v5917 = vmul.f32 %v5900, %v5162
    %v5918 = vmul.f32 %v5902, %v5163
    %v5919 = vmul.f32 %v5888, %v5903
    %v5920 = vmul.f32 %v5890, %v5904
    %v5921 = vadd.f32 %v5917, %v5919
    %v5922 = vadd.f32 %v5918, %v5920
    %v5923 = vtanh.pop %v5921
    %v5924 = vtanh.pop %v5922
    %v5925 = vmul.f32 %v5914, %v5923
    %v5926 = vmul.f32 %v5916, %v5924
    %s5927 = scalar_lea.vmem [#allocation6], 32
    %v5928 = vld [vmem:[%s5927] sm:$0xff]
    %v5929 = vpack.c.bf16 %v5928, %v5928
    %5930 = vmatprep.subr.bf16.mxu0 %v1231
    %5931 = vmatpush1.bf16.msra.mxu0 %v1230
    %5932 = vmatprep.subr.bf16.mxu0 %v1239
    %5933 = vmatpush1.bf16.msra.mxu0 %v1238
    %5934 = vmatprep.subr.bf16.mxu0 %v1247
    %5935 = vmatpush1.bf16.msra.mxu0 %v1246
    %5936 = vmatprep.subr.bf16.mxu0 %v1255
    %5937 = vmatpush1.bf16.msra.mxu0 %v1254
    %5938 = vmatprep.subr.bf16.mxu0 %v1263
    %5939 = vmatpush1.bf16.msra.mxu0 %v1262
    %5940 = vmatprep.subr.bf16.mxu0 %v1271
    %5941 = vmatpush1.bf16.msra.mxu0 %v1270
    %5942 = vmatprep.subr.bf16.mxu0 %v1279
    %5943 = vmatpush1.bf16.msra.mxu0 %v1278
    %5944 = vmatprep.subr.bf16.mxu0 %v1287
    %5945 = vmatpush1.bf16.msra.mxu0 %v1286
    %5946 = vmatprep.subr.bf16.mxu0 %v1295
    %5947 = vmatpush1.bf16.msra.mxu0 %v1294
    %5948 = vmatprep.subr.bf16.mxu0 %v1303
    %5949 = vmatpush1.bf16.msra.mxu0 %v1302
    %5950 = vmatprep.subr.bf16.mxu0 %v1311
    %5951 = vmatpush1.bf16.msra.mxu0 %v1310
    %5952 = vmatprep.subr.bf16.mxu0 %v1319
    %5953 = vmatpush1.bf16.msra.mxu0 %v1318
    %5954 = vmatprep.subr.bf16.mxu0 %v1327
    %5955 = vmatpush1.bf16.msra.mxu0 %v1326
    %5956 = vmatprep.subr.bf16.mxu0 %v1335
    %5957 = vmatpush1.bf16.msra.mxu0 %v1334
    %5958 = vmatprep.subr.bf16.mxu0 %v1343
    %5959 = vmatpush1.bf16.msra.mxu0 %v1342
    %5960 = vmatprep.subr.bf16.mxu0 %v1351
    %5961 = vmatpush1.bf16.msra.mxu0 %v1350
    %5962 = vmatprep.mubr.bf16.mxu0 %v5547
    %5963 = vmatmul.mubr.bf16.gmra.mrb[0].mxu0 %v5929
    %v5964 = vpop.f32.mrb[0].mxu0
    %v5965 = vadd.f32 %v563, %v5964
    %v5966 = vpop.f32.mrb[0].mxu0
    %v5967 = vadd.f32 %v567, %v5966
    %v5968 = vpop.f32.mrb[0].mxu0
    %v5969 = vpop.f32.mrb[0].mxu0
    %5970 = vdwg.mxu0
    %5971 = vmatprep.subr.bf16.mxu0 %v1359
    %5972 = vmatpush1.bf16.msra.mxu0 %v1358
    %5973 = vmatprep.subr.bf16.mxu0 %v1367
    %5974 = vmatpush1.bf16.msra.mxu0 %v1366
    %5975 = vmatprep.subr.bf16.mxu0 %v1375
    %5976 = vmatpush1.bf16.msra.mxu0 %v1374
    %5977 = vmatprep.subr.bf16.mxu0 %v1383
    %5978 = vmatpush1.bf16.msra.mxu0 %v1382
    %5979 = vmatprep.subr.bf16.mxu0 %v1391
    %5980 = vmatpush1.bf16.msra.mxu0 %v1390
    %5981 = vmatprep.subr.bf16.mxu0 %v1399
    %5982 = vmatpush1.bf16.msra.mxu0 %v1398
    %5983 = vmatprep.subr.bf16.mxu0 %v1407
    %5984 = vmatpush1.bf16.msra.mxu0 %v1406
    %5985 = vmatprep.subr.bf16.mxu0 %v1415
    %5986 = vmatpush1.bf16.msra.mxu0 %v1414
    %5987 = vmatprep.subr.bf16.mxu0 0
    %5988 = vmatpush1.bf16.msra.mxu0 0
    %5989 = vmatprep.subr.bf16.mxu0 0
    %5990 = vmatpush1.bf16.msra.mxu0 0
    %5991 = vmatprep.subr.bf16.mxu0 0
    %5992 = vmatpush1.bf16.msra.mxu0 0
    %5993 = vmatprep.subr.bf16.mxu0 0
    %5994 = vmatpush1.bf16.msra.mxu0 0
    %5995 = vmatprep.subr.bf16.mxu0 0
    %5996 = vmatpush1.bf16.msra.mxu0 0
    %5997 = vmatprep.subr.bf16.mxu0 0
    %5998 = vmatpush1.bf16.msra.mxu0 0
    %5999 = vmatprep.subr.bf16.mxu0 0
    %6000 = vmatpush1.bf16.msra.mxu0 0
    %6001 = vmatprep.subr.bf16.mxu0 0
    %6002 = vmatpush1.bf16.msra.mxu0 0
    %6003 = vmatprep.mubr.bf16.mxu0 0
    %6004 = vmatmul.mubr.bf16.gmra.mrb[0].mxu0 %v5548
    %v6005 = vpop.f32.mrb[0].mxu0
    %v6006 = vadd.f32 %v5965, %v6005
    %v6007 = vpop.f32.mrb[0].mxu0
    %v6008 = vadd.f32 %v5967, %v6007
    %v6009 = vpop.f32.mrb[0].mxu0
    %v6010 = vpop.f32.mrb[0].mxu0
    %6011 = vdwg.mxu0
    %6012 = vmatprep.subr.bf16.mxu0 %v1233
    %6013 = vmatpush1.bf16.msra.mxu0 %v1232
    %6014 = vmatprep.subr.bf16.mxu0 %v1241
    %6015 = vmatpush1.bf16.msra.mxu0 %v1240
    %6016 = vmatprep.subr.bf16.mxu0 %v1249
    %6017 = vmatpush1.bf16.msra.mxu0 %v1248
    %6018 = vmatprep.subr.bf16.mxu0 %v1257
    %6019 = vmatpush1.bf16.msra.mxu0 %v1256
    %6020 = vmatprep.subr.bf16.mxu0 %v1265
    %6021 = vmatpush1.bf16.msra.mxu0 %v1264
    %6022 = vmatprep.subr.bf16.mxu0 %v1273
    %6023 = vmatpush1.bf16.msra.mxu0 %v1272
    %6024 = vmatprep.subr.bf16.mxu0 %v1281
    %6025 = vmatpush1.bf16.msra.mxu0 %v1280
    %6026 = vmatprep.subr.bf16.mxu0 %v1289
    %6027 = vmatpush1.bf16.msra.mxu0 %v1288
    %6028 = vmatprep.subr.bf16.mxu0 %v1297
    %6029 = vmatpush1.bf16.msra.mxu0 %v1296
    %6030 = vmatprep.subr.bf16.mxu0 %v1305
    %6031 = vmatpush1.bf16.msra.mxu0 %v1304
    %6032 = vmatprep.subr.bf16.mxu0 %v1313
    %6033 = vmatpush1.bf16.msra.mxu0 %v1312
    %6034 = vmatprep.subr.bf16.mxu0 %v1321
    %6035 = vmatpush1.bf16.msra.mxu0 %v1320
    %6036 = vmatprep.subr.bf16.mxu0 %v1329
    %6037 = vmatpush1.bf16.msra.mxu0 %v1328
    %6038 = vmatprep.subr.bf16.mxu0 %v1337
    %6039 = vmatpush1.bf16.msra.mxu0 %v1336
    %6040 = vmatprep.subr.bf16.mxu0 %v1345
    %6041 = vmatpush1.bf16.msra.mxu0 %v1344
    %6042 = vmatprep.subr.bf16.mxu0 %v1353
    %6043 = vmatpush1.bf16.msra.mxu0 %v1352
    %6044 = vmatprep.mubr.bf16.mxu0 %v5547
    %6045 = vmatmul.mubr.bf16.gmra.mrb[0].mxu0 %v5929
    %v6046 = vpop.f32.mrb[0].mxu0
    %v6047 = vadd.f32 %v571, %v6046
    %v6048 = vpop.f32.mrb[0].mxu0
    %v6049 = vadd.f32 %v575, %v6048
    %v6050 = vpop.f32.mrb[0].mxu0
    %v6051 = vpop.f32.mrb[0].mxu0
    %6052 = vdwg.mxu0
    %6053 = vmatprep.subr.bf16.mxu0 %v1361
    %6054 = vmatpush1.bf16.msra.mxu0 %v1360
    %6055 = vmatprep.subr.bf16.mxu0 %v1369
    %6056 = vmatpush1.bf16.msra.mxu0 %v1368
    %6057 = vmatprep.subr.bf16.mxu0 %v1377
    %6058 = vmatpush1.bf16.msra.mxu0 %v1376
    %6059 = vmatprep.subr.bf16.mxu0 %v1385
    %6060 = vmatpush1.bf16.msra.mxu0 %v1384
    %6061 = vmatprep.subr.bf16.mxu0 %v1393
    %6062 = vmatpush1.bf16.msra.mxu0 %v1392
    %6063 = vmatprep.subr.bf16.mxu0 %v1401
    %6064 = vmatpush1.bf16.msra.mxu0 %v1400
    %6065 = vmatprep.subr.bf16.mxu0 %v1409
    %6066 = vmatpush1.bf16.msra.mxu0 %v1408
    %6067 = vmatprep.subr.bf16.mxu0 %v1417
    %6068 = vmatpush1.bf16.msra.mxu0 %v1416
    %6069 = vmatprep.subr.bf16.mxu0 0
    %6070 = vmatpush1.bf16.msra.mxu0 0
    %6071 = vmatprep.subr.bf16.mxu0 0
    %6072 = vmatpush1.bf16.msra.mxu0 0
    %6073 = vmatprep.subr.bf16.mxu0 0
    %6074 = vmatpush1.bf16.msra.mxu0 0
    %6075 = vmatprep.subr.bf16.mxu0 0
    %6076 = vmatpush1.bf16.msra.mxu0 0
    %6077 = vmatprep.subr.bf16.mxu0 0
    %6078 = vmatpush1.bf16.msra.mxu0 0
    %6079 = vmatprep.subr.bf16.mxu0 0
    %6080 = vmatpush1.bf16.msra.mxu0 0
    %6081 = vmatprep.subr.bf16.mxu0 0
    %6082 = vmatpush1.bf16.msra.mxu0 0
    %6083 = vmatprep.subr.bf16.mxu0 0
    %6084 = vmatpush1.bf16.msra.mxu0 0
    %6085 = vmatprep.mubr.bf16.mxu0 0
    %6086 = vmatmul.mubr.bf16.gmra.mrb[0].mxu0 %v5548
    %v6087 = vpop.f32.mrb[0].mxu0
    %v6088 = vadd.f32 %v6047, %v6087
    %v6089 = vpop.f32.mrb[0].mxu0
    %v6090 = vadd.f32 %v6049, %v6089
    %v6091 = vpop.f32.mrb[0].mxu0
    %v6092 = vpop.f32.mrb[0].mxu0
    %6093 = vdwg.mxu0
    %6094 = vmatprep.subr.bf16.mxu0 %v1235
    %6095 = vmatpush1.bf16.msra.mxu0 %v1234
    %6096 = vmatprep.subr.bf16.mxu0 %v1243
    %6097 = vmatpush1.bf16.msra.mxu0 %v1242
    %6098 = vmatprep.subr.bf16.mxu0 %v1251
    %6099 = vmatpush1.bf16.msra.mxu0 %v1250
    %6100 = vmatprep.subr.bf16.mxu0 %v1259
    %6101 = vmatpush1.bf16.msra.mxu0 %v1258
    %6102 = vmatprep.subr.bf16.mxu0 %v1267
    %6103 = vmatpush1.bf16.msra.mxu0 %v1266
    %6104 = vmatprep.subr.bf16.mxu0 %v1275
    %6105 = vmatpush1.bf16.msra.mxu0 %v1274
    %6106 = vmatprep.subr.bf16.mxu0 %v1283
    %6107 = vmatpush1.bf16.msra.mxu0 %v1282
    %6108 = vmatprep.subr.bf16.mxu0 %v1291
    %6109 = vmatpush1.bf16.msra.mxu0 %v1290
    %6110 = vmatprep.subr.bf16.mxu0 %v1299
    %6111 = vmatpush1.bf16.msra.mxu0 %v1298
    %6112 = vmatprep.subr.bf16.mxu0 %v1307
    %6113 = vmatpush1.bf16.msra.mxu0 %v1306
    %6114 = vmatprep.subr.bf16.mxu0 %v1315
    %6115 = vmatpush1.bf16.msra.mxu0 %v1314
    %6116 = vmatprep.subr.bf16.mxu0 %v1323
    %6117 = vmatpush1.bf16.msra.mxu0 %v1322
    %6118 = vmatprep.subr.bf16.mxu0 %v1331
    %6119 = vmatpush1.bf16.msra.mxu0 %v1330
    %6120 = vmatprep.subr.bf16.mxu0 %v1339
    %6121 = vmatpush1.bf16.msra.mxu0 %v1338
    %6122 = vmatprep.subr.bf16.mxu0 %v1347
    %6123 = vmatpush1.bf16.msra.mxu0 %v1346
    %6124 = vmatprep.subr.bf16.mxu0 %v1355
    %6125 = vmatpush1.bf16.msra.mxu0 %v1354
    %6126 = vmatprep.mubr.bf16.mxu0 %v5547
    %6127 = vmatmul.mubr.bf16.gmra.mrb[0].mxu0 %v5929
    %v6128 = vpop.f32.mrb[0].mxu0
    %v6129 = vadd.f32 %v579, %v6128
    %v6130 = vpop.f32.mrb[0].mxu0
    %v6131 = vadd.f32 %v583, %v6130
    %v6132 = vpop.f32.mrb[0].mxu0
    %v6133 = vpop.f32.mrb[0].mxu0
    %6134 = vdwg.mxu0
    %6135 = vmatprep.subr.bf16.mxu0 %v1363
    %6136 = vmatpush1.bf16.msra.mxu0 %v1362
    %6137 = vmatprep.subr.bf16.mxu0 %v1371
    %6138 = vmatpush1.bf16.msra.mxu0 %v1370
    %6139 = vmatprep.subr.bf16.mxu0 %v1379
    %6140 = vmatpush1.bf16.msra.mxu0 %v1378
    %6141 = vmatprep.subr.bf16.mxu0 %v1387
    %6142 = vmatpush1.bf16.msra.mxu0 %v1386
    %6143 = vmatprep.subr.bf16.mxu0 %v1395
    %6144 = vmatpush1.bf16.msra.mxu0 %v1394
    %6145 = vmatprep.subr.bf16.mxu0 %v1403
    %6146 = vmatpush1.bf16.msra.mxu0 %v1402
    %6147 = vmatprep.subr.bf16.mxu0 %v1411
    %6148 = vmatpush1.bf16.msra.mxu0 %v1410
    %6149 = vmatprep.subr.bf16.mxu0 %v1419
    %6150 = vmatpush1.bf16.msra.mxu0 %v1418
    %6151 = vmatprep.subr.bf16.mxu0 0
    %6152 = vmatpush1.bf16.msra.mxu0 0
    %6153 = vmatprep.subr.bf16.mxu0 0
    %6154 = vmatpush1.bf16.msra.mxu0 0
    %6155 = vmatprep.subr.bf16.mxu0 0
    %6156 = vmatpush1.bf16.msra.mxu0 0
    %6157 = vmatprep.subr.bf16.mxu0 0
    %6158 = vmatpush1.bf16.msra.mxu0 0
    %6159 = vmatprep.subr.bf16.mxu0 0
    %6160 = vmatpush1.bf16.msra.mxu0 0
    %6161 = vmatprep.subr.bf16.mxu0 0
    %6162 = vmatpush1.bf16.msra.mxu0 0
    %6163 = vmatprep.subr.bf16.mxu0 0
    %6164 = vmatpush1.bf16.msra.mxu0 0
    %6165 = vmatprep.subr.bf16.mxu0 0
    %6166 = vmatpush1.bf16.msra.mxu0 0
    %6167 = vmatprep.mubr.bf16.mxu0 0
    %6168 = vmatmul.mubr.bf16.gmra.mrb[0].mxu0 %v5548
    %v6169 = vpop.f32.mrb[0].mxu0
    %v6170 = vadd.f32 %v6129, %v6169
    %v6171 = vpop.f32.mrb[0].mxu0
    %v6172 = vadd.f32 %v6131, %v6171
    %v6173 = vpop.f32.mrb[0].mxu0
    %v6174 = vpop.f32.mrb[0].mxu0
    %6175 = vdwg.mxu0
    %6176 = vmatprep.subr.bf16.mxu0 %v1237
    %6177 = vmatpush1.bf16.msra.mxu0 %v1236
    %6178 = vmatprep.subr.bf16.mxu0 %v1245
    %6179 = vmatpush1.bf16.msra.mxu0 %v1244
    %6180 = vmatprep.subr.bf16.mxu0 %v1253
    %6181 = vmatpush1.bf16.msra.mxu0 %v1252
    %6182 = vmatprep.subr.bf16.mxu0 %v1261
    %6183 = vmatpush1.bf16.msra.mxu0 %v1260
    %6184 = vmatprep.subr.bf16.mxu0 %v1269
    %6185 = vmatpush1.bf16.msra.mxu0 %v1268
    %6186 = vmatprep.subr.bf16.mxu0 %v1277
    %6187 = vmatpush1.bf16.msra.mxu0 %v1276
    %6188 = vmatprep.subr.bf16.mxu0 %v1285
    %6189 = vmatpush1.bf16.msra.mxu0 %v1284
    %6190 = vmatprep.subr.bf16.mxu0 %v1293
    %6191 = vmatpush1.bf16.msra.mxu0 %v1292
    %6192 = vmatprep.subr.bf16.mxu0 %v1301
    %6193 = vmatpush1.bf16.msra.mxu0 %v1300
    %6194 = vmatprep.subr.bf16.mxu0 %v1309
    %6195 = vmatpush1.bf16.msra.mxu0 %v1308
    %6196 = vmatprep.subr.bf16.mxu0 %v1317
    %6197 = vmatpush1.bf16.msra.mxu0 %v1316
    %6198 = vmatprep.subr.bf16.mxu0 %v1325
    %6199 = vmatpush1.bf16.msra.mxu0 %v1324
    %6200 = vmatprep.subr.bf16.mxu0 %v1333
    %6201 = vmatpush1.bf16.msra.mxu0 %v1332
    %6202 = vmatprep.subr.bf16.mxu0 %v1341
    %6203 = vmatpush1.bf16.msra.mxu0 %v1340
    %6204 = vmatprep.subr.bf16.mxu0 %v1349
    %6205 = vmatpush1.bf16.msra.mxu0 %v1348
    %6206 = vmatprep.subr.bf16.mxu0 %v1357
    %6207 = vmatpush1.bf16.msra.mxu0 %v1356
    %6208 = vmatprep.mubr.bf16.mxu0 %v5547
    %6209 = vmatmul.mubr.bf16.gmra.mrb[0].mxu0 %v5929
    %v6210 = vpop.f32.mrb[0].mxu0
    %v6211 = vadd.f32 %v587, %v6210
    %v6212 = vpop.f32.mrb[0].mxu0
    %v6213 = vadd.f32 %v591, %v6212
    %v6214 = vpop.f32.mrb[0].mxu0
    %v6215 = vpop.f32.mrb[0].mxu0
    %6216 = vdwg.mxu0
    %6217 = vmatprep.subr.bf16.mxu0 %v1365
    %6218 = vmatpush1.bf16.msra.mxu0 %v1364
    %6219 = vmatprep.subr.bf16.mxu0 %v1373
    %6220 = vmatpush1.bf16.msra.mxu0 %v1372
    %6221 = vmatprep.subr.bf16.mxu0 %v1381
    %6222 = vmatpush1.bf16.msra.mxu0 %v1380
    %6223 = vmatprep.subr.bf16.mxu0 %v1389
    %6224 = vmatpush1.bf16.msra.mxu0 %v1388
    %6225 = vmatprep.subr.bf16.mxu0 %v1397
    %6226 = vmatpush1.bf16.msra.mxu0 %v1396
    %6227 = vmatprep.subr.bf16.mxu0 %v1405
    %6228 = vmatpush1.bf16.msra.mxu0 %v1404
    %6229 = vmatprep.subr.bf16.mxu0 %v1413
    %6230 = vmatpush1.bf16.msra.mxu0 %v1412
    %6231 = vmatprep.subr.bf16.mxu0 %v1421
    %6232 = vmatpush1.bf16.msra.mxu0 %v1420
    %6233 = vmatprep.subr.bf16.mxu0 0
    %6234 = vmatpush1.bf16.msra.mxu0 0
    %6235 = vmatprep.subr.bf16.mxu0 0
    %6236 = vmatpush1.bf16.msra.mxu0 0
    %6237 = vmatprep.subr.bf16.mxu0 0
    %6238 = vmatpush1.bf16.msra.mxu0 0
    %6239 = vmatprep.subr.bf16.mxu0 0
    %6240 = vmatpush1.bf16.msra.mxu0 0
    %6241 = vmatprep.subr.bf16.mxu0 0
    %6242 = vmatpush1.bf16.msra.mxu0 0
    %6243 = vmatprep.subr.bf16.mxu0 0
    %6244 = vmatpush1.bf16.msra.mxu0 0
    %6245 = vmatprep.subr.bf16.mxu0 0
    %6246 = vmatpush1.bf16.msra.mxu0 0
    %6247 = vmatprep.subr.bf16.mxu0 0
    %6248 = vmatpush1.bf16.msra.mxu0 0
    %6249 = vmatprep.mubr.bf16.mxu0 0
    %6250 = vmatmul.mubr.bf16.gmra.mrb[0].mxu0 %v5548
    %v6251 = vpop.f32.mrb[0].mxu0
    %v6252 = vadd.f32 %v6211, %v6251
    %v6253 = vpop.f32.mrb[0].mxu0
    %v6254 = vadd.f32 %v6213, %v6253
    %v6255 = vpop.f32.mrb[0].mxu0
    %v6256 = vpop.f32.mrb[0].mxu0
    %6257 = vdwg.mxu0
    %v6258 = vxor.u32 %v6006, 2147483648
    %v6259 = vxor.u32 %v6008, 2147483648
    %v6260 = vmul.f32 %v6258, 1.442695
    %v6261 = vpow.pop %v6260
    %v6262 = vmul.f32 %v6259, 1.442695
    %v6263 = vpow.pop %v6262
    %v6264 = vadd.f32 %v6261, 1.0
    %v6265 = vadd.f32 %v6263, 1.0
    %v6266 = vrcp.pop %v6264
    %v6267 = vmul.f32 1.0, %v6266
    %v6268 = vrcp.pop %v6265
    %v6269 = vmul.f32 1.0, %v6268
    %v6270 = vxor.u32 %v6088, 2147483648
    %v6271 = vxor.u32 %v6090, 2147483648
    %v6272 = vmul.f32 %v6270, 1.442695
    %v6273 = vpow.pop %v6272
    %v6274 = vmul.f32 %v6271, 1.442695
    %v6275 = vpow.pop %v6274
    %v6276 = vadd.f32 %v6273, 1.0
    %v6277 = vadd.f32 %v6275, 1.0
    %v6278 = vrcp.pop %v6276
    %v6279 = vmul.f32 1.0, %v6278
    %v6280 = vrcp.pop %v6277
    %v6281 = vmul.f32 1.0, %v6280
    %v6282 = vtanh.pop %v6170
    %v6283 = vtanh.pop %v6172
    %v6284 = vxor.u32 %v6252, 2147483648
    %v6285 = vxor.u32 %v6254, 2147483648
    %v6286 = vmul.f32 %v6284, 1.442695
    %v6287 = vpow.pop %v6286
    %v6288 = vmul.f32 %v6285, 1.442695
    %v6289 = vpow.pop %v6288
    %v6290 = vadd.f32 %v6287, 1.0
    %v6291 = vadd.f32 %v6289, 1.0
    %v6292 = vrcp.pop %v6290
    %v6293 = vmul.f32 1.0, %v6292
    %v6294 = vrcp.pop %v6291
    %v6295 = vmul.f32 1.0, %v6294
    %v6296 = vmul.f32 %v6279, %v5541
    %v6297 = vmul.f32 %v6281, %v5542
    %v6298 = vmul.f32 %v6267, %v6282
    %v6299 = vmul.f32 %v6269, %v6283
    %v6300 = vadd.f32 %v6296, %v6298
    %v6301 = vadd.f32 %v6297, %v6299
    %v6302 = vtanh.pop %v6300
    %v6303 = vtanh.pop %v6301
    %v6304 = vmul.f32 %v6293, %v6302
    %v6305 = vmul.f32 %v6295, %v6303
    %v6306 = vpack.c.bf16 %v6304, %v6304
    %v6307 = vpack.c.bf16 %v6305, %v6305
    %v6308 = vpack.c.bf16 %v5925, %v5925
    %v6309 = vpack.c.bf16 %v5926, %v5926
    %6310 = vmatprep.subr.bf16.mxu0 %v2763
    %6311 = vmatpush1.bf16.msra.mxu0 %v2762
    %6312 = vmatprep.subr.bf16.mxu0 %v2771
    %6313 = vmatpush1.bf16.msra.mxu0 %v2770
    %6314 = vmatprep.subr.bf16.mxu0 %v2779
    %6315 = vmatpush1.bf16.msra.mxu0 %v2778
    %6316 = vmatprep.subr.bf16.mxu0 %v2787
    %6317 = vmatpush1.bf16.msra.mxu0 %v2786
    %6318 = vmatprep.subr.bf16.mxu0 %v2795
    %6319 = vmatpush1.bf16.msra.mxu0 %v2794
    %6320 = vmatprep.subr.bf16.mxu0 %v2803
    %6321 = vmatpush1.bf16.msra.mxu0 %v2802
    %6322 = vmatprep.subr.bf16.mxu0 %v2811
    %6323 = vmatpush1.bf16.msra.mxu0 %v2810
    %6324 = vmatprep.subr.bf16.mxu0 %v2819
    %6325 = vmatpush1.bf16.msra.mxu0 %v2818
    %6326 = vmatprep.subr.bf16.mxu0 %v2827
    %6327 = vmatpush1.bf16.msra.mxu0 %v2826
    %6328 = vmatprep.subr.bf16.mxu0 %v2835
    %6329 = vmatpush1.bf16.msra.mxu0 %v2834
    %6330 = vmatprep.subr.bf16.mxu0 %v2843
    %6331 = vmatpush1.bf16.msra.mxu0 %v2842
    %6332 = vmatprep.subr.bf16.mxu0 %v2851
    %6333 = vmatpush1.bf16.msra.mxu0 %v2850
    %6334 = vmatprep.subr.bf16.mxu0 %v2859
    %6335 = vmatpush1.bf16.msra.mxu0 %v2858
    %6336 = vmatprep.subr.bf16.mxu0 %v2867
    %6337 = vmatpush1.bf16.msra.mxu0 %v2866
    %6338 = vmatprep.subr.bf16.mxu0 %v2875
    %6339 = vmatpush1.bf16.msra.mxu0 %v2874
    %6340 = vmatprep.subr.bf16.mxu0 %v2883
    %6341 = vmatpush1.bf16.msra.mxu0 %v2882
    %6342 = vmatprep.mubr.bf16.mxu0 %v6307
    %6343 = vmatmul.mubr.bf16.gmra.mrb[0].mxu0 %v6306
    %v6344 = vpop.f32.mrb[0].mxu0
    %v6345 = vadd.f32 %v605, %v6344
    %v6346 = vpop.f32.mrb[0].mxu0
    %v6347 = vadd.f32 %v609, %v6346
    %v6348 = vpop.f32.mrb[0].mxu0
    %v6349 = vpop.f32.mrb[0].mxu0
    %6350 = vdwg.mxu0
    %6351 = vmatprep.subr.bf16.mxu0 %v2891
    %6352 = vmatpush1.bf16.msra.mxu0 %v2890
    %6353 = vmatprep.subr.bf16.mxu0 %v2899
    %6354 = vmatpush1.bf16.msra.mxu0 %v2898
    %6355 = vmatprep.subr.bf16.mxu0 %v2907
    %6356 = vmatpush1.bf16.msra.mxu0 %v2906
    %6357 = vmatprep.subr.bf16.mxu0 %v2915
    %6358 = vmatpush1.bf16.msra.mxu0 %v2914
    %6359 = vmatprep.subr.bf16.mxu0 %v2923
    %6360 = vmatpush1.bf16.msra.mxu0 %v2922
    %6361 = vmatprep.subr.bf16.mxu0 %v2931
    %6362 = vmatpush1.bf16.msra.mxu0 %v2930
    %6363 = vmatprep.subr.bf16.mxu0 %v2939
    %6364 = vmatpush1.bf16.msra.mxu0 %v2938
    %6365 = vmatprep.subr.bf16.mxu0 %v2947
    %6366 = vmatpush1.bf16.msra.mxu0 %v2946
    %6367 = vmatprep.subr.bf16.mxu0 %v2955
    %6368 = vmatpush1.bf16.msra.mxu0 %v2954
    %6369 = vmatprep.subr.bf16.mxu0 %v2963
    %6370 = vmatpush1.bf16.msra.mxu0 %v2962
    %6371 = vmatprep.subr.bf16.mxu0 %v2971
    %6372 = vmatpush1.bf16.msra.mxu0 %v2970
    %6373 = vmatprep.subr.bf16.mxu0 %v2979
    %6374 = vmatpush1.bf16.msra.mxu0 %v2978
    %6375 = vmatprep.subr.bf16.mxu0 %v2987
    %6376 = vmatpush1.bf16.msra.mxu0 %v2986
    %6377 = vmatprep.subr.bf16.mxu0 %v2995
    %6378 = vmatpush1.bf16.msra.mxu0 %v2994
    %6379 = vmatprep.subr.bf16.mxu0 %v3003
    %6380 = vmatpush1.bf16.msra.mxu0 %v3002
    %6381 = vmatprep.subr.bf16.mxu0 %v3011
    %6382 = vmatpush1.bf16.msra.mxu0 %v3010
    %6383 = vmatprep.mubr.bf16.mxu0 %v6309
    %6384 = vmatmul.mubr.bf16.gmra.mrb[0].mxu0 %v6308
    %v6385 = vpop.f32.mrb[0].mxu0
    %v6386 = vadd.f32 %v6345, %v6385
    %v6387 = vpop.f32.mrb[0].mxu0
    %v6388 = vadd.f32 %v6347, %v6387
    %v6389 = vpop.f32.mrb[0].mxu0
    %v6390 = vpop.f32.mrb[0].mxu0
    %6391 = vdwg.mxu0
    %6392 = vmatprep.subr.bf16.mxu0 %v2765
    %6393 = vmatpush1.bf16.msra.mxu0 %v2764
    %6394 = vmatprep.subr.bf16.mxu0 %v2773
    %6395 = vmatpush1.bf16.msra.mxu0 %v2772
    %6396 = vmatprep.subr.bf16.mxu0 %v2781
    %6397 = vmatpush1.bf16.msra.mxu0 %v2780
    %6398 = vmatprep.subr.bf16.mxu0 %v2789
    %6399 = vmatpush1.bf16.msra.mxu0 %v2788
    %6400 = vmatprep.subr.bf16.mxu0 %v2797
    %6401 = vmatpush1.bf16.msra.mxu0 %v2796
    %6402 = vmatprep.subr.bf16.mxu0 %v2805
    %6403 = vmatpush1.bf16.msra.mxu0 %v2804
    %6404 = vmatprep.subr.bf16.mxu0 %v2813
    %6405 = vmatpush1.bf16.msra.mxu0 %v2812
    %6406 = vmatprep.subr.bf16.mxu0 %v2821
    %6407 = vmatpush1.bf16.msra.mxu0 %v2820
    %6408 = vmatprep.subr.bf16.mxu0 %v2829
    %6409 = vmatpush1.bf16.msra.mxu0 %v2828
    %6410 = vmatprep.subr.bf16.mxu0 %v2837
    %6411 = vmatpush1.bf16.msra.mxu0 %v2836
    %6412 = vmatprep.subr.bf16.mxu0 %v2845
    %6413 = vmatpush1.bf16.msra.mxu0 %v2844
    %6414 = vmatprep.subr.bf16.mxu0 %v2853
    %6415 = vmatpush1.bf16.msra.mxu0 %v2852
    %6416 = vmatprep.subr.bf16.mxu0 %v2861
    %6417 = vmatpush1.bf16.msra.mxu0 %v2860
    %6418 = vmatprep.subr.bf16.mxu0 %v2869
    %6419 = vmatpush1.bf16.msra.mxu0 %v2868
    %6420 = vmatprep.subr.bf16.mxu0 %v2877
    %6421 = vmatpush1.bf16.msra.mxu0 %v2876
    %6422 = vmatprep.subr.bf16.mxu0 %v2885
    %6423 = vmatpush1.bf16.msra.mxu0 %v2884
    %6424 = vmatprep.mubr.bf16.mxu0 %v6307
    %6425 = vmatmul.mubr.bf16.gmra.mrb[0].mxu0 %v6306
    %v6426 = vpop.f32.mrb[0].mxu0
    %v6427 = vadd.f32 %v613, %v6426
    %v6428 = vpop.f32.mrb[0].mxu0
    %v6429 = vadd.f32 %v617, %v6428
    %v6430 = vpop.f32.mrb[0].mxu0
    %v6431 = vpop.f32.mrb[0].mxu0
    %6432 = vdwg.mxu0
    %6433 = vmatprep.subr.bf16.mxu0 %v2893
    %6434 = vmatpush1.bf16.msra.mxu0 %v2892
    %6435 = vmatprep.subr.bf16.mxu0 %v2901
    %6436 = vmatpush1.bf16.msra.mxu0 %v2900
    %6437 = vmatprep.subr.bf16.mxu0 %v2909
    %6438 = vmatpush1.bf16.msra.mxu0 %v2908
    %6439 = vmatprep.subr.bf16.mxu0 %v2917
    %6440 = vmatpush1.bf16.msra.mxu0 %v2916
    %6441 = vmatprep.subr.bf16.mxu0 %v2925
    %6442 = vmatpush1.bf16.msra.mxu0 %v2924
    %6443 = vmatprep.subr.bf16.mxu0 %v2933
    %6444 = vmatpush1.bf16.msra.mxu0 %v2932
    %6445 = vmatprep.subr.bf16.mxu0 %v2941
    %6446 = vmatpush1.bf16.msra.mxu0 %v2940
    %6447 = vmatprep.subr.bf16.mxu0 %v2949
    %6448 = vmatpush1.bf16.msra.mxu0 %v2948
    %6449 = vmatprep.subr.bf16.mxu0 %v2957
    %6450 = vmatpush1.bf16.msra.mxu0 %v2956
    %6451 = vmatprep.subr.bf16.mxu0 %v2965
    %6452 = vmatpush1.bf16.msra.mxu0 %v2964
    %6453 = vmatprep.subr.bf16.mxu0 %v2973
    %6454 = vmatpush1.bf16.msra.mxu0 %v2972
    %6455 = vmatprep.subr.bf16.mxu0 %v2981
    %6456 = vmatpush1.bf16.msra.mxu0 %v2980
    %6457 = vmatprep.subr.bf16.mxu0 %v2989
    %6458 = vmatpush1.bf16.msra.mxu0 %v2988
    %6459 = vmatprep.subr.bf16.mxu0 %v2997
    %6460 = vmatpush1.bf16.msra.mxu0 %v2996
    %6461 = vmatprep.subr.bf16.mxu0 %v3005
    %6462 = vmatpush1.bf16.msra.mxu0 %v3004
    %6463 = vmatprep.subr.bf16.mxu0 %v3013
    %6464 = vmatpush1.bf16.msra.mxu0 %v3012
    %6465 = vmatprep.mubr.bf16.mxu0 %v6309
    %6466 = vmatmul.mubr.bf16.gmra.mrb[0].mxu0 %v6308
    %v6467 = vpop.f32.mrb[0].mxu0
    %v6468 = vadd.f32 %v6427, %v6467
    %v6469 = vpop.f32.mrb[0].mxu0
    %v6470 = vadd.f32 %v6429, %v6469
    %v6471 = vpop.f32.mrb[0].mxu0
    %v6472 = vpop.f32.mrb[0].mxu0
    %6473 = vdwg.mxu0
    %6474 = vmatprep.subr.bf16.mxu0 %v2767
    %6475 = vmatpush1.bf16.msra.mxu0 %v2766
    %6476 = vmatprep.subr.bf16.mxu0 %v2775
    %6477 = vmatpush1.bf16.msra.mxu0 %v2774
    %6478 = vmatprep.subr.bf16.mxu0 %v2783
    %6479 = vmatpush1.bf16.msra.mxu0 %v2782
    %6480 = vmatprep.subr.bf16.mxu0 %v2791
    %6481 = vmatpush1.bf16.msra.mxu0 %v2790
    %6482 = vmatprep.subr.bf16.mxu0 %v2799
    %6483 = vmatpush1.bf16.msra.mxu0 %v2798
    %6484 = vmatprep.subr.bf16.mxu0 %v2807
    %6485 = vmatpush1.bf16.msra.mxu0 %v2806
    %6486 = vmatprep.subr.bf16.mxu0 %v2815
    %6487 = vmatpush1.bf16.msra.mxu0 %v2814
    %6488 = vmatprep.subr.bf16.mxu0 %v2823
    %6489 = vmatpush1.bf16.msra.mxu0 %v2822
    %6490 = vmatprep.subr.bf16.mxu0 %v2831
    %6491 = vmatpush1.bf16.msra.mxu0 %v2830
    %6492 = vmatprep.subr.bf16.mxu0 %v2839
    %6493 = vmatpush1.bf16.msra.mxu0 %v2838
    %6494 = vmatprep.subr.bf16.mxu0 %v2847
    %6495 = vmatpush1.bf16.msra.mxu0 %v2846
    %6496 = vmatprep.subr.bf16.mxu0 %v2855
    %6497 = vmatpush1.bf16.msra.mxu0 %v2854
    %6498 = vmatprep.subr.bf16.mxu0 %v2863
    %6499 = vmatpush1.bf16.msra.mxu0 %v2862
    %6500 = vmatprep.subr.bf16.mxu0 %v2871
    %6501 = vmatpush1.bf16.msra.mxu0 %v2870
    %6502 = vmatprep.subr.bf16.mxu0 %v2879
    %6503 = vmatpush1.bf16.msra.mxu0 %v2878
    %6504 = vmatprep.subr.bf16.mxu0 %v2887
    %6505 = vmatpush1.bf16.msra.mxu0 %v2886
    %6506 = vmatprep.mubr.bf16.mxu0 %v6307
    %6507 = vmatmul.mubr.bf16.gmra.mrb[0].mxu0 %v6306
    %v6508 = vpop.f32.mrb[0].mxu0
    %v6509 = vadd.f32 %v621, %v6508
    %v6510 = vpop.f32.mrb[0].mxu0
    %v6511 = vadd.f32 %v625, %v6510
    %v6512 = vpop.f32.mrb[0].mxu0
    %v6513 = vpop.f32.mrb[0].mxu0
    %6514 = vdwg.mxu0
    %6515 = vmatprep.subr.bf16.mxu0 %v2895
    %6516 = vmatpush1.bf16.msra.mxu0 %v2894
    %6517 = vmatprep.subr.bf16.mxu0 %v2903
    %6518 = vmatpush1.bf16.msra.mxu0 %v2902
    %6519 = vmatprep.subr.bf16.mxu0 %v2911
    %6520 = vmatpush1.bf16.msra.mxu0 %v2910
    %6521 = vmatprep.subr.bf16.mxu0 %v2919
    %6522 = vmatpush1.bf16.msra.mxu0 %v2918
    %6523 = vmatprep.subr.bf16.mxu0 %v2927
    %6524 = vmatpush1.bf16.msra.mxu0 %v2926
    %6525 = vmatprep.subr.bf16.mxu0 %v2935
    %6526 = vmatpush1.bf16.msra.mxu0 %v2934
    %6527 = vmatprep.subr.bf16.mxu0 %v2943
    %6528 = vmatpush1.bf16.msra.mxu0 %v2942
    %6529 = vmatprep.subr.bf16.mxu0 %v2951
    %6530 = vmatpush1.bf16.msra.mxu0 %v2950
    %6531 = vmatprep.subr.bf16.mxu0 %v2959
    %6532 = vmatpush1.bf16.msra.mxu0 %v2958
    %6533 = vmatprep.subr.bf16.mxu0 %v2967
    %6534 = vmatpush1.bf16.msra.mxu0 %v2966
    %6535 = vmatprep.subr.bf16.mxu0 %v2975
    %6536 = vmatpush1.bf16.msra.mxu0 %v2974
    %6537 = vmatprep.subr.bf16.mxu0 %v2983
    %6538 = vmatpush1.bf16.msra.mxu0 %v2982
    %6539 = vmatprep.subr.bf16.mxu0 %v2991
    %6540 = vmatpush1.bf16.msra.mxu0 %v2990
    %6541 = vmatprep.subr.bf16.mxu0 %v2999
    %6542 = vmatpush1.bf16.msra.mxu0 %v2998
    %6543 = vmatprep.subr.bf16.mxu0 %v3007
    %6544 = vmatpush1.bf16.msra.mxu0 %v3006
    %6545 = vmatprep.subr.bf16.mxu0 %v3015
    %6546 = vmatpush1.bf16.msra.mxu0 %v3014
    %6547 = vmatprep.mubr.bf16.mxu0 %v6309
    %6548 = vmatmul.mubr.bf16.gmra.mrb[0].mxu0 %v6308
    %v6549 = vpop.f32.mrb[0].mxu0
    %v6550 = vadd.f32 %v6509, %v6549
    %v6551 = vpop.f32.mrb[0].mxu0
    %v6552 = vadd.f32 %v6511, %v6551
    %v6553 = vpop.f32.mrb[0].mxu0
    %v6554 = vpop.f32.mrb[0].mxu0
    %6555 = vdwg.mxu0
    %6556 = vmatprep.subr.bf16.mxu0 %v2769
    %6557 = vmatpush1.bf16.msra.mxu0 %v2768
    %6558 = vmatprep.subr.bf16.mxu0 %v2777
    %6559 = vmatpush1.bf16.msra.mxu0 %v2776
    %6560 = vmatprep.subr.bf16.mxu0 %v2785
    %6561 = vmatpush1.bf16.msra.mxu0 %v2784
    %6562 = vmatprep.subr.bf16.mxu0 %v2793
    %6563 = vmatpush1.bf16.msra.mxu0 %v2792
    %6564 = vmatprep.subr.bf16.mxu0 %v2801
    %6565 = vmatpush1.bf16.msra.mxu0 %v2800
    %6566 = vmatprep.subr.bf16.mxu0 %v2809
    %6567 = vmatpush1.bf16.msra.mxu0 %v2808
    %6568 = vmatprep.subr.bf16.mxu0 %v2817
    %6569 = vmatpush1.bf16.msra.mxu0 %v2816
    %6570 = vmatprep.subr.bf16.mxu0 %v2825
    %6571 = vmatpush1.bf16.msra.mxu0 %v2824
    %6572 = vmatprep.subr.bf16.mxu0 %v2833
    %6573 = vmatpush1.bf16.msra.mxu0 %v2832
    %6574 = vmatprep.subr.bf16.mxu0 %v2841
    %6575 = vmatpush1.bf16.msra.mxu0 %v2840
    %6576 = vmatprep.subr.bf16.mxu0 %v2849
    %6577 = vmatpush1.bf16.msra.mxu0 %v2848
    %6578 = vmatprep.subr.bf16.mxu0 %v2857
    %6579 = vmatpush1.bf16.msra.mxu0 %v2856
    %6580 = vmatprep.subr.bf16.mxu0 %v2865
    %6581 = vmatpush1.bf16.msra.mxu0 %v2864
    %6582 = vmatprep.subr.bf16.mxu0 %v2873
    %6583 = vmatpush1.bf16.msra.mxu0 %v2872
    %6584 = vmatprep.subr.bf16.mxu0 %v2881
    %6585 = vmatpush1.bf16.msra.mxu0 %v2880
    %6586 = vmatprep.subr.bf16.mxu0 %v2889
    %6587 = vmatpush1.bf16.msra.mxu0 %v2888
    %6588 = vmatprep.mubr.bf16.mxu0 %v6307
    %6589 = vmatmul.mubr.bf16.gmra.mrb[0].mxu0 %v6306
    %v6590 = vpop.f32.mrb[0].mxu0
    %v6591 = vadd.f32 %v629, %v6590
    %v6592 = vpop.f32.mrb[0].mxu0
    %v6593 = vadd.f32 %v633, %v6592
    %v6594 = vpop.f32.mrb[0].mxu0
    %v6595 = vpop.f32.mrb[0].mxu0
    %6596 = vdwg.mxu0
    %6597 = vmatprep.subr.bf16.mxu0 %v2897
    %6598 = vmatpush1.bf16.msra.mxu0 %v2896
    %6599 = vmatprep.subr.bf16.mxu0 %v2905
    %6600 = vmatpush1.bf16.msra.mxu0 %v2904
    %6601 = vmatprep.subr.bf16.mxu0 %v2913
    %6602 = vmatpush1.bf16.msra.mxu0 %v2912
    %6603 = vmatprep.subr.bf16.mxu0 %v2921
    %6604 = vmatpush1.bf16.msra.mxu0 %v2920
    %6605 = vmatprep.subr.bf16.mxu0 %v2929
    %6606 = vmatpush1.bf16.msra.mxu0 %v2928
    %6607 = vmatprep.subr.bf16.mxu0 %v2937
    %6608 = vmatpush1.bf16.msra.mxu0 %v2936
    %6609 = vmatprep.subr.bf16.mxu0 %v2945
    %6610 = vmatpush1.bf16.msra.mxu0 %v2944
    %6611 = vmatprep.subr.bf16.mxu0 %v2953
    %6612 = vmatpush1.bf16.msra.mxu0 %v2952
    %6613 = vmatprep.subr.bf16.mxu0 %v2961
    %6614 = vmatpush1.bf16.msra.mxu0 %v2960
    %6615 = vmatprep.subr.bf16.mxu0 %v2969
    %6616 = vmatpush1.bf16.msra.mxu0 %v2968
    %6617 = vmatprep.subr.bf16.mxu0 %v2977
    %6618 = vmatpush1.bf16.msra.mxu0 %v2976
    %6619 = vmatprep.subr.bf16.mxu0 %v2985
    %6620 = vmatpush1.bf16.msra.mxu0 %v2984
    %6621 = vmatprep.subr.bf16.mxu0 %v2993
    %6622 = vmatpush1.bf16.msra.mxu0 %v2992
    %6623 = vmatprep.subr.bf16.mxu0 %v3001
    %6624 = vmatpush1.bf16.msra.mxu0 %v3000
    %6625 = vmatprep.subr.bf16.mxu0 %v3009
    %6626 = vmatpush1.bf16.msra.mxu0 %v3008
    %6627 = vmatprep.subr.bf16.mxu0 %v3017
    %6628 = vmatpush1.bf16.msra.mxu0 %v3016
    %6629 = vmatprep.mubr.bf16.mxu0 %v6309
    %6630 = vmatmul.mubr.bf16.gmra.mrb[0].mxu0 %v6308
    %v6631 = vpop.f32.mrb[0].mxu0
    %v6632 = vadd.f32 %v6591, %v6631
    %v6633 = vpop.f32.mrb[0].mxu0
    %v6634 = vadd.f32 %v6593, %v6633
    %v6635 = vpop.f32.mrb[0].mxu0
    %v6636 = vpop.f32.mrb[0].mxu0
    %6637 = vdwg.mxu0
    %v6638 = vxor.u32 %v6386, 2147483648
    %v6639 = vxor.u32 %v6388, 2147483648
    %v6640 = vmul.f32 %v6638, 1.442695
    %v6641 = vpow.pop %v6640
    %v6642 = vmul.f32 %v6639, 1.442695
    %v6643 = vpow.pop %v6642
    %v6644 = vadd.f32 %v6641, 1.0
    %v6645 = vadd.f32 %v6643, 1.0
    %v6646 = vrcp.pop %v6644
    %v6647 = vmul.f32 1.0, %v6646
    %v6648 = vrcp.pop %v6645
    %v6649 = vmul.f32 1.0, %v6648
    %v6650 = vxor.u32 %v6468, 2147483648
    %v6651 = vxor.u32 %v6470, 2147483648
    %v6652 = vmul.f32 %v6650, 1.442695
    %v6653 = vpow.pop %v6652
    %v6654 = vmul.f32 %v6651, 1.442695
    %v6655 = vpow.pop %v6654
    %v6656 = vadd.f32 %v6653, 1.0
    %v6657 = vadd.f32 %v6655, 1.0
    %v6658 = vrcp.pop %v6656
    %v6659 = vmul.f32 1.0, %v6658
    %v6660 = vrcp.pop %v6657
    %v6661 = vmul.f32 1.0, %v6660
    %v6662 = vtanh.pop %v6550
    %v6663 = vtanh.pop %v6552
    %v6664 = vxor.u32 %v6632, 2147483648
    %v6665 = vxor.u32 %v6634, 2147483648
    %v6666 = vmul.f32 %v6664, 1.442695
    %v6667 = vpow.pop %v6666
    %v6668 = vmul.f32 %v6665, 1.442695
    %v6669 = vpow.pop %v6668
    %v6670 = vadd.f32 %v6667, 1.0
    %v6671 = vadd.f32 %v6669, 1.0
    %v6672 = vrcp.pop %v6670
    %v6673 = vmul.f32 1.0, %v6672
    %v6674 = vrcp.pop %v6671
    %v6675 = vmul.f32 1.0, %v6674
    %v6676 = vmul.f32 %v6659, %v5921
    %v6677 = vmul.f32 %v6661, %v5922
    %v6678 = vmul.f32 %v6647, %v6662
    %v6679 = vmul.f32 %v6649, %v6663
    %v6680 = vadd.f32 %v6676, %v6678
    %v6681 = vadd.f32 %v6677, %v6679
    %v6682 = vtanh.pop %v6680
    %v6683 = vtanh.pop %v6681
    %v6684 = vmul.f32 %v6673, %v6682
    %v6685 = vmul.f32 %v6675, %v6683
    %s6686 = scalar_lea.vmem [#allocation6], 40
    %v6687 = vld [vmem:[%s6686] sm:$0xff]
    %v6688 = vpack.c.bf16 %v6687, %v6687
    %6689 = vmatprep.subr.bf16.mxu0 %v1231
    %6690 = vmatpush1.bf16.msra.mxu0 %v1230
    %6691 = vmatprep.subr.bf16.mxu0 %v1239
    %6692 = vmatpush1.bf16.msra.mxu0 %v1238
    %6693 = vmatprep.subr.bf16.mxu0 %v1247
    %6694 = vmatpush1.bf16.msra.mxu0 %v1246
    %6695 = vmatprep.subr.bf16.mxu0 %v1255
    %6696 = vmatpush1.bf16.msra.mxu0 %v1254
    %6697 = vmatprep.subr.bf16.mxu0 %v1263
    %6698 = vmatpush1.bf16.msra.mxu0 %v1262
    %6699 = vmatprep.subr.bf16.mxu0 %v1271
    %6700 = vmatpush1.bf16.msra.mxu0 %v1270
    %6701 = vmatprep.subr.bf16.mxu0 %v1279
    %6702 = vmatpush1.bf16.msra.mxu0 %v1278
    %6703 = vmatprep.subr.bf16.mxu0 %v1287
    %6704 = vmatpush1.bf16.msra.mxu0 %v1286
    %6705 = vmatprep.subr.bf16.mxu0 %v1295
    %6706 = vmatpush1.bf16.msra.mxu0 %v1294
    %6707 = vmatprep.subr.bf16.mxu0 %v1303
    %6708 = vmatpush1.bf16.msra.mxu0 %v1302
    %6709 = vmatprep.subr.bf16.mxu0 %v1311
    %6710 = vmatpush1.bf16.msra.mxu0 %v1310
    %6711 = vmatprep.subr.bf16.mxu0 %v1319
    %6712 = vmatpush1.bf16.msra.mxu0 %v1318
    %6713 = vmatprep.subr.bf16.mxu0 %v1327
    %6714 = vmatpush1.bf16.msra.mxu0 %v1326
    %6715 = vmatprep.subr.bf16.mxu0 %v1335
    %6716 = vmatpush1.bf16.msra.mxu0 %v1334
    %6717 = vmatprep.subr.bf16.mxu0 %v1343
    %6718 = vmatpush1.bf16.msra.mxu0 %v1342
    %6719 = vmatprep.subr.bf16.mxu0 %v1351
    %6720 = vmatpush1.bf16.msra.mxu0 %v1350
    %6721 = vmatprep.mubr.bf16.mxu0 %v6306
    %6722 = vmatmul.mubr.bf16.gmra.mrb[0].mxu0 %v6688
    %v6723 = vpop.f32.mrb[0].mxu0
    %v6724 = vadd.f32 %v563, %v6723
    %v6725 = vpop.f32.mrb[0].mxu0
    %v6726 = vadd.f32 %v567, %v6725
    %v6727 = vpop.f32.mrb[0].mxu0
    %v6728 = vpop.f32.mrb[0].mxu0
    %6729 = vdwg.mxu0
    %6730 = vmatprep.subr.bf16.mxu0 %v1359
    %6731 = vmatpush1.bf16.msra.mxu0 %v1358
    %6732 = vmatprep.subr.bf16.mxu0 %v1367
    %6733 = vmatpush1.bf16.msra.mxu0 %v1366
    %6734 = vmatprep.subr.bf16.mxu0 %v1375
    %6735 = vmatpush1.bf16.msra.mxu0 %v1374
    %6736 = vmatprep.subr.bf16.mxu0 %v1383
    %6737 = vmatpush1.bf16.msra.mxu0 %v1382
    %6738 = vmatprep.subr.bf16.mxu0 %v1391
    %6739 = vmatpush1.bf16.msra.mxu0 %v1390
    %6740 = vmatprep.subr.bf16.mxu0 %v1399
    %6741 = vmatpush1.bf16.msra.mxu0 %v1398
    %6742 = vmatprep.subr.bf16.mxu0 %v1407
    %6743 = vmatpush1.bf16.msra.mxu0 %v1406
    %6744 = vmatprep.subr.bf16.mxu0 %v1415
    %6745 = vmatpush1.bf16.msra.mxu0 %v1414
    %6746 = vmatprep.subr.bf16.mxu0 0
    %6747 = vmatpush1.bf16.msra.mxu0 0
    %6748 = vmatprep.subr.bf16.mxu0 0
    %6749 = vmatpush1.bf16.msra.mxu0 0
    %6750 = vmatprep.subr.bf16.mxu0 0
    %6751 = vmatpush1.bf16.msra.mxu0 0
    %6752 = vmatprep.subr.bf16.mxu0 0
    %6753 = vmatpush1.bf16.msra.mxu0 0
    %6754 = vmatprep.subr.bf16.mxu0 0
    %6755 = vmatpush1.bf16.msra.mxu0 0
    %6756 = vmatprep.subr.bf16.mxu0 0
    %6757 = vmatpush1.bf16.msra.mxu0 0
    %6758 = vmatprep.subr.bf16.mxu0 0
    %6759 = vmatpush1.bf16.msra.mxu0 0
    %6760 = vmatprep.subr.bf16.mxu0 0
    %6761 = vmatpush1.bf16.msra.mxu0 0
    %6762 = vmatprep.mubr.bf16.mxu0 0
    %6763 = vmatmul.mubr.bf16.gmra.mrb[0].mxu0 %v6307
    %v6764 = vpop.f32.mrb[0].mxu0
    %v6765 = vadd.f32 %v6724, %v6764
    %v6766 = vpop.f32.mrb[0].mxu0
    %v6767 = vadd.f32 %v6726, %v6766
    %v6768 = vpop.f32.mrb[0].mxu0
    %v6769 = vpop.f32.mrb[0].mxu0
    %6770 = vdwg.mxu0
    %6771 = vmatprep.subr.bf16.mxu0 %v1233
    %6772 = vmatpush1.bf16.msra.mxu0 %v1232
    %6773 = vmatprep.subr.bf16.mxu0 %v1241
    %6774 = vmatpush1.bf16.msra.mxu0 %v1240
    %6775 = vmatprep.subr.bf16.mxu0 %v1249
    %6776 = vmatpush1.bf16.msra.mxu0 %v1248
    %6777 = vmatprep.subr.bf16.mxu0 %v1257
    %6778 = vmatpush1.bf16.msra.mxu0 %v1256
    %6779 = vmatprep.subr.bf16.mxu0 %v1265
    %6780 = vmatpush1.bf16.msra.mxu0 %v1264
    %6781 = vmatprep.subr.bf16.mxu0 %v1273
    %6782 = vmatpush1.bf16.msra.mxu0 %v1272
    %6783 = vmatprep.subr.bf16.mxu0 %v1281
    %6784 = vmatpush1.bf16.msra.mxu0 %v1280
    %6785 = vmatprep.subr.bf16.mxu0 %v1289
    %6786 = vmatpush1.bf16.msra.mxu0 %v1288
    %6787 = vmatprep.subr.bf16.mxu0 %v1297
    %6788 = vmatpush1.bf16.msra.mxu0 %v1296
    %6789 = vmatprep.subr.bf16.mxu0 %v1305
    %6790 = vmatpush1.bf16.msra.mxu0 %v1304
    %6791 = vmatprep.subr.bf16.mxu0 %v1313
    %6792 = vmatpush1.bf16.msra.mxu0 %v1312
    %6793 = vmatprep.subr.bf16.mxu0 %v1321
    %6794 = vmatpush1.bf16.msra.mxu0 %v1320
    %6795 = vmatprep.subr.bf16.mxu0 %v1329
    %6796 = vmatpush1.bf16.msra.mxu0 %v1328
    %6797 = vmatprep.subr.bf16.mxu0 %v1337
    %6798 = vmatpush1.bf16.msra.mxu0 %v1336
    %6799 = vmatprep.subr.bf16.mxu0 %v1345
    %6800 = vmatpush1.bf16.msra.mxu0 %v1344
    %6801 = vmatprep.subr.bf16.mxu0 %v1353
    %6802 = vmatpush1.bf16.msra.mxu0 %v1352
    %6803 = vmatprep.mubr.bf16.mxu0 %v6306
    %6804 = vmatmul.mubr.bf16.gmra.mrb[0].mxu0 %v6688
    %v6805 = vpop.f32.mrb[0].mxu0
    %v6806 = vadd.f32 %v571, %v6805
    %v6807 = vpop.f32.mrb[0].mxu0
    %v6808 = vadd.f32 %v575, %v6807
    %v6809 = vpop.f32.mrb[0].mxu0
    %v6810 = vpop.f32.mrb[0].mxu0
    %6811 = vdwg.mxu0
    %6812 = vmatprep.subr.bf16.mxu0 %v1361
    %6813 = vmatpush1.bf16.msra.mxu0 %v1360
    %6814 = vmatprep.subr.bf16.mxu0 %v1369
    %6815 = vmatpush1.bf16.msra.mxu0 %v1368
    %6816 = vmatprep.subr.bf16.mxu0 %v1377
    %6817 = vmatpush1.bf16.msra.mxu0 %v1376
    %6818 = vmatprep.subr.bf16.mxu0 %v1385
    %6819 = vmatpush1.bf16.msra.mxu0 %v1384
    %6820 = vmatprep.subr.bf16.mxu0 %v1393
    %6821 = vmatpush1.bf16.msra.mxu0 %v1392
    %6822 = vmatprep.subr.bf16.mxu0 %v1401
    %6823 = vmatpush1.bf16.msra.mxu0 %v1400
    %6824 = vmatprep.subr.bf16.mxu0 %v1409
    %6825 = vmatpush1.bf16.msra.mxu0 %v1408
    %6826 = vmatprep.subr.bf16.mxu0 %v1417
    %6827 = vmatpush1.bf16.msra.mxu0 %v1416
    %6828 = vmatprep.subr.bf16.mxu0 0
    %6829 = vmatpush1.bf16.msra.mxu0 0
    %6830 = vmatprep.subr.bf16.mxu0 0
    %6831 = vmatpush1.bf16.msra.mxu0 0
    %6832 = vmatprep.subr.bf16.mxu0 0
    %6833 = vmatpush1.bf16.msra.mxu0 0
    %6834 = vmatprep.subr.bf16.mxu0 0
    %6835 = vmatpush1.bf16.msra.mxu0 0
    %6836 = vmatprep.subr.bf16.mxu0 0
    %6837 = vmatpush1.bf16.msra.mxu0 0
    %6838 = vmatprep.subr.bf16.mxu0 0
    %6839 = vmatpush1.bf16.msra.mxu0 0
    %6840 = vmatprep.subr.bf16.mxu0 0
    %6841 = vmatpush1.bf16.msra.mxu0 0
    %6842 = vmatprep.subr.bf16.mxu0 0
    %6843 = vmatpush1.bf16.msra.mxu0 0
    %6844 = vmatprep.mubr.bf16.mxu0 0
    %6845 = vmatmul.mubr.bf16.gmra.mrb[0].mxu0 %v6307
    %v6846 = vpop.f32.mrb[0].mxu0
    %v6847 = vadd.f32 %v6806, %v6846
    %v6848 = vpop.f32.mrb[0].mxu0
    %v6849 = vadd.f32 %v6808, %v6848
    %v6850 = vpop.f32.mrb[0].mxu0
    %v6851 = vpop.f32.mrb[0].mxu0
    %6852 = vdwg.mxu0
    %6853 = vmatprep.subr.bf16.mxu0 %v1235
    %6854 = vmatpush1.bf16.msra.mxu0 %v1234
    %6855 = vmatprep.subr.bf16.mxu0 %v1243
    %6856 = vmatpush1.bf16.msra.mxu0 %v1242
    %6857 = vmatprep.subr.bf16.mxu0 %v1251
    %6858 = vmatpush1.bf16.msra.mxu0 %v1250
    %6859 = vmatprep.subr.bf16.mxu0 %v1259
    %6860 = vmatpush1.bf16.msra.mxu0 %v1258
    %6861 = vmatprep.subr.bf16.mxu0 %v1267
    %6862 = vmatpush1.bf16.msra.mxu0 %v1266
    %6863 = vmatprep.subr.bf16.mxu0 %v1275
    %6864 = vmatpush1.bf16.msra.mxu0 %v1274
    %6865 = vmatprep.subr.bf16.mxu0 %v1283
    %6866 = vmatpush1.bf16.msra.mxu0 %v1282
    %6867 = vmatprep.subr.bf16.mxu0 %v1291
    %6868 = vmatpush1.bf16.msra.mxu0 %v1290
    %6869 = vmatprep.subr.bf16.mxu0 %v1299
    %6870 = vmatpush1.bf16.msra.mxu0 %v1298
    %6871 = vmatprep.subr.bf16.mxu0 %v1307
    %6872 = vmatpush1.bf16.msra.mxu0 %v1306
    %6873 = vmatprep.subr.bf16.mxu0 %v1315
    %6874 = vmatpush1.bf16.msra.mxu0 %v1314
    %6875 = vmatprep.subr.bf16.mxu0 %v1323
    %6876 = vmatpush1.bf16.msra.mxu0 %v1322
    %6877 = vmatprep.subr.bf16.mxu0 %v1331
    %6878 = vmatpush1.bf16.msra.mxu0 %v1330
    %6879 = vmatprep.subr.bf16.mxu0 %v1339
    %6880 = vmatpush1.bf16.msra.mxu0 %v1338
    %6881 = vmatprep.subr.bf16.mxu0 %v1347
    %6882 = vmatpush1.bf16.msra.mxu0 %v1346
    %6883 = vmatprep.subr.bf16.mxu0 %v1355
    %6884 = vmatpush1.bf16.msra.mxu0 %v1354
    %6885 = vmatprep.mubr.bf16.mxu0 %v6306
    %6886 = vmatmul.mubr.bf16.gmra.mrb[0].mxu0 %v6688
    %v6887 = vpop.f32.mrb[0].mxu0
    %v6888 = vadd.f32 %v579, %v6887
    %v6889 = vpop.f32.mrb[0].mxu0
    %v6890 = vadd.f32 %v583, %v6889
    %v6891 = vpop.f32.mrb[0].mxu0
    %v6892 = vpop.f32.mrb[0].mxu0
    %6893 = vdwg.mxu0
    %6894 = vmatprep.subr.bf16.mxu0 %v1363
    %6895 = vmatpush1.bf16.msra.mxu0 %v1362
    %6896 = vmatprep.subr.bf16.mxu0 %v1371
    %6897 = vmatpush1.bf16.msra.mxu0 %v1370
    %6898 = vmatprep.subr.bf16.mxu0 %v1379
    %6899 = vmatpush1.bf16.msra.mxu0 %v1378
    %6900 = vmatprep.subr.bf16.mxu0 %v1387
    %6901 = vmatpush1.bf16.msra.mxu0 %v1386
    %6902 = vmatprep.subr.bf16.mxu0 %v1395
    %6903 = vmatpush1.bf16.msra.mxu0 %v1394
    %6904 = vmatprep.subr.bf16.mxu0 %v1403
    %6905 = vmatpush1.bf16.msra.mxu0 %v1402
    %6906 = vmatprep.subr.bf16.mxu0 %v1411
    %6907 = vmatpush1.bf16.msra.mxu0 %v1410
    %6908 = vmatprep.subr.bf16.mxu0 %v1419
    %6909 = vmatpush1.bf16.msra.mxu0 %v1418
    %6910 = vmatprep.subr.bf16.mxu0 0
    %6911 = vmatpush1.bf16.msra.mxu0 0
    %6912 = vmatprep.subr.bf16.mxu0 0
    %6913 = vmatpush1.bf16.msra.mxu0 0
    %6914 = vmatprep.subr.bf16.mxu0 0
    %6915 = vmatpush1.bf16.msra.mxu0 0
    %6916 = vmatprep.subr.bf16.mxu0 0
    %6917 = vmatpush1.bf16.msra.mxu0 0
    %6918 = vmatprep.subr.bf16.mxu0 0
    %6919 = vmatpush1.bf16.msra.mxu0 0
    %6920 = vmatprep.subr.bf16.mxu0 0
    %6921 = vmatpush1.bf16.msra.mxu0 0
    %6922 = vmatprep.subr.bf16.mxu0 0
    %6923 = vmatpush1.bf16.msra.mxu0 0
    %6924 = vmatprep.subr.bf16.mxu0 0
    %6925 = vmatpush1.bf16.msra.mxu0 0
    %6926 = vmatprep.mubr.bf16.mxu0 0
    %6927 = vmatmul.mubr.bf16.gmra.mrb[0].mxu0 %v6307
    %v6928 = vpop.f32.mrb[0].mxu0
    %v6929 = vadd.f32 %v6888, %v6928
    %v6930 = vpop.f32.mrb[0].mxu0
    %v6931 = vadd.f32 %v6890, %v6930
    %v6932 = vpop.f32.mrb[0].mxu0
    %v6933 = vpop.f32.mrb[0].mxu0
    %6934 = vdwg.mxu0
    %6935 = vmatprep.subr.bf16.mxu0 %v1237
    %6936 = vmatpush1.bf16.msra.mxu0 %v1236
    %6937 = vmatprep.subr.bf16.mxu0 %v1245
    %6938 = vmatpush1.bf16.msra.mxu0 %v1244
    %6939 = vmatprep.subr.bf16.mxu0 %v1253
    %6940 = vmatpush1.bf16.msra.mxu0 %v1252
    %6941 = vmatprep.subr.bf16.mxu0 %v1261
    %6942 = vmatpush1.bf16.msra.mxu0 %v1260
    %6943 = vmatprep.subr.bf16.mxu0 %v1269
    %6944 = vmatpush1.bf16.msra.mxu0 %v1268
    %6945 = vmatprep.subr.bf16.mxu0 %v1277
    %6946 = vmatpush1.bf16.msra.mxu0 %v1276
    %6947 = vmatprep.subr.bf16.mxu0 %v1285
    %6948 = vmatpush1.bf16.msra.mxu0 %v1284
    %6949 = vmatprep.subr.bf16.mxu0 %v1293
    %6950 = vmatpush1.bf16.msra.mxu0 %v1292
    %6951 = vmatprep.subr.bf16.mxu0 %v1301
    %6952 = vmatpush1.bf16.msra.mxu0 %v1300
    %6953 = vmatprep.subr.bf16.mxu0 %v1309
    %6954 = vmatpush1.bf16.msra.mxu0 %v1308
    %6955 = vmatprep.subr.bf16.mxu0 %v1317
    %6956 = vmatpush1.bf16.msra.mxu0 %v1316
    %6957 = vmatprep.subr.bf16.mxu0 %v1325
    %6958 = vmatpush1.bf16.msra.mxu0 %v1324
    %6959 = vmatprep.subr.bf16.mxu0 %v1333
    %6960 = vmatpush1.bf16.msra.mxu0 %v1332
    %6961 = vmatprep.subr.bf16.mxu0 %v1341
    %6962 = vmatpush1.bf16.msra.mxu0 %v1340
    %6963 = vmatprep.subr.bf16.mxu0 %v1349
    %6964 = vmatpush1.bf16.msra.mxu0 %v1348
    %6965 = vmatprep.subr.bf16.mxu0 %v1357
    %6966 = vmatpush1.bf16.msra.mxu0 %v1356
    %6967 = vmatprep.mubr.bf16.mxu0 %v6306
    %6968 = vmatmul.mubr.bf16.gmra.mrb[0].mxu0 %v6688
    %v6969 = vpop.f32.mrb[0].mxu0
    %v6970 = vadd.f32 %v587, %v6969
    %v6971 = vpop.f32.mrb[0].mxu0
    %v6972 = vadd.f32 %v591, %v6971
    %v6973 = vpop.f32.mrb[0].mxu0
    %v6974 = vpop.f32.mrb[0].mxu0
    %6975 = vdwg.mxu0
    %6976 = vmatprep.subr.bf16.mxu0 %v1365
    %6977 = vmatpush1.bf16.msra.mxu0 %v1364
    %6978 = vmatprep.subr.bf16.mxu0 %v1373
    %6979 = vmatpush1.bf16.msra.mxu0 %v1372
    %6980 = vmatprep.subr.bf16.mxu0 %v1381
    %6981 = vmatpush1.bf16.msra.mxu0 %v1380
    %6982 = vmatprep.subr.bf16.mxu0 %v1389
    %6983 = vmatpush1.bf16.msra.mxu0 %v1388
    %6984 = vmatprep.subr.bf16.mxu0 %v1397
    %6985 = vmatpush1.bf16.msra.mxu0 %v1396
    %6986 = vmatprep.subr.bf16.mxu0 %v1405
    %6987 = vmatpush1.bf16.msra.mxu0 %v1404
    %6988 = vmatprep.subr.bf16.mxu0 %v1413
    %6989 = vmatpush1.bf16.msra.mxu0 %v1412
    %6990 = vmatprep.subr.bf16.mxu0 %v1421
    %6991 = vmatpush1.bf16.msra.mxu0 %v1420
    %6992 = vmatprep.subr.bf16.mxu0 0
    %6993 = vmatpush1.bf16.msra.mxu0 0
    %6994 = vmatprep.subr.bf16.mxu0 0
    %6995 = vmatpush1.bf16.msra.mxu0 0
    %6996 = vmatprep.subr.bf16.mxu0 0
    %6997 = vmatpush1.bf16.msra.mxu0 0
    %6998 = vmatprep.subr.bf16.mxu0 0
    %6999 = vmatpush1.bf16.msra.mxu0 0
    %7000 = vmatprep.subr.bf16.mxu0 0
    %7001 = vmatpush1.bf16.msra.mxu0 0
    %7002 = vmatprep.subr.bf16.mxu0 0
    %7003 = vmatpush1.bf16.msra.mxu0 0
    %7004 = vmatprep.subr.bf16.mxu0 0
    %7005 = vmatpush1.bf16.msra.mxu0 0
    %7006 = vmatprep.subr.bf16.mxu0 0
    %7007 = vmatpush1.bf16.msra.mxu0 0
    %7008 = vmatprep.mubr.bf16.mxu0 0
    %7009 = vmatmul.mubr.bf16.gmra.mrb[0].mxu0 %v6307
    %v7010 = vpop.f32.mrb[0].mxu0
    %v7011 = vadd.f32 %v6970, %v7010
    %v7012 = vpop.f32.mrb[0].mxu0
    %v7013 = vadd.f32 %v6972, %v7012
    %v7014 = vpop.f32.mrb[0].mxu0
    %v7015 = vpop.f32.mrb[0].mxu0
    %7016 = vdwg.mxu0
    %v7017 = vxor.u32 %v6765, 2147483648
    %v7018 = vxor.u32 %v6767, 2147483648
    %v7019 = vmul.f32 %v7017, 1.442695
    %v7020 = vpow.pop %v7019
    %v7021 = vmul.f32 %v7018, 1.442695
    %v7022 = vpow.pop %v7021
    %v7023 = vadd.f32 %v7020, 1.0
    %v7024 = vadd.f32 %v7022, 1.0
    %v7025 = vrcp.pop %v7023
    %v7026 = vmul.f32 1.0, %v7025
    %v7027 = vrcp.pop %v7024
    %v7028 = vmul.f32 1.0, %v7027
    %v7029 = vxor.u32 %v6847, 2147483648
    %v7030 = vxor.u32 %v6849, 2147483648
    %v7031 = vmul.f32 %v7029, 1.442695
    %v7032 = vpow.pop %v7031
    %v7033 = vmul.f32 %v7030, 1.442695
    %v7034 = vpow.pop %v7033
    %v7035 = vadd.f32 %v7032, 1.0
    %v7036 = vadd.f32 %v7034, 1.0
    %v7037 = vrcp.pop %v7035
    %v7038 = vmul.f32 1.0, %v7037
    %v7039 = vrcp.pop %v7036
    %v7040 = vmul.f32 1.0, %v7039
    %v7041 = vtanh.pop %v6929
    %v7042 = vtanh.pop %v6931
    %v7043 = vxor.u32 %v7011, 2147483648
    %v7044 = vxor.u32 %v7013, 2147483648
    %v7045 = vmul.f32 %v7043, 1.442695
    %v7046 = vpow.pop %v7045
    %v7047 = vmul.f32 %v7044, 1.442695
    %v7048 = vpow.pop %v7047
    %v7049 = vadd.f32 %v7046, 1.0
    %v7050 = vadd.f32 %v7048, 1.0
    %v7051 = vrcp.pop %v7049
    %v7052 = vmul.f32 1.0, %v7051
    %v7053 = vrcp.pop %v7050
    %v7054 = vmul.f32 1.0, %v7053
    %v7055 = vmul.f32 %v7038, %v6300
    %v7056 = vmul.f32 %v7040, %v6301
    %v7057 = vmul.f32 %v7026, %v7041
    %v7058 = vmul.f32 %v7028, %v7042
    %v7059 = vadd.f32 %v7055, %v7057
    %v7060 = vadd.f32 %v7056, %v7058
    %v7061 = vtanh.pop %v7059
    %v7062 = vtanh.pop %v7060
    %v7063 = vmul.f32 %v7052, %v7061
    %v7064 = vmul.f32 %v7054, %v7062
    %v7065 = vpack.c.bf16 %v7063, %v7063
    %v7066 = vpack.c.bf16 %v7064, %v7064
    %v7067 = vpack.c.bf16 %v6684, %v6684
    %v7068 = vpack.c.bf16 %v6685, %v6685
    %7069 = vmatprep.subr.bf16.mxu0 %v2763
    %7070 = vmatpush1.bf16.msra.mxu0 %v2762
    %7071 = vmatprep.subr.bf16.mxu0 %v2771
    %7072 = vmatpush1.bf16.msra.mxu0 %v2770
    %7073 = vmatprep.subr.bf16.mxu0 %v2779
    %7074 = vmatpush1.bf16.msra.mxu0 %v2778
    %7075 = vmatprep.subr.bf16.mxu0 %v2787
    %7076 = vmatpush1.bf16.msra.mxu0 %v2786
    %7077 = vmatprep.subr.bf16.mxu0 %v2795
    %7078 = vmatpush1.bf16.msra.mxu0 %v2794
    %7079 = vmatprep.subr.bf16.mxu0 %v2803
    %7080 = vmatpush1.bf16.msra.mxu0 %v2802
    %7081 = vmatprep.subr.bf16.mxu0 %v2811
    %7082 = vmatpush1.bf16.msra.mxu0 %v2810
    %7083 = vmatprep.subr.bf16.mxu0 %v2819
    %7084 = vmatpush1.bf16.msra.mxu0 %v2818
    %7085 = vmatprep.subr.bf16.mxu0 %v2827
    %7086 = vmatpush1.bf16.msra.mxu0 %v2826
    %7087 = vmatprep.subr.bf16.mxu0 %v2835
    %7088 = vmatpush1.bf16.msra.mxu0 %v2834
    %7089 = vmatprep.subr.bf16.mxu0 %v2843
    %7090 = vmatpush1.bf16.msra.mxu0 %v2842
    %7091 = vmatprep.subr.bf16.mxu0 %v2851
    %7092 = vmatpush1.bf16.msra.mxu0 %v2850
    %7093 = vmatprep.subr.bf16.mxu0 %v2859
    %7094 = vmatpush1.bf16.msra.mxu0 %v2858
    %7095 = vmatprep.subr.bf16.mxu0 %v2867
    %7096 = vmatpush1.bf16.msra.mxu0 %v2866
    %7097 = vmatprep.subr.bf16.mxu0 %v2875
    %7098 = vmatpush1.bf16.msra.mxu0 %v2874
    %7099 = vmatprep.subr.bf16.mxu0 %v2883
    %7100 = vmatpush1.bf16.msra.mxu0 %v2882
    %7101 = vmatprep.mubr.bf16.mxu0 %v7066
    %7102 = vmatmul.mubr.bf16.gmra.mrb[0].mxu0 %v7065
    %v7103 = vpop.f32.mrb[0].mxu0
    %v7104 = vadd.f32 %v605, %v7103
    %v7105 = vpop.f32.mrb[0].mxu0
    %v7106 = vadd.f32 %v609, %v7105
    %v7107 = vpop.f32.mrb[0].mxu0
    %v7108 = vpop.f32.mrb[0].mxu0
    %7109 = vdwg.mxu0
    %7110 = vmatprep.subr.bf16.mxu0 %v2891
    %7111 = vmatpush1.bf16.msra.mxu0 %v2890
    %7112 = vmatprep.subr.bf16.mxu0 %v2899
    %7113 = vmatpush1.bf16.msra.mxu0 %v2898
    %7114 = vmatprep.subr.bf16.mxu0 %v2907
    %7115 = vmatpush1.bf16.msra.mxu0 %v2906
    %7116 = vmatprep.subr.bf16.mxu0 %v2915
    %7117 = vmatpush1.bf16.msra.mxu0 %v2914
    %7118 = vmatprep.subr.bf16.mxu0 %v2923
    %7119 = vmatpush1.bf16.msra.mxu0 %v2922
    %7120 = vmatprep.subr.bf16.mxu0 %v2931
    %7121 = vmatpush1.bf16.msra.mxu0 %v2930
    %7122 = vmatprep.subr.bf16.mxu0 %v2939
    %7123 = vmatpush1.bf16.msra.mxu0 %v2938
    %7124 = vmatprep.subr.bf16.mxu0 %v2947
    %7125 = vmatpush1.bf16.msra.mxu0 %v2946
    %7126 = vmatprep.subr.bf16.mxu0 %v2955
    %7127 = vmatpush1.bf16.msra.mxu0 %v2954
    %7128 = vmatprep.subr.bf16.mxu0 %v2963
    %7129 = vmatpush1.bf16.msra.mxu0 %v2962
    %7130 = vmatprep.subr.bf16.mxu0 %v2971
    %7131 = vmatpush1.bf16.msra.mxu0 %v2970
    %7132 = vmatprep.subr.bf16.mxu0 %v2979
    %7133 = vmatpush1.bf16.msra.mxu0 %v2978
    %7134 = vmatprep.subr.bf16.mxu0 %v2987
    %7135 = vmatpush1.bf16.msra.mxu0 %v2986
    %7136 = vmatprep.subr.bf16.mxu0 %v2995
    %7137 = vmatpush1.bf16.msra.mxu0 %v2994
    %7138 = vmatprep.subr.bf16.mxu0 %v3003
    %7139 = vmatpush1.bf16.msra.mxu0 %v3002
    %7140 = vmatprep.subr.bf16.mxu0 %v3011
    %7141 = vmatpush1.bf16.msra.mxu0 %v3010
    %7142 = vmatprep.mubr.bf16.mxu0 %v7068
    %7143 = vmatmul.mubr.bf16.gmra.mrb[0].mxu0 %v7067
    %v7144 = vpop.f32.mrb[0].mxu0
    %v7145 = vadd.f32 %v7104, %v7144
    %v7146 = vpop.f32.mrb[0].mxu0
    %v7147 = vadd.f32 %v7106, %v7146
    %v7148 = vpop.f32.mrb[0].mxu0
    %v7149 = vpop.f32.mrb[0].mxu0
    %7150 = vdwg.mxu0
    %7151 = vmatprep.subr.bf16.mxu0 %v2765
    %7152 = vmatpush1.bf16.msra.mxu0 %v2764
    %7153 = vmatprep.subr.bf16.mxu0 %v2773
    %7154 = vmatpush1.bf16.msra.mxu0 %v2772
    %7155 = vmatprep.subr.bf16.mxu0 %v2781
    %7156 = vmatpush1.bf16.msra.mxu0 %v2780
    %7157 = vmatprep.subr.bf16.mxu0 %v2789
    %7158 = vmatpush1.bf16.msra.mxu0 %v2788
    %7159 = vmatprep.subr.bf16.mxu0 %v2797
    %7160 = vmatpush1.bf16.msra.mxu0 %v2796
    %7161 = vmatprep.subr.bf16.mxu0 %v2805
    %7162 = vmatpush1.bf16.msra.mxu0 %v2804
    %7163 = vmatprep.subr.bf16.mxu0 %v2813
    %7164 = vmatpush1.bf16.msra.mxu0 %v2812
    %7165 = vmatprep.subr.bf16.mxu0 %v2821
    %7166 = vmatpush1.bf16.msra.mxu0 %v2820
    %7167 = vmatprep.subr.bf16.mxu0 %v2829
    %7168 = vmatpush1.bf16.msra.mxu0 %v2828
    %7169 = vmatprep.subr.bf16.mxu0 %v2837
    %7170 = vmatpush1.bf16.msra.mxu0 %v2836
    %7171 = vmatprep.subr.bf16.mxu0 %v2845
    %7172 = vmatpush1.bf16.msra.mxu0 %v2844
    %7173 = vmatprep.subr.bf16.mxu0 %v2853
    %7174 = vmatpush1.bf16.msra.mxu0 %v2852
    %7175 = vmatprep.subr.bf16.mxu0 %v2861
    %7176 = vmatpush1.bf16.msra.mxu0 %v2860
    %7177 = vmatprep.subr.bf16.mxu0 %v2869
    %7178 = vmatpush1.bf16.msra.mxu0 %v2868
    %7179 = vmatprep.subr.bf16.mxu0 %v2877
    %7180 = vmatpush1.bf16.msra.mxu0 %v2876
    %7181 = vmatprep.subr.bf16.mxu0 %v2885
    %7182 = vmatpush1.bf16.msra.mxu0 %v2884
    %7183 = vmatprep.mubr.bf16.mxu0 %v7066
    %7184 = vmatmul.mubr.bf16.gmra.mrb[0].mxu0 %v7065
    %v7185 = vpop.f32.mrb[0].mxu0
    %v7186 = vadd.f32 %v613, %v7185
    %v7187 = vpop.f32.mrb[0].mxu0
    %v7188 = vadd.f32 %v617, %v7187
    %v7189 = vpop.f32.mrb[0].mxu0
    %v7190 = vpop.f32.mrb[0].mxu0
    %7191 = vdwg.mxu0
    %7192 = vmatprep.subr.bf16.mxu0 %v2893
    %7193 = vmatpush1.bf16.msra.mxu0 %v2892
    %7194 = vmatprep.subr.bf16.mxu0 %v2901
    %7195 = vmatpush1.bf16.msra.mxu0 %v2900
    %7196 = vmatprep.subr.bf16.mxu0 %v2909
    %7197 = vmatpush1.bf16.msra.mxu0 %v2908
    %7198 = vmatprep.subr.bf16.mxu0 %v2917
    %7199 = vmatpush1.bf16.msra.mxu0 %v2916
    %7200 = vmatprep.subr.bf16.mxu0 %v2925
    %7201 = vmatpush1.bf16.msra.mxu0 %v2924
    %7202 = vmatprep.subr.bf16.mxu0 %v2933
    %7203 = vmatpush1.bf16.msra.mxu0 %v2932
    %7204 = vmatprep.subr.bf16.mxu0 %v2941
    %7205 = vmatpush1.bf16.msra.mxu0 %v2940
    %7206 = vmatprep.subr.bf16.mxu0 %v2949
    %7207 = vmatpush1.bf16.msra.mxu0 %v2948
    %7208 = vmatprep.subr.bf16.mxu0 %v2957
    %7209 = vmatpush1.bf16.msra.mxu0 %v2956
    %7210 = vmatprep.subr.bf16.mxu0 %v2965
    %7211 = vmatpush1.bf16.msra.mxu0 %v2964
    %7212 = vmatprep.subr.bf16.mxu0 %v2973
    %7213 = vmatpush1.bf16.msra.mxu0 %v2972
    %7214 = vmatprep.subr.bf16.mxu0 %v2981
    %7215 = vmatpush1.bf16.msra.mxu0 %v2980
    %7216 = vmatprep.subr.bf16.mxu0 %v2989
    %7217 = vmatpush1.bf16.msra.mxu0 %v2988
    %7218 = vmatprep.subr.bf16.mxu0 %v2997
    %7219 = vmatpush1.bf16.msra.mxu0 %v2996
    %7220 = vmatprep.subr.bf16.mxu0 %v3005
    %7221 = vmatpush1.bf16.msra.mxu0 %v3004
    %7222 = vmatprep.subr.bf16.mxu0 %v3013
    %7223 = vmatpush1.bf16.msra.mxu0 %v3012
    %7224 = vmatprep.mubr.bf16.mxu0 %v7068
    %7225 = vmatmul.mubr.bf16.gmra.mrb[0].mxu0 %v7067
    %v7226 = vpop.f32.mrb[0].mxu0
    %v7227 = vadd.f32 %v7186, %v7226
    %v7228 = vpop.f32.mrb[0].mxu0
    %v7229 = vadd.f32 %v7188, %v7228
    %v7230 = vpop.f32.mrb[0].mxu0
    %v7231 = vpop.f32.mrb[0].mxu0
    %7232 = vdwg.mxu0
    %7233 = vmatprep.subr.bf16.mxu0 %v2767
    %7234 = vmatpush1.bf16.msra.mxu0 %v2766
    %7235 = vmatprep.subr.bf16.mxu0 %v2775
    %7236 = vmatpush1.bf16.msra.mxu0 %v2774
    %7237 = vmatprep.subr.bf16.mxu0 %v2783
    %7238 = vmatpush1.bf16.msra.mxu0 %v2782
    %7239 = vmatprep.subr.bf16.mxu0 %v2791
    %7240 = vmatpush1.bf16.msra.mxu0 %v2790
    %7241 = vmatprep.subr.bf16.mxu0 %v2799
    %7242 = vmatpush1.bf16.msra.mxu0 %v2798
    %7243 = vmatprep.subr.bf16.mxu0 %v2807
    %7244 = vmatpush1.bf16.msra.mxu0 %v2806
    %7245 = vmatprep.subr.bf16.mxu0 %v2815
    %7246 = vmatpush1.bf16.msra.mxu0 %v2814
    %7247 = vmatprep.subr.bf16.mxu0 %v2823
    %7248 = vmatpush1.bf16.msra.mxu0 %v2822
    %7249 = vmatprep.subr.bf16.mxu0 %v2831
    %7250 = vmatpush1.bf16.msra.mxu0 %v2830
    %7251 = vmatprep.subr.bf16.mxu0 %v2839
    %7252 = vmatpush1.bf16.msra.mxu0 %v2838
    %7253 = vmatprep.subr.bf16.mxu0 %v2847
    %7254 = vmatpush1.bf16.msra.mxu0 %v2846
    %7255 = vmatprep.subr.bf16.mxu0 %v2855
    %7256 = vmatpush1.bf16.msra.mxu0 %v2854
    %7257 = vmatprep.subr.bf16.mxu0 %v2863
    %7258 = vmatpush1.bf16.msra.mxu0 %v2862
    %7259 = vmatprep.subr.bf16.mxu0 %v2871
    %7260 = vmatpush1.bf16.msra.mxu0 %v2870
    %7261 = vmatprep.subr.bf16.mxu0 %v2879
    %7262 = vmatpush1.bf16.msra.mxu0 %v2878
    %7263 = vmatprep.subr.bf16.mxu0 %v2887
    %7264 = vmatpush1.bf16.msra.mxu0 %v2886
    %7265 = vmatprep.mubr.bf16.mxu0 %v7066
    %7266 = vmatmul.mubr.bf16.gmra.mrb[0].mxu0 %v7065
    %v7267 = vpop.f32.mrb[0].mxu0
    %v7268 = vadd.f32 %v621, %v7267
    %v7269 = vpop.f32.mrb[0].mxu0
    %v7270 = vadd.f32 %v625, %v7269
    %v7271 = vpop.f32.mrb[0].mxu0
    %v7272 = vpop.f32.mrb[0].mxu0
    %7273 = vdwg.mxu0
    %7274 = vmatprep.subr.bf16.mxu0 %v2895
    %7275 = vmatpush1.bf16.msra.mxu0 %v2894
    %7276 = vmatprep.subr.bf16.mxu0 %v2903
    %7277 = vmatpush1.bf16.msra.mxu0 %v2902
    %7278 = vmatprep.subr.bf16.mxu0 %v2911
    %7279 = vmatpush1.bf16.msra.mxu0 %v2910
    %7280 = vmatprep.subr.bf16.mxu0 %v2919
    %7281 = vmatpush1.bf16.msra.mxu0 %v2918
    %7282 = vmatprep.subr.bf16.mxu0 %v2927
    %7283 = vmatpush1.bf16.msra.mxu0 %v2926
    %7284 = vmatprep.subr.bf16.mxu0 %v2935
    %7285 = vmatpush1.bf16.msra.mxu0 %v2934
    %7286 = vmatprep.subr.bf16.mxu0 %v2943
    %7287 = vmatpush1.bf16.msra.mxu0 %v2942
    %7288 = vmatprep.subr.bf16.mxu0 %v2951
    %7289 = vmatpush1.bf16.msra.mxu0 %v2950
    %7290 = vmatprep.subr.bf16.mxu0 %v2959
    %7291 = vmatpush1.bf16.msra.mxu0 %v2958
    %7292 = vmatprep.subr.bf16.mxu0 %v2967
    %7293 = vmatpush1.bf16.msra.mxu0 %v2966
    %7294 = vmatprep.subr.bf16.mxu0 %v2975
    %7295 = vmatpush1.bf16.msra.mxu0 %v2974
    %7296 = vmatprep.subr.bf16.mxu0 %v2983
    %7297 = vmatpush1.bf16.msra.mxu0 %v2982
    %7298 = vmatprep.subr.bf16.mxu0 %v2991
    %7299 = vmatpush1.bf16.msra.mxu0 %v2990
    %7300 = vmatprep.subr.bf16.mxu0 %v2999
    %7301 = vmatpush1.bf16.msra.mxu0 %v2998
    %7302 = vmatprep.subr.bf16.mxu0 %v3007
    %7303 = vmatpush1.bf16.msra.mxu0 %v3006
    %7304 = vmatprep.subr.bf16.mxu0 %v3015
    %7305 = vmatpush1.bf16.msra.mxu0 %v3014
    %7306 = vmatprep.mubr.bf16.mxu0 %v7068
    %7307 = vmatmul.mubr.bf16.gmra.mrb[0].mxu0 %v7067
    %v7308 = vpop.f32.mrb[0].mxu0
    %v7309 = vadd.f32 %v7268, %v7308
    %v7310 = vpop.f32.mrb[0].mxu0
    %v7311 = vadd.f32 %v7270, %v7310
    %v7312 = vpop.f32.mrb[0].mxu0
    %v7313 = vpop.f32.mrb[0].mxu0
    %7314 = vdwg.mxu0
    %7315 = vmatprep.subr.bf16.mxu0 %v2769
    %7316 = vmatpush1.bf16.msra.mxu0 %v2768
    %7317 = vmatprep.subr.bf16.mxu0 %v2777
    %7318 = vmatpush1.bf16.msra.mxu0 %v2776
    %7319 = vmatprep.subr.bf16.mxu0 %v2785
    %7320 = vmatpush1.bf16.msra.mxu0 %v2784
    %7321 = vmatprep.subr.bf16.mxu0 %v2793
    %7322 = vmatpush1.bf16.msra.mxu0 %v2792
    %7323 = vmatprep.subr.bf16.mxu0 %v2801
    %7324 = vmatpush1.bf16.msra.mxu0 %v2800
    %7325 = vmatprep.subr.bf16.mxu0 %v2809
    %7326 = vmatpush1.bf16.msra.mxu0 %v2808
    %7327 = vmatprep.subr.bf16.mxu0 %v2817
    %7328 = vmatpush1.bf16.msra.mxu0 %v2816
    %7329 = vmatprep.subr.bf16.mxu0 %v2825
    %7330 = vmatpush1.bf16.msra.mxu0 %v2824
    %7331 = vmatprep.subr.bf16.mxu0 %v2833
    %7332 = vmatpush1.bf16.msra.mxu0 %v2832
    %7333 = vmatprep.subr.bf16.mxu0 %v2841
    %7334 = vmatpush1.bf16.msra.mxu0 %v2840
    %7335 = vmatprep.subr.bf16.mxu0 %v2849
    %7336 = vmatpush1.bf16.msra.mxu0 %v2848
    %7337 = vmatprep.subr.bf16.mxu0 %v2857
    %7338 = vmatpush1.bf16.msra.mxu0 %v2856
    %7339 = vmatprep.subr.bf16.mxu0 %v2865
    %7340 = vmatpush1.bf16.msra.mxu0 %v2864
    %7341 = vmatprep.subr.bf16.mxu0 %v2873
    %7342 = vmatpush1.bf16.msra.mxu0 %v2872
    %7343 = vmatprep.subr.bf16.mxu0 %v2881
    %7344 = vmatpush1.bf16.msra.mxu0 %v2880
    %7345 = vmatprep.subr.bf16.mxu0 %v2889
    %7346 = vmatpush1.bf16.msra.mxu0 %v2888
    %7347 = vmatprep.mubr.bf16.mxu0 %v7066
    %7348 = vmatmul.mubr.bf16.gmra.mrb[0].mxu0 %v7065
    %v7349 = vpop.f32.mrb[0].mxu0
    %v7350 = vadd.f32 %v629, %v7349
    %v7351 = vpop.f32.mrb[0].mxu0
    %v7352 = vadd.f32 %v633, %v7351
    %v7353 = vpop.f32.mrb[0].mxu0
    %v7354 = vpop.f32.mrb[0].mxu0
    %7355 = vdwg.mxu0
    %7356 = vmatprep.subr.bf16.mxu0 %v2897
    %7357 = vmatpush1.bf16.msra.mxu0 %v2896
    %7358 = vmatprep.subr.bf16.mxu0 %v2905
    %7359 = vmatpush1.bf16.msra.mxu0 %v2904
    %7360 = vmatprep.subr.bf16.mxu0 %v2913
    %7361 = vmatpush1.bf16.msra.mxu0 %v2912
    %7362 = vmatprep.subr.bf16.mxu0 %v2921
    %7363 = vmatpush1.bf16.msra.mxu0 %v2920
    %7364 = vmatprep.subr.bf16.mxu0 %v2929
    %7365 = vmatpush1.bf16.msra.mxu0 %v2928
    %7366 = vmatprep.subr.bf16.mxu0 %v2937
    %7367 = vmatpush1.bf16.msra.mxu0 %v2936
    %7368 = vmatprep.subr.bf16.mxu0 %v2945
    %7369 = vmatpush1.bf16.msra.mxu0 %v2944
    %7370 = vmatprep.subr.bf16.mxu0 %v2953
    %7371 = vmatpush1.bf16.msra.mxu0 %v2952
    %7372 = vmatprep.subr.bf16.mxu0 %v2961
    %7373 = vmatpush1.bf16.msra.mxu0 %v2960
    %7374 = vmatprep.subr.bf16.mxu0 %v2969
    %7375 = vmatpush1.bf16.msra.mxu0 %v2968
    %7376 = vmatprep.subr.bf16.mxu0 %v2977
    %7377 = vmatpush1.bf16.msra.mxu0 %v2976
    %7378 = vmatprep.subr.bf16.mxu0 %v2985
    %7379 = vmatpush1.bf16.msra.mxu0 %v2984
    %7380 = vmatprep.subr.bf16.mxu0 %v2993
    %7381 = vmatpush1.bf16.msra.mxu0 %v2992
    %7382 = vmatprep.subr.bf16.mxu0 %v3001
    %7383 = vmatpush1.bf16.msra.mxu0 %v3000
    %7384 = vmatprep.subr.bf16.mxu0 %v3009
    %7385 = vmatpush1.bf16.msra.mxu0 %v3008
    %7386 = vmatprep.subr.bf16.mxu0 %v3017
    %7387 = vmatpush1.bf16.msra.mxu0 %v3016
    %7388 = vmatprep.mubr.bf16.mxu0 %v7068
    %7389 = vmatmul.mubr.bf16.gmra.mrb[0].mxu0 %v7067
    %v7390 = vpop.f32.mrb[0].mxu0
    %v7391 = vadd.f32 %v7350, %v7390
    %v7392 = vpop.f32.mrb[0].mxu0
    %v7393 = vadd.f32 %v7352, %v7392
    %v7394 = vpop.f32.mrb[0].mxu0
    %v7395 = vpop.f32.mrb[0].mxu0
    %7396 = vdwg.mxu0
    %v7397 = vxor.u32 %v7145, 2147483648
    %v7398 = vxor.u32 %v7147, 2147483648
    %v7399 = vmul.f32 %v7397, 1.442695
    %v7400 = vpow.pop %v7399
    %v7401 = vmul.f32 %v7398, 1.442695
    %v7402 = vpow.pop %v7401
    %v7403 = vadd.f32 %v7400, 1.0
    %v7404 = vadd.f32 %v7402, 1.0
    %v7405 = vrcp.pop %v7403
    %v7406 = vmul.f32 1.0, %v7405
    %v7407 = vrcp.pop %v7404
    %v7408 = vmul.f32 1.0, %v7407
    %v7409 = vxor.u32 %v7227, 2147483648
    %v7410 = vxor.u32 %v7229, 2147483648
    %v7411 = vmul.f32 %v7409, 1.442695
    %v7412 = vpow.pop %v7411
    %v7413 = vmul.f32 %v7410, 1.442695
    %v7414 = vpow.pop %v7413
    %v7415 = vadd.f32 %v7412, 1.0
    %v7416 = vadd.f32 %v7414, 1.0
    %v7417 = vrcp.pop %v7415
    %v7418 = vmul.f32 1.0, %v7417
    %v7419 = vrcp.pop %v7416
    %v7420 = vmul.f32 1.0, %v7419
    %v7421 = vtanh.pop %v7309
    %v7422 = vtanh.pop %v7311
    %v7423 = vxor.u32 %v7391, 2147483648
    %v7424 = vxor.u32 %v7393, 2147483648
    %v7425 = vmul.f32 %v7423, 1.442695
    %v7426 = vpow.pop %v7425
    %v7427 = vmul.f32 %v7424, 1.442695
    %v7428 = vpow.pop %v7427
    %v7429 = vadd.f32 %v7426, 1.0
    %v7430 = vadd.f32 %v7428, 1.0
    %v7431 = vrcp.pop %v7429
    %v7432 = vmul.f32 1.0, %v7431
    %v7433 = vrcp.pop %v7430
    %v7434 = vmul.f32 1.0, %v7433
    %v7435 = vmul.f32 %v7418, %v6680
    %v7436 = vmul.f32 %v7420, %v6681
    %v7437 = vmul.f32 %v7406, %v7421
    %v7438 = vmul.f32 %v7408, %v7422
    %v7439 = vadd.f32 %v7435, %v7437
    %v7440 = vadd.f32 %v7436, %v7438
    %v7441 = vtanh.pop %v7439
    %v7442 = vtanh.pop %v7440
    %v7443 = vmul.f32 %v7432, %v7441
    %v7444 = vmul.f32 %v7434, %v7442
    %s7445 = scalar_lea.vmem [#allocation6], 48
    %v7446 = vld [vmem:[%s7445] sm:$0xff]
    %v7447 = vpack.c.bf16 %v7446, %v7446
    %7448 = vmatprep.subr.bf16.mxu0 %v1231
    %7449 = vmatpush1.bf16.msra.mxu0 %v1230
    %7450 = vmatprep.subr.bf16.mxu0 %v1239
    %7451 = vmatpush1.bf16.msra.mxu0 %v1238
    %7452 = vmatprep.subr.bf16.mxu0 %v1247
    %7453 = vmatpush1.bf16.msra.mxu0 %v1246
    %7454 = vmatprep.subr.bf16.mxu0 %v1255
    %7455 = vmatpush1.bf16.msra.mxu0 %v1254
    %7456 = vmatprep.subr.bf16.mxu0 %v1263
    %7457 = vmatpush1.bf16.msra.mxu0 %v1262
    %7458 = vmatprep.subr.bf16.mxu0 %v1271
    %7459 = vmatpush1.bf16.msra.mxu0 %v1270
    %7460 = vmatprep.subr.bf16.mxu0 %v1279
    %7461 = vmatpush1.bf16.msra.mxu0 %v1278
    %7462 = vmatprep.subr.bf16.mxu0 %v1287
    %7463 = vmatpush1.bf16.msra.mxu0 %v1286
    %7464 = vmatprep.subr.bf16.mxu0 %v1295
    %7465 = vmatpush1.bf16.msra.mxu0 %v1294
    %7466 = vmatprep.subr.bf16.mxu0 %v1303
    %7467 = vmatpush1.bf16.msra.mxu0 %v1302
    %7468 = vmatprep.subr.bf16.mxu0 %v1311
    %7469 = vmatpush1.bf16.msra.mxu0 %v1310
    %7470 = vmatprep.subr.bf16.mxu0 %v1319
    %7471 = vmatpush1.bf16.msra.mxu0 %v1318
    %7472 = vmatprep.subr.bf16.mxu0 %v1327
    %7473 = vmatpush1.bf16.msra.mxu0 %v1326
    %7474 = vmatprep.subr.bf16.mxu0 %v1335
    %7475 = vmatpush1.bf16.msra.mxu0 %v1334
    %7476 = vmatprep.subr.bf16.mxu0 %v1343
    %7477 = vmatpush1.bf16.msra.mxu0 %v1342
    %7478 = vmatprep.subr.bf16.mxu0 %v1351
    %7479 = vmatpush1.bf16.msra.mxu0 %v1350
    %7480 = vmatprep.mubr.bf16.mxu0 %v7065
    %7481 = vmatmul.mubr.bf16.gmra.mrb[0].mxu0 %v7447
    %v7482 = vpop.f32.mrb[0].mxu0
    %v7483 = vadd.f32 %v563, %v7482
    %v7484 = vpop.f32.mrb[0].mxu0
    %v7485 = vadd.f32 %v567, %v7484
    %v7486 = vpop.f32.mrb[0].mxu0
    %v7487 = vpop.f32.mrb[0].mxu0
    %7488 = vdwg.mxu0
    %7489 = vmatprep.subr.bf16.mxu0 %v1359
    %7490 = vmatpush1.bf16.msra.mxu0 %v1358
    %7491 = vmatprep.subr.bf16.mxu0 %v1367
    %7492 = vmatpush1.bf16.msra.mxu0 %v1366
    %7493 = vmatprep.subr.bf16.mxu0 %v1375
    %7494 = vmatpush1.bf16.msra.mxu0 %v1374
    %7495 = vmatprep.subr.bf16.mxu0 %v1383
    %7496 = vmatpush1.bf16.msra.mxu0 %v1382
    %7497 = vmatprep.subr.bf16.mxu0 %v1391
    %7498 = vmatpush1.bf16.msra.mxu0 %v1390
    %7499 = vmatprep.subr.bf16.mxu0 %v1399
    %7500 = vmatpush1.bf16.msra.mxu0 %v1398
    %7501 = vmatprep.subr.bf16.mxu0 %v1407
    %7502 = vmatpush1.bf16.msra.mxu0 %v1406
    %7503 = vmatprep.subr.bf16.mxu0 %v1415
    %7504 = vmatpush1.bf16.msra.mxu0 %v1414
    %7505 = vmatprep.subr.bf16.mxu0 0
    %7506 = vmatpush1.bf16.msra.mxu0 0
    %7507 = vmatprep.subr.bf16.mxu0 0
    %7508 = vmatpush1.bf16.msra.mxu0 0
    %7509 = vmatprep.subr.bf16.mxu0 0
    %7510 = vmatpush1.bf16.msra.mxu0 0
    %7511 = vmatprep.subr.bf16.mxu0 0
    %7512 = vmatpush1.bf16.msra.mxu0 0
    %7513 = vmatprep.subr.bf16.mxu0 0
    %7514 = vmatpush1.bf16.msra.mxu0 0
    %7515 = vmatprep.subr.bf16.mxu0 0
    %7516 = vmatpush1.bf16.msra.mxu0 0
    %7517 = vmatprep.subr.bf16.mxu0 0
    %7518 = vmatpush1.bf16.msra.mxu0 0
    %7519 = vmatprep.subr.bf16.mxu0 0
    %7520 = vmatpush1.bf16.msra.mxu0 0
    %7521 = vmatprep.mubr.bf16.mxu0 0
    %7522 = vmatmul.mubr.bf16.gmra.mrb[0].mxu0 %v7066
    %v7523 = vpop.f32.mrb[0].mxu0
    %v7524 = vadd.f32 %v7483, %v7523
    %v7525 = vpop.f32.mrb[0].mxu0
    %v7526 = vadd.f32 %v7485, %v7525
    %v7527 = vpop.f32.mrb[0].mxu0
    %v7528 = vpop.f32.mrb[0].mxu0
    %7529 = vdwg.mxu0
    %7530 = vmatprep.subr.bf16.mxu0 %v1233
    %7531 = vmatpush1.bf16.msra.mxu0 %v1232
    %7532 = vmatprep.subr.bf16.mxu0 %v1241
    %7533 = vmatpush1.bf16.msra.mxu0 %v1240
    %7534 = vmatprep.subr.bf16.mxu0 %v1249
    %7535 = vmatpush1.bf16.msra.mxu0 %v1248
    %7536 = vmatprep.subr.bf16.mxu0 %v1257
    %7537 = vmatpush1.bf16.msra.mxu0 %v1256
    %7538 = vmatprep.subr.bf16.mxu0 %v1265
    %7539 = vmatpush1.bf16.msra.mxu0 %v1264
    %7540 = vmatprep.subr.bf16.mxu0 %v1273
    %7541 = vmatpush1.bf16.msra.mxu0 %v1272
    %7542 = vmatprep.subr.bf16.mxu0 %v1281
    %7543 = vmatpush1.bf16.msra.mxu0 %v1280
    %7544 = vmatprep.subr.bf16.mxu0 %v1289
    %7545 = vmatpush1.bf16.msra.mxu0 %v1288
    %7546 = vmatprep.subr.bf16.mxu0 %v1297
    %7547 = vmatpush1.bf16.msra.mxu0 %v1296
    %7548 = vmatprep.subr.bf16.mxu0 %v1305
    %7549 = vmatpush1.bf16.msra.mxu0 %v1304
    %7550 = vmatprep.subr.bf16.mxu0 %v1313
    %7551 = vmatpush1.bf16.msra.mxu0 %v1312
    %7552 = vmatprep.subr.bf16.mxu0 %v1321
    %7553 = vmatpush1.bf16.msra.mxu0 %v1320
    %7554 = vmatprep.subr.bf16.mxu0 %v1329
    %7555 = vmatpush1.bf16.msra.mxu0 %v1328
    %7556 = vmatprep.subr.bf16.mxu0 %v1337
    %7557 = vmatpush1.bf16.msra.mxu0 %v1336
    %7558 = vmatprep.subr.bf16.mxu0 %v1345
    %7559 = vmatpush1.bf16.msra.mxu0 %v1344
    %7560 = vmatprep.subr.bf16.mxu0 %v1353
    %7561 = vmatpush1.bf16.msra.mxu0 %v1352
    %7562 = vmatprep.mubr.bf16.mxu0 %v7065
    %7563 = vmatmul.mubr.bf16.gmra.mrb[0].mxu0 %v7447
    %v7564 = vpop.f32.mrb[0].mxu0
    %v7565 = vadd.f32 %v571, %v7564
    %v7566 = vpop.f32.mrb[0].mxu0
    %v7567 = vadd.f32 %v575, %v7566
    %v7568 = vpop.f32.mrb[0].mxu0
    %v7569 = vpop.f32.mrb[0].mxu0
    %7570 = vdwg.mxu0
    %7571 = vmatprep.subr.bf16.mxu0 %v1361
    %7572 = vmatpush1.bf16.msra.mxu0 %v1360
    %7573 = vmatprep.subr.bf16.mxu0 %v1369
    %7574 = vmatpush1.bf16.msra.mxu0 %v1368
    %7575 = vmatprep.subr.bf16.mxu0 %v1377
    %7576 = vmatpush1.bf16.msra.mxu0 %v1376
    %7577 = vmatprep.subr.bf16.mxu0 %v1385
    %7578 = vmatpush1.bf16.msra.mxu0 %v1384
    %7579 = vmatprep.subr.bf16.mxu0 %v1393
    %7580 = vmatpush1.bf16.msra.mxu0 %v1392
    %7581 = vmatprep.subr.bf16.mxu0 %v1401
    %7582 = vmatpush1.bf16.msra.mxu0 %v1400
    %7583 = vmatprep.subr.bf16.mxu0 %v1409
    %7584 = vmatpush1.bf16.msra.mxu0 %v1408
    %7585 = vmatprep.subr.bf16.mxu0 %v1417
    %7586 = vmatpush1.bf16.msra.mxu0 %v1416
    %7587 = vmatprep.subr.bf16.mxu0 0
    %7588 = vmatpush1.bf16.msra.mxu0 0
    %7589 = vmatprep.subr.bf16.mxu0 0
    %7590 = vmatpush1.bf16.msra.mxu0 0
    %7591 = vmatprep.subr.bf16.mxu0 0
    %7592 = vmatpush1.bf16.msra.mxu0 0
    %7593 = vmatprep.subr.bf16.mxu0 0
    %7594 = vmatpush1.bf16.msra.mxu0 0
    %7595 = vmatprep.subr.bf16.mxu0 0
    %7596 = vmatpush1.bf16.msra.mxu0 0
    %7597 = vmatprep.subr.bf16.mxu0 0
    %7598 = vmatpush1.bf16.msra.mxu0 0
    %7599 = vmatprep.subr.bf16.mxu0 0
    %7600 = vmatpush1.bf16.msra.mxu0 0
    %7601 = vmatprep.subr.bf16.mxu0 0
    %7602 = vmatpush1.bf16.msra.mxu0 0
    %7603 = vmatprep.mubr.bf16.mxu0 0
    %7604 = vmatmul.mubr.bf16.gmra.mrb[0].mxu0 %v7066
    %v7605 = vpop.f32.mrb[0].mxu0
    %v7606 = vadd.f32 %v7565, %v7605
    %v7607 = vpop.f32.mrb[0].mxu0
    %v7608 = vadd.f32 %v7567, %v7607
    %v7609 = vpop.f32.mrb[0].mxu0
    %v7610 = vpop.f32.mrb[0].mxu0
    %7611 = vdwg.mxu0
    %7612 = vmatprep.subr.bf16.mxu0 %v1235
    %7613 = vmatpush1.bf16.msra.mxu0 %v1234
    %7614 = vmatprep.subr.bf16.mxu0 %v1243
    %7615 = vmatpush1.bf16.msra.mxu0 %v1242
    %7616 = vmatprep.subr.bf16.mxu0 %v1251
    %7617 = vmatpush1.bf16.msra.mxu0 %v1250
    %7618 = vmatprep.subr.bf16.mxu0 %v1259
    %7619 = vmatpush1.bf16.msra.mxu0 %v1258
    %7620 = vmatprep.subr.bf16.mxu0 %v1267
    %7621 = vmatpush1.bf16.msra.mxu0 %v1266
    %7622 = vmatprep.subr.bf16.mxu0 %v1275
    %7623 = vmatpush1.bf16.msra.mxu0 %v1274
    %7624 = vmatprep.subr.bf16.mxu0 %v1283
    %7625 = vmatpush1.bf16.msra.mxu0 %v1282
    %7626 = vmatprep.subr.bf16.mxu0 %v1291
    %7627 = vmatpush1.bf16.msra.mxu0 %v1290
    %7628 = vmatprep.subr.bf16.mxu0 %v1299
    %7629 = vmatpush1.bf16.msra.mxu0 %v1298
    %7630 = vmatprep.subr.bf16.mxu0 %v1307
    %7631 = vmatpush1.bf16.msra.mxu0 %v1306
    %7632 = vmatprep.subr.bf16.mxu0 %v1315
    %7633 = vmatpush1.bf16.msra.mxu0 %v1314
    %7634 = vmatprep.subr.bf16.mxu0 %v1323
    %7635 = vmatpush1.bf16.msra.mxu0 %v1322
    %7636 = vmatprep.subr.bf16.mxu0 %v1331
    %7637 = vmatpush1.bf16.msra.mxu0 %v1330
    %7638 = vmatprep.subr.bf16.mxu0 %v1339
    %7639 = vmatpush1.bf16.msra.mxu0 %v1338
    %7640 = vmatprep.subr.bf16.mxu0 %v1347
    %7641 = vmatpush1.bf16.msra.mxu0 %v1346
    %7642 = vmatprep.subr.bf16.mxu0 %v1355
    %7643 = vmatpush1.bf16.msra.mxu0 %v1354
    %7644 = vmatprep.mubr.bf16.mxu0 %v7065
    %7645 = vmatmul.mubr.bf16.gmra.mrb[0].mxu0 %v7447
    %v7646 = vpop.f32.mrb[0].mxu0
    %v7647 = vadd.f32 %v579, %v7646
    %v7648 = vpop.f32.mrb[0].mxu0
    %v7649 = vadd.f32 %v583, %v7648
    %v7650 = vpop.f32.mrb[0].mxu0
    %v7651 = vpop.f32.mrb[0].mxu0
    %7652 = vdwg.mxu0
    %7653 = vmatprep.subr.bf16.mxu0 %v1363
    %7654 = vmatpush1.bf16.msra.mxu0 %v1362
    %7655 = vmatprep.subr.bf16.mxu0 %v1371
    %7656 = vmatpush1.bf16.msra.mxu0 %v1370
    %7657 = vmatprep.subr.bf16.mxu0 %v1379
    %7658 = vmatpush1.bf16.msra.mxu0 %v1378
    %7659 = vmatprep.subr.bf16.mxu0 %v1387
    %7660 = vmatpush1.bf16.msra.mxu0 %v1386
    %7661 = vmatprep.subr.bf16.mxu0 %v1395
    %7662 = vmatpush1.bf16.msra.mxu0 %v1394
    %7663 = vmatprep.subr.bf16.mxu0 %v1403
    %7664 = vmatpush1.bf16.msra.mxu0 %v1402
    %7665 = vmatprep.subr.bf16.mxu0 %v1411
    %7666 = vmatpush1.bf16.msra.mxu0 %v1410
    %7667 = vmatprep.subr.bf16.mxu0 %v1419
    %7668 = vmatpush1.bf16.msra.mxu0 %v1418
    %7669 = vmatprep.subr.bf16.mxu0 0
    %7670 = vmatpush1.bf16.msra.mxu0 0
    %7671 = vmatprep.subr.bf16.mxu0 0
    %7672 = vmatpush1.bf16.msra.mxu0 0
    %7673 = vmatprep.subr.bf16.mxu0 0
    %7674 = vmatpush1.bf16.msra.mxu0 0
    %7675 = vmatprep.subr.bf16.mxu0 0
    %7676 = vmatpush1.bf16.msra.mxu0 0
    %7677 = vmatprep.subr.bf16.mxu0 0
    %7678 = vmatpush1.bf16.msra.mxu0 0
    %7679 = vmatprep.subr.bf16.mxu0 0
    %7680 = vmatpush1.bf16.msra.mxu0 0
    %7681 = vmatprep.subr.bf16.mxu0 0
    %7682 = vmatpush1.bf16.msra.mxu0 0
    %7683 = vmatprep.subr.bf16.mxu0 0
    %7684 = vmatpush1.bf16.msra.mxu0 0
    %7685 = vmatprep.mubr.bf16.mxu0 0
    %7686 = vmatmul.mubr.bf16.gmra.mrb[0].mxu0 %v7066
    %v7687 = vpop.f32.mrb[0].mxu0
    %v7688 = vadd.f32 %v7647, %v7687
    %v7689 = vpop.f32.mrb[0].mxu0
    %v7690 = vadd.f32 %v7649, %v7689
    %v7691 = vpop.f32.mrb[0].mxu0
    %v7692 = vpop.f32.mrb[0].mxu0
    %7693 = vdwg.mxu0
    %7694 = vmatprep.subr.bf16.mxu0 %v1237
    %7695 = vmatpush1.bf16.msra.mxu0 %v1236
    %7696 = vmatprep.subr.bf16.mxu0 %v1245
    %7697 = vmatpush1.bf16.msra.mxu0 %v1244
    %7698 = vmatprep.subr.bf16.mxu0 %v1253
    %7699 = vmatpush1.bf16.msra.mxu0 %v1252
    %7700 = vmatprep.subr.bf16.mxu0 %v1261
    %7701 = vmatpush1.bf16.msra.mxu0 %v1260
    %7702 = vmatprep.subr.bf16.mxu0 %v1269
    %7703 = vmatpush1.bf16.msra.mxu0 %v1268
    %7704 = vmatprep.subr.bf16.mxu0 %v1277
    %7705 = vmatpush1.bf16.msra.mxu0 %v1276
    %7706 = vmatprep.subr.bf16.mxu0 %v1285
    %7707 = vmatpush1.bf16.msra.mxu0 %v1284
    %7708 = vmatprep.subr.bf16.mxu0 %v1293
    %7709 = vmatpush1.bf16.msra.mxu0 %v1292
    %7710 = vmatprep.subr.bf16.mxu0 %v1301
    %7711 = vmatpush1.bf16.msra.mxu0 %v1300
    %7712 = vmatprep.subr.bf16.mxu0 %v1309
    %7713 = vmatpush1.bf16.msra.mxu0 %v1308
    %7714 = vmatprep.subr.bf16.mxu0 %v1317
    %7715 = vmatpush1.bf16.msra.mxu0 %v1316
    %7716 = vmatprep.subr.bf16.mxu0 %v1325
    %7717 = vmatpush1.bf16.msra.mxu0 %v1324
    %7718 = vmatprep.subr.bf16.mxu0 %v1333
    %7719 = vmatpush1.bf16.msra.mxu0 %v1332
    %7720 = vmatprep.subr.bf16.mxu0 %v1341
    %7721 = vmatpush1.bf16.msra.mxu0 %v1340
    %7722 = vmatprep.subr.bf16.mxu0 %v1349
    %7723 = vmatpush1.bf16.msra.mxu0 %v1348
    %7724 = vmatprep.subr.bf16.mxu0 %v1357
    %7725 = vmatpush1.bf16.msra.mxu0 %v1356
    %7726 = vmatprep.mubr.bf16.mxu0 %v7065
    %7727 = vmatmul.mubr.bf16.gmra.mrb[0].mxu0 %v7447
    %v7728 = vpop.f32.mrb[0].mxu0
    %v7729 = vadd.f32 %v587, %v7728
    %v7730 = vpop.f32.mrb[0].mxu0
    %v7731 = vadd.f32 %v591, %v7730
    %v7732 = vpop.f32.mrb[0].mxu0
    %v7733 = vpop.f32.mrb[0].mxu0
    %7734 = vdwg.mxu0
    %7735 = vmatprep.subr.bf16.mxu0 %v1365
    %7736 = vmatpush1.bf16.msra.mxu0 %v1364
    %7737 = vmatprep.subr.bf16.mxu0 %v1373
    %7738 = vmatpush1.bf16.msra.mxu0 %v1372
    %7739 = vmatprep.subr.bf16.mxu0 %v1381
    %7740 = vmatpush1.bf16.msra.mxu0 %v1380
    %7741 = vmatprep.subr.bf16.mxu0 %v1389
    %7742 = vmatpush1.bf16.msra.mxu0 %v1388
    %7743 = vmatprep.subr.bf16.mxu0 %v1397
    %7744 = vmatpush1.bf16.msra.mxu0 %v1396
    %7745 = vmatprep.subr.bf16.mxu0 %v1405
    %7746 = vmatpush1.bf16.msra.mxu0 %v1404
    %7747 = vmatprep.subr.bf16.mxu0 %v1413
    %7748 = vmatpush1.bf16.msra.mxu0 %v1412
    %7749 = vmatprep.subr.bf16.mxu0 %v1421
    %7750 = vmatpush1.bf16.msra.mxu0 %v1420
    %7751 = vmatprep.subr.bf16.mxu0 0
    %7752 = vmatpush1.bf16.msra.mxu0 0
    %7753 = vmatprep.subr.bf16.mxu0 0
    %7754 = vmatpush1.bf16.msra.mxu0 0
    %7755 = vmatprep.subr.bf16.mxu0 0
    %7756 = vmatpush1.bf16.msra.mxu0 0
    %7757 = vmatprep.subr.bf16.mxu0 0
    %7758 = vmatpush1.bf16.msra.mxu0 0
    %7759 = vmatprep.subr.bf16.mxu0 0
    %7760 = vmatpush1.bf16.msra.mxu0 0
    %7761 = vmatprep.subr.bf16.mxu0 0
    %7762 = vmatpush1.bf16.msra.mxu0 0
    %7763 = vmatprep.subr.bf16.mxu0 0
    %7764 = vmatpush1.bf16.msra.mxu0 0
    %7765 = vmatprep.subr.bf16.mxu0 0
    %7766 = vmatpush1.bf16.msra.mxu0 0
    %7767 = vmatprep.mubr.bf16.mxu0 0
    %7768 = vmatmul.mubr.bf16.gmra.mrb[0].mxu0 %v7066
    %v7769 = vpop.f32.mrb[0].mxu0
    %v7770 = vadd.f32 %v7729, %v7769
    %v7771 = vpop.f32.mrb[0].mxu0
    %v7772 = vadd.f32 %v7731, %v7771
    %v7773 = vpop.f32.mrb[0].mxu0
    %v7774 = vpop.f32.mrb[0].mxu0
    %7775 = vdwg.mxu0
    %v7776 = vxor.u32 %v7524, 2147483648
    %v7777 = vxor.u32 %v7526, 2147483648
    %v7778 = vmul.f32 %v7776, 1.442695
    %v7779 = vpow.pop %v7778
    %v7780 = vmul.f32 %v7777, 1.442695
    %v7781 = vpow.pop %v7780
    %v7782 = vadd.f32 %v7779, 1.0
    %v7783 = vadd.f32 %v7781, 1.0
    %v7784 = vrcp.pop %v7782
    %v7785 = vmul.f32 1.0, %v7784
    %v7786 = vrcp.pop %v7783
    %v7787 = vmul.f32 1.0, %v7786
    %v7788 = vxor.u32 %v7606, 2147483648
    %v7789 = vxor.u32 %v7608, 2147483648
    %v7790 = vmul.f32 %v7788, 1.442695
    %v7791 = vpow.pop %v7790
    %v7792 = vmul.f32 %v7789, 1.442695
    %v7793 = vpow.pop %v7792
    %v7794 = vadd.f32 %v7791, 1.0
    %v7795 = vadd.f32 %v7793, 1.0
    %v7796 = vrcp.pop %v7794
    %v7797 = vmul.f32 1.0, %v7796
    %v7798 = vrcp.pop %v7795
    %v7799 = vmul.f32 1.0, %v7798
    %v7800 = vtanh.pop %v7688
    %v7801 = vtanh.pop %v7690
    %v7802 = vxor.u32 %v7770, 2147483648
    %v7803 = vxor.u32 %v7772, 2147483648
    %v7804 = vmul.f32 %v7802, 1.442695
    %v7805 = vpow.pop %v7804
    %v7806 = vmul.f32 %v7803, 1.442695
    %v7807 = vpow.pop %v7806
    %v7808 = vadd.f32 %v7805, 1.0
    %v7809 = vadd.f32 %v7807, 1.0
    %v7810 = vrcp.pop %v7808
    %v7811 = vmul.f32 1.0, %v7810
    %v7812 = vrcp.pop %v7809
    %v7813 = vmul.f32 1.0, %v7812
    %v7814 = vmul.f32 %v7797, %v7059
    %v7815 = vmul.f32 %v7799, %v7060
    %v7816 = vmul.f32 %v7785, %v7800
    %v7817 = vmul.f32 %v7787, %v7801
    %v7818 = vadd.f32 %v7814, %v7816
    %v7819 = vadd.f32 %v7815, %v7817
    %v7820 = vtanh.pop %v7818
    %v7821 = vtanh.pop %v7819
    %v7822 = vmul.f32 %v7811, %v7820
    %v7823 = vmul.f32 %v7813, %v7821
    %v7824 = vpack.c.bf16 %v7822, %v7822
    %v7825 = vpack.c.bf16 %v7823, %v7823
    %v7826 = vpack.c.bf16 %v7443, %v7443
    %v7827 = vpack.c.bf16 %v7444, %v7444
    %7828 = vmatprep.subr.bf16.mxu0 %v2763
    %7829 = vmatpush1.bf16.msra.mxu0 %v2762
    %7830 = vmatprep.subr.bf16.mxu0 %v2771
    %7831 = vmatpush1.bf16.msra.mxu0 %v2770
    %7832 = vmatprep.subr.bf16.mxu0 %v2779
    %7833 = vmatpush1.bf16.msra.mxu0 %v2778
    %7834 = vmatprep.subr.bf16.mxu0 %v2787
    %7835 = vmatpush1.bf16.msra.mxu0 %v2786
    %7836 = vmatprep.subr.bf16.mxu0 %v2795
    %7837 = vmatpush1.bf16.msra.mxu0 %v2794
    %7838 = vmatprep.subr.bf16.mxu0 %v2803
    %7839 = vmatpush1.bf16.msra.mxu0 %v2802
    %7840 = vmatprep.subr.bf16.mxu0 %v2811
    %7841 = vmatpush1.bf16.msra.mxu0 %v2810
    %7842 = vmatprep.subr.bf16.mxu0 %v2819
    %7843 = vmatpush1.bf16.msra.mxu0 %v2818
    %7844 = vmatprep.subr.bf16.mxu0 %v2827
    %7845 = vmatpush1.bf16.msra.mxu0 %v2826
    %7846 = vmatprep.subr.bf16.mxu0 %v2835
    %7847 = vmatpush1.bf16.msra.mxu0 %v2834
    %7848 = vmatprep.subr.bf16.mxu0 %v2843
    %7849 = vmatpush1.bf16.msra.mxu0 %v2842
    %7850 = vmatprep.subr.bf16.mxu0 %v2851
    %7851 = vmatpush1.bf16.msra.mxu0 %v2850
    %7852 = vmatprep.subr.bf16.mxu0 %v2859
    %7853 = vmatpush1.bf16.msra.mxu0 %v2858
    %7854 = vmatprep.subr.bf16.mxu0 %v2867
    %7855 = vmatpush1.bf16.msra.mxu0 %v2866
    %7856 = vmatprep.subr.bf16.mxu0 %v2875
    %7857 = vmatpush1.bf16.msra.mxu0 %v2874
    %7858 = vmatprep.subr.bf16.mxu0 %v2883
    %7859 = vmatpush1.bf16.msra.mxu0 %v2882
    %7860 = vmatprep.mubr.bf16.mxu0 %v7825
    %7861 = vmatmul.mubr.bf16.gmra.mrb[0].mxu0 %v7824
    %v7862 = vpop.f32.mrb[0].mxu0
    %v7863 = vadd.f32 %v605, %v7862
    %v7864 = vpop.f32.mrb[0].mxu0
    %v7865 = vadd.f32 %v609, %v7864
    %v7866 = vpop.f32.mrb[0].mxu0
    %v7867 = vpop.f32.mrb[0].mxu0
    %7868 = vdwg.mxu0
    %7869 = vmatprep.subr.bf16.mxu0 %v2891
    %7870 = vmatpush1.bf16.msra.mxu0 %v2890
    %7871 = vmatprep.subr.bf16.mxu0 %v2899
    %7872 = vmatpush1.bf16.msra.mxu0 %v2898
    %7873 = vmatprep.subr.bf16.mxu0 %v2907
    %7874 = vmatpush1.bf16.msra.mxu0 %v2906
    %7875 = vmatprep.subr.bf16.mxu0 %v2915
    %7876 = vmatpush1.bf16.msra.mxu0 %v2914
    %7877 = vmatprep.subr.bf16.mxu0 %v2923
    %7878 = vmatpush1.bf16.msra.mxu0 %v2922
    %7879 = vmatprep.subr.bf16.mxu0 %v2931
    %7880 = vmatpush1.bf16.msra.mxu0 %v2930
    %7881 = vmatprep.subr.bf16.mxu0 %v2939
    %7882 = vmatpush1.bf16.msra.mxu0 %v2938
    %7883 = vmatprep.subr.bf16.mxu0 %v2947
    %7884 = vmatpush1.bf16.msra.mxu0 %v2946
    %7885 = vmatprep.subr.bf16.mxu0 %v2955
    %7886 = vmatpush1.bf16.msra.mxu0 %v2954
    %7887 = vmatprep.subr.bf16.mxu0 %v2963
    %7888 = vmatpush1.bf16.msra.mxu0 %v2962
    %7889 = vmatprep.subr.bf16.mxu0 %v2971
    %7890 = vmatpush1.bf16.msra.mxu0 %v2970
    %7891 = vmatprep.subr.bf16.mxu0 %v2979
    %7892 = vmatpush1.bf16.msra.mxu0 %v2978
    %7893 = vmatprep.subr.bf16.mxu0 %v2987
    %7894 = vmatpush1.bf16.msra.mxu0 %v2986
    %7895 = vmatprep.subr.bf16.mxu0 %v2995
    %7896 = vmatpush1.bf16.msra.mxu0 %v2994
    %7897 = vmatprep.subr.bf16.mxu0 %v3003
    %7898 = vmatpush1.bf16.msra.mxu0 %v3002
    %7899 = vmatprep.subr.bf16.mxu0 %v3011
    %7900 = vmatpush1.bf16.msra.mxu0 %v3010
    %7901 = vmatprep.mubr.bf16.mxu0 %v7827
    %7902 = vmatmul.mubr.bf16.gmra.mrb[0].mxu0 %v7826
    %v7903 = vpop.f32.mrb[0].mxu0
    %v7904 = vadd.f32 %v7863, %v7903
    %v7905 = vpop.f32.mrb[0].mxu0
    %v7906 = vadd.f32 %v7865, %v7905
    %v7907 = vpop.f32.mrb[0].mxu0
    %v7908 = vpop.f32.mrb[0].mxu0
    %7909 = vdwg.mxu0
    %7910 = vmatprep.subr.bf16.mxu0 %v2765
    %7911 = vmatpush1.bf16.msra.mxu0 %v2764
    %7912 = vmatprep.subr.bf16.mxu0 %v2773
    %7913 = vmatpush1.bf16.msra.mxu0 %v2772
    %7914 = vmatprep.subr.bf16.mxu0 %v2781
    %7915 = vmatpush1.bf16.msra.mxu0 %v2780
    %7916 = vmatprep.subr.bf16.mxu0 %v2789
    %7917 = vmatpush1.bf16.msra.mxu0 %v2788
    %7918 = vmatprep.subr.bf16.mxu0 %v2797
    %7919 = vmatpush1.bf16.msra.mxu0 %v2796
    %7920 = vmatprep.subr.bf16.mxu0 %v2805
    %7921 = vmatpush1.bf16.msra.mxu0 %v2804
    %7922 = vmatprep.subr.bf16.mxu0 %v2813
    %7923 = vmatpush1.bf16.msra.mxu0 %v2812
    %7924 = vmatprep.subr.bf16.mxu0 %v2821
    %7925 = vmatpush1.bf16.msra.mxu0 %v2820
    %7926 = vmatprep.subr.bf16.mxu0 %v2829
    %7927 = vmatpush1.bf16.msra.mxu0 %v2828
    %7928 = vmatprep.subr.bf16.mxu0 %v2837
    %7929 = vmatpush1.bf16.msra.mxu0 %v2836
    %7930 = vmatprep.subr.bf16.mxu0 %v2845
    %7931 = vmatpush1.bf16.msra.mxu0 %v2844
    %7932 = vmatprep.subr.bf16.mxu0 %v2853
    %7933 = vmatpush1.bf16.msra.mxu0 %v2852
    %7934 = vmatprep.subr.bf16.mxu0 %v2861
    %7935 = vmatpush1.bf16.msra.mxu0 %v2860
    %7936 = vmatprep.subr.bf16.mxu0 %v2869
    %7937 = vmatpush1.bf16.msra.mxu0 %v2868
    %7938 = vmatprep.subr.bf16.mxu0 %v2877
    %7939 = vmatpush1.bf16.msra.mxu0 %v2876
    %7940 = vmatprep.subr.bf16.mxu0 %v2885
    %7941 = vmatpush1.bf16.msra.mxu0 %v2884
    %7942 = vmatprep.mubr.bf16.mxu0 %v7825
    %7943 = vmatmul.mubr.bf16.gmra.mrb[0].mxu0 %v7824
    %v7944 = vpop.f32.mrb[0].mxu0
    %v7945 = vadd.f32 %v613, %v7944
    %v7946 = vpop.f32.mrb[0].mxu0
    %v7947 = vadd.f32 %v617, %v7946
    %v7948 = vpop.f32.mrb[0].mxu0
    %v7949 = vpop.f32.mrb[0].mxu0
    %7950 = vdwg.mxu0
    %7951 = vmatprep.subr.bf16.mxu0 %v2893
    %7952 = vmatpush1.bf16.msra.mxu0 %v2892
    %7953 = vmatprep.subr.bf16.mxu0 %v2901
    %7954 = vmatpush1.bf16.msra.mxu0 %v2900
    %7955 = vmatprep.subr.bf16.mxu0 %v2909
    %7956 = vmatpush1.bf16.msra.mxu0 %v2908
    %7957 = vmatprep.subr.bf16.mxu0 %v2917
    %7958 = vmatpush1.bf16.msra.mxu0 %v2916
    %7959 = vmatprep.subr.bf16.mxu0 %v2925
    %7960 = vmatpush1.bf16.msra.mxu0 %v2924
    %7961 = vmatprep.subr.bf16.mxu0 %v2933
    %7962 = vmatpush1.bf16.msra.mxu0 %v2932
    %7963 = vmatprep.subr.bf16.mxu0 %v2941
    %7964 = vmatpush1.bf16.msra.mxu0 %v2940
    %7965 = vmatprep.subr.bf16.mxu0 %v2949
    %7966 = vmatpush1.bf16.msra.mxu0 %v2948
    %7967 = vmatprep.subr.bf16.mxu0 %v2957
    %7968 = vmatpush1.bf16.msra.mxu0 %v2956
    %7969 = vmatprep.subr.bf16.mxu0 %v2965
    %7970 = vmatpush1.bf16.msra.mxu0 %v2964
    %7971 = vmatprep.subr.bf16.mxu0 %v2973
    %7972 = vmatpush1.bf16.msra.mxu0 %v2972
    %7973 = vmatprep.subr.bf16.mxu0 %v2981
    %7974 = vmatpush1.bf16.msra.mxu0 %v2980
    %7975 = vmatprep.subr.bf16.mxu0 %v2989
    %7976 = vmatpush1.bf16.msra.mxu0 %v2988
    %7977 = vmatprep.subr.bf16.mxu0 %v2997
    %7978 = vmatpush1.bf16.msra.mxu0 %v2996
    %7979 = vmatprep.subr.bf16.mxu0 %v3005
    %7980 = vmatpush1.bf16.msra.mxu0 %v3004
    %7981 = vmatprep.subr.bf16.mxu0 %v3013
    %7982 = vmatpush1.bf16.msra.mxu0 %v3012
    %7983 = vmatprep.mubr.bf16.mxu0 %v7827
    %7984 = vmatmul.mubr.bf16.gmra.mrb[0].mxu0 %v7826
    %v7985 = vpop.f32.mrb[0].mxu0
    %v7986 = vadd.f32 %v7945, %v7985
    %v7987 = vpop.f32.mrb[0].mxu0
    %v7988 = vadd.f32 %v7947, %v7987
    %v7989 = vpop.f32.mrb[0].mxu0
    %v7990 = vpop.f32.mrb[0].mxu0
    %7991 = vdwg.mxu0
    %7992 = vmatprep.subr.bf16.mxu0 %v2767
    %7993 = vmatpush1.bf16.msra.mxu0 %v2766
    %7994 = vmatprep.subr.bf16.mxu0 %v2775
    %7995 = vmatpush1.bf16.msra.mxu0 %v2774
    %7996 = vmatprep.subr.bf16.mxu0 %v2783
    %7997 = vmatpush1.bf16.msra.mxu0 %v2782
    %7998 = vmatprep.subr.bf16.mxu0 %v2791
    %7999 = vmatpush1.bf16.msra.mxu0 %v2790
    %8000 = vmatprep.subr.bf16.mxu0 %v2799
    %8001 = vmatpush1.bf16.msra.mxu0 %v2798
    %8002 = vmatprep.subr.bf16.mxu0 %v2807
    %8003 = vmatpush1.bf16.msra.mxu0 %v2806
    %8004 = vmatprep.subr.bf16.mxu0 %v2815
    %8005 = vmatpush1.bf16.msra.mxu0 %v2814
    %8006 = vmatprep.subr.bf16.mxu0 %v2823
    %8007 = vmatpush1.bf16.msra.mxu0 %v2822
    %8008 = vmatprep.subr.bf16.mxu0 %v2831
    %8009 = vmatpush1.bf16.msra.mxu0 %v2830
    %8010 = vmatprep.subr.bf16.mxu0 %v2839
    %8011 = vmatpush1.bf16.msra.mxu0 %v2838
    %8012 = vmatprep.subr.bf16.mxu0 %v2847
    %8013 = vmatpush1.bf16.msra.mxu0 %v2846
    %8014 = vmatprep.subr.bf16.mxu0 %v2855
    %8015 = vmatpush1.bf16.msra.mxu0 %v2854
    %8016 = vmatprep.subr.bf16.mxu0 %v2863
    %8017 = vmatpush1.bf16.msra.mxu0 %v2862
    %8018 = vmatprep.subr.bf16.mxu0 %v2871
    %8019 = vmatpush1.bf16.msra.mxu0 %v2870
    %8020 = vmatprep.subr.bf16.mxu0 %v2879
    %8021 = vmatpush1.bf16.msra.mxu0 %v2878
    %8022 = vmatprep.subr.bf16.mxu0 %v2887
    %8023 = vmatpush1.bf16.msra.mxu0 %v2886
    %8024 = vmatprep.mubr.bf16.mxu0 %v7825
    %8025 = vmatmul.mubr.bf16.gmra.mrb[0].mxu0 %v7824
    %v8026 = vpop.f32.mrb[0].mxu0
    %v8027 = vadd.f32 %v621, %v8026
    %v8028 = vpop.f32.mrb[0].mxu0
    %v8029 = vadd.f32 %v625, %v8028
    %v8030 = vpop.f32.mrb[0].mxu0
    %v8031 = vpop.f32.mrb[0].mxu0
    %8032 = vdwg.mxu0
    %8033 = vmatprep.subr.bf16.mxu0 %v2895
    %8034 = vmatpush1.bf16.msra.mxu0 %v2894
    %8035 = vmatprep.subr.bf16.mxu0 %v2903
    %8036 = vmatpush1.bf16.msra.mxu0 %v2902
    %8037 = vmatprep.subr.bf16.mxu0 %v2911
    %8038 = vmatpush1.bf16.msra.mxu0 %v2910
    %8039 = vmatprep.subr.bf16.mxu0 %v2919
    %8040 = vmatpush1.bf16.msra.mxu0 %v2918
    %8041 = vmatprep.subr.bf16.mxu0 %v2927
    %8042 = vmatpush1.bf16.msra.mxu0 %v2926
    %8043 = vmatprep.subr.bf16.mxu0 %v2935
    %8044 = vmatpush1.bf16.msra.mxu0 %v2934
    %8045 = vmatprep.subr.bf16.mxu0 %v2943
    %8046 = vmatpush1.bf16.msra.mxu0 %v2942
    %8047 = vmatprep.subr.bf16.mxu0 %v2951
    %8048 = vmatpush1.bf16.msra.mxu0 %v2950
    %8049 = vmatprep.subr.bf16.mxu0 %v2959
    %8050 = vmatpush1.bf16.msra.mxu0 %v2958
    %8051 = vmatprep.subr.bf16.mxu0 %v2967
    %8052 = vmatpush1.bf16.msra.mxu0 %v2966
    %8053 = vmatprep.subr.bf16.mxu0 %v2975
    %8054 = vmatpush1.bf16.msra.mxu0 %v2974
    %8055 = vmatprep.subr.bf16.mxu0 %v2983
    %8056 = vmatpush1.bf16.msra.mxu0 %v2982
    %8057 = vmatprep.subr.bf16.mxu0 %v2991
    %8058 = vmatpush1.bf16.msra.mxu0 %v2990
    %8059 = vmatprep.subr.bf16.mxu0 %v2999
    %8060 = vmatpush1.bf16.msra.mxu0 %v2998
    %8061 = vmatprep.subr.bf16.mxu0 %v3007
    %8062 = vmatpush1.bf16.msra.mxu0 %v3006
    %8063 = vmatprep.subr.bf16.mxu0 %v3015
    %8064 = vmatpush1.bf16.msra.mxu0 %v3014
    %8065 = vmatprep.mubr.bf16.mxu0 %v7827
    %8066 = vmatmul.mubr.bf16.gmra.mrb[0].mxu0 %v7826
    %v8067 = vpop.f32.mrb[0].mxu0
    %v8068 = vadd.f32 %v8027, %v8067
    %v8069 = vpop.f32.mrb[0].mxu0
    %v8070 = vadd.f32 %v8029, %v8069
    %v8071 = vpop.f32.mrb[0].mxu0
    %v8072 = vpop.f32.mrb[0].mxu0
    %8073 = vdwg.mxu0
    %8074 = vmatprep.subr.bf16.mxu0 %v2769
    %8075 = vmatpush1.bf16.msra.mxu0 %v2768
    %8076 = vmatprep.subr.bf16.mxu0 %v2777
    %8077 = vmatpush1.bf16.msra.mxu0 %v2776
    %8078 = vmatprep.subr.bf16.mxu0 %v2785
    %8079 = vmatpush1.bf16.msra.mxu0 %v2784
    %8080 = vmatprep.subr.bf16.mxu0 %v2793
    %8081 = vmatpush1.bf16.msra.mxu0 %v2792
    %8082 = vmatprep.subr.bf16.mxu0 %v2801
    %8083 = vmatpush1.bf16.msra.mxu0 %v2800
    %8084 = vmatprep.subr.bf16.mxu0 %v2809
    %8085 = vmatpush1.bf16.msra.mxu0 %v2808
    %8086 = vmatprep.subr.bf16.mxu0 %v2817
    %8087 = vmatpush1.bf16.msra.mxu0 %v2816
    %8088 = vmatprep.subr.bf16.mxu0 %v2825
    %8089 = vmatpush1.bf16.msra.mxu0 %v2824
    %8090 = vmatprep.subr.bf16.mxu0 %v2833
    %8091 = vmatpush1.bf16.msra.mxu0 %v2832
    %8092 = vmatprep.subr.bf16.mxu0 %v2841
    %8093 = vmatpush1.bf16.msra.mxu0 %v2840
    %8094 = vmatprep.subr.bf16.mxu0 %v2849
    %8095 = vmatpush1.bf16.msra.mxu0 %v2848
    %8096 = vmatprep.subr.bf16.mxu0 %v2857
    %8097 = vmatpush1.bf16.msra.mxu0 %v2856
    %8098 = vmatprep.subr.bf16.mxu0 %v2865
    %8099 = vmatpush1.bf16.msra.mxu0 %v2864
    %8100 = vmatprep.subr.bf16.mxu0 %v2873
    %8101 = vmatpush1.bf16.msra.mxu0 %v2872
    %8102 = vmatprep.subr.bf16.mxu0 %v2881
    %8103 = vmatpush1.bf16.msra.mxu0 %v2880
    %8104 = vmatprep.subr.bf16.mxu0 %v2889
    %8105 = vmatpush1.bf16.msra.mxu0 %v2888
    %8106 = vmatprep.mubr.bf16.mxu0 %v7825
    %8107 = vmatmul.mubr.bf16.gmra.mrb[0].mxu0 %v7824
    %v8108 = vpop.f32.mrb[0].mxu0
    %v8109 = vadd.f32 %v629, %v8108
    %v8110 = vpop.f32.mrb[0].mxu0
    %v8111 = vadd.f32 %v633, %v8110
    %v8112 = vpop.f32.mrb[0].mxu0
    %v8113 = vpop.f32.mrb[0].mxu0
    %8114 = vdwg.mxu0
    %8115 = vmatprep.subr.bf16.mxu0 %v2897
    %8116 = vmatpush1.bf16.msra.mxu0 %v2896
    %8117 = vmatprep.subr.bf16.mxu0 %v2905
    %8118 = vmatpush1.bf16.msra.mxu0 %v2904
    %8119 = vmatprep.subr.bf16.mxu0 %v2913
    %8120 = vmatpush1.bf16.msra.mxu0 %v2912
    %8121 = vmatprep.subr.bf16.mxu0 %v2921
    %8122 = vmatpush1.bf16.msra.mxu0 %v2920
    %8123 = vmatprep.subr.bf16.mxu0 %v2929
    %8124 = vmatpush1.bf16.msra.mxu0 %v2928
    %8125 = vmatprep.subr.bf16.mxu0 %v2937
    %8126 = vmatpush1.bf16.msra.mxu0 %v2936
    %8127 = vmatprep.subr.bf16.mxu0 %v2945
    %8128 = vmatpush1.bf16.msra.mxu0 %v2944
    %8129 = vmatprep.subr.bf16.mxu0 %v2953
    %8130 = vmatpush1.bf16.msra.mxu0 %v2952
    %8131 = vmatprep.subr.bf16.mxu0 %v2961
    %8132 = vmatpush1.bf16.msra.mxu0 %v2960
    %8133 = vmatprep.subr.bf16.mxu0 %v2969
    %8134 = vmatpush1.bf16.msra.mxu0 %v2968
    %8135 = vmatprep.subr.bf16.mxu0 %v2977
    %8136 = vmatpush1.bf16.msra.mxu0 %v2976
    %8137 = vmatprep.subr.bf16.mxu0 %v2985
    %8138 = vmatpush1.bf16.msra.mxu0 %v2984
    %8139 = vmatprep.subr.bf16.mxu0 %v2993
    %8140 = vmatpush1.bf16.msra.mxu0 %v2992
    %8141 = vmatprep.subr.bf16.mxu0 %v3001
    %8142 = vmatpush1.bf16.msra.mxu0 %v3000
    %8143 = vmatprep.subr.bf16.mxu0 %v3009
    %8144 = vmatpush1.bf16.msra.mxu0 %v3008
    %8145 = vmatprep.subr.bf16.mxu0 %v3017
    %8146 = vmatpush1.bf16.msra.mxu0 %v3016
    %8147 = vmatprep.mubr.bf16.mxu0 %v7827
    %8148 = vmatmul.mubr.bf16.gmra.mrb[0].mxu0 %v7826
    %v8149 = vpop.f32.mrb[0].mxu0
    %v8150 = vadd.f32 %v8109, %v8149
    %v8151 = vpop.f32.mrb[0].mxu0
    %v8152 = vadd.f32 %v8111, %v8151
    %v8153 = vpop.f32.mrb[0].mxu0
    %v8154 = vpop.f32.mrb[0].mxu0
    %8155 = vdwg.mxu0
    %v8156 = vxor.u32 %v7904, 2147483648
    %v8157 = vxor.u32 %v7906, 2147483648
    %v8158 = vmul.f32 %v8156, 1.442695
    %v8159 = vpow.pop %v8158
    %v8160 = vmul.f32 %v8157, 1.442695
    %v8161 = vpow.pop %v8160
    %v8162 = vadd.f32 %v8159, 1.0
    %v8163 = vadd.f32 %v8161, 1.0
    %v8164 = vrcp.pop %v8162
    %v8165 = vmul.f32 1.0, %v8164
    %v8166 = vrcp.pop %v8163
    %v8167 = vmul.f32 1.0, %v8166
    %v8168 = vxor.u32 %v7986, 2147483648
    %v8169 = vxor.u32 %v7988, 2147483648
    %v8170 = vmul.f32 %v8168, 1.442695
    %v8171 = vpow.pop %v8170
    %v8172 = vmul.f32 %v8169, 1.442695
    %v8173 = vpow.pop %v8172
    %v8174 = vadd.f32 %v8171, 1.0
    %v8175 = vadd.f32 %v8173, 1.0
    %v8176 = vrcp.pop %v8174
    %v8177 = vmul.f32 1.0, %v8176
    %v8178 = vrcp.pop %v8175
    %v8179 = vmul.f32 1.0, %v8178
    %v8180 = vtanh.pop %v8068
    %v8181 = vtanh.pop %v8070
    %v8182 = vxor.u32 %v8150, 2147483648
    %v8183 = vxor.u32 %v8152, 2147483648
    %v8184 = vmul.f32 %v8182, 1.442695
    %v8185 = vpow.pop %v8184
    %v8186 = vmul.f32 %v8183, 1.442695
    %v8187 = vpow.pop %v8186
    %v8188 = vadd.f32 %v8185, 1.0
    %v8189 = vadd.f32 %v8187, 1.0
    %v8190 = vrcp.pop %v8188
    %v8191 = vmul.f32 1.0, %v8190
    %v8192 = vrcp.pop %v8189
    %v8193 = vmul.f32 1.0, %v8192
    %v8194 = vmul.f32 %v8177, %v7439
    %v8195 = vmul.f32 %v8179, %v7440
    %v8196 = vmul.f32 %v8165, %v8180
    %v8197 = vmul.f32 %v8167, %v8181
    %v8198 = vadd.f32 %v8194, %v8196
    %v8199 = vadd.f32 %v8195, %v8197
    %v8200 = vtanh.pop %v8198
    %v8201 = vtanh.pop %v8199
    %v8202 = vmul.f32 %v8191, %v8200
    %v8203 = vmul.f32 %v8193, %v8201
    %s8204 = scalar_lea.vmem [#allocation6], 56
    %v8205 = vld [vmem:[%s8204] sm:$0xff]
    %v8206 = vpack.c.bf16 %v8205, %v8205
    %8207 = vmatprep.subr.bf16.mxu0 %v1231
    %8208 = vmatpush1.bf16.msra.mxu0 %v1230
    %8209 = vmatprep.subr.bf16.mxu0 %v1239
    %8210 = vmatpush1.bf16.msra.mxu0 %v1238
    %8211 = vmatprep.subr.bf16.mxu0 %v1247
    %8212 = vmatpush1.bf16.msra.mxu0 %v1246
    %8213 = vmatprep.subr.bf16.mxu0 %v1255
    %8214 = vmatpush1.bf16.msra.mxu0 %v1254
    %8215 = vmatprep.subr.bf16.mxu0 %v1263
    %8216 = vmatpush1.bf16.msra.mxu0 %v1262
    %8217 = vmatprep.subr.bf16.mxu0 %v1271
    %8218 = vmatpush1.bf16.msra.mxu0 %v1270
    %8219 = vmatprep.subr.bf16.mxu0 %v1279
    %8220 = vmatpush1.bf16.msra.mxu0 %v1278
    %8221 = vmatprep.subr.bf16.mxu0 %v1287
    %8222 = vmatpush1.bf16.msra.mxu0 %v1286
    %8223 = vmatprep.subr.bf16.mxu0 %v1295
    %8224 = vmatpush1.bf16.msra.mxu0 %v1294
    %8225 = vmatprep.subr.bf16.mxu0 %v1303
    %8226 = vmatpush1.bf16.msra.mxu0 %v1302
    %8227 = vmatprep.subr.bf16.mxu0 %v1311
    %8228 = vmatpush1.bf16.msra.mxu0 %v1310
    %8229 = vmatprep.subr.bf16.mxu0 %v1319
    %8230 = vmatpush1.bf16.msra.mxu0 %v1318
    %8231 = vmatprep.subr.bf16.mxu0 %v1327
    %8232 = vmatpush1.bf16.msra.mxu0 %v1326
    %8233 = vmatprep.subr.bf16.mxu0 %v1335
    %8234 = vmatpush1.bf16.msra.mxu0 %v1334
    %8235 = vmatprep.subr.bf16.mxu0 %v1343
    %8236 = vmatpush1.bf16.msra.mxu0 %v1342
    %8237 = vmatprep.subr.bf16.mxu0 %v1351
    %8238 = vmatpush1.bf16.msra.mxu0 %v1350
    %8239 = vmatprep.mubr.bf16.mxu0 %v7824
    %8240 = vmatmul.mubr.bf16.gmra.mrb[0].mxu0 %v8206
    %v8241 = vpop.f32.mrb[0].mxu0
    %v8242 = vadd.f32 %v563, %v8241
    %v8243 = vpop.f32.mrb[0].mxu0
    %v8244 = vadd.f32 %v567, %v8243
    %v8245 = vpop.f32.mrb[0].mxu0
    %v8246 = vpop.f32.mrb[0].mxu0
    %8247 = vdwg.mxu0
    %8248 = vmatprep.subr.bf16.mxu0 %v1359
    %8249 = vmatpush1.bf16.msra.mxu0 %v1358
    %8250 = vmatprep.subr.bf16.mxu0 %v1367
    %8251 = vmatpush1.bf16.msra.mxu0 %v1366
    %8252 = vmatprep.subr.bf16.mxu0 %v1375
    %8253 = vmatpush1.bf16.msra.mxu0 %v1374
    %8254 = vmatprep.subr.bf16.mxu0 %v1383
    %8255 = vmatpush1.bf16.msra.mxu0 %v1382
    %8256 = vmatprep.subr.bf16.mxu0 %v1391
    %8257 = vmatpush1.bf16.msra.mxu0 %v1390
    %8258 = vmatprep.subr.bf16.mxu0 %v1399
    %8259 = vmatpush1.bf16.msra.mxu0 %v1398
    %8260 = vmatprep.subr.bf16.mxu0 %v1407
    %8261 = vmatpush1.bf16.msra.mxu0 %v1406
    %8262 = vmatprep.subr.bf16.mxu0 %v1415
    %8263 = vmatpush1.bf16.msra.mxu0 %v1414
    %8264 = vmatprep.subr.bf16.mxu0 0
    %8265 = vmatpush1.bf16.msra.mxu0 0
    %8266 = vmatprep.subr.bf16.mxu0 0
    %8267 = vmatpush1.bf16.msra.mxu0 0
    %8268 = vmatprep.subr.bf16.mxu0 0
    %8269 = vmatpush1.bf16.msra.mxu0 0
    %8270 = vmatprep.subr.bf16.mxu0 0
    %8271 = vmatpush1.bf16.msra.mxu0 0
    %8272 = vmatprep.subr.bf16.mxu0 0
    %8273 = vmatpush1.bf16.msra.mxu0 0
    %8274 = vmatprep.subr.bf16.mxu0 0
    %8275 = vmatpush1.bf16.msra.mxu0 0
    %8276 = vmatprep.subr.bf16.mxu0 0
    %8277 = vmatpush1.bf16.msra.mxu0 0
    %8278 = vmatprep.subr.bf16.mxu0 0
    %8279 = vmatpush1.bf16.msra.mxu0 0
    %8280 = vmatprep.mubr.bf16.mxu0 0
    %8281 = vmatmul.mubr.bf16.gmra.mrb[0].mxu0 %v7825
    %v8282 = vpop.f32.mrb[0].mxu0
    %v8283 = vadd.f32 %v8242, %v8282
    %v8284 = vpop.f32.mrb[0].mxu0
    %v8285 = vadd.f32 %v8244, %v8284
    %v8286 = vpop.f32.mrb[0].mxu0
    %v8287 = vpop.f32.mrb[0].mxu0
    %8288 = vdwg.mxu0
    %8289 = vmatprep.subr.bf16.mxu0 %v1233
    %8290 = vmatpush1.bf16.msra.mxu0 %v1232
    %8291 = vmatprep.subr.bf16.mxu0 %v1241
    %8292 = vmatpush1.bf16.msra.mxu0 %v1240
    %8293 = vmatprep.subr.bf16.mxu0 %v1249
    %8294 = vmatpush1.bf16.msra.mxu0 %v1248
    %8295 = vmatprep.subr.bf16.mxu0 %v1257
    %8296 = vmatpush1.bf16.msra.mxu0 %v1256
    %8297 = vmatprep.subr.bf16.mxu0 %v1265
    %8298 = vmatpush1.bf16.msra.mxu0 %v1264
    %8299 = vmatprep.subr.bf16.mxu0 %v1273
    %8300 = vmatpush1.bf16.msra.mxu0 %v1272
    %8301 = vmatprep.subr.bf16.mxu0 %v1281
    %8302 = vmatpush1.bf16.msra.mxu0 %v1280
    %8303 = vmatprep.subr.bf16.mxu0 %v1289
    %8304 = vmatpush1.bf16.msra.mxu0 %v1288
    %8305 = vmatprep.subr.bf16.mxu0 %v1297
    %8306 = vmatpush1.bf16.msra.mxu0 %v1296
    %8307 = vmatprep.subr.bf16.mxu0 %v1305
    %8308 = vmatpush1.bf16.msra.mxu0 %v1304
    %8309 = vmatprep.subr.bf16.mxu0 %v1313
    %8310 = vmatpush1.bf16.msra.mxu0 %v1312
    %8311 = vmatprep.subr.bf16.mxu0 %v1321
    %8312 = vmatpush1.bf16.msra.mxu0 %v1320
    %8313 = vmatprep.subr.bf16.mxu0 %v1329
    %8314 = vmatpush1.bf16.msra.mxu0 %v1328
    %8315 = vmatprep.subr.bf16.mxu0 %v1337
    %8316 = vmatpush1.bf16.msra.mxu0 %v1336
    %8317 = vmatprep.subr.bf16.mxu0 %v1345
    %8318 = vmatpush1.bf16.msra.mxu0 %v1344
    %8319 = vmatprep.subr.bf16.mxu0 %v1353
    %8320 = vmatpush1.bf16.msra.mxu0 %v1352
    %8321 = vmatprep.mubr.bf16.mxu0 %v7824
    %8322 = vmatmul.mubr.bf16.gmra.mrb[0].mxu0 %v8206
    %v8323 = vpop.f32.mrb[0].mxu0
    %v8324 = vadd.f32 %v571, %v8323
    %v8325 = vpop.f32.mrb[0].mxu0
    %v8326 = vadd.f32 %v575, %v8325
    %v8327 = vpop.f32.mrb[0].mxu0
    %v8328 = vpop.f32.mrb[0].mxu0
    %8329 = vdwg.mxu0
    %8330 = vmatprep.subr.bf16.mxu0 %v1361
    %8331 = vmatpush1.bf16.msra.mxu0 %v1360
    %8332 = vmatprep.subr.bf16.mxu0 %v1369
    %8333 = vmatpush1.bf16.msra.mxu0 %v1368
    %8334 = vmatprep.subr.bf16.mxu0 %v1377
    %8335 = vmatpush1.bf16.msra.mxu0 %v1376
    %8336 = vmatprep.subr.bf16.mxu0 %v1385
    %8337 = vmatpush1.bf16.msra.mxu0 %v1384
    %8338 = vmatprep.subr.bf16.mxu0 %v1393
    %8339 = vmatpush1.bf16.msra.mxu0 %v1392
    %8340 = vmatprep.subr.bf16.mxu0 %v1401
    %8341 = vmatpush1.bf16.msra.mxu0 %v1400
    %8342 = vmatprep.subr.bf16.mxu0 %v1409
    %8343 = vmatpush1.bf16.msra.mxu0 %v1408
    %8344 = vmatprep.subr.bf16.mxu0 %v1417
    %8345 = vmatpush1.bf16.msra.mxu0 %v1416
    %8346 = vmatprep.subr.bf16.mxu0 0
    %8347 = vmatpush1.bf16.msra.mxu0 0
    %8348 = vmatprep.subr.bf16.mxu0 0
    %8349 = vmatpush1.bf16.msra.mxu0 0
    %8350 = vmatprep.subr.bf16.mxu0 0
    %8351 = vmatpush1.bf16.msra.mxu0 0
    %8352 = vmatprep.subr.bf16.mxu0 0
    %8353 = vmatpush1.bf16.msra.mxu0 0
    %8354 = vmatprep.subr.bf16.mxu0 0
    %8355 = vmatpush1.bf16.msra.mxu0 0
    %8356 = vmatprep.subr.bf16.mxu0 0
    %8357 = vmatpush1.bf16.msra.mxu0 0
    %8358 = vmatprep.subr.bf16.mxu0 0
    %8359 = vmatpush1.bf16.msra.mxu0 0
    %8360 = vmatprep.subr.bf16.mxu0 0
    %8361 = vmatpush1.bf16.msra.mxu0 0
    %8362 = vmatprep.mubr.bf16.mxu0 0
    %8363 = vmatmul.mubr.bf16.gmra.mrb[0].mxu0 %v7825
    %v8364 = vpop.f32.mrb[0].mxu0
    %v8365 = vadd.f32 %v8324, %v8364
    %v8366 = vpop.f32.mrb[0].mxu0
    %v8367 = vadd.f32 %v8326, %v8366
    %v8368 = vpop.f32.mrb[0].mxu0
    %v8369 = vpop.f32.mrb[0].mxu0
    %8370 = vdwg.mxu0
    %8371 = vmatprep.subr.bf16.mxu0 %v1235
    %8372 = vmatpush1.bf16.msra.mxu0 %v1234
    %8373 = vmatprep.subr.bf16.mxu0 %v1243
    %8374 = vmatpush1.bf16.msra.mxu0 %v1242
    %8375 = vmatprep.subr.bf16.mxu0 %v1251
    %8376 = vmatpush1.bf16.msra.mxu0 %v1250
    %8377 = vmatprep.subr.bf16.mxu0 %v1259
    %8378 = vmatpush1.bf16.msra.mxu0 %v1258
    %8379 = vmatprep.subr.bf16.mxu0 %v1267
    %8380 = vmatpush1.bf16.msra.mxu0 %v1266
    %8381 = vmatprep.subr.bf16.mxu0 %v1275
    %8382 = vmatpush1.bf16.msra.mxu0 %v1274
    %8383 = vmatprep.subr.bf16.mxu0 %v1283
    %8384 = vmatpush1.bf16.msra.mxu0 %v1282
    %8385 = vmatprep.subr.bf16.mxu0 %v1291
    %8386 = vmatpush1.bf16.msra.mxu0 %v1290
    %8387 = vmatprep.subr.bf16.mxu0 %v1299
    %8388 = vmatpush1.bf16.msra.mxu0 %v1298
    %8389 = vmatprep.subr.bf16.mxu0 %v1307
    %8390 = vmatpush1.bf16.msra.mxu0 %v1306
    %8391 = vmatprep.subr.bf16.mxu0 %v1315
    %8392 = vmatpush1.bf16.msra.mxu0 %v1314
    %8393 = vmatprep.subr.bf16.mxu0 %v1323
    %8394 = vmatpush1.bf16.msra.mxu0 %v1322
    %8395 = vmatprep.subr.bf16.mxu0 %v1331
    %8396 = vmatpush1.bf16.msra.mxu0 %v1330
    %8397 = vmatprep.subr.bf16.mxu0 %v1339
    %8398 = vmatpush1.bf16.msra.mxu0 %v1338
    %8399 = vmatprep.subr.bf16.mxu0 %v1347
    %8400 = vmatpush1.bf16.msra.mxu0 %v1346
    %8401 = vmatprep.subr.bf16.mxu0 %v1355
    %8402 = vmatpush1.bf16.msra.mxu0 %v1354
    %8403 = vmatprep.mubr.bf16.mxu0 %v7824
    %8404 = vmatmul.mubr.bf16.gmra.mrb[0].mxu0 %v8206
    %v8405 = vpop.f32.mrb[0].mxu0
    %v8406 = vadd.f32 %v579, %v8405
    %v8407 = vpop.f32.mrb[0].mxu0
    %v8408 = vadd.f32 %v583, %v8407
    %v8409 = vpop.f32.mrb[0].mxu0
    %v8410 = vpop.f32.mrb[0].mxu0
    %8411 = vdwg.mxu0
    %8412 = vmatprep.subr.bf16.mxu0 %v1363
    %8413 = vmatpush1.bf16.msra.mxu0 %v1362
    %8414 = vmatprep.subr.bf16.mxu0 %v1371
    %8415 = vmatpush1.bf16.msra.mxu0 %v1370
    %8416 = vmatprep.subr.bf16.mxu0 %v1379
    %8417 = vmatpush1.bf16.msra.mxu0 %v1378
    %8418 = vmatprep.subr.bf16.mxu0 %v1387
    %8419 = vmatpush1.bf16.msra.mxu0 %v1386
    %8420 = vmatprep.subr.bf16.mxu0 %v1395
    %8421 = vmatpush1.bf16.msra.mxu0 %v1394
    %8422 = vmatprep.subr.bf16.mxu0 %v1403
    %8423 = vmatpush1.bf16.msra.mxu0 %v1402
    %8424 = vmatprep.subr.bf16.mxu0 %v1411
    %8425 = vmatpush1.bf16.msra.mxu0 %v1410
    %8426 = vmatprep.subr.bf16.mxu0 %v1419
    %8427 = vmatpush1.bf16.msra.mxu0 %v1418
    %8428 = vmatprep.subr.bf16.mxu0 0
    %8429 = vmatpush1.bf16.msra.mxu0 0
    %8430 = vmatprep.subr.bf16.mxu0 0
    %8431 = vmatpush1.bf16.msra.mxu0 0
    %8432 = vmatprep.subr.bf16.mxu0 0
    %8433 = vmatpush1.bf16.msra.mxu0 0
    %8434 = vmatprep.subr.bf16.mxu0 0
    %8435 = vmatpush1.bf16.msra.mxu0 0
    %8436 = vmatprep.subr.bf16.mxu0 0
    %8437 = vmatpush1.bf16.msra.mxu0 0
    %8438 = vmatprep.subr.bf16.mxu0 0
    %8439 = vmatpush1.bf16.msra.mxu0 0
    %8440 = vmatprep.subr.bf16.mxu0 0
    %8441 = vmatpush1.bf16.msra.mxu0 0
    %8442 = vmatprep.subr.bf16.mxu0 0
    %8443 = vmatpush1.bf16.msra.mxu0 0
    %8444 = vmatprep.mubr.bf16.mxu0 0
    %8445 = vmatmul.mubr.bf16.gmra.mrb[0].mxu0 %v7825
    %v8446 = vpop.f32.mrb[0].mxu0
    %v8447 = vadd.f32 %v8406, %v8446
    %v8448 = vpop.f32.mrb[0].mxu0
    %v8449 = vadd.f32 %v8408, %v8448
    %v8450 = vpop.f32.mrb[0].mxu0
    %v8451 = vpop.f32.mrb[0].mxu0
    %8452 = vdwg.mxu0
    %8453 = vmatprep.subr.bf16.mxu0 %v1237
    %8454 = vmatpush1.bf16.msra.mxu0 %v1236
    %8455 = vmatprep.subr.bf16.mxu0 %v1245
    %8456 = vmatpush1.bf16.msra.mxu0 %v1244
    %8457 = vmatprep.subr.bf16.mxu0 %v1253
    %8458 = vmatpush1.bf16.msra.mxu0 %v1252
    %8459 = vmatprep.subr.bf16.mxu0 %v1261
    %8460 = vmatpush1.bf16.msra.mxu0 %v1260
    %8461 = vmatprep.subr.bf16.mxu0 %v1269
    %8462 = vmatpush1.bf16.msra.mxu0 %v1268
    %8463 = vmatprep.subr.bf16.mxu0 %v1277
    %8464 = vmatpush1.bf16.msra.mxu0 %v1276
    %8465 = vmatprep.subr.bf16.mxu0 %v1285
    %8466 = vmatpush1.bf16.msra.mxu0 %v1284
    %8467 = vmatprep.subr.bf16.mxu0 %v1293
    %8468 = vmatpush1.bf16.msra.mxu0 %v1292
    %8469 = vmatprep.subr.bf16.mxu0 %v1301
    %8470 = vmatpush1.bf16.msra.mxu0 %v1300
    %8471 = vmatprep.subr.bf16.mxu0 %v1309
    %8472 = vmatpush1.bf16.msra.mxu0 %v1308
    %8473 = vmatprep.subr.bf16.mxu0 %v1317
    %8474 = vmatpush1.bf16.msra.mxu0 %v1316
    %8475 = vmatprep.subr.bf16.mxu0 %v1325
    %8476 = vmatpush1.bf16.msra.mxu0 %v1324
    %8477 = vmatprep.subr.bf16.mxu0 %v1333
    %8478 = vmatpush1.bf16.msra.mxu0 %v1332
    %8479 = vmatprep.subr.bf16.mxu0 %v1341
    %8480 = vmatpush1.bf16.msra.mxu0 %v1340
    %8481 = vmatprep.subr.bf16.mxu0 %v1349
    %8482 = vmatpush1.bf16.msra.mxu0 %v1348
    %8483 = vmatprep.subr.bf16.mxu0 %v1357
    %8484 = vmatpush1.bf16.msra.mxu0 %v1356
    %8485 = vmatprep.mubr.bf16.mxu0 %v7824
    %8486 = vmatmul.mubr.bf16.gmra.mrb[0].mxu0 %v8206
    %v8487 = vpop.f32.mrb[0].mxu0
    %v8488 = vadd.f32 %v587, %v8487
    %v8489 = vpop.f32.mrb[0].mxu0
    %v8490 = vadd.f32 %v591, %v8489
    %v8491 = vpop.f32.mrb[0].mxu0
    %v8492 = vpop.f32.mrb[0].mxu0
    %8493 = vdwg.mxu0
    %8494 = vmatprep.subr.bf16.mxu0 %v1365
    %8495 = vmatpush1.bf16.msra.mxu0 %v1364
    %8496 = vmatprep.subr.bf16.mxu0 %v1373
    %8497 = vmatpush1.bf16.msra.mxu0 %v1372
    %8498 = vmatprep.subr.bf16.mxu0 %v1381
    %8499 = vmatpush1.bf16.msra.mxu0 %v1380
    %8500 = vmatprep.subr.bf16.mxu0 %v1389
    %8501 = vmatpush1.bf16.msra.mxu0 %v1388
    %8502 = vmatprep.subr.bf16.mxu0 %v1397
    %8503 = vmatpush1.bf16.msra.mxu0 %v1396
    %8504 = vmatprep.subr.bf16.mxu0 %v1405
    %8505 = vmatpush1.bf16.msra.mxu0 %v1404
    %8506 = vmatprep.subr.bf16.mxu0 %v1413
    %8507 = vmatpush1.bf16.msra.mxu0 %v1412
    %8508 = vmatprep.subr.bf16.mxu0 %v1421
    %8509 = vmatpush1.bf16.msra.mxu0 %v1420
    %8510 = vmatprep.subr.bf16.mxu0 0
    %8511 = vmatpush1.bf16.msra.mxu0 0
    %8512 = vmatprep.subr.bf16.mxu0 0
    %8513 = vmatpush1.bf16.msra.mxu0 0
    %8514 = vmatprep.subr.bf16.mxu0 0
    %8515 = vmatpush1.bf16.msra.mxu0 0
    %8516 = vmatprep.subr.bf16.mxu0 0
    %8517 = vmatpush1.bf16.msra.mxu0 0
    %8518 = vmatprep.subr.bf16.mxu0 0
    %8519 = vmatpush1.bf16.msra.mxu0 0
    %8520 = vmatprep.subr.bf16.mxu0 0
    %8521 = vmatpush1.bf16.msra.mxu0 0
    %8522 = vmatprep.subr.bf16.mxu0 0
    %8523 = vmatpush1.bf16.msra.mxu0 0
    %8524 = vmatprep.subr.bf16.mxu0 0
    %8525 = vmatpush1.bf16.msra.mxu0 0
    %8526 = vmatprep.mubr.bf16.mxu0 0
    %8527 = vmatmul.mubr.bf16.gmra.mrb[0].mxu0 %v7825
    %v8528 = vpop.f32.mrb[0].mxu0
    %v8529 = vadd.f32 %v8488, %v8528
    %v8530 = vpop.f32.mrb[0].mxu0
    %v8531 = vadd.f32 %v8490, %v8530
    %v8532 = vpop.f32.mrb[0].mxu0
    %v8533 = vpop.f32.mrb[0].mxu0
    %8534 = vdwg.mxu0
    %v8535 = vxor.u32 %v8283, 2147483648
    %v8536 = vxor.u32 %v8285, 2147483648
    %v8537 = vmul.f32 %v8535, 1.442695
    %v8538 = vpow.pop %v8537
    %v8539 = vmul.f32 %v8536, 1.442695
    %v8540 = vpow.pop %v8539
    %v8541 = vadd.f32 %v8538, 1.0
    %v8542 = vadd.f32 %v8540, 1.0
    %v8543 = vrcp.pop %v8541
    %v8544 = vmul.f32 1.0, %v8543
    %v8545 = vrcp.pop %v8542
    %v8546 = vmul.f32 1.0, %v8545
    %v8547 = vxor.u32 %v8365, 2147483648
    %v8548 = vxor.u32 %v8367, 2147483648
    %v8549 = vmul.f32 %v8547, 1.442695
    %v8550 = vpow.pop %v8549
    %v8551 = vmul.f32 %v8548, 1.442695
    %v8552 = vpow.pop %v8551
    %v8553 = vadd.f32 %v8550, 1.0
    %v8554 = vadd.f32 %v8552, 1.0
    %v8555 = vrcp.pop %v8553
    %v8556 = vmul.f32 1.0, %v8555
    %v8557 = vrcp.pop %v8554
    %v8558 = vmul.f32 1.0, %v8557
    %v8559 = vtanh.pop %v8447
    %v8560 = vtanh.pop %v8449
    %v8561 = vxor.u32 %v8529, 2147483648
    %v8562 = vxor.u32 %v8531, 2147483648
    %v8563 = vmul.f32 %v8561, 1.442695
    %v8564 = vpow.pop %v8563
    %v8565 = vmul.f32 %v8562, 1.442695
    %v8566 = vpow.pop %v8565
    %v8567 = vadd.f32 %v8564, 1.0
    %v8568 = vadd.f32 %v8566, 1.0
    %v8569 = vrcp.pop %v8567
    %v8570 = vmul.f32 1.0, %v8569
    %v8571 = vrcp.pop %v8568
    %v8572 = vmul.f32 1.0, %v8571
    %v8573 = vmul.f32 %v8556, %v7818
    %v8574 = vmul.f32 %v8558, %v7819
    %v8575 = vmul.f32 %v8544, %v8559
    %v8576 = vmul.f32 %v8546, %v8560
    %v8577 = vadd.f32 %v8573, %v8575
    %v8578 = vadd.f32 %v8574, %v8576
    %v8579 = vtanh.pop %v8577
    %v8580 = vtanh.pop %v8578
    %v8581 = vmul.f32 %v8570, %v8579
    %v8582 = vmul.f32 %v8572, %v8580
    %v8583 = vpack.c.bf16 %v8581, %v8581
    %v8584 = vpack.c.bf16 %v8582, %v8582
    %v8585 = vpack.c.bf16 %v8202, %v8202
    %v8586 = vpack.c.bf16 %v8203, %v8203
    %8587 = vmatprep.subr.bf16.mxu0 %v2763
    %8588 = vmatpush1.bf16.msra.mxu0 %v2762
    %8589 = vmatprep.subr.bf16.mxu0 %v2771
    %8590 = vmatpush1.bf16.msra.mxu0 %v2770
    %8591 = vmatprep.subr.bf16.mxu0 %v2779
    %8592 = vmatpush1.bf16.msra.mxu0 %v2778
    %8593 = vmatprep.subr.bf16.mxu0 %v2787
    %8594 = vmatpush1.bf16.msra.mxu0 %v2786
    %8595 = vmatprep.subr.bf16.mxu0 %v2795
    %8596 = vmatpush1.bf16.msra.mxu0 %v2794
    %8597 = vmatprep.subr.bf16.mxu0 %v2803
    %8598 = vmatpush1.bf16.msra.mxu0 %v2802
    %8599 = vmatprep.subr.bf16.mxu0 %v2811
    %8600 = vmatpush1.bf16.msra.mxu0 %v2810
    %8601 = vmatprep.subr.bf16.mxu0 %v2819
    %8602 = vmatpush1.bf16.msra.mxu0 %v2818
    %8603 = vmatprep.subr.bf16.mxu0 %v2827
    %8604 = vmatpush1.bf16.msra.mxu0 %v2826
    %8605 = vmatprep.subr.bf16.mxu0 %v2835
    %8606 = vmatpush1.bf16.msra.mxu0 %v2834
    %8607 = vmatprep.subr.bf16.mxu0 %v2843
    %8608 = vmatpush1.bf16.msra.mxu0 %v2842
    %8609 = vmatprep.subr.bf16.mxu0 %v2851
    %8610 = vmatpush1.bf16.msra.mxu0 %v2850
    %8611 = vmatprep.subr.bf16.mxu0 %v2859
    %8612 = vmatpush1.bf16.msra.mxu0 %v2858
    %8613 = vmatprep.subr.bf16.mxu0 %v2867
    %8614 = vmatpush1.bf16.msra.mxu0 %v2866
    %8615 = vmatprep.subr.bf16.mxu0 %v2875
    %8616 = vmatpush1.bf16.msra.mxu0 %v2874
    %8617 = vmatprep.subr.bf16.mxu0 %v2883
    %8618 = vmatpush1.bf16.msra.mxu0 %v2882
    %8619 = vmatprep.mubr.bf16.mxu0 %v8584
    %8620 = vmatmul.mubr.bf16.gmra.mrb[0].mxu0 %v8583
    %v8621 = vpop.f32.mrb[0].mxu0
    %v8622 = vadd.f32 %v605, %v8621
    %v8623 = vpop.f32.mrb[0].mxu0
    %v8624 = vadd.f32 %v609, %v8623
    %v8625 = vpop.f32.mrb[0].mxu0
    %v8626 = vpop.f32.mrb[0].mxu0
    %8627 = vdwg.mxu0
    %8628 = vmatprep.subr.bf16.mxu0 %v2891
    %8629 = vmatpush1.bf16.msra.mxu0 %v2890
    %8630 = vmatprep.subr.bf16.mxu0 %v2899
    %8631 = vmatpush1.bf16.msra.mxu0 %v2898
    %8632 = vmatprep.subr.bf16.mxu0 %v2907
    %8633 = vmatpush1.bf16.msra.mxu0 %v2906
    %8634 = vmatprep.subr.bf16.mxu0 %v2915
    %8635 = vmatpush1.bf16.msra.mxu0 %v2914
    %8636 = vmatprep.subr.bf16.mxu0 %v2923
    %8637 = vmatpush1.bf16.msra.mxu0 %v2922
    %8638 = vmatprep.subr.bf16.mxu0 %v2931
    %8639 = vmatpush1.bf16.msra.mxu0 %v2930
    %8640 = vmatprep.subr.bf16.mxu0 %v2939
    %8641 = vmatpush1.bf16.msra.mxu0 %v2938
    %8642 = vmatprep.subr.bf16.mxu0 %v2947
    %8643 = vmatpush1.bf16.msra.mxu0 %v2946
    %8644 = vmatprep.subr.bf16.mxu0 %v2955
    %8645 = vmatpush1.bf16.msra.mxu0 %v2954
    %8646 = vmatprep.subr.bf16.mxu0 %v2963
    %8647 = vmatpush1.bf16.msra.mxu0 %v2962
    %8648 = vmatprep.subr.bf16.mxu0 %v2971
    %8649 = vmatpush1.bf16.msra.mxu0 %v2970
    %8650 = vmatprep.subr.bf16.mxu0 %v2979
    %8651 = vmatpush1.bf16.msra.mxu0 %v2978
    %8652 = vmatprep.subr.bf16.mxu0 %v2987
    %8653 = vmatpush1.bf16.msra.mxu0 %v2986
    %8654 = vmatprep.subr.bf16.mxu0 %v2995
    %8655 = vmatpush1.bf16.msra.mxu0 %v2994
    %8656 = vmatprep.subr.bf16.mxu0 %v3003
    %8657 = vmatpush1.bf16.msra.mxu0 %v3002
    %8658 = vmatprep.subr.bf16.mxu0 %v3011
    %8659 = vmatpush1.bf16.msra.mxu0 %v3010
    %8660 = vmatprep.mubr.bf16.mxu0 %v8586
    %8661 = vmatmul.mubr.bf16.gmra.mrb[0].mxu0 %v8585
    %v8662 = vpop.f32.mrb[0].mxu0
    %v8663 = vadd.f32 %v8622, %v8662
    %v8664 = vpop.f32.mrb[0].mxu0
    %v8665 = vadd.f32 %v8624, %v8664
    %v8666 = vpop.f32.mrb[0].mxu0
    %v8667 = vpop.f32.mrb[0].mxu0
    %8668 = vdwg.mxu0
    %8669 = vmatprep.subr.bf16.mxu0 %v2765
    %8670 = vmatpush1.bf16.msra.mxu0 %v2764
    %8671 = vmatprep.subr.bf16.mxu0 %v2773
    %8672 = vmatpush1.bf16.msra.mxu0 %v2772
    %8673 = vmatprep.subr.bf16.mxu0 %v2781
    %8674 = vmatpush1.bf16.msra.mxu0 %v2780
    %8675 = vmatprep.subr.bf16.mxu0 %v2789
    %8676 = vmatpush1.bf16.msra.mxu0 %v2788
    %8677 = vmatprep.subr.bf16.mxu0 %v2797
    %8678 = vmatpush1.bf16.msra.mxu0 %v2796
    %8679 = vmatprep.subr.bf16.mxu0 %v2805
    %8680 = vmatpush1.bf16.msra.mxu0 %v2804
    %8681 = vmatprep.subr.bf16.mxu0 %v2813
    %8682 = vmatpush1.bf16.msra.mxu0 %v2812
    %8683 = vmatprep.subr.bf16.mxu0 %v2821
    %8684 = vmatpush1.bf16.msra.mxu0 %v2820
    %8685 = vmatprep.subr.bf16.mxu0 %v2829
    %8686 = vmatpush1.bf16.msra.mxu0 %v2828
    %8687 = vmatprep.subr.bf16.mxu0 %v2837
    %8688 = vmatpush1.bf16.msra.mxu0 %v2836
    %8689 = vmatprep.subr.bf16.mxu0 %v2845
    %8690 = vmatpush1.bf16.msra.mxu0 %v2844
    %8691 = vmatprep.subr.bf16.mxu0 %v2853
    %8692 = vmatpush1.bf16.msra.mxu0 %v2852
    %8693 = vmatprep.subr.bf16.mxu0 %v2861
    %8694 = vmatpush1.bf16.msra.mxu0 %v2860
    %8695 = vmatprep.subr.bf16.mxu0 %v2869
    %8696 = vmatpush1.bf16.msra.mxu0 %v2868
    %8697 = vmatprep.subr.bf16.mxu0 %v2877
    %8698 = vmatpush1.bf16.msra.mxu0 %v2876
    %8699 = vmatprep.subr.bf16.mxu0 %v2885
    %8700 = vmatpush1.bf16.msra.mxu0 %v2884
    %8701 = vmatprep.mubr.bf16.mxu0 %v8584
    %8702 = vmatmul.mubr.bf16.gmra.mrb[0].mxu0 %v8583
    %v8703 = vpop.f32.mrb[0].mxu0
    %v8704 = vadd.f32 %v613, %v8703
    %v8705 = vpop.f32.mrb[0].mxu0
    %v8706 = vadd.f32 %v617, %v8705
    %v8707 = vpop.f32.mrb[0].mxu0
    %v8708 = vpop.f32.mrb[0].mxu0
    %8709 = vdwg.mxu0
    %8710 = vmatprep.subr.bf16.mxu0 %v2893
    %8711 = vmatpush1.bf16.msra.mxu0 %v2892
    %8712 = vmatprep.subr.bf16.mxu0 %v2901
    %8713 = vmatpush1.bf16.msra.mxu0 %v2900
    %8714 = vmatprep.subr.bf16.mxu0 %v2909
    %8715 = vmatpush1.bf16.msra.mxu0 %v2908
    %8716 = vmatprep.subr.bf16.mxu0 %v2917
    %8717 = vmatpush1.bf16.msra.mxu0 %v2916
    %8718 = vmatprep.subr.bf16.mxu0 %v2925
    %8719 = vmatpush1.bf16.msra.mxu0 %v2924
    %8720 = vmatprep.subr.bf16.mxu0 %v2933
    %8721 = vmatpush1.bf16.msra.mxu0 %v2932
    %8722 = vmatprep.subr.bf16.mxu0 %v2941
    %8723 = vmatpush1.bf16.msra.mxu0 %v2940
    %8724 = vmatprep.subr.bf16.mxu0 %v2949
    %8725 = vmatpush1.bf16.msra.mxu0 %v2948
    %8726 = vmatprep.subr.bf16.mxu0 %v2957
    %8727 = vmatpush1.bf16.msra.mxu0 %v2956
    %8728 = vmatprep.subr.bf16.mxu0 %v2965
    %8729 = vmatpush1.bf16.msra.mxu0 %v2964
    %8730 = vmatprep.subr.bf16.mxu0 %v2973
    %8731 = vmatpush1.bf16.msra.mxu0 %v2972
    %8732 = vmatprep.subr.bf16.mxu0 %v2981
    %8733 = vmatpush1.bf16.msra.mxu0 %v2980
    %8734 = vmatprep.subr.bf16.mxu0 %v2989
    %8735 = vmatpush1.bf16.msra.mxu0 %v2988
    %8736 = vmatprep.subr.bf16.mxu0 %v2997
    %8737 = vmatpush1.bf16.msra.mxu0 %v2996
    %8738 = vmatprep.subr.bf16.mxu0 %v3005
    %8739 = vmatpush1.bf16.msra.mxu0 %v3004
    %8740 = vmatprep.subr.bf16.mxu0 %v3013
    %8741 = vmatpush1.bf16.msra.mxu0 %v3012
    %8742 = vmatprep.mubr.bf16.mxu0 %v8586
    %8743 = vmatmul.mubr.bf16.gmra.mrb[0].mxu0 %v8585
    %v8744 = vpop.f32.mrb[0].mxu0
    %v8745 = vadd.f32 %v8704, %v8744
    %v8746 = vpop.f32.mrb[0].mxu0
    %v8747 = vadd.f32 %v8706, %v8746
    %v8748 = vpop.f32.mrb[0].mxu0
    %v8749 = vpop.f32.mrb[0].mxu0
    %8750 = vdwg.mxu0
    %8751 = vmatprep.subr.bf16.mxu0 %v2767
    %8752 = vmatpush1.bf16.msra.mxu0 %v2766
    %8753 = vmatprep.subr.bf16.mxu0 %v2775
    %8754 = vmatpush1.bf16.msra.mxu0 %v2774
    %8755 = vmatprep.subr.bf16.mxu0 %v2783
    %8756 = vmatpush1.bf16.msra.mxu0 %v2782
    %8757 = vmatprep.subr.bf16.mxu0 %v2791
    %8758 = vmatpush1.bf16.msra.mxu0 %v2790
    %8759 = vmatprep.subr.bf16.mxu0 %v2799
    %8760 = vmatpush1.bf16.msra.mxu0 %v2798
    %8761 = vmatprep.subr.bf16.mxu0 %v2807
    %8762 = vmatpush1.bf16.msra.mxu0 %v2806
    %8763 = vmatprep.subr.bf16.mxu0 %v2815
    %8764 = vmatpush1.bf16.msra.mxu0 %v2814
    %8765 = vmatprep.subr.bf16.mxu0 %v2823
    %8766 = vmatpush1.bf16.msra.mxu0 %v2822
    %8767 = vmatprep.subr.bf16.mxu0 %v2831
    %8768 = vmatpush1.bf16.msra.mxu0 %v2830
    %8769 = vmatprep.subr.bf16.mxu0 %v2839
    %8770 = vmatpush1.bf16.msra.mxu0 %v2838
    %8771 = vmatprep.subr.bf16.mxu0 %v2847
    %8772 = vmatpush1.bf16.msra.mxu0 %v2846
    %8773 = vmatprep.subr.bf16.mxu0 %v2855
    %8774 = vmatpush1.bf16.msra.mxu0 %v2854
    %8775 = vmatprep.subr.bf16.mxu0 %v2863
    %8776 = vmatpush1.bf16.msra.mxu0 %v2862
    %8777 = vmatprep.subr.bf16.mxu0 %v2871
    %8778 = vmatpush1.bf16.msra.mxu0 %v2870
    %8779 = vmatprep.subr.bf16.mxu0 %v2879
    %8780 = vmatpush1.bf16.msra.mxu0 %v2878
    %8781 = vmatprep.subr.bf16.mxu0 %v2887
    %8782 = vmatpush1.bf16.msra.mxu0 %v2886
    %8783 = vmatprep.mubr.bf16.mxu0 %v8584
    %8784 = vmatmul.mubr.bf16.gmra.mrb[0].mxu0 %v8583
    %v8785 = vpop.f32.mrb[0].mxu0
    %v8786 = vadd.f32 %v621, %v8785
    %v8787 = vpop.f32.mrb[0].mxu0
    %v8788 = vadd.f32 %v625, %v8787
    %v8789 = vpop.f32.mrb[0].mxu0
    %v8790 = vpop.f32.mrb[0].mxu0
    %8791 = vdwg.mxu0
    %8792 = vmatprep.subr.bf16.mxu0 %v2895
    %8793 = vmatpush1.bf16.msra.mxu0 %v2894
    %8794 = vmatprep.subr.bf16.mxu0 %v2903
    %8795 = vmatpush1.bf16.msra.mxu0 %v2902
    %8796 = vmatprep.subr.bf16.mxu0 %v2911
    %8797 = vmatpush1.bf16.msra.mxu0 %v2910
    %8798 = vmatprep.subr.bf16.mxu0 %v2919
    %8799 = vmatpush1.bf16.msra.mxu0 %v2918
    %8800 = vmatprep.subr.bf16.mxu0 %v2927
    %8801 = vmatpush1.bf16.msra.mxu0 %v2926
    %8802 = vmatprep.subr.bf16.mxu0 %v2935
    %8803 = vmatpush1.bf16.msra.mxu0 %v2934
    %8804 = vmatprep.subr.bf16.mxu0 %v2943
    %8805 = vmatpush1.bf16.msra.mxu0 %v2942
    %8806 = vmatprep.subr.bf16.mxu0 %v2951
    %8807 = vmatpush1.bf16.msra.mxu0 %v2950
    %8808 = vmatprep.subr.bf16.mxu0 %v2959
    %8809 = vmatpush1.bf16.msra.mxu0 %v2958
    %8810 = vmatprep.subr.bf16.mxu0 %v2967
    %8811 = vmatpush1.bf16.msra.mxu0 %v2966
    %8812 = vmatprep.subr.bf16.mxu0 %v2975
    %8813 = vmatpush1.bf16.msra.mxu0 %v2974
    %8814 = vmatprep.subr.bf16.mxu0 %v2983
    %8815 = vmatpush1.bf16.msra.mxu0 %v2982
    %8816 = vmatprep.subr.bf16.mxu0 %v2991
    %8817 = vmatpush1.bf16.msra.mxu0 %v2990
    %8818 = vmatprep.subr.bf16.mxu0 %v2999
    %8819 = vmatpush1.bf16.msra.mxu0 %v2998
    %8820 = vmatprep.subr.bf16.mxu0 %v3007
    %8821 = vmatpush1.bf16.msra.mxu0 %v3006
    %8822 = vmatprep.subr.bf16.mxu0 %v3015
    %8823 = vmatpush1.bf16.msra.mxu0 %v3014
    %8824 = vmatprep.mubr.bf16.mxu0 %v8586
    %8825 = vmatmul.mubr.bf16.gmra.mrb[0].mxu0 %v8585
    %v8826 = vpop.f32.mrb[0].mxu0
    %v8827 = vadd.f32 %v8786, %v8826
    %v8828 = vpop.f32.mrb[0].mxu0
    %v8829 = vadd.f32 %v8788, %v8828
    %v8830 = vpop.f32.mrb[0].mxu0
    %v8831 = vpop.f32.mrb[0].mxu0
    %8832 = vdwg.mxu0
    %8833 = vmatprep.subr.bf16.mxu0 %v2769
    %8834 = vmatpush1.bf16.msra.mxu0 %v2768
    %8835 = vmatprep.subr.bf16.mxu0 %v2777
    %8836 = vmatpush1.bf16.msra.mxu0 %v2776
    %8837 = vmatprep.subr.bf16.mxu0 %v2785
    %8838 = vmatpush1.bf16.msra.mxu0 %v2784
    %8839 = vmatprep.subr.bf16.mxu0 %v2793
    %8840 = vmatpush1.bf16.msra.mxu0 %v2792
    %8841 = vmatprep.subr.bf16.mxu0 %v2801
    %8842 = vmatpush1.bf16.msra.mxu0 %v2800
    %8843 = vmatprep.subr.bf16.mxu0 %v2809
    %8844 = vmatpush1.bf16.msra.mxu0 %v2808
    %8845 = vmatprep.subr.bf16.mxu0 %v2817
    %8846 = vmatpush1.bf16.msra.mxu0 %v2816
    %8847 = vmatprep.subr.bf16.mxu0 %v2825
    %8848 = vmatpush1.bf16.msra.mxu0 %v2824
    %8849 = vmatprep.subr.bf16.mxu0 %v2833
    %8850 = vmatpush1.bf16.msra.mxu0 %v2832
    %8851 = vmatprep.subr.bf16.mxu0 %v2841
    %8852 = vmatpush1.bf16.msra.mxu0 %v2840
    %8853 = vmatprep.subr.bf16.mxu0 %v2849
    %8854 = vmatpush1.bf16.msra.mxu0 %v2848
    %8855 = vmatprep.subr.bf16.mxu0 %v2857
    %8856 = vmatpush1.bf16.msra.mxu0 %v2856
    %8857 = vmatprep.subr.bf16.mxu0 %v2865
    %8858 = vmatpush1.bf16.msra.mxu0 %v2864
    %8859 = vmatprep.subr.bf16.mxu0 %v2873
    %8860 = vmatpush1.bf16.msra.mxu0 %v2872
    %8861 = vmatprep.subr.bf16.mxu0 %v2881
    %8862 = vmatpush1.bf16.msra.mxu0 %v2880
    %8863 = vmatprep.subr.bf16.mxu0 %v2889
    %8864 = vmatpush1.bf16.msra.mxu0 %v2888
    %8865 = vmatprep.mubr.bf16.mxu0 %v8584
    %8866 = vmatmul.mubr.bf16.gmra.mrb[0].mxu0 %v8583
    %v8867 = vpop.f32.mrb[0].mxu0
    %v8868 = vadd.f32 %v629, %v8867
    %v8869 = vpop.f32.mrb[0].mxu0
    %v8870 = vadd.f32 %v633, %v8869
    %v8871 = vpop.f32.mrb[0].mxu0
    %v8872 = vpop.f32.mrb[0].mxu0
    %8873 = vdwg.mxu0
    %8874 = vmatprep.subr.bf16.mxu0 %v2897
    %8875 = vmatpush1.bf16.msra.mxu0 %v2896
    %8876 = vmatprep.subr.bf16.mxu0 %v2905
    %8877 = vmatpush1.bf16.msra.mxu0 %v2904
    %8878 = vmatprep.subr.bf16.mxu0 %v2913
    %8879 = vmatpush1.bf16.msra.mxu0 %v2912
    %8880 = vmatprep.subr.bf16.mxu0 %v2921
    %8881 = vmatpush1.bf16.msra.mxu0 %v2920
    %8882 = vmatprep.subr.bf16.mxu0 %v2929
    %8883 = vmatpush1.bf16.msra.mxu0 %v2928
    %8884 = vmatprep.subr.bf16.mxu0 %v2937
    %8885 = vmatpush1.bf16.msra.mxu0 %v2936
    %8886 = vmatprep.subr.bf16.mxu0 %v2945
    %8887 = vmatpush1.bf16.msra.mxu0 %v2944
    %8888 = vmatprep.subr.bf16.mxu0 %v2953
    %8889 = vmatpush1.bf16.msra.mxu0 %v2952
    %8890 = vmatprep.subr.bf16.mxu0 %v2961
    %8891 = vmatpush1.bf16.msra.mxu0 %v2960
    %8892 = vmatprep.subr.bf16.mxu0 %v2969
    %8893 = vmatpush1.bf16.msra.mxu0 %v2968
    %8894 = vmatprep.subr.bf16.mxu0 %v2977
    %8895 = vmatpush1.bf16.msra.mxu0 %v2976
    %8896 = vmatprep.subr.bf16.mxu0 %v2985
    %8897 = vmatpush1.bf16.msra.mxu0 %v2984
    %8898 = vmatprep.subr.bf16.mxu0 %v2993
    %8899 = vmatpush1.bf16.msra.mxu0 %v2992
    %8900 = vmatprep.subr.bf16.mxu0 %v3001
    %8901 = vmatpush1.bf16.msra.mxu0 %v3000
    %8902 = vmatprep.subr.bf16.mxu0 %v3009
    %8903 = vmatpush1.bf16.msra.mxu0 %v3008
    %8904 = vmatprep.subr.bf16.mxu0 %v3017
    %8905 = vmatpush1.bf16.msra.mxu0 %v3016
    %8906 = vmatprep.mubr.bf16.mxu0 %v8586
    %8907 = vmatmul.mubr.bf16.gmra.mrb[0].mxu0 %v8585
    %v8908 = vpop.f32.mrb[0].mxu0
    %v8909 = vadd.f32 %v8868, %v8908
    %v8910 = vpop.f32.mrb[0].mxu0
    %v8911 = vadd.f32 %v8870, %v8910
    %v8912 = vpop.f32.mrb[0].mxu0
    %v8913 = vpop.f32.mrb[0].mxu0
    %8914 = vdwg.mxu0
    %v8915 = vxor.u32 %v8663, 2147483648
    %v8916 = vxor.u32 %v8665, 2147483648
    %v8917 = vmul.f32 %v8915, 1.442695
    %v8918 = vpow.pop %v8917
    %v8919 = vmul.f32 %v8916, 1.442695
    %v8920 = vpow.pop %v8919
    %v8921 = vadd.f32 %v8918, 1.0
    %v8922 = vadd.f32 %v8920, 1.0
    %v8923 = vrcp.pop %v8921
    %v8924 = vmul.f32 1.0, %v8923
    %v8925 = vrcp.pop %v8922
    %v8926 = vmul.f32 1.0, %v8925
    %v8927 = vxor.u32 %v8745, 2147483648
    %v8928 = vxor.u32 %v8747, 2147483648
    %v8929 = vmul.f32 %v8927, 1.442695
    %v8930 = vpow.pop %v8929
    %v8931 = vmul.f32 %v8928, 1.442695
    %v8932 = vpow.pop %v8931
    %v8933 = vadd.f32 %v8930, 1.0
    %v8934 = vadd.f32 %v8932, 1.0
    %v8935 = vrcp.pop %v8933
    %v8936 = vmul.f32 1.0, %v8935
    %v8937 = vrcp.pop %v8934
    %v8938 = vmul.f32 1.0, %v8937
    %v8939 = vtanh.pop %v8827
    %v8940 = vtanh.pop %v8829
    %v8941 = vxor.u32 %v8909, 2147483648
    %v8942 = vxor.u32 %v8911, 2147483648
    %v8943 = vmul.f32 %v8941, 1.442695
    %v8944 = vpow.pop %v8943
    %v8945 = vmul.f32 %v8942, 1.442695
    %v8946 = vpow.pop %v8945
    %v8947 = vadd.f32 %v8944, 1.0
    %v8948 = vadd.f32 %v8946, 1.0
    %v8949 = vrcp.pop %v8947
    %v8950 = vmul.f32 1.0, %v8949
    %v8951 = vrcp.pop %v8948
    %v8952 = vmul.f32 1.0, %v8951
    %v8953 = vmul.f32 %v8936, %v8198
    %v8954 = vmul.f32 %v8938, %v8199
    %v8955 = vmul.f32 %v8924, %v8939
    %v8956 = vmul.f32 %v8926, %v8940
    %v8957 = vadd.f32 %v8953, %v8955
    %v8958 = vadd.f32 %v8954, %v8956
    %v8959 = vtanh.pop %v8957
    %v8960 = vtanh.pop %v8958
    %v8961 = vmul.f32 %v8950, %v8959
    %v8962 = vmul.f32 %v8952, %v8960
    %8963 = vst [vmem:[#allocation2] sm:$0xff] %v8581
    %8964 = vst [vmem:[#allocation2 + $0x8] sm:$0xff] %v8582
    %8965 = vst [vmem:[#allocation3] sm:$0xff] %v8577
    %8966 = vst [vmem:[#allocation3 + $0x8] sm:$0xff] %v8578
    %8967 = vst [vmem:[#allocation4] sm:$0xff] %v8961
    %8968 = vst [vmem:[#allocation4 + $0x8] sm:$0xff] %v8962
    %8969 = vst [vmem:[#allocation5] sm:$0xff] %v8957
    %8970 = vst [vmem:[#allocation5 + $0x8] sm:$0xff] %v8958
    // Predicated region
    $region54: #{tpu_custom_call.1} parent=1 // pred_check
      %p8971 = pneg %p98
    $region55: #{tpu_custom_call.1} parent=1 // pred_check_branch
      %8973 = sbr.rel (%p8971) target = $region57
    $region56: #{tpu_custom_call.1} parent=1 // pred_region
      %v8974 = vpack.c.bf16 %v8961, %v8961
      %v8975 = vpack.c.bf16 %v8962, %v8962
      %v8976 = vld [vmem:[#allocation14] sm:$0xf]
      %v8977 = vld [vmem:[#allocation14 + $0x4] sm:$0xf]
      %v8978 = vld [vmem:[#allocation14 + $0x8] sm:$0xf]
      %v8979 = vld [vmem:[#allocation14 + $0xc] sm:$0xf]
      %v8980 = vld [vmem:[#allocation14 + $0x10] sm:$0xf]
      %v8981 = vld [vmem:[#allocation14 + $0x14] sm:$0xf]
      %v8982 = vld [vmem:[#allocation14 + $0x18] sm:$0xf]
      %v8983 = vld [vmem:[#allocation14 + $0x1c] sm:$0xf]
      %v8984 = vld [vmem:[#allocation14 + $0x20] sm:$0xf]
      %v8985 = vld [vmem:[#allocation14 + $0x24] sm:$0xf]
      %v8986 = vld [vmem:[#allocation14 + $0x28] sm:$0xf]
      %v8987 = vld [vmem:[#allocation14 + $0x2c] sm:$0xf]
      %v8988 = vld [vmem:[#allocation14 + $0x30] sm:$0xf]
      %v8989 = vld [vmem:[#allocation14 + $0x34] sm:$0xf]
      %v8990 = vld [vmem:[#allocation14 + $0x38] sm:$0xf]
      %v8991 = vld [vmem:[#allocation14 + $0x3c] sm:$0xf]
      %v8992 = vld [vmem:[#allocation14 + $0x40] sm:$0xf]
      %v8993 = vld [vmem:[#allocation14 + $0x44] sm:$0xf]
      %v8994 = vld [vmem:[#allocation14 + $0x48] sm:$0xf]
      %v8995 = vld [vmem:[#allocation14 + $0x4c] sm:$0xf]
      %v8996 = vld [vmem:[#allocation14 + $0x50] sm:$0xf]
      %v8997 = vld [vmem:[#allocation14 + $0x54] sm:$0xf]
      %v8998 = vld [vmem:[#allocation14 + $0x58] sm:$0xf]
      %v8999 = vld [vmem:[#allocation14 + $0x5c] sm:$0xf]
      %v9000 = vld [vmem:[#allocation14 + $0x60] sm:$0xf]
      %v9001 = vld [vmem:[#allocation14 + $0x64] sm:$0xf]
      %v9002 = vld [vmem:[#allocation14 + $0x68] sm:$0xf]
      %v9003 = vld [vmem:[#allocation14 + $0x6c] sm:$0xf]
      %v9004 = vld [vmem:[#allocation14 + $0x70] sm:$0xf]
      %v9005 = vld [vmem:[#allocation14 + $0x74] sm:$0xf]
      %v9006 = vld [vmem:[#allocation14 + $0x78] sm:$0xf]
      %v9007 = vld [vmem:[#allocation14 + $0x7c] sm:$0xf]
      %v9008 = vld [vmem:[%s6] sm:$0x1]
      %v9010 = vlaneseq
      %v9011 = vshrl.u32 %v9010, 7
      %v9012 = vsub.s32 0, %v9011
      %v9013 = vrot.slane %v9008, %v9012
      %v9047 = vunpack.c.l.b16 %v8976
      %v9048 = vunpack.c.l.b16 %v8977
      %v9049 = vunpack.c.l.b16 %v8978
      %v9050 = vunpack.c.l.b16 %v8979
      %v9051 = vunpack.c.l.b16 %v8980
      %v9052 = vunpack.c.l.b16 %v8981
      %v9053 = vunpack.c.l.b16 %v8982
      %v9054 = vunpack.c.l.b16 %v8983
      %v9055 = vunpack.c.l.b16 %v8984
      %v9056 = vunpack.c.l.b16 %v8985
      %v9057 = vunpack.c.l.b16 %v8986
      %v9058 = vunpack.c.l.b16 %v8987
      %v9059 = vunpack.c.l.b16 %v8988
      %v9060 = vunpack.c.l.b16 %v8989
      %v9061 = vunpack.c.l.b16 %v8990
      %v9062 = vunpack.c.l.b16 %v8991
      %v9063 = vunpack.c.l.b16 %v8992
      %v9064 = vunpack.c.l.b16 %v8993
      %v9065 = vunpack.c.l.b16 %v8994
      %v9066 = vunpack.c.l.b16 %v8995
      %v9067 = vunpack.c.l.b16 %v8996
      %v9068 = vunpack.c.l.b16 %v8997
      %v9069 = vunpack.c.l.b16 %v8998
      %v9070 = vunpack.c.l.b16 %v8999
      %v9071 = vunpack.c.l.b16 %v9000
      %v9072 = vunpack.c.l.b16 %v9001
      %v9073 = vunpack.c.l.b16 %v9002
      %v9074 = vunpack.c.l.b16 %v9003
      %v9075 = vunpack.c.l.b16 %v9004
      %v9076 = vunpack.c.l.b16 %v9005
      %v9077 = vunpack.c.l.b16 %v9006
      %v9078 = vunpack.c.l.b16 %v9007
      %v9079 = vpack.c.b16 %v9048, %v9047
      %v9080 = vpack.c.b16 %v9050, %v9049
      %v9081 = vpack.c.b16 %v9052, %v9051
      %v9082 = vpack.c.b16 %v9054, %v9053
      %v9083 = vpack.c.b16 %v9056, %v9055
      %v9084 = vpack.c.b16 %v9058, %v9057
      %v9085 = vpack.c.b16 %v9060, %v9059
      %v9086 = vpack.c.b16 %v9062, %v9061
      %v9087 = vpack.c.b16 %v9064, %v9063
      %v9088 = vpack.c.b16 %v9066, %v9065
      %v9089 = vpack.c.b16 %v9068, %v9067
      %v9090 = vpack.c.b16 %v9070, %v9069
      %v9091 = vpack.c.b16 %v9072, %v9071
      %v9092 = vpack.c.b16 %v9074, %v9073
      %v9093 = vpack.c.b16 %v9076, %v9075
      %v9094 = vpack.c.b16 %v9078, %v9077
      %9111 = vmatprep.subr.bf16.mxu0 0
      %9112 = vmatpush1.bf16.msra.mxu0 %v9079
      %9113 = vmatprep.subr.bf16.mxu0 0
      %9114 = vmatpush1.bf16.msra.mxu0 %v9080
      %9115 = vmatprep.subr.bf16.mxu0 0
      %9116 = vmatpush1.bf16.msra.mxu0 %v9081
      %9117 = vmatprep.subr.bf16.mxu0 0
      %9118 = vmatpush1.bf16.msra.mxu0 %v9082
      %9119 = vmatprep.subr.bf16.mxu0 0
      %9120 = vmatpush1.bf16.msra.mxu0 %v9083
      %9121 = vmatprep.subr.bf16.mxu0 0
      %9122 = vmatpush1.bf16.msra.mxu0 %v9084
      %9123 = vmatprep.subr.bf16.mxu0 0
      %9124 = vmatpush1.bf16.msra.mxu0 %v9085
      %9125 = vmatprep.subr.bf16.mxu0 0
      %9126 = vmatpush1.bf16.msra.mxu0 %v9086
      %9127 = vmatprep.subr.bf16.mxu0 0
      %9128 = vmatpush1.bf16.msra.mxu0 %v9087
      %9129 = vmatprep.subr.bf16.mxu0 0
      %9130 = vmatpush1.bf16.msra.mxu0 %v9088
      %9131 = vmatprep.subr.bf16.mxu0 0
      %9132 = vmatpush1.bf16.msra.mxu0 %v9089
      %9133 = vmatprep.subr.bf16.mxu0 0
      %9134 = vmatpush1.bf16.msra.mxu0 %v9090
      %9135 = vmatprep.subr.bf16.mxu0 0
      %9136 = vmatpush1.bf16.msra.mxu0 %v9091
      %9137 = vmatprep.subr.bf16.mxu0 0
      %9138 = vmatpush1.bf16.msra.mxu0 %v9092
      %9139 = vmatprep.subr.bf16.mxu0 0
      %9140 = vmatpush1.bf16.msra.mxu0 %v9093
      %9141 = vmatprep.subr.bf16.mxu0 0
      %9142 = vmatpush1.bf16.msra.mxu0 %v9094
      %9143 = vmatprep.mubr.bf16.mxu0 %v8975
      %9144 = vmatmul.mubr.bf16.gmra.mrb[0].mxu0 %v8974
      %v9145 = vpop.f32.mrb[0].mxu0
      %v9146 = vadd.f32 %v9013, %v9145
      %v9147 = vpop.f32.mrb[0].mxu0
      %v9148 = vpop.f32.mrb[0].mxu0
      %v9149 = vpop.f32.mrb[0].mxu0
      %9150 = vdwg.mxu0
      %9151 = vst [vmem:[#allocation15] sm:$0xff] %v9146
      %9152 = vst [vmem:[#allocation16] sm:$0xff] %v8581
      %9153 = vst [vmem:[#allocation16 + $0x8] sm:$0xff] %v8582
      %s9154 = scalar_lea.vmem [#allocation16], 16
      %9155 = vst [vmem:[%s9154] sm:$0xff] %v8961
      %9156 = vst [vmem:[%s9154 + $0x8] sm:$0xff] %v8962
      %9157 = vst [vmem:[#allocation18] sm:$0xff] %v8577
      %9158 = vst [vmem:[#allocation18 + $0x8] sm:$0xff] %v8578
      %s9159 = scalar_lea.vmem [#allocation18], 16
      %9160 = vst [vmem:[%s9159] sm:$0xff] %v8957
      %9161 = vst [vmem:[%s9159 + $0x8] sm:$0xff] %v8958
    $region57: #{tpu_custom_call.1} parent=1 // pred_fallthru
      _
    // Predicated region
    $region58: #{tpu_custom_call.1} parent=1 // pred_check
      _
    $region59: #{tpu_custom_call.1} parent=1 // pred_check_branch
      %9163 = sbr.rel (0) target = $region61
    $region60: #{tpu_custom_call.1} parent=1 // pred_region
      %s9165 = ssub.s32 128, 128
      %9166 = vsyncadd [#allocation8], %s9165
      %s9168 = sshll.u32 [#allocation15], 4
      %s9169 = int_to_ptr.vmem [resolvable:$true] %s9168
      %9171 = dma.vmem_to_hbm [thread:$0]  %s9169, 128, %s7, [#allocation8]
    $region61: #{tpu_custom_call.1} parent=1 // pred_fallthru
      _
    // Predicated region
    $region62: #{tpu_custom_call.1} parent=1 // pred_check
      _
    $region63: #{tpu_custom_call.1} parent=1 // pred_check_branch
      %9173 = sbr.rel (0) target = $region65
    $region64: #{tpu_custom_call.1} parent=1 // pred_region
      %s9175 = ssub.s32 512, 512
      %9176 = vsyncadd [#allocation17], %s9175
      %s9177 = sshll.u32 [#allocation16], 4
      %s9178 = int_to_ptr.vmem [resolvable:$true] %s9177
      %9183 = dma.vmem_to_hbm [thread:$0]  %s9178, 512, %s8, [#allocation17], 256, 256, 16
    $region65: #{tpu_custom_call.1} parent=1 // pred_fallthru
      _
    // Predicated region
    $region66: #{tpu_custom_call.1} parent=1 // pred_check
      _
    $region67: #{tpu_custom_call.1} parent=1 // pred_check_branch
      %9185 = sbr.rel (0) target = $region69
    $region68: #{tpu_custom_call.1} parent=1 // pred_region
      %s9187 = ssub.s32 512, 512
      %9188 = vsyncadd [#allocation17], %s9187
      %s9189 = sshll.u32 [#allocation18], 4
      %s9190 = int_to_ptr.vmem [resolvable:$true] %s9189
      %9195 = dma.vmem_to_hbm [thread:$0]  %s9190, 512, %s9, [#allocation17], 256, 256, 16
    $region69: #{tpu_custom_call.1} parent=1 // pred_fallthru
      _
    // Predicated region
    $region70: #{tpu_custom_call.1} parent=1 // pred_check
      _
    $region71: #{tpu_custom_call.1} parent=1 // pred_check_branch
      %9197 = sbr.rel (0) target = $region73
    $region72: #{tpu_custom_call.1} parent=1 // pred_region
      %9198 = dma.done [#allocation8], 128
    $region73: #{tpu_custom_call.1} parent=1 // pred_fallthru
      _
    // Predicated region
    $region74: #{tpu_custom_call.1} parent=1 // pred_check
      _
    $region75: #{tpu_custom_call.1} parent=1 // pred_check_branch
      %9200 = sbr.rel (0) target = $region77
    $region76: #{tpu_custom_call.1} parent=1 // pred_region
      %9201 = dma.done [#allocation17], 512
    $region77: #{tpu_custom_call.1} parent=1 // pred_fallthru
      _
    // Predicated region
    $region78: #{tpu_custom_call.1} parent=1 // pred_check
      _
    $region79: #{tpu_custom_call.1} parent=1 // pred_check_branch
      %9203 = sbr.rel (0) target = $region81
    $region80: #{tpu_custom_call.1} parent=1 // pred_region
      %9204 = dma.done [#allocation17], 512
    $region81: #{tpu_custom_call.1} parent=1 // pred_fallthru
      _
    %9205 = vsyncpa [#allocation7], 1
    %9206 = vsyncpa [#allocation10], 1
    %9207 = vsyncpa [#allocation13], 1
    %9208 = vsyncpa [#allocation8], 1
    %9209 = vsyncpa [#allocation17], 1

</llo_original>
